<compile_context>
chip_gen: v5e
topology: v5e:2x2
jax: 0.10.0
libtpu: 0.0.40
codegen_flags: <defaults>
</compile_context>

<pallas_src>
import jax
import jax.numpy as jnp
from jax.experimental import pallas as pl
from jax.experimental.pallas import tpu as pltpu

K_BASIS = 20        # PointNetBasis(k=20)
K_PAD = 32          # output channels padded to an 8-aligned sublane count
FEAT_CH = 512       # channels expected by PointNetBasis.conv1
BN_EPS = 1e-5


def _basis_kernel(x_ref,                 # (1, 3, TN)       f32
                  wf_ref, bf_ref,        # (512, 3) f32,    (512, 1) f32
                  w1_ref, t1_ref,        # (256, 512) bf16, (256, 1) f32
                  w2_ref, t2_ref,        # (256, 256) bf16, (256, 1) f32
                  w3_ref, t3_ref,        # (256, 256) bf16, (256, 1) f32
                  w4_ref, b4_ref,        # (32, 256) bf16,  (32, 1) f32
                  o_ref):                # (1, 32, TN)      f32
    """One (batch, point-tile) per grid step, channels-major ([C, TN])."""
    x = x_ref[0]                                                     # (3, TN) f32

    # --- Stand-in feature layer 3 -> 512 on the VPU -------------------------
    # A K=3 MXU contraction burns full TN-column streaming passes for <1% of
    # the FLOPs, so compute it as three broadcast multiply-adds on the
    # (otherwise mostly idle) VPU, in f32 -- this also keeps full precision on
    # the raw xyz coordinates.
    f = bf_ref[...] + wf_ref[:, 0:1] * x[0:1, :]
    f = f + wf_ref[:, 1:2] * x[1:2, :]
    f = f + wf_ref[:, 2:3] * x[2:3, :]
    h = jnp.maximum(f, 0.0).astype(jnp.bfloat16)                     # (512, TN)

    def conv_shift_relu(w_ref, t_ref, h_bf16):
        # 1x1 Conv1d (BN scale pre-folded into w) -> + shift -> ReLU.
        # Returns bf16 so only one copy of each (C, TN) activation stays live
        # (halves vld/vst and spill traffic vs. keeping an f32 copy around).
        acc = jax.lax.dot_general(
            w_ref[...], h_bf16,
            dimension_numbers=(((1,), (0,)), ((), ())),
            preferred_element_type=jnp.float32)
        return jnp.maximum(acc + t_ref[...], 0.0).astype(jnp.bfloat16)

    h = conv_shift_relu(w1_ref, t1_ref, h)   # 512 -> 256  relu(bn1(conv1(x)))
    h = conv_shift_relu(w2_ref, t2_ref, h)   # 256 -> 256  relu(bn2(conv2(x)))
    h = conv_shift_relu(w3_ref, t3_ref, h)   # 256 -> 256  relu(bn2b(conv3(x)))

    # x = self.m(x) -> Dropout(p=0.3): identity in eval mode.

    # conv4: 256 -> k (padded to 32 output channels; stays on the MXU).
    o = jax.lax.dot_general(
        w4_ref[...], h,
        dimension_numbers=(((1,), (0,)), ((), ())),
        preferred_element_type=jnp.float32) + b4_ref[...]
    o_ref[0] = o.astype(o_ref.dtype)                                 # (32, TN)


def _choose_tn(B, N):
    """Largest 128-aligned point tile (<= 2048) that still yields >= 4 grid
    steps -- keeps both v7x TensorCores busy -- else the smallest tile."""
    n128 = pl.cdiv(N, 128) * 128
    candidates = [t for t in (2048, 1024, 512, 256, 128) if t <= max(n128, 128)]
    for tn in candidates:
        if B * pl.cdiv(N, tn) >= 4:
            return tn
    return candidates[-1]


def pointnet_basis_forward(x_ncw, params):
    """x_ncw: [B, 3, N] float32 (PyTorch NCW layout).  Returns [B, N, k]."""
    B, C, N = x_ncw.shape
    assert C == 3

    tn = _choose_tn(B, N)
    n_total = pl.cdiv(N, tn) * tn            # pad N up to a tile multiple
    if n_total != N:
        x_ncw = jnp.pad(x_ncw, ((0, 0), (0, 0), (0, n_total - N)))

    wf, bf, w1, t1, w2, t2, w3, t3, w4, b4 = params

    def rep(arr):
        # Whole (replicated) parameter block, constant across the grid.
        # (pl.Buffered(1) single-buffering was considered per review; skipped
        #  since the ~0.5 MiB saving is negligible against the 32 MiB budget.)
        nd = arr.ndim
        return pl.BlockSpec(arr.shape, lambda b, n: (0,) * nd)

    grid_spec = pltpu.PrefetchScalarGridSpec(
        num_scalar_prefetch=0,
        grid=(B, n_total // tn),
        in_specs=[
            pl.BlockSpec((1, 3, tn), lambda b, n: (b, 0, n)),        # xyz tile
            rep(wf), rep(bf),
            rep(w1), rep(t1),
            rep(w2), rep(t2),
            rep(w3), rep(t3),
            rep(w4), rep(b4),
        ],
        out_specs=pl.BlockSpec((1, K_PAD, tn), lambda b, n: (b, 0, n)),
    )

    out_cm = pl.pallas_call(
        _basis_kernel,
        out_shape=jax.ShapeDtypeStruct((B, K_PAD, n_total), jnp.float32),
        grid_spec=grid_spec,
        compiler_params=pltpu.CompilerParams(
            dimension_semantics=("parallel", "parallel"),
            vmem_limit_bytes=32 << 20,
        ),
    )(x_ncw, wf, bf, w1, t1, w2, t2, w3, t3, w4, b4)

    # conv4 output transpose(2,1): [B, k, N] -> [B, N, k]; drop channel/point
    # pads.  TODO(synk): fold this transpose into the kernel epilogue only if
    # it shows up in a profile at large B*N (kernel is MXU-bound today).
    return jnp.transpose(out_cm[:, :K_BASIS, :N], (0, 2, 1))


def make_params(key):
    """Deterministic synthetic parameters, channels-major ([C_out, C_in]),
    with eval-mode BatchNorm folded into the weights (scale) and shift."""
    ks = jax.random.split(key, 16)
    f32 = jnp.float32

    def rnd(k, shape, scale=0.1):
        return (scale * jax.random.normal(k, shape)).astype(f32)

    # Stand-in feature MLP 3 -> 512 (see TODO at top); kept f32 since it runs
    # on the VPU (f32 FMAs work on all of v5e/v6e/v7x).
    wf = rnd(ks[0], (FEAT_CH, 3), 0.5)
    bf = rnd(ks[1], (FEAT_CH, 1))

    def conv_bn(kw, kb, kg, kbe, c_in, c_out):
        w = rnd(kw, (c_out, c_in), 1.0 / (c_in ** 0.5))
        b = rnd(kb, (c_out,))
        gamma = 1.0 + rnd(kg, (c_out,), 0.05)
        beta = rnd(kbe, (c_out,))
        mean = jnp.zeros((c_out,), f32)
        var = jnp.ones((c_out,), f32)
        inv_std = 1.0 / jnp.sqrt(var + BN_EPS)
        scale = gamma * inv_std
        w_folded = w * scale[:, None]                 # fold BN scale into W
        shift = beta - mean * scale + b * scale       # conv bias + BN shift
        return w_folded, shift[:, None]

    w1, t1 = conv_bn(ks[2], ks[3], ks[4], ks[5], FEAT_CH, 256)
    w2, t2 = conv_bn(ks[6], ks[7], ks[8], ks[9], 256, 256)
    w3, t3 = conv_bn(ks[10], ks[11], ks[12], ks[13], 256, 256)

    w4 = rnd(ks[14], (K_BASIS, 256), 1.0 / 16.0)
    b4 = rnd(ks[15], (K_BASIS,))
    # Pad output channels 20 -> 32 (extra rows are zero and sliced off later).
    w4p = jnp.zeros((K_PAD, 256), f32).at[:K_BASIS].set(w4)
    b4p = jnp.zeros((K_PAD, 1), f32).at[:K_BASIS, 0].set(b4)

    bf16 = jnp.bfloat16
    return (wf, bf,
            w1.astype(bf16), t1,
            w2.astype(bf16), t2,
            w3.astype(bf16), t3,
            w4p.astype(bf16), b4p)


def _reference(x_ncw, params):
    """Pure-JAX reference mirroring the kernel math exactly
    (f32 VPU layer 0; bf16 dots with f32 accumulation; bf16 activations)."""
    wf, bf, w1, t1, w2, t2, w3, t3, w4, b4 = params

    f = jnp.einsum("oc,bcn->bon", wf, x_ncw) + bf[None]            # f32 layer 0
    h = jnp.maximum(f, 0.0).astype(jnp.bfloat16)

    def layer(w, t, h_bf16):
        acc = jnp.einsum("oc,bcn->bon", w, h_bf16,
                         preferred_element_type=jnp.float32)
        return jnp.maximum(acc + t[None], 0.0).astype(jnp.bfloat16)

    h = layer(w1, t1, h)
    h = layer(w2, t2, h)
    h = layer(w3, t3, h)
    o = jnp.einsum("oc,bcn->bon", w4, h,
                   preferred_element_type=jnp.float32) + b4[None]
    return jnp.transpose(o[:, :K_BASIS, :], (0, 2, 1))


if __name__ == "__main__":
    # N not a multiple of 128 on purpose: exercises the pad + multi-tile path.
    B, N = 2, 1000
    key = jax.random.PRNGKey(0)
    k_x, k_p = jax.random.split(key)

    # PyTorch-style input: [B, 3, N] point cloud (NCW).
    x = jax.random.normal(k_x, (B, 3, N), dtype=jnp.float32)
    params = make_params(k_p)

    out = pointnet_basis_forward(x, params)
    out = jax.block_until_ready(out)
    assert out.shape == (B, N, K_BASIS), out.shape

    ref = _reference(x, params)
    assert jnp.allclose(out, ref, atol=1e-2, rtol=1e-2), float(
        jnp.max(jnp.abs(out - ref)))

    print("KERNEL_OK")
</pallas_src>

<mosaic_0001>
module attributes {stable_mosaic.version = 11 : i64} {
  func.func @_basis_kernel(%arg0: i32, %arg1: i32, %arg2: memref<1x3x512xf32, #tpu.memory_space<vmem>>, %arg3: memref<512x3xf32, #tpu.memory_space<vmem>>, %arg4: memref<512x1xf32, #tpu.memory_space<vmem>>, %arg5: memref<256x512xbf16, #tpu.memory_space<vmem>>, %arg6: memref<256x1xf32, #tpu.memory_space<vmem>>, %arg7: memref<256x256xbf16, #tpu.memory_space<vmem>>, %arg8: memref<256x1xf32, #tpu.memory_space<vmem>>, %arg9: memref<256x256xbf16, #tpu.memory_space<vmem>>, %arg10: memref<256x1xf32, #tpu.memory_space<vmem>>, %arg11: memref<32x256xbf16, #tpu.memory_space<vmem>>, %arg12: memref<32x1xf32, #tpu.memory_space<vmem>>, %arg13: memref<1x32x512xf32, #tpu.memory_space<vmem>>) attributes {dimension_semantics = [#tpu.dimension_semantics<parallel>, #tpu.dimension_semantics<parallel>], iteration_bounds = array<i64: 2, 2>, scalar_prefetch = 0 : i64, scratch_operands = 0 : i64, tpu.core_type = #tpu.core_type<tc>, window_params = [{transform_indices = @transform_0, window_bounds = array<i64: 1, 3, 512>}, {pipeline_mode = #tpu.pipeline_mode<synchronous>, transform_indices = @transform_1, window_bounds = array<i64: 512, 3>}, {pipeline_mode = #tpu.pipeline_mode<synchronous>, transform_indices = @transform_2, window_bounds = array<i64: 512, 1>}, {pipeline_mode = #tpu.pipeline_mode<synchronous>, transform_indices = @transform_3, window_bounds = array<i64: 256, 512>}, {pipeline_mode = #tpu.pipeline_mode<synchronous>, transform_indices = @transform_4, window_bounds = array<i64: 256, 1>}, {pipeline_mode = #tpu.pipeline_mode<synchronous>, transform_indices = @transform_5, window_bounds = array<i64: 256, 256>}, {pipeline_mode = #tpu.pipeline_mode<synchronous>, transform_indices = @transform_6, window_bounds = array<i64: 256, 1>}, {pipeline_mode = #tpu.pipeline_mode<synchronous>, transform_indices = @transform_7, window_bounds = array<i64: 256, 256>}, {pipeline_mode = #tpu.pipeline_mode<synchronous>, transform_indices = @transform_8, window_bounds = array<i64: 256, 1>}, {pipeline_mode = #tpu.pipeline_mode<synchronous>, transform_indices = @transform_9, window_bounds = array<i64: 32, 256>}, {pipeline_mode = #tpu.pipeline_mode<synchronous>, transform_indices = @transform_10, window_bounds = array<i64: 32, 1>}, {transform_indices = @transform_11, window_bounds = array<i64: 1, 32, 512>}]} {
    %c0 = arith.constant 0 : index
    %c0_0 = arith.constant 0 : index
    %c0_1 = arith.constant 0 : index
    %0 = vector.load %arg2[%c0, %c0_0, %c0_1] : memref<1x3x512xf32, #tpu.memory_space<vmem>>, vector<1x3x512xf32>
    %1 = vector.shape_cast %0 : vector<1x3x512xf32> to vector<3x512xf32>
    %c0_2 = arith.constant 0 : index
    %c0_3 = arith.constant 0 : index
    %2 = vector.load %arg4[%c0_2, %c0_3] : memref<512x1xf32, #tpu.memory_space<vmem>>, vector<512x1xf32>
    %c0_4 = arith.constant 0 : index
    %c0_5 = arith.constant 0 : index
    %3 = vector.load %arg3[%c0_4, %c0_5] : memref<512x3xf32, #tpu.memory_space<vmem>>, vector<512x1xf32>
    %4 = vector.extract_strided_slice %1 {offsets = [0, 0], sizes = [1, 512], strides = [1, 1]} : vector<3x512xf32> to vector<1x512xf32>
    %5 = vector.broadcast %3 : vector<512x1xf32> to vector<512x512xf32>
    %6 = vector.broadcast %4 : vector<1x512xf32> to vector<512x512xf32>
    %7 = arith.mulf %5, %6 : vector<512x512xf32>
    %8 = vector.broadcast %2 : vector<512x1xf32> to vector<512x512xf32>
    %9 = arith.addf %8, %7 : vector<512x512xf32>
    %c0_6 = arith.constant 0 : index
    %c1 = arith.constant 1 : index
    %10 = vector.load %arg3[%c0_6, %c1] : memref<512x3xf32, #tpu.memory_space<vmem>>, vector<512x1xf32>
    %11 = vector.extract_strided_slice %1 {offsets = [1, 0], sizes = [1, 512], strides = [1, 1]} : vector<3x512xf32> to vector<1x512xf32>
    %12 = vector.broadcast %10 : vector<512x1xf32> to vector<512x512xf32>
    %13 = vector.broadcast %11 : vector<1x512xf32> to vector<512x512xf32>
    %14 = arith.mulf %12, %13 : vector<512x512xf32>
    %15 = arith.addf %9, %14 : vector<512x512xf32>
    %c0_7 = arith.constant 0 : index
    %c2 = arith.constant 2 : index
    %16 = vector.load %arg3[%c0_7, %c2] : memref<512x3xf32, #tpu.memory_space<vmem>>, vector<512x1xf32>
    %17 = vector.extract_strided_slice %1 {offsets = [2, 0], sizes = [1, 512], strides = [1, 1]} : vector<3x512xf32> to vector<1x512xf32>
    %18 = vector.broadcast %16 : vector<512x1xf32> to vector<512x512xf32>
    %19 = vector.broadcast %17 : vector<1x512xf32> to vector<512x512xf32>
    %20 = arith.mulf %18, %19 : vector<512x512xf32>
    %21 = arith.addf %15, %20 : vector<512x512xf32>
    %cst = arith.constant 0.000000e+00 : f32
    %22 = vector.broadcast %cst : f32 to vector<512x512xf32>
    %23 = arith.maximumf %21, %22 : vector<512x512xf32>
    %24 = arith.truncf %23 : vector<512x512xf32> to vector<512x512xbf16>
    %c0_8 = arith.constant 0 : index
    %c0_9 = arith.constant 0 : index
    %25 = vector.load %arg5[%c0_8, %c0_9] : memref<256x512xbf16, #tpu.memory_space<vmem>>, vector<256x512xbf16>
    %cst_10 = arith.constant dense<0.000000e+00> : vector<256x512xf32>
    %26 = tpu.matmul %25, %24, %cst_10 {dimension_numbers = #tpu.dot_dimension_numbers<[1], [0], [0], [1], [0, 0, 1, 1], [], []>} : vector<256x512xbf16>, vector<512x512xbf16>, vector<256x512xf32> -> vector<256x512xf32>
    %c0_11 = arith.constant 0 : index
    %c0_12 = arith.constant 0 : index
    %27 = vector.load %arg6[%c0_11, %c0_12] : memref<256x1xf32, #tpu.memory_space<vmem>>, vector<256x1xf32>
    %28 = vector.broadcast %27 : vector<256x1xf32> to vector<256x512xf32>
    %29 = arith.addf %26, %28 : vector<256x512xf32>
    %cst_13 = arith.constant 0.000000e+00 : f32
    %30 = vector.broadcast %cst_13 : f32 to vector<256x512xf32>
    %31 = arith.maximumf %29, %30 : vector<256x512xf32>
    %32 = arith.truncf %31 : vector<256x512xf32> to vector<256x512xbf16>
    %c0_14 = arith.constant 0 : index
    %c0_15 = arith.constant 0 : index
    %33 = vector.load %arg7[%c0_14, %c0_15] : memref<256x256xbf16, #tpu.memory_space<vmem>>, vector<256x256xbf16>
    %cst_16 = arith.constant dense<0.000000e+00> : vector<256x512xf32>
    %34 = tpu.matmul %33, %32, %cst_16 {dimension_numbers = #tpu.dot_dimension_numbers<[1], [0], [0], [1], [0, 0, 1, 1], [], []>} : vector<256x256xbf16>, vector<256x512xbf16>, vector<256x512xf32> -> vector<256x512xf32>
    %c0_17 = arith.constant 0 : index
    %c0_18 = arith.constant 0 : index
    %35 = vector.load %arg8[%c0_17, %c0_18] : memref<256x1xf32, #tpu.memory_space<vmem>>, vector<256x1xf32>
    %36 = vector.broadcast %35 : vector<256x1xf32> to vector<256x512xf32>
    %37 = arith.addf %34, %36 : vector<256x512xf32>
    %cst_19 = arith.constant 0.000000e+00 : f32
    %38 = vector.broadcast %cst_19 : f32 to vector<256x512xf32>
    %39 = arith.maximumf %37, %38 : vector<256x512xf32>
    %40 = arith.truncf %39 : vector<256x512xf32> to vector<256x512xbf16>
    %c0_20 = arith.constant 0 : index
    %c0_21 = arith.constant 0 : index
    %41 = vector.load %arg9[%c0_20, %c0_21] : memref<256x256xbf16, #tpu.memory_space<vmem>>, vector<256x256xbf16>
    %cst_22 = arith.constant dense<0.000000e+00> : vector<256x512xf32>
    %42 = tpu.matmul %41, %40, %cst_22 {dimension_numbers = #tpu.dot_dimension_numbers<[1], [0], [0], [1], [0, 0, 1, 1], [], []>} : vector<256x256xbf16>, vector<256x512xbf16>, vector<256x512xf32> -> vector<256x512xf32>
    %c0_23 = arith.constant 0 : index
    %c0_24 = arith.constant 0 : index
    %43 = vector.load %arg10[%c0_23, %c0_24] : memref<256x1xf32, #tpu.memory_space<vmem>>, vector<256x1xf32>
    %44 = vector.broadcast %43 : vector<256x1xf32> to vector<256x512xf32>
    %45 = arith.addf %42, %44 : vector<256x512xf32>
    %cst_25 = arith.constant 0.000000e+00 : f32
    %46 = vector.broadcast %cst_25 : f32 to vector<256x512xf32>
    %47 = arith.maximumf %45, %46 : vector<256x512xf32>
    %48 = arith.truncf %47 : vector<256x512xf32> to vector<256x512xbf16>
    %c0_26 = arith.constant 0 : index
    %c0_27 = arith.constant 0 : index
    %49 = vector.load %arg11[%c0_26, %c0_27] : memref<32x256xbf16, #tpu.memory_space<vmem>>, vector<32x256xbf16>
    %cst_28 = arith.constant dense<0.000000e+00> : vector<32x512xf32>
    %50 = tpu.matmul %49, %48, %cst_28 {dimension_numbers = #tpu.dot_dimension_numbers<[1], [0], [0], [1], [0, 0, 1, 1], [], []>} : vector<32x256xbf16>, vector<256x512xbf16>, vector<32x512xf32> -> vector<32x512xf32>
    %c0_29 = arith.constant 0 : index
    %c0_30 = arith.constant 0 : index
    %51 = vector.load %arg12[%c0_29, %c0_30] : memref<32x1xf32, #tpu.memory_space<vmem>>, vector<32x1xf32>
    %52 = vector.broadcast %51 : vector<32x1xf32> to vector<32x512xf32>
    %53 = arith.addf %50, %52 : vector<32x512xf32>
    %c0_31 = arith.constant 0 : index
    %c0_32 = arith.constant 0 : index
    %c0_33 = arith.constant 0 : index
    %54 = vector.load %arg13[%c0_31, %c0_32, %c0_33] : memref<1x32x512xf32, #tpu.memory_space<vmem>>, vector<1x32x512xf32>
    %55 = vector.shape_cast %54 : vector<1x32x512xf32> to vector<32x512xf32>
    %56 = vector.shape_cast %53 : vector<32x512xf32> to vector<1x32x512xf32>
    tpu.vector_store %arg13[%c0_31, %c0_32, %c0_33], %56 {strides = array<i32>} : memref<1x32x512xf32, #tpu.memory_space<vmem>>, vector<1x32x512xf32>,
    return
  }
  func.func @transform_0(%arg0: i32, %arg1: i32) -> (i32, i32, i32) {
    %c0_i32 = arith.constant 0 : i32
    %c0_i32_0 = arith.constant 0 : i32
    return %arg0, %c0_i32, %arg1 : i32, i32, i32
  }
  func.func @transform_1(%arg0: i32, %arg1: i32) -> (i32, i32) {
    %c0_i32 = arith.constant 0 : i32
    %c0_i32_0 = arith.constant 0 : i32
    %c0_i32_1 = arith.constant 0 : i32
    return %c0_i32, %c0_i32_0 : i32, i32
  }
  func.func @transform_2(%arg0: i32, %arg1: i32) -> (i32, i32) {
    %c0_i32 = arith.constant 0 : i32
    %c0_i32_0 = arith.constant 0 : i32
    %c0_i32_1 = arith.constant 0 : i32
    return %c0_i32, %c0_i32_0 : i32, i32
  }
  func.func @transform_3(%arg0: i32, %arg1: i32) -> (i32, i32) {
    %c0_i32 = arith.constant 0 : i32
    %c0_i32_0 = arith.constant 0 : i32
    %c0_i32_1 = arith.constant 0 : i32
    return %c0_i32, %c0_i32_0 : i32, i32
  }
  func.func @transform_4(%arg0: i32, %arg1: i32) -> (i32, i32) {
    %c0_i32 = arith.constant 0 : i32
    %c0_i32_0 = arith.constant 0 : i32
    %c0_i32_1 = arith.constant 0 : i32
    return %c0_i32, %c0_i32_0 : i32, i32
  }
  func.func @transform_5(%arg0: i32, %arg1: i32) -> (i32, i32) {
    %c0_i32 = arith.constant 0 : i32
    %c0_i32_0 = arith.constant 0 : i32
    %c0_i32_1 = arith.constant 0 : i32
    return %c0_i32, %c0_i32_0 : i32, i32
  }
  func.func @transform_6(%arg0: i32, %arg1: i32) -> (i32, i32) {
    %c0_i32 = arith.constant 0 : i32
    %c0_i32_0 = arith.constant 0 : i32
    %c0_i32_1 = arith.constant 0 : i32
    return %c0_i32, %c0_i32_0 : i32, i32
  }
  func.func @transform_7(%arg0: i32, %arg1: i32) -> (i32, i32) {
    %c0_i32 = arith.constant 0 : i32
    %c0_i32_0 = arith.constant 0 : i32
    %c0_i32_1 = arith.constant 0 : i32
    return %c0_i32, %c0_i32_0 : i32, i32
  }
  func.func @transform_8(%arg0: i32, %arg1: i32) -> (i32, i32) {
    %c0_i32 = arith.constant 0 : i32
    %c0_i32_0 = arith.constant 0 : i32
    %c0_i32_1 = arith.constant 0 : i32
    return %c0_i32, %c0_i32_0 : i32, i32
  }
  func.func @transform_9(%arg0: i32, %arg1: i32) -> (i32, i32) {
    %c0_i32 = arith.constant 0 : i32
    %c0_i32_0 = arith.constant 0 : i32
    %c0_i32_1 = arith.constant 0 : i32
    return %c0_i32, %c0_i32_0 : i32, i32
  }
  func.func @transform_10(%arg0: i32, %arg1: i32) -> (i32, i32) {
    %c0_i32 = arith.constant 0 : i32
    %c0_i32_0 = arith.constant 0 : i32
    %c0_i32_1 = arith.constant 0 : i32
    return %c0_i32, %c0_i32_0 : i32, i32
  }
  func.func @transform_11(%arg0: i32, %arg1: i32) -> (i32, i32, i32) {
    %c0_i32 = arith.constant 0 : i32
    %c0_i32_0 = arith.constant 0 : i32
    return %arg0, %c0_i32, %arg1 : i32, i32, i32
  }
}

</mosaic_0001>

<llo_original>
// kernel: tpu_custom_call.1
$region0: #{tpu_custom_call.1}
  #allocation0 [shape = 'u32[]', space=smem, size = 0x4, offset = 0x4, fixed_abs, tag = 'smem constant byte address 0x4 - core index']
  #allocation1 [shape = 'u32[72,128]{1,0:T(1,128)}', space=vmem, size = 0x9000, scoped, tag = 'internal scratch']
  %s0 = inlined_call_operand.vmem [shape: f32[2,3,1024], index: 0, kind: input, shape index: {}]
  %s1 = inlined_call_operand.vmem [shape: f32[512,3], index: 1, kind: input, shape index: {}]
  %s2 = inlined_call_operand.vmem [shape: f32[512,1], index: 2, kind: input, shape index: {}]
  %s3 = inlined_call_operand.vmem [shape: bf16[256,512], index: 3, kind: input, shape index: {}]
  %s4 = inlined_call_operand.vmem [shape: f32[256,1], index: 4, kind: input, shape index: {}]
  %s5 = inlined_call_operand.vmem [shape: bf16[256,256], index: 5, kind: input, shape index: {}]
  %s6 = inlined_call_operand.vmem [shape: f32[256,1], index: 6, kind: input, shape index: {}]
  %s7 = inlined_call_operand.vmem [shape: bf16[256,256], index: 7, kind: input, shape index: {}]
  %s8 = inlined_call_operand.vmem [shape: f32[256,1], index: 8, kind: input, shape index: {}]
  %s9 = inlined_call_operand.vmem [shape: bf16[32,256], index: 9, kind: input, shape index: {}]
  %s10 = inlined_call_operand.vmem [shape: f32[32,1], index: 10, kind: input, shape index: {}]
  %s11 = inlined_call_operand.hbm [shape: f32[2,32,1024], index: 11, kind: output, shape index: {}]
  %s12 = sld [smem:[#allocation0]]
  $region77: #{tpu_custom_call.1} parent=0
    _
  %s14 = ssub.s32 1, %s12
  %s15 = scalar_select 0, %s14, %s12
  $region1: #{tpu_custom_call.1} parent=0
    #allocation2 [shape = 'u8[131072]{0}', space=vmem, size = 0x20000, scoped, tag = 'output window, operand 0']
    #allocation3 [shape = 's32[2]{0}', space=sflag, size = 0x8, scoped, tag = 'scoped memory for tpu_custom_call.1']
    %16 = vsyncpa [#allocation3], 0
    %s17 = scalar_lea.sflag [#allocation3], 1
    %18 = vsyncpa %s17, 0
    loop: start=0, step=1, limit=6
    $region2: #{tpu_custom_call.1} parent=1 // loop_pre_header
      _
    $region3: #{tpu_custom_call.1} parent=1 // loop_header
      %s20 = sphi 0, %s24
      %p21 = scmp.ge.s32.totalorder %s20, 6
      %s27 = sphi 0, %s39
      %s28 = sphi 0, %s35
      %s29 = sphi 0, %s27
      %s30 = sphi 0, %s28
      %s31 = sphi 0, %s29
      %s32 = sphi 0, %s30
      %s44 = sphi 0, %s46
      %s47 = sphi 0, %s44
      %s48 = sphi 0, %s47
      %s64 = sphi 0, %s48
      %s68 = sphi 0, %s68
      %s70 = sphi 0, %s68
      %s71 = sphi 0, %s70
      %s85 = sphi 0, %s71
      %s89 = sphi 0, %s89
      %s91 = sphi 0, %s89
      %s92 = sphi 0, %s91
      %s106 = sphi 0, %s92
      %s110 = sphi 0, %s110
      %s112 = sphi 0, %s110
      %s113 = sphi 0, %s112
      %s127 = sphi 0, %s113
      %s131 = sphi 0, %s131
      %s133 = sphi 0, %s131
      %s134 = sphi 0, %s133
      %s148 = sphi 0, %s134
      %s152 = sphi 0, %s152
      %s154 = sphi 0, %s152
      %s155 = sphi 0, %s154
      %s169 = sphi 0, %s155
      %s173 = sphi 0, %s173
      %s175 = sphi 0, %s173
      %s176 = sphi 0, %s175
      %s190 = sphi 0, %s176
      %s194 = sphi 0, %s194
      %s196 = sphi 0, %s194
      %s197 = sphi 0, %s196
      %s211 = sphi 0, %s197
      %s215 = sphi 0, %s215
      %s217 = sphi 0, %s215
      %s218 = sphi 0, %s217
      %s232 = sphi 0, %s218
      %s236 = sphi 0, %s236
      %s238 = sphi 0, %s236
      %s239 = sphi 0, %s238
      %s253 = sphi 0, %s239
      %s257 = sphi 0, %s257
      %s259 = sphi 0, %s257
      %s260 = sphi 0, %s259
      %s274 = sphi 0, %s260
      %s282 = sphi 0, %s284
      %s285 = sphi 0, %s282
      %s286 = sphi 0, %s285
      %s302 = sphi 0, %s286
    $region4: #{tpu_custom_call.1} parent=1 // loop_header_branch
      %23 = sbr.rel (%p21) target = $region8
    $region5: #{tpu_custom_call.1} parent=1 // loop_body
      %s25 = ssub.s32 %s20, 1
      %s26 = ssub.s32 %s20, 2
      %s33 = sadd.s32 1, %s28
      %p34 = scmp.ge.s32.totalorder %s33, 2
      %s35 = scalar_select %p34, 0, %s33
      %s36 = sadd.s32 1, %s27
      %s37 = scalar_select %p34, %s36, %s27
      %p38 = scmp.ge.s32.totalorder %s37, 2
      %s39 = scalar_select %p38, 0, %s37
      %s40 = ssub.s32 %s27, %s39
      %s41 = ssub.s32 %s28, %s35
      %s42 = sor.u32 %s40, %s41
      %p43 = scmp.eq.s32.totalorder %s42, 0
      %s45 = sadd.s32 %s44, 1
      %s46 = scalar_select %p43, %s44, %s45
      %p49 = pneg %p43
      %p50 = scmp.eq.s32.totalorder %s20, 3
      %p51 = por %p49, %p50
      %p52 = scmp.ne.s32.totalorder %s44, %s47
      %p53 = scmp.eq.s32.totalorder %s20, 0
      %p54 = por %p52, %p53
      %p55 = scmp.ne.s32.totalorder %s44, %s47
      %p56 = scmp.eq.s32.totalorder %s25, 3
      %p57 = por %p55, %p56
      %p58 = scmp.ne.s32.totalorder %s47, %s48
      %p59 = scmp.eq.s32.totalorder %s25, 0
      %p60 = por %p58, %p59
      %p61 = scmp.ne.s32.totalorder %s47, %s48
      %p62 = scmp.eq.s32.totalorder %s26, 3
      %p63 = por %p61, %p62
      %p65 = scmp.ne.s32.totalorder %s48, %s64
      %p66 = scmp.eq.s32.totalorder %s26, 0
      %p67 = por %p65, %p66
      %s69 = sadd.s32 %s68, 1
      %p72 = scmp.eq.s32.totalorder %s20, 3
      %p73 = scmp.ne.s32.totalorder %s68, %s70
      %p74 = scmp.eq.s32.totalorder %s20, 0
      %p75 = por %p73, %p74
      %p76 = scmp.ne.s32.totalorder %s68, %s70
      %p77 = scmp.eq.s32.totalorder %s25, 3
      %p78 = por %p76, %p77
      %p79 = scmp.ne.s32.totalorder %s70, %s71
      %p80 = scmp.eq.s32.totalorder %s25, 0
      %p81 = por %p79, %p80
      %p82 = scmp.ne.s32.totalorder %s70, %s71
      %p83 = scmp.eq.s32.totalorder %s26, 3
      %p84 = por %p82, %p83
      %p86 = scmp.ne.s32.totalorder %s71, %s85
      %p87 = scmp.eq.s32.totalorder %s26, 0
      %p88 = por %p86, %p87
      %s90 = sadd.s32 %s89, 1
      %p93 = scmp.eq.s32.totalorder %s20, 3
      %p94 = scmp.ne.s32.totalorder %s89, %s91
      %p95 = scmp.eq.s32.totalorder %s20, 0
      %p96 = por %p94, %p95
      %p97 = scmp.ne.s32.totalorder %s89, %s91
      %p98 = scmp.eq.s32.totalorder %s25, 3
      %p99 = por %p97, %p98
      %p100 = scmp.ne.s32.totalorder %s91, %s92
      %p101 = scmp.eq.s32.totalorder %s25, 0
      %p102 = por %p100, %p101
      %p103 = scmp.ne.s32.totalorder %s91, %s92
      %p104 = scmp.eq.s32.totalorder %s26, 3
      %p105 = por %p103, %p104
      %p107 = scmp.ne.s32.totalorder %s92, %s106
      %p108 = scmp.eq.s32.totalorder %s26, 0
      %p109 = por %p107, %p108
      %s111 = sadd.s32 %s110, 1
      %p114 = scmp.eq.s32.totalorder %s20, 3
      %p115 = scmp.ne.s32.totalorder %s110, %s112
      %p116 = scmp.eq.s32.totalorder %s20, 0
      %p117 = por %p115, %p116
      %p118 = scmp.ne.s32.totalorder %s110, %s112
      %p119 = scmp.eq.s32.totalorder %s25, 3
      %p120 = por %p118, %p119
      %p121 = scmp.ne.s32.totalorder %s112, %s113
      %p122 = scmp.eq.s32.totalorder %s25, 0
      %p123 = por %p121, %p122
      %p124 = scmp.ne.s32.totalorder %s112, %s113
      %p125 = scmp.eq.s32.totalorder %s26, 3
      %p126 = por %p124, %p125
      %p128 = scmp.ne.s32.totalorder %s113, %s127
      %p129 = scmp.eq.s32.totalorder %s26, 0
      %p130 = por %p128, %p129
      %s132 = sadd.s32 %s131, 1
      %p135 = scmp.eq.s32.totalorder %s20, 3
      %p136 = scmp.ne.s32.totalorder %s131, %s133
      %p137 = scmp.eq.s32.totalorder %s20, 0
      %p138 = por %p136, %p137
      %p139 = scmp.ne.s32.totalorder %s131, %s133
      %p140 = scmp.eq.s32.totalorder %s25, 3
      %p141 = por %p139, %p140
      %p142 = scmp.ne.s32.totalorder %s133, %s134
      %p143 = scmp.eq.s32.totalorder %s25, 0
      %p144 = por %p142, %p143
      %p145 = scmp.ne.s32.totalorder %s133, %s134
      %p146 = scmp.eq.s32.totalorder %s26, 3
      %p147 = por %p145, %p146
      %p149 = scmp.ne.s32.totalorder %s134, %s148
      %p150 = scmp.eq.s32.totalorder %s26, 0
      %p151 = por %p149, %p150
      %s153 = sadd.s32 %s152, 1
      %p156 = scmp.eq.s32.totalorder %s20, 3
      %p157 = scmp.ne.s32.totalorder %s152, %s154
      %p158 = scmp.eq.s32.totalorder %s20, 0
      %p159 = por %p157, %p158
      %p160 = scmp.ne.s32.totalorder %s152, %s154
      %p161 = scmp.eq.s32.totalorder %s25, 3
      %p162 = por %p160, %p161
      %p163 = scmp.ne.s32.totalorder %s154, %s155
      %p164 = scmp.eq.s32.totalorder %s25, 0
      %p165 = por %p163, %p164
      %p166 = scmp.ne.s32.totalorder %s154, %s155
      %p167 = scmp.eq.s32.totalorder %s26, 3
      %p168 = por %p166, %p167
      %p170 = scmp.ne.s32.totalorder %s155, %s169
      %p171 = scmp.eq.s32.totalorder %s26, 0
      %p172 = por %p170, %p171
      %s174 = sadd.s32 %s173, 1
      %p177 = scmp.eq.s32.totalorder %s20, 3
      %p178 = scmp.ne.s32.totalorder %s173, %s175
      %p179 = scmp.eq.s32.totalorder %s20, 0
      %p180 = por %p178, %p179
      %p181 = scmp.ne.s32.totalorder %s173, %s175
      %p182 = scmp.eq.s32.totalorder %s25, 3
      %p183 = por %p181, %p182
      %p184 = scmp.ne.s32.totalorder %s175, %s176
      %p185 = scmp.eq.s32.totalorder %s25, 0
      %p186 = por %p184, %p185
      %p187 = scmp.ne.s32.totalorder %s175, %s176
      %p188 = scmp.eq.s32.totalorder %s26, 3
      %p189 = por %p187, %p188
      %p191 = scmp.ne.s32.totalorder %s176, %s190
      %p192 = scmp.eq.s32.totalorder %s26, 0
      %p193 = por %p191, %p192
      %s195 = sadd.s32 %s194, 1
      %p198 = scmp.eq.s32.totalorder %s20, 3
      %p199 = scmp.ne.s32.totalorder %s194, %s196
      %p200 = scmp.eq.s32.totalorder %s20, 0
      %p201 = por %p199, %p200
      %p202 = scmp.ne.s32.totalorder %s194, %s196
      %p203 = scmp.eq.s32.totalorder %s25, 3
      %p204 = por %p202, %p203
      %p205 = scmp.ne.s32.totalorder %s196, %s197
      %p206 = scmp.eq.s32.totalorder %s25, 0
      %p207 = por %p205, %p206
      %p208 = scmp.ne.s32.totalorder %s196, %s197
      %p209 = scmp.eq.s32.totalorder %s26, 3
      %p210 = por %p208, %p209
      %p212 = scmp.ne.s32.totalorder %s197, %s211
      %p213 = scmp.eq.s32.totalorder %s26, 0
      %p214 = por %p212, %p213
      %s216 = sadd.s32 %s215, 1
      %p219 = scmp.eq.s32.totalorder %s20, 3
      %p220 = scmp.ne.s32.totalorder %s215, %s217
      %p221 = scmp.eq.s32.totalorder %s20, 0
      %p222 = por %p220, %p221
      %p223 = scmp.ne.s32.totalorder %s215, %s217
      %p224 = scmp.eq.s32.totalorder %s25, 3
      %p225 = por %p223, %p224
      %p226 = scmp.ne.s32.totalorder %s217, %s218
      %p227 = scmp.eq.s32.totalorder %s25, 0
      %p228 = por %p226, %p227
      %p229 = scmp.ne.s32.totalorder %s217, %s218
      %p230 = scmp.eq.s32.totalorder %s26, 3
      %p231 = por %p229, %p230
      %p233 = scmp.ne.s32.totalorder %s218, %s232
      %p234 = scmp.eq.s32.totalorder %s26, 0
      %p235 = por %p233, %p234
      %s237 = sadd.s32 %s236, 1
      %p240 = scmp.eq.s32.totalorder %s20, 3
      %p241 = scmp.ne.s32.totalorder %s236, %s238
      %p242 = scmp.eq.s32.totalorder %s20, 0
      %p243 = por %p241, %p242
      %p244 = scmp.ne.s32.totalorder %s236, %s238
      %p245 = scmp.eq.s32.totalorder %s25, 3
      %p246 = por %p244, %p245
      %p247 = scmp.ne.s32.totalorder %s238, %s239
      %p248 = scmp.eq.s32.totalorder %s25, 0
      %p249 = por %p247, %p248
      %p250 = scmp.ne.s32.totalorder %s238, %s239
      %p251 = scmp.eq.s32.totalorder %s26, 3
      %p252 = por %p250, %p251
      %p254 = scmp.ne.s32.totalorder %s239, %s253
      %p255 = scmp.eq.s32.totalorder %s26, 0
      %p256 = por %p254, %p255
      %s258 = sadd.s32 %s257, 1
      %p261 = scmp.eq.s32.totalorder %s20, 3
      %p262 = scmp.ne.s32.totalorder %s257, %s259
      %p263 = scmp.eq.s32.totalorder %s20, 0
      %p264 = por %p262, %p263
      %p265 = scmp.ne.s32.totalorder %s257, %s259
      %p266 = scmp.eq.s32.totalorder %s25, 3
      %p267 = por %p265, %p266
      %p268 = scmp.ne.s32.totalorder %s259, %s260
      %p269 = scmp.eq.s32.totalorder %s25, 0
      %p270 = por %p268, %p269
      %p271 = scmp.ne.s32.totalorder %s259, %s260
      %p272 = scmp.eq.s32.totalorder %s26, 3
      %p273 = por %p271, %p272
      %p275 = scmp.ne.s32.totalorder %s260, %s274
      %p276 = scmp.eq.s32.totalorder %s26, 0
      %p277 = por %p275, %p276
      %s278 = ssub.s32 %s27, %s39
      %s279 = ssub.s32 %s28, %s35
      %s280 = sor.u32 %s278, %s279
      %p281 = scmp.eq.s32.totalorder %s280, 0
      %s283 = sadd.s32 %s282, 1
      %s284 = scalar_select %p281, %s282, %s283
      %p287 = pneg %p281
      %p288 = scmp.eq.s32.totalorder %s20, 3
      %p289 = por %p287, %p288
      %p290 = scmp.ne.s32.totalorder %s282, %s285
      %p291 = scmp.eq.s32.totalorder %s20, 0
      %p292 = por %p290, %p291
      %p293 = scmp.ne.s32.totalorder %s282, %s285
      %p294 = scmp.eq.s32.totalorder %s25, 3
      %p295 = por %p293, %p294
      %p296 = scmp.ne.s32.totalorder %s285, %s286
      %p297 = scmp.eq.s32.totalorder %s25, 0
      %p298 = por %p296, %p297
      %p299 = scmp.ne.s32.totalorder %s285, %s286
      %p300 = scmp.eq.s32.totalorder %s26, 3
      %p301 = por %p299, %p300
      %p303 = scmp.ne.s32.totalorder %s286, %s302
      %p304 = scmp.eq.s32.totalorder %s26, 0
      %p305 = por %p303, %p304
      %p306 = scmp.le.s32.totalorder 1, %s20
      %p307 = scmp.lt.s32.totalorder %s20, 5
      %p308 = pnand %p306, %p307
      %p309 = pneg %p308
      // Predicated region
      $region9: #{tpu_custom_call.1} parent=5 // pred_check
        _
      $region10: #{tpu_custom_call.1} parent=5 // pred_check_branch
        %311 = sbr.rel (%p308) target = $region12
      $region11: #{tpu_custom_call.1} parent=5 // pred_region
        %s312 = ssub.s32 %s20, 1
        // Predicated region
        $region13: #{tpu_custom_call.1} parent=11 // pred_check
          %p313 = pneg %p81
        $region14: #{tpu_custom_call.1} parent=11 // pred_check_branch
          %315 = sbr.rel (%p313) target = $region16
        $region15: #{tpu_custom_call.1} parent=11 // pred_region
          _
        $region16: #{tpu_custom_call.1} parent=11 // pred_fallthru
          _
        // Predicated region
        $region17: #{tpu_custom_call.1} parent=11 // pred_check
          %p316 = pneg %p102
        $region18: #{tpu_custom_call.1} parent=11 // pred_check_branch
          %318 = sbr.rel (%p316) target = $region20
        $region19: #{tpu_custom_call.1} parent=11 // pred_region
          _
        $region20: #{tpu_custom_call.1} parent=11 // pred_fallthru
          _
        // Predicated region
        $region21: #{tpu_custom_call.1} parent=11 // pred_check
          %p319 = pneg %p123
        $region22: #{tpu_custom_call.1} parent=11 // pred_check_branch
          %321 = sbr.rel (%p319) target = $region24
        $region23: #{tpu_custom_call.1} parent=11 // pred_region
          _
        $region24: #{tpu_custom_call.1} parent=11 // pred_fallthru
          _
        // Predicated region
        $region25: #{tpu_custom_call.1} parent=11 // pred_check
          %p322 = pneg %p144
        $region26: #{tpu_custom_call.1} parent=11 // pred_check_branch
          %324 = sbr.rel (%p322) target = $region28
        $region27: #{tpu_custom_call.1} parent=11 // pred_region
          _
        $region28: #{tpu_custom_call.1} parent=11 // pred_fallthru
          _
        // Predicated region
        $region29: #{tpu_custom_call.1} parent=11 // pred_check
          %p325 = pneg %p165
        $region30: #{tpu_custom_call.1} parent=11 // pred_check_branch
          %327 = sbr.rel (%p325) target = $region32
        $region31: #{tpu_custom_call.1} parent=11 // pred_region
          _
        $region32: #{tpu_custom_call.1} parent=11 // pred_fallthru
          _
        // Predicated region
        $region33: #{tpu_custom_call.1} parent=11 // pred_check
          %p328 = pneg %p186
        $region34: #{tpu_custom_call.1} parent=11 // pred_check_branch
          %330 = sbr.rel (%p328) target = $region36
        $region35: #{tpu_custom_call.1} parent=11 // pred_region
          _
        $region36: #{tpu_custom_call.1} parent=11 // pred_fallthru
          _
        // Predicated region
        $region37: #{tpu_custom_call.1} parent=11 // pred_check
          %p331 = pneg %p207
        $region38: #{tpu_custom_call.1} parent=11 // pred_check_branch
          %333 = sbr.rel (%p331) target = $region40
        $region39: #{tpu_custom_call.1} parent=11 // pred_region
          _
        $region40: #{tpu_custom_call.1} parent=11 // pred_fallthru
          _
        // Predicated region
        $region41: #{tpu_custom_call.1} parent=11 // pred_check
          %p334 = pneg %p228
        $region42: #{tpu_custom_call.1} parent=11 // pred_check_branch
          %336 = sbr.rel (%p334) target = $region44
        $region43: #{tpu_custom_call.1} parent=11 // pred_region
          _
        $region44: #{tpu_custom_call.1} parent=11 // pred_fallthru
          _
        // Predicated region
        $region45: #{tpu_custom_call.1} parent=11 // pred_check
          %p337 = pneg %p249
        $region46: #{tpu_custom_call.1} parent=11 // pred_check_branch
          %339 = sbr.rel (%p337) target = $region48
        $region47: #{tpu_custom_call.1} parent=11 // pred_region
          _
        $region48: #{tpu_custom_call.1} parent=11 // pred_fallthru
          _
        // Predicated region
        $region49: #{tpu_custom_call.1} parent=11 // pred_check
          %p340 = pneg %p270
        $region50: #{tpu_custom_call.1} parent=11 // pred_check_branch
          %342 = sbr.rel (%p340) target = $region52
        $region51: #{tpu_custom_call.1} parent=11 // pred_region
          _
        $region52: #{tpu_custom_call.1} parent=11 // pred_fallthru
          _
      $region12: #{tpu_custom_call.1} parent=5 // pred_fallthru
        _
      %p343 = scmp.lt.s32.totalorder %s20, 4
      // Predicated region
      $region53: #{tpu_custom_call.1} parent=5 // pred_check
        %p344 = pneg %p343
      $region54: #{tpu_custom_call.1} parent=5 // pred_check_branch
        %346 = sbr.rel (%p344) target = $region56
      $region55: #{tpu_custom_call.1} parent=5 // pred_region
        // Predicated region
        $region57: #{tpu_custom_call.1} parent=55 // pred_check
          %p347 = pneg %p54
        $region58: #{tpu_custom_call.1} parent=55 // pred_check_branch
          %349 = sbr.rel (%p347) target = $region60
        $region59: #{tpu_custom_call.1} parent=55 // pred_region
          %s350 = smul.u32 4, %s28
          %p351 = scmp.lt.s32.totalorder %s27, 1
          %s352 = scalar_select %p351, %s27, 1
          %p353 = scmp.lt.s32.totalorder %s350, 7
          %s354 = scalar_select %p353, %s350, 7
          %s355 = smul.addr %s352, 8
          %s356 = sadd.s32 %s354, %s355
          %s357 = smul.addr %s356, 4
          %s358 = scalar_lea.vmem %s0, %s357
          %s359 = smul.u32 4, %s28
        $region60: #{tpu_custom_call.1} parent=55 // pred_fallthru
          _
      $region56: #{tpu_custom_call.1} parent=5 // pred_fallthru
        _
      %p360 = scmp.le.s32.totalorder 1, %s20
      %p361 = scmp.lt.s32.totalorder %s20, 5
      %p362 = pnand %p360, %p361
      %p363 = pneg %p362
      // Predicated region
      $region61: #{tpu_custom_call.1} parent=5 // pred_check
        _
      $region62: #{tpu_custom_call.1} parent=5 // pred_check_branch
        %365 = sbr.rel (%p362) target = $region64
      $region63: #{tpu_custom_call.1} parent=5 // pred_region
        %s366 = ssub.s32 %s20, 1
        %s367 = smul.u32 4, %s30
        %p368 = scmp.lt.s32.totalorder %s29, 1
        %s369 = scalar_select %p368, %s29, 1
        %p370 = scmp.lt.s32.totalorder %s367, 7
        %s371 = scalar_select %p370, %s367, 7
        %s372 = smul.addr %s369, 8
        %s373 = sadd.s32 %s371, %s372
        %s374 = smul.addr %s373, 4
        %s375 = scalar_lea.vmem %s0, %s374
        %p376 = pneg %p60
        %p377 = pneg %p57
        %p378 = pneg %p81
        %p379 = pneg %p78
        %p380 = pneg %p102
        %p381 = pneg %p99
        %p382 = pneg %p123
        %p383 = pneg %p120
        %p384 = pneg %p144
        %p385 = pneg %p141
        %p386 = pneg %p165
        %p387 = pneg %p162
        %p388 = pneg %p186
        %p389 = pneg %p183
        %p390 = pneg %p207
        %p391 = pneg %p204
        %p392 = pneg %p228
        %p393 = pneg %p225
        %p394 = pneg %p249
        %p395 = pneg %p246
        %p396 = pneg %p270
        %p397 = pneg %p267
        %p398 = pneg %p298
        %p399 = pneg %p295
        %s400 = sand.u32 %s285, 1
        %s401 = scalar_lea.sflag [#allocation3], %s400
        %s402 = sand.u32 %s285, 1
        %s403 = smul.addr %s402, 128
        %s404 = scalar_lea.vmem [#allocation2], %s403
        %s405 = smul.u32 4, %s30
        %p406 = scmp.lt.s32.totalorder %s29, 1
        %s407 = scalar_select %p406, %s29, 1
        %p408 = scmp.lt.s32.totalorder %s405, 7
        %s409 = scalar_select %p408, %s405, 7
        %s410 = smul.addr %s407, 8
        %s411 = sadd.s32 %s409, %s410
        %s412 = smul.addr %s411, 4
        %s413 = scalar_lea.vmem %s0, %s412
        %s414 = smul.u32 4, %s30
        %s415 = smul.u32 4, %s30
        %v416 = vld [vmem:[%s413] sm:$0x77]
        %v417 = vld [vmem:[%s413 + $0x8] sm:$0x77]
        %v418 = vld [vmem:[%s2] sm:$0xff]
        %v419 = vld [vmem:[%s2 + $0x8] sm:$0xff]
        %v420 = vld [vmem:[%s2 + $0x10] sm:$0xff]
        %v421 = vld [vmem:[%s2 + $0x18] sm:$0xff]
        %v422 = vld [vmem:[%s2 + $0x20] sm:$0xff]
        %v423 = vld [vmem:[%s2 + $0x28] sm:$0xff]
        %v424 = vld [vmem:[%s2 + $0x30] sm:$0xff]
        %v425 = vld [vmem:[%s2 + $0x38] sm:$0xff]
        %v426 = vld [vmem:[%s2 + $0x40] sm:$0xff]
        %v427 = vld [vmem:[%s2 + $0x48] sm:$0xff]
        %v428 = vld [vmem:[%s2 + $0x50] sm:$0xff]
        %v429 = vld [vmem:[%s2 + $0x58] sm:$0xff]
        %v430 = vld [vmem:[%s2 + $0x60] sm:$0xff]
        %v431 = vld [vmem:[%s2 + $0x68] sm:$0xff]
        %v432 = vld [vmem:[%s2 + $0x70] sm:$0xff]
        %v433 = vld [vmem:[%s2 + $0x78] sm:$0xff]
        %v434 = vld [vmem:[%s2 + $0x80] sm:$0xff]
        %v435 = vld [vmem:[%s2 + $0x88] sm:$0xff]
        %v436 = vld [vmem:[%s2 + $0x90] sm:$0xff]
        %v437 = vld [vmem:[%s2 + $0x98] sm:$0xff]
        %v438 = vld [vmem:[%s2 + $0xa0] sm:$0xff]
        %v439 = vld [vmem:[%s2 + $0xa8] sm:$0xff]
        %v440 = vld [vmem:[%s2 + $0xb0] sm:$0xff]
        %v441 = vld [vmem:[%s2 + $0xb8] sm:$0xff]
        %v442 = vld [vmem:[%s2 + $0xc0] sm:$0xff]
        %v443 = vld [vmem:[%s2 + $0xc8] sm:$0xff]
        %v444 = vld [vmem:[%s2 + $0xd0] sm:$0xff]
        %v445 = vld [vmem:[%s2 + $0xd8] sm:$0xff]
        %v446 = vld [vmem:[%s2 + $0xe0] sm:$0xff]
        %v447 = vld [vmem:[%s2 + $0xe8] sm:$0xff]
        %v448 = vld [vmem:[%s2 + $0xf0] sm:$0xff]
        %v449 = vld [vmem:[%s2 + $0xf8] sm:$0xff]
        %v450 = vld [vmem:[%s2 + $0x100] sm:$0xff]
        %v451 = vld [vmem:[%s2 + $0x108] sm:$0xff]
        %v452 = vld [vmem:[%s2 + $0x110] sm:$0xff]
        %v453 = vld [vmem:[%s2 + $0x118] sm:$0xff]
        %v454 = vld [vmem:[%s2 + $0x120] sm:$0xff]
        %v455 = vld [vmem:[%s2 + $0x128] sm:$0xff]
        %v456 = vld [vmem:[%s2 + $0x130] sm:$0xff]
        %v457 = vld [vmem:[%s2 + $0x138] sm:$0xff]
        %v458 = vld [vmem:[%s2 + $0x140] sm:$0xff]
        %v459 = vld [vmem:[%s2 + $0x148] sm:$0xff]
        %v460 = vld [vmem:[%s2 + $0x150] sm:$0xff]
        %v461 = vld [vmem:[%s2 + $0x158] sm:$0xff]
        %v462 = vld [vmem:[%s2 + $0x160] sm:$0xff]
        %v463 = vld [vmem:[%s2 + $0x168] sm:$0xff]
        %v464 = vld [vmem:[%s2 + $0x170] sm:$0xff]
        %v465 = vld [vmem:[%s2 + $0x178] sm:$0xff]
        %v466 = vld [vmem:[%s2 + $0x180] sm:$0xff]
        %v467 = vld [vmem:[%s2 + $0x188] sm:$0xff]
        %v468 = vld [vmem:[%s2 + $0x190] sm:$0xff]
        %v469 = vld [vmem:[%s2 + $0x198] sm:$0xff]
        %v470 = vld [vmem:[%s2 + $0x1a0] sm:$0xff]
        %v471 = vld [vmem:[%s2 + $0x1a8] sm:$0xff]
        %v472 = vld [vmem:[%s2 + $0x1b0] sm:$0xff]
        %v473 = vld [vmem:[%s2 + $0x1b8] sm:$0xff]
        %v474 = vld [vmem:[%s2 + $0x1c0] sm:$0xff]
        %v475 = vld [vmem:[%s2 + $0x1c8] sm:$0xff]
        %v476 = vld [vmem:[%s2 + $0x1d0] sm:$0xff]
        %v477 = vld [vmem:[%s2 + $0x1d8] sm:$0xff]
        %v478 = vld [vmem:[%s2 + $0x1e0] sm:$0xff]
        %v479 = vld [vmem:[%s2 + $0x1e8] sm:$0xff]
        %v480 = vld [vmem:[%s2 + $0x1f0] sm:$0xff]
        %v481 = vld [vmem:[%s2 + $0x1f8] sm:$0xff]
        %v482 = vld [vmem:[%s1] sm:$0xff]
        %v483 = vld [vmem:[%s1 + $0x8] sm:$0xff]
        %v484 = vld [vmem:[%s1 + $0x10] sm:$0xff]
        %v485 = vld [vmem:[%s1 + $0x18] sm:$0xff]
        %v486 = vld [vmem:[%s1 + $0x20] sm:$0xff]
        %v487 = vld [vmem:[%s1 + $0x28] sm:$0xff]
        %v488 = vld [vmem:[%s1 + $0x30] sm:$0xff]
        %v489 = vld [vmem:[%s1 + $0x38] sm:$0xff]
        %v490 = vld [vmem:[%s1 + $0x40] sm:$0xff]
        %v491 = vld [vmem:[%s1 + $0x48] sm:$0xff]
        %v492 = vld [vmem:[%s1 + $0x50] sm:$0xff]
        %v493 = vld [vmem:[%s1 + $0x58] sm:$0xff]
        %v494 = vld [vmem:[%s1 + $0x60] sm:$0xff]
        %v495 = vld [vmem:[%s1 + $0x68] sm:$0xff]
        %v496 = vld [vmem:[%s1 + $0x70] sm:$0xff]
        %v497 = vld [vmem:[%s1 + $0x78] sm:$0xff]
        %v498 = vld [vmem:[%s1 + $0x80] sm:$0xff]
        %v499 = vld [vmem:[%s1 + $0x88] sm:$0xff]
        %v500 = vld [vmem:[%s1 + $0x90] sm:$0xff]
        %v501 = vld [vmem:[%s1 + $0x98] sm:$0xff]
        %v502 = vld [vmem:[%s1 + $0xa0] sm:$0xff]
        %v503 = vld [vmem:[%s1 + $0xa8] sm:$0xff]
        %v504 = vld [vmem:[%s1 + $0xb0] sm:$0xff]
        %v505 = vld [vmem:[%s1 + $0xb8] sm:$0xff]
        %v506 = vld [vmem:[%s1 + $0xc0] sm:$0xff]
        %v507 = vld [vmem:[%s1 + $0xc8] sm:$0xff]
        %v508 = vld [vmem:[%s1 + $0xd0] sm:$0xff]
        %v509 = vld [vmem:[%s1 + $0xd8] sm:$0xff]
        %v510 = vld [vmem:[%s1 + $0xe0] sm:$0xff]
        %v511 = vld [vmem:[%s1 + $0xe8] sm:$0xff]
        %v512 = vld [vmem:[%s1 + $0xf0] sm:$0xff]
        %v513 = vld [vmem:[%s1 + $0xf8] sm:$0xff]
        %v514 = vld [vmem:[%s1 + $0x100] sm:$0xff]
        %v515 = vld [vmem:[%s1 + $0x108] sm:$0xff]
        %v516 = vld [vmem:[%s1 + $0x110] sm:$0xff]
        %v517 = vld [vmem:[%s1 + $0x118] sm:$0xff]
        %v518 = vld [vmem:[%s1 + $0x120] sm:$0xff]
        %v519 = vld [vmem:[%s1 + $0x128] sm:$0xff]
        %v520 = vld [vmem:[%s1 + $0x130] sm:$0xff]
        %v521 = vld [vmem:[%s1 + $0x138] sm:$0xff]
        %v522 = vld [vmem:[%s1 + $0x140] sm:$0xff]
        %v523 = vld [vmem:[%s1 + $0x148] sm:$0xff]
        %v524 = vld [vmem:[%s1 + $0x150] sm:$0xff]
        %v525 = vld [vmem:[%s1 + $0x158] sm:$0xff]
        %v526 = vld [vmem:[%s1 + $0x160] sm:$0xff]
        %v527 = vld [vmem:[%s1 + $0x168] sm:$0xff]
        %v528 = vld [vmem:[%s1 + $0x170] sm:$0xff]
        %v529 = vld [vmem:[%s1 + $0x178] sm:$0xff]
        %v530 = vld [vmem:[%s1 + $0x180] sm:$0xff]
        %v531 = vld [vmem:[%s1 + $0x188] sm:$0xff]
        %v532 = vld [vmem:[%s1 + $0x190] sm:$0xff]
        %v533 = vld [vmem:[%s1 + $0x198] sm:$0xff]
        %v534 = vld [vmem:[%s1 + $0x1a0] sm:$0xff]
        %v535 = vld [vmem:[%s1 + $0x1a8] sm:$0xff]
        %v536 = vld [vmem:[%s1 + $0x1b0] sm:$0xff]
        %v537 = vld [vmem:[%s1 + $0x1b8] sm:$0xff]
        %v538 = vld [vmem:[%s1 + $0x1c0] sm:$0xff]
        %v539 = vld [vmem:[%s1 + $0x1c8] sm:$0xff]
        %v540 = vld [vmem:[%s1 + $0x1d0] sm:$0xff]
        %v541 = vld [vmem:[%s1 + $0x1d8] sm:$0xff]
        %v542 = vld [vmem:[%s1 + $0x1e0] sm:$0xff]
        %v543 = vld [vmem:[%s1 + $0x1e8] sm:$0xff]
        %v544 = vld [vmem:[%s1 + $0x1f0] sm:$0xff]
        %v545 = vld [vmem:[%s1 + $0x1f8] sm:$0xff]
        %547 = vset.pattern.permute.xlu0 0
        %548 = vperm.xlu0 %547, %v482
        %v549 = vpop.permute.xlu0 %548
        %552 = vset.pattern.permute.xlu0 0
        %553 = vperm.xlu0 %552, %v483
        %v554 = vpop.permute.xlu0 %553
        %557 = vset.pattern.permute.xlu0 0
        %558 = vperm.xlu0 %557, %v484
        %v559 = vpop.permute.xlu0 %558
        %562 = vset.pattern.permute.xlu0 0
        %563 = vperm.xlu0 %562, %v485
        %v564 = vpop.permute.xlu0 %563
        %567 = vset.pattern.permute.xlu0 0
        %568 = vperm.xlu0 %567, %v486
        %v569 = vpop.permute.xlu0 %568
        %572 = vset.pattern.permute.xlu0 0
        %573 = vperm.xlu0 %572, %v487
        %v574 = vpop.permute.xlu0 %573
        %577 = vset.pattern.permute.xlu0 0
        %578 = vperm.xlu0 %577, %v488
        %v579 = vpop.permute.xlu0 %578
        %582 = vset.pattern.permute.xlu0 0
        %583 = vperm.xlu0 %582, %v489
        %v584 = vpop.permute.xlu0 %583
        %587 = vset.pattern.permute.xlu0 0
        %588 = vperm.xlu0 %587, %v490
        %v589 = vpop.permute.xlu0 %588
        %592 = vset.pattern.permute.xlu0 0
        %593 = vperm.xlu0 %592, %v491
        %v594 = vpop.permute.xlu0 %593
        %597 = vset.pattern.permute.xlu0 0
        %598 = vperm.xlu0 %597, %v492
        %v599 = vpop.permute.xlu0 %598
        %602 = vset.pattern.permute.xlu0 0
        %603 = vperm.xlu0 %602, %v493
        %v604 = vpop.permute.xlu0 %603
        %607 = vset.pattern.permute.xlu0 0
        %608 = vperm.xlu0 %607, %v494
        %v609 = vpop.permute.xlu0 %608
        %612 = vset.pattern.permute.xlu0 0
        %613 = vperm.xlu0 %612, %v495
        %v614 = vpop.permute.xlu0 %613
        %617 = vset.pattern.permute.xlu0 0
        %618 = vperm.xlu0 %617, %v496
        %v619 = vpop.permute.xlu0 %618
        %622 = vset.pattern.permute.xlu0 0
        %623 = vperm.xlu0 %622, %v497
        %v624 = vpop.permute.xlu0 %623
        %627 = vset.pattern.permute.xlu0 0
        %628 = vperm.xlu0 %627, %v498
        %v629 = vpop.permute.xlu0 %628
        %632 = vset.pattern.permute.xlu0 0
        %633 = vperm.xlu0 %632, %v499
        %v634 = vpop.permute.xlu0 %633
        %637 = vset.pattern.permute.xlu0 0
        %638 = vperm.xlu0 %637, %v500
        %v639 = vpop.permute.xlu0 %638
        %642 = vset.pattern.permute.xlu0 0
        %643 = vperm.xlu0 %642, %v501
        %v644 = vpop.permute.xlu0 %643
        %647 = vset.pattern.permute.xlu0 0
        %648 = vperm.xlu0 %647, %v502
        %v649 = vpop.permute.xlu0 %648
        %652 = vset.pattern.permute.xlu0 0
        %653 = vperm.xlu0 %652, %v503
        %v654 = vpop.permute.xlu0 %653
        %657 = vset.pattern.permute.xlu0 0
        %658 = vperm.xlu0 %657, %v504
        %v659 = vpop.permute.xlu0 %658
        %662 = vset.pattern.permute.xlu0 0
        %663 = vperm.xlu0 %662, %v505
        %v664 = vpop.permute.xlu0 %663
        %667 = vset.pattern.permute.xlu0 0
        %668 = vperm.xlu0 %667, %v506
        %v669 = vpop.permute.xlu0 %668
        %672 = vset.pattern.permute.xlu0 0
        %673 = vperm.xlu0 %672, %v507
        %v674 = vpop.permute.xlu0 %673
        %677 = vset.pattern.permute.xlu0 0
        %678 = vperm.xlu0 %677, %v508
        %v679 = vpop.permute.xlu0 %678
        %682 = vset.pattern.permute.xlu0 0
        %683 = vperm.xlu0 %682, %v509
        %v684 = vpop.permute.xlu0 %683
        %687 = vset.pattern.permute.xlu0 0
        %688 = vperm.xlu0 %687, %v510
        %v689 = vpop.permute.xlu0 %688
        %692 = vset.pattern.permute.xlu0 0
        %693 = vperm.xlu0 %692, %v511
        %v694 = vpop.permute.xlu0 %693
        %697 = vset.pattern.permute.xlu0 0
        %698 = vperm.xlu0 %697, %v512
        %v699 = vpop.permute.xlu0 %698
        %702 = vset.pattern.permute.xlu0 0
        %703 = vperm.xlu0 %702, %v513
        %v704 = vpop.permute.xlu0 %703
        %707 = vset.pattern.permute.xlu0 0
        %708 = vperm.xlu0 %707, %v514
        %v709 = vpop.permute.xlu0 %708
        %712 = vset.pattern.permute.xlu0 0
        %713 = vperm.xlu0 %712, %v515
        %v714 = vpop.permute.xlu0 %713
        %717 = vset.pattern.permute.xlu0 0
        %718 = vperm.xlu0 %717, %v516
        %v719 = vpop.permute.xlu0 %718
        %722 = vset.pattern.permute.xlu0 0
        %723 = vperm.xlu0 %722, %v517
        %v724 = vpop.permute.xlu0 %723
        %727 = vset.pattern.permute.xlu0 0
        %728 = vperm.xlu0 %727, %v518
        %v729 = vpop.permute.xlu0 %728
        %732 = vset.pattern.permute.xlu0 0
        %733 = vperm.xlu0 %732, %v519
        %v734 = vpop.permute.xlu0 %733
        %737 = vset.pattern.permute.xlu0 0
        %738 = vperm.xlu0 %737, %v520
        %v739 = vpop.permute.xlu0 %738
        %742 = vset.pattern.permute.xlu0 0
        %743 = vperm.xlu0 %742, %v521
        %v744 = vpop.permute.xlu0 %743
        %747 = vset.pattern.permute.xlu0 0
        %748 = vperm.xlu0 %747, %v522
        %v749 = vpop.permute.xlu0 %748
        %752 = vset.pattern.permute.xlu0 0
        %753 = vperm.xlu0 %752, %v523
        %v754 = vpop.permute.xlu0 %753
        %757 = vset.pattern.permute.xlu0 0
        %758 = vperm.xlu0 %757, %v524
        %v759 = vpop.permute.xlu0 %758
        %762 = vset.pattern.permute.xlu0 0
        %763 = vperm.xlu0 %762, %v525
        %v764 = vpop.permute.xlu0 %763
        %767 = vset.pattern.permute.xlu0 0
        %768 = vperm.xlu0 %767, %v526
        %v769 = vpop.permute.xlu0 %768
        %772 = vset.pattern.permute.xlu0 0
        %773 = vperm.xlu0 %772, %v527
        %v774 = vpop.permute.xlu0 %773
        %777 = vset.pattern.permute.xlu0 0
        %778 = vperm.xlu0 %777, %v528
        %v779 = vpop.permute.xlu0 %778
        %782 = vset.pattern.permute.xlu0 0
        %783 = vperm.xlu0 %782, %v529
        %v784 = vpop.permute.xlu0 %783
        %787 = vset.pattern.permute.xlu0 0
        %788 = vperm.xlu0 %787, %v530
        %v789 = vpop.permute.xlu0 %788
        %792 = vset.pattern.permute.xlu0 0
        %793 = vperm.xlu0 %792, %v531
        %v794 = vpop.permute.xlu0 %793
        %797 = vset.pattern.permute.xlu0 0
        %798 = vperm.xlu0 %797, %v532
        %v799 = vpop.permute.xlu0 %798
        %802 = vset.pattern.permute.xlu0 0
        %803 = vperm.xlu0 %802, %v533
        %v804 = vpop.permute.xlu0 %803
        %807 = vset.pattern.permute.xlu0 0
        %808 = vperm.xlu0 %807, %v534
        %v809 = vpop.permute.xlu0 %808
        %812 = vset.pattern.permute.xlu0 0
        %813 = vperm.xlu0 %812, %v535
        %v814 = vpop.permute.xlu0 %813
        %817 = vset.pattern.permute.xlu0 0
        %818 = vperm.xlu0 %817, %v536
        %v819 = vpop.permute.xlu0 %818
        %822 = vset.pattern.permute.xlu0 0
        %823 = vperm.xlu0 %822, %v537
        %v824 = vpop.permute.xlu0 %823
        %827 = vset.pattern.permute.xlu0 0
        %828 = vperm.xlu0 %827, %v538
        %v829 = vpop.permute.xlu0 %828
        %832 = vset.pattern.permute.xlu0 0
        %833 = vperm.xlu0 %832, %v539
        %v834 = vpop.permute.xlu0 %833
        %837 = vset.pattern.permute.xlu0 0
        %838 = vperm.xlu0 %837, %v540
        %v839 = vpop.permute.xlu0 %838
        %842 = vset.pattern.permute.xlu0 0
        %843 = vperm.xlu0 %842, %v541
        %v844 = vpop.permute.xlu0 %843
        %847 = vset.pattern.permute.xlu0 0
        %848 = vperm.xlu0 %847, %v542
        %v849 = vpop.permute.xlu0 %848
        %852 = vset.pattern.permute.xlu0 0
        %853 = vperm.xlu0 %852, %v543
        %v854 = vpop.permute.xlu0 %853
        %857 = vset.pattern.permute.xlu0 0
        %858 = vperm.xlu0 %857, %v544
        %v859 = vpop.permute.xlu0 %858
        %862 = vset.pattern.permute.xlu0 0
        %863 = vperm.xlu0 %862, %v545
        %v864 = vpop.permute.xlu0 %863
        %v868 = vperm.slane %v416, 0
        %v869 = vperm.slane %v416, 4
        %v870 = vperm.slane %v417, 0
        %v871 = vperm.slane %v417, 4
        %v876 = vperm.slane %v868, 0
        %v877 = vperm.slane %v869, 0
        %v878 = vperm.slane %v870, 0
        %v879 = vperm.slane %v871, 0
        %v880 = vmul.f32 %v549, %v876
        %v881 = vmul.f32 %v549, %v877
        %v882 = vmul.f32 %v549, %v878
        %v883 = vmul.f32 %v549, %v879
        %v884 = vmul.f32 %v554, %v876
        %v885 = vmul.f32 %v554, %v877
        %v886 = vmul.f32 %v554, %v878
        %v887 = vmul.f32 %v554, %v879
        %v888 = vmul.f32 %v559, %v876
        %v889 = vmul.f32 %v559, %v877
        %v890 = vmul.f32 %v559, %v878
        %v891 = vmul.f32 %v559, %v879
        %v892 = vmul.f32 %v564, %v876
        %v893 = vmul.f32 %v564, %v877
        %v894 = vmul.f32 %v564, %v878
        %v895 = vmul.f32 %v564, %v879
        %v896 = vmul.f32 %v569, %v876
        %v897 = vmul.f32 %v569, %v877
        %v898 = vmul.f32 %v569, %v878
        %v899 = vmul.f32 %v569, %v879
        %v900 = vmul.f32 %v574, %v876
        %v901 = vmul.f32 %v574, %v877
        %v902 = vmul.f32 %v574, %v878
        %v903 = vmul.f32 %v574, %v879
        %v904 = vmul.f32 %v579, %v876
        %v905 = vmul.f32 %v579, %v877
        %v906 = vmul.f32 %v579, %v878
        %v907 = vmul.f32 %v579, %v879
        %v908 = vmul.f32 %v584, %v876
        %v909 = vmul.f32 %v584, %v877
        %v910 = vmul.f32 %v584, %v878
        %v911 = vmul.f32 %v584, %v879
        %v912 = vmul.f32 %v589, %v876
        %v913 = vmul.f32 %v589, %v877
        %v914 = vmul.f32 %v589, %v878
        %v915 = vmul.f32 %v589, %v879
        %v916 = vmul.f32 %v594, %v876
        %v917 = vmul.f32 %v594, %v877
        %v918 = vmul.f32 %v594, %v878
        %v919 = vmul.f32 %v594, %v879
        %v920 = vmul.f32 %v599, %v876
        %v921 = vmul.f32 %v599, %v877
        %v922 = vmul.f32 %v599, %v878
        %v923 = vmul.f32 %v599, %v879
        %v924 = vmul.f32 %v604, %v876
        %v925 = vmul.f32 %v604, %v877
        %v926 = vmul.f32 %v604, %v878
        %v927 = vmul.f32 %v604, %v879
        %v928 = vmul.f32 %v609, %v876
        %v929 = vmul.f32 %v609, %v877
        %v930 = vmul.f32 %v609, %v878
        %v931 = vmul.f32 %v609, %v879
        %v932 = vmul.f32 %v614, %v876
        %v933 = vmul.f32 %v614, %v877
        %v934 = vmul.f32 %v614, %v878
        %v935 = vmul.f32 %v614, %v879
        %v936 = vmul.f32 %v619, %v876
        %v937 = vmul.f32 %v619, %v877
        %v938 = vmul.f32 %v619, %v878
        %v939 = vmul.f32 %v619, %v879
        %v940 = vmul.f32 %v624, %v876
        %v941 = vmul.f32 %v624, %v877
        %v942 = vmul.f32 %v624, %v878
        %v943 = vmul.f32 %v624, %v879
        %v944 = vmul.f32 %v629, %v876
        %v945 = vmul.f32 %v629, %v877
        %v946 = vmul.f32 %v629, %v878
        %v947 = vmul.f32 %v629, %v879
        %v948 = vmul.f32 %v634, %v876
        %v949 = vmul.f32 %v634, %v877
        %v950 = vmul.f32 %v634, %v878
        %v951 = vmul.f32 %v634, %v879
        %v952 = vmul.f32 %v639, %v876
        %v953 = vmul.f32 %v639, %v877
        %v954 = vmul.f32 %v639, %v878
        %v955 = vmul.f32 %v639, %v879
        %v956 = vmul.f32 %v644, %v876
        %v957 = vmul.f32 %v644, %v877
        %v958 = vmul.f32 %v644, %v878
        %v959 = vmul.f32 %v644, %v879
        %v960 = vmul.f32 %v649, %v876
        %v961 = vmul.f32 %v649, %v877
        %v962 = vmul.f32 %v649, %v878
        %v963 = vmul.f32 %v649, %v879
        %v964 = vmul.f32 %v654, %v876
        %v965 = vmul.f32 %v654, %v877
        %v966 = vmul.f32 %v654, %v878
        %v967 = vmul.f32 %v654, %v879
        %v968 = vmul.f32 %v659, %v876
        %v969 = vmul.f32 %v659, %v877
        %v970 = vmul.f32 %v659, %v878
        %v971 = vmul.f32 %v659, %v879
        %v972 = vmul.f32 %v664, %v876
        %v973 = vmul.f32 %v664, %v877
        %v974 = vmul.f32 %v664, %v878
        %v975 = vmul.f32 %v664, %v879
        %v976 = vmul.f32 %v669, %v876
        %v977 = vmul.f32 %v669, %v877
        %v978 = vmul.f32 %v669, %v878
        %v979 = vmul.f32 %v669, %v879
        %v980 = vmul.f32 %v674, %v876
        %v981 = vmul.f32 %v674, %v877
        %v982 = vmul.f32 %v674, %v878
        %v983 = vmul.f32 %v674, %v879
        %v984 = vmul.f32 %v679, %v876
        %v985 = vmul.f32 %v679, %v877
        %v986 = vmul.f32 %v679, %v878
        %v987 = vmul.f32 %v679, %v879
        %v988 = vmul.f32 %v684, %v876
        %v989 = vmul.f32 %v684, %v877
        %v990 = vmul.f32 %v684, %v878
        %v991 = vmul.f32 %v684, %v879
        %v992 = vmul.f32 %v689, %v876
        %v993 = vmul.f32 %v689, %v877
        %v994 = vmul.f32 %v689, %v878
        %v995 = vmul.f32 %v689, %v879
        %v996 = vmul.f32 %v694, %v876
        %v997 = vmul.f32 %v694, %v877
        %v998 = vmul.f32 %v694, %v878
        %v999 = vmul.f32 %v694, %v879
        %v1000 = vmul.f32 %v699, %v876
        %v1001 = vmul.f32 %v699, %v877
        %v1002 = vmul.f32 %v699, %v878
        %v1003 = vmul.f32 %v699, %v879
        %v1004 = vmul.f32 %v704, %v876
        %v1005 = vmul.f32 %v704, %v877
        %v1006 = vmul.f32 %v704, %v878
        %v1007 = vmul.f32 %v704, %v879
        %v1008 = vmul.f32 %v709, %v876
        %v1009 = vmul.f32 %v709, %v877
        %v1010 = vmul.f32 %v709, %v878
        %v1011 = vmul.f32 %v709, %v879
        %v1012 = vmul.f32 %v714, %v876
        %v1013 = vmul.f32 %v714, %v877
        %v1014 = vmul.f32 %v714, %v878
        %v1015 = vmul.f32 %v714, %v879
        %v1016 = vmul.f32 %v719, %v876
        %v1017 = vmul.f32 %v719, %v877
        %v1018 = vmul.f32 %v719, %v878
        %v1019 = vmul.f32 %v719, %v879
        %v1020 = vmul.f32 %v724, %v876
        %v1021 = vmul.f32 %v724, %v877
        %v1022 = vmul.f32 %v724, %v878
        %v1023 = vmul.f32 %v724, %v879
        %v1024 = vmul.f32 %v729, %v876
        %v1025 = vmul.f32 %v729, %v877
        %v1026 = vmul.f32 %v729, %v878
        %v1027 = vmul.f32 %v729, %v879
        %v1028 = vmul.f32 %v734, %v876
        %v1029 = vmul.f32 %v734, %v877
        %v1030 = vmul.f32 %v734, %v878
        %v1031 = vmul.f32 %v734, %v879
        %v1032 = vmul.f32 %v739, %v876
        %v1033 = vmul.f32 %v739, %v877
        %v1034 = vmul.f32 %v739, %v878
        %v1035 = vmul.f32 %v739, %v879
        %v1036 = vmul.f32 %v744, %v876
        %v1037 = vmul.f32 %v744, %v877
        %v1038 = vmul.f32 %v744, %v878
        %v1039 = vmul.f32 %v744, %v879
        %v1040 = vmul.f32 %v749, %v876
        %v1041 = vmul.f32 %v749, %v877
        %v1042 = vmul.f32 %v749, %v878
        %v1043 = vmul.f32 %v749, %v879
        %v1044 = vmul.f32 %v754, %v876
        %v1045 = vmul.f32 %v754, %v877
        %v1046 = vmul.f32 %v754, %v878
        %v1047 = vmul.f32 %v754, %v879
        %v1048 = vmul.f32 %v759, %v876
        %v1049 = vmul.f32 %v759, %v877
        %v1050 = vmul.f32 %v759, %v878
        %v1051 = vmul.f32 %v759, %v879
        %v1052 = vmul.f32 %v764, %v876
        %v1053 = vmul.f32 %v764, %v877
        %v1054 = vmul.f32 %v764, %v878
        %v1055 = vmul.f32 %v764, %v879
        %v1056 = vmul.f32 %v769, %v876
        %v1057 = vmul.f32 %v769, %v877
        %v1058 = vmul.f32 %v769, %v878
        %v1059 = vmul.f32 %v769, %v879
        %v1060 = vmul.f32 %v774, %v876
        %v1061 = vmul.f32 %v774, %v877
        %v1062 = vmul.f32 %v774, %v878
        %v1063 = vmul.f32 %v774, %v879
        %v1064 = vmul.f32 %v779, %v876
        %v1065 = vmul.f32 %v779, %v877
        %v1066 = vmul.f32 %v779, %v878
        %v1067 = vmul.f32 %v779, %v879
        %v1068 = vmul.f32 %v784, %v876
        %v1069 = vmul.f32 %v784, %v877
        %v1070 = vmul.f32 %v784, %v878
        %v1071 = vmul.f32 %v784, %v879
        %v1072 = vmul.f32 %v789, %v876
        %v1073 = vmul.f32 %v789, %v877
        %v1074 = vmul.f32 %v789, %v878
        %v1075 = vmul.f32 %v789, %v879
        %v1076 = vmul.f32 %v794, %v876
        %v1077 = vmul.f32 %v794, %v877
        %v1078 = vmul.f32 %v794, %v878
        %v1079 = vmul.f32 %v794, %v879
        %v1080 = vmul.f32 %v799, %v876
        %v1081 = vmul.f32 %v799, %v877
        %v1082 = vmul.f32 %v799, %v878
        %v1083 = vmul.f32 %v799, %v879
        %v1084 = vmul.f32 %v804, %v876
        %v1085 = vmul.f32 %v804, %v877
        %v1086 = vmul.f32 %v804, %v878
        %v1087 = vmul.f32 %v804, %v879
        %v1088 = vmul.f32 %v809, %v876
        %v1089 = vmul.f32 %v809, %v877
        %v1090 = vmul.f32 %v809, %v878
        %v1091 = vmul.f32 %v809, %v879
        %v1092 = vmul.f32 %v814, %v876
        %v1093 = vmul.f32 %v814, %v877
        %v1094 = vmul.f32 %v814, %v878
        %v1095 = vmul.f32 %v814, %v879
        %v1096 = vmul.f32 %v819, %v876
        %v1097 = vmul.f32 %v819, %v877
        %v1098 = vmul.f32 %v819, %v878
        %v1099 = vmul.f32 %v819, %v879
        %v1100 = vmul.f32 %v824, %v876
        %v1101 = vmul.f32 %v824, %v877
        %v1102 = vmul.f32 %v824, %v878
        %v1103 = vmul.f32 %v824, %v879
        %v1104 = vmul.f32 %v829, %v876
        %v1105 = vmul.f32 %v829, %v877
        %v1106 = vmul.f32 %v829, %v878
        %v1107 = vmul.f32 %v829, %v879
        %v1108 = vmul.f32 %v834, %v876
        %v1109 = vmul.f32 %v834, %v877
        %v1110 = vmul.f32 %v834, %v878
        %v1111 = vmul.f32 %v834, %v879
        %v1112 = vmul.f32 %v839, %v876
        %v1113 = vmul.f32 %v839, %v877
        %v1114 = vmul.f32 %v839, %v878
        %v1115 = vmul.f32 %v839, %v879
        %v1116 = vmul.f32 %v844, %v876
        %v1117 = vmul.f32 %v844, %v877
        %v1118 = vmul.f32 %v844, %v878
        %v1119 = vmul.f32 %v844, %v879
        %v1120 = vmul.f32 %v849, %v876
        %v1121 = vmul.f32 %v849, %v877
        %v1122 = vmul.f32 %v849, %v878
        %v1123 = vmul.f32 %v849, %v879
        %v1124 = vmul.f32 %v854, %v876
        %v1125 = vmul.f32 %v854, %v877
        %v1126 = vmul.f32 %v854, %v878
        %v1127 = vmul.f32 %v854, %v879
        %v1128 = vmul.f32 %v859, %v876
        %v1129 = vmul.f32 %v859, %v877
        %v1130 = vmul.f32 %v859, %v878
        %v1131 = vmul.f32 %v859, %v879
        %v1132 = vmul.f32 %v864, %v876
        %v1133 = vmul.f32 %v864, %v877
        %v1134 = vmul.f32 %v864, %v878
        %v1135 = vmul.f32 %v864, %v879
        %1137 = vset.pattern.permute.xlu0 0
        %1138 = vperm.xlu0 %1137, %v418
        %v1139 = vpop.permute.xlu0 %1138
        %1142 = vset.pattern.permute.xlu0 0
        %1143 = vperm.xlu0 %1142, %v419
        %v1144 = vpop.permute.xlu0 %1143
        %1147 = vset.pattern.permute.xlu0 0
        %1148 = vperm.xlu0 %1147, %v420
        %v1149 = vpop.permute.xlu0 %1148
        %1152 = vset.pattern.permute.xlu0 0
        %1153 = vperm.xlu0 %1152, %v421
        %v1154 = vpop.permute.xlu0 %1153
        %1157 = vset.pattern.permute.xlu0 0
        %1158 = vperm.xlu0 %1157, %v422
        %v1159 = vpop.permute.xlu0 %1158
        %1162 = vset.pattern.permute.xlu0 0
        %1163 = vperm.xlu0 %1162, %v423
        %v1164 = vpop.permute.xlu0 %1163
        %1167 = vset.pattern.permute.xlu0 0
        %1168 = vperm.xlu0 %1167, %v424
        %v1169 = vpop.permute.xlu0 %1168
        %1172 = vset.pattern.permute.xlu0 0
        %1173 = vperm.xlu0 %1172, %v425
        %v1174 = vpop.permute.xlu0 %1173
        %1177 = vset.pattern.permute.xlu0 0
        %1178 = vperm.xlu0 %1177, %v426
        %v1179 = vpop.permute.xlu0 %1178
        %1182 = vset.pattern.permute.xlu0 0
        %1183 = vperm.xlu0 %1182, %v427
        %v1184 = vpop.permute.xlu0 %1183
        %1187 = vset.pattern.permute.xlu0 0
        %1188 = vperm.xlu0 %1187, %v428
        %v1189 = vpop.permute.xlu0 %1188
        %1192 = vset.pattern.permute.xlu0 0
        %1193 = vperm.xlu0 %1192, %v429
        %v1194 = vpop.permute.xlu0 %1193
        %1197 = vset.pattern.permute.xlu0 0
        %1198 = vperm.xlu0 %1197, %v430
        %v1199 = vpop.permute.xlu0 %1198
        %1202 = vset.pattern.permute.xlu0 0
        %1203 = vperm.xlu0 %1202, %v431
        %v1204 = vpop.permute.xlu0 %1203
        %1207 = vset.pattern.permute.xlu0 0
        %1208 = vperm.xlu0 %1207, %v432
        %v1209 = vpop.permute.xlu0 %1208
        %1212 = vset.pattern.permute.xlu0 0
        %1213 = vperm.xlu0 %1212, %v433
        %v1214 = vpop.permute.xlu0 %1213
        %1217 = vset.pattern.permute.xlu0 0
        %1218 = vperm.xlu0 %1217, %v434
        %v1219 = vpop.permute.xlu0 %1218
        %1222 = vset.pattern.permute.xlu0 0
        %1223 = vperm.xlu0 %1222, %v435
        %v1224 = vpop.permute.xlu0 %1223
        %1227 = vset.pattern.permute.xlu0 0
        %1228 = vperm.xlu0 %1227, %v436
        %v1229 = vpop.permute.xlu0 %1228
        %1232 = vset.pattern.permute.xlu0 0
        %1233 = vperm.xlu0 %1232, %v437
        %v1234 = vpop.permute.xlu0 %1233
        %1237 = vset.pattern.permute.xlu0 0
        %1238 = vperm.xlu0 %1237, %v438
        %v1239 = vpop.permute.xlu0 %1238
        %1242 = vset.pattern.permute.xlu0 0
        %1243 = vperm.xlu0 %1242, %v439
        %v1244 = vpop.permute.xlu0 %1243
        %1247 = vset.pattern.permute.xlu0 0
        %1248 = vperm.xlu0 %1247, %v440
        %v1249 = vpop.permute.xlu0 %1248
        %1252 = vset.pattern.permute.xlu0 0
        %1253 = vperm.xlu0 %1252, %v441
        %v1254 = vpop.permute.xlu0 %1253
        %1257 = vset.pattern.permute.xlu0 0
        %1258 = vperm.xlu0 %1257, %v442
        %v1259 = vpop.permute.xlu0 %1258
        %1262 = vset.pattern.permute.xlu0 0
        %1263 = vperm.xlu0 %1262, %v443
        %v1264 = vpop.permute.xlu0 %1263
        %1267 = vset.pattern.permute.xlu0 0
        %1268 = vperm.xlu0 %1267, %v444
        %v1269 = vpop.permute.xlu0 %1268
        %1272 = vset.pattern.permute.xlu0 0
        %1273 = vperm.xlu0 %1272, %v445
        %v1274 = vpop.permute.xlu0 %1273
        %1277 = vset.pattern.permute.xlu0 0
        %1278 = vperm.xlu0 %1277, %v446
        %v1279 = vpop.permute.xlu0 %1278
        %1282 = vset.pattern.permute.xlu0 0
        %1283 = vperm.xlu0 %1282, %v447
        %v1284 = vpop.permute.xlu0 %1283
        %1287 = vset.pattern.permute.xlu0 0
        %1288 = vperm.xlu0 %1287, %v448
        %v1289 = vpop.permute.xlu0 %1288
        %1292 = vset.pattern.permute.xlu0 0
        %1293 = vperm.xlu0 %1292, %v449
        %v1294 = vpop.permute.xlu0 %1293
        %1297 = vset.pattern.permute.xlu0 0
        %1298 = vperm.xlu0 %1297, %v450
        %v1299 = vpop.permute.xlu0 %1298
        %1302 = vset.pattern.permute.xlu0 0
        %1303 = vperm.xlu0 %1302, %v451
        %v1304 = vpop.permute.xlu0 %1303
        %1307 = vset.pattern.permute.xlu0 0
        %1308 = vperm.xlu0 %1307, %v452
        %v1309 = vpop.permute.xlu0 %1308
        %1312 = vset.pattern.permute.xlu0 0
        %1313 = vperm.xlu0 %1312, %v453
        %v1314 = vpop.permute.xlu0 %1313
        %1317 = vset.pattern.permute.xlu0 0
        %1318 = vperm.xlu0 %1317, %v454
        %v1319 = vpop.permute.xlu0 %1318
        %1322 = vset.pattern.permute.xlu0 0
        %1323 = vperm.xlu0 %1322, %v455
        %v1324 = vpop.permute.xlu0 %1323
        %1327 = vset.pattern.permute.xlu0 0
        %1328 = vperm.xlu0 %1327, %v456
        %v1329 = vpop.permute.xlu0 %1328
        %1332 = vset.pattern.permute.xlu0 0
        %1333 = vperm.xlu0 %1332, %v457
        %v1334 = vpop.permute.xlu0 %1333
        %1337 = vset.pattern.permute.xlu0 0
        %1338 = vperm.xlu0 %1337, %v458
        %v1339 = vpop.permute.xlu0 %1338
        %1342 = vset.pattern.permute.xlu0 0
        %1343 = vperm.xlu0 %1342, %v459
        %v1344 = vpop.permute.xlu0 %1343
        %1347 = vset.pattern.permute.xlu0 0
        %1348 = vperm.xlu0 %1347, %v460
        %v1349 = vpop.permute.xlu0 %1348
        %1352 = vset.pattern.permute.xlu0 0
        %1353 = vperm.xlu0 %1352, %v461
        %v1354 = vpop.permute.xlu0 %1353
        %1357 = vset.pattern.permute.xlu0 0
        %1358 = vperm.xlu0 %1357, %v462
        %v1359 = vpop.permute.xlu0 %1358
        %1362 = vset.pattern.permute.xlu0 0
        %1363 = vperm.xlu0 %1362, %v463
        %v1364 = vpop.permute.xlu0 %1363
        %1367 = vset.pattern.permute.xlu0 0
        %1368 = vperm.xlu0 %1367, %v464
        %v1369 = vpop.permute.xlu0 %1368
        %1372 = vset.pattern.permute.xlu0 0
        %1373 = vperm.xlu0 %1372, %v465
        %v1374 = vpop.permute.xlu0 %1373
        %1377 = vset.pattern.permute.xlu0 0
        %1378 = vperm.xlu0 %1377, %v466
        %v1379 = vpop.permute.xlu0 %1378
        %1382 = vset.pattern.permute.xlu0 0
        %1383 = vperm.xlu0 %1382, %v467
        %v1384 = vpop.permute.xlu0 %1383
        %1387 = vset.pattern.permute.xlu0 0
        %1388 = vperm.xlu0 %1387, %v468
        %v1389 = vpop.permute.xlu0 %1388
        %1392 = vset.pattern.permute.xlu0 0
        %1393 = vperm.xlu0 %1392, %v469
        %v1394 = vpop.permute.xlu0 %1393
        %1397 = vset.pattern.permute.xlu0 0
        %1398 = vperm.xlu0 %1397, %v470
        %v1399 = vpop.permute.xlu0 %1398
        %1402 = vset.pattern.permute.xlu0 0
        %1403 = vperm.xlu0 %1402, %v471
        %v1404 = vpop.permute.xlu0 %1403
        %1407 = vset.pattern.permute.xlu0 0
        %1408 = vperm.xlu0 %1407, %v472
        %v1409 = vpop.permute.xlu0 %1408
        %1412 = vset.pattern.permute.xlu0 0
        %1413 = vperm.xlu0 %1412, %v473
        %v1414 = vpop.permute.xlu0 %1413
        %1417 = vset.pattern.permute.xlu0 0
        %1418 = vperm.xlu0 %1417, %v474
        %v1419 = vpop.permute.xlu0 %1418
        %1422 = vset.pattern.permute.xlu0 0
        %1423 = vperm.xlu0 %1422, %v475
        %v1424 = vpop.permute.xlu0 %1423
        %1427 = vset.pattern.permute.xlu0 0
        %1428 = vperm.xlu0 %1427, %v476
        %v1429 = vpop.permute.xlu0 %1428
        %1432 = vset.pattern.permute.xlu0 0
        %1433 = vperm.xlu0 %1432, %v477
        %v1434 = vpop.permute.xlu0 %1433
        %1437 = vset.pattern.permute.xlu0 0
        %1438 = vperm.xlu0 %1437, %v478
        %v1439 = vpop.permute.xlu0 %1438
        %1442 = vset.pattern.permute.xlu0 0
        %1443 = vperm.xlu0 %1442, %v479
        %v1444 = vpop.permute.xlu0 %1443
        %1447 = vset.pattern.permute.xlu0 0
        %1448 = vperm.xlu0 %1447, %v480
        %v1449 = vpop.permute.xlu0 %1448
        %1452 = vset.pattern.permute.xlu0 0
        %1453 = vperm.xlu0 %1452, %v481
        %v1454 = vpop.permute.xlu0 %1453
        %v1456 = vadd.f32 %v1139, %v880
        %v1457 = vadd.f32 %v1139, %v881
        %v1458 = vadd.f32 %v1139, %v882
        %v1459 = vadd.f32 %v1139, %v883
        %v1460 = vadd.f32 %v1144, %v884
        %v1461 = vadd.f32 %v1144, %v885
        %v1462 = vadd.f32 %v1144, %v886
        %v1463 = vadd.f32 %v1144, %v887
        %v1464 = vadd.f32 %v1149, %v888
        %v1465 = vadd.f32 %v1149, %v889
        %v1466 = vadd.f32 %v1149, %v890
        %v1467 = vadd.f32 %v1149, %v891
        %v1468 = vadd.f32 %v1154, %v892
        %v1469 = vadd.f32 %v1154, %v893
        %v1470 = vadd.f32 %v1154, %v894
        %v1471 = vadd.f32 %v1154, %v895
        %v1472 = vadd.f32 %v1159, %v896
        %v1473 = vadd.f32 %v1159, %v897
        %v1474 = vadd.f32 %v1159, %v898
        %v1475 = vadd.f32 %v1159, %v899
        %v1476 = vadd.f32 %v1164, %v900
        %v1477 = vadd.f32 %v1164, %v901
        %v1478 = vadd.f32 %v1164, %v902
        %v1479 = vadd.f32 %v1164, %v903
        %v1480 = vadd.f32 %v1169, %v904
        %v1481 = vadd.f32 %v1169, %v905
        %v1482 = vadd.f32 %v1169, %v906
        %v1483 = vadd.f32 %v1169, %v907
        %v1484 = vadd.f32 %v1174, %v908
        %v1485 = vadd.f32 %v1174, %v909
        %v1486 = vadd.f32 %v1174, %v910
        %v1487 = vadd.f32 %v1174, %v911
        %v1488 = vadd.f32 %v1179, %v912
        %v1489 = vadd.f32 %v1179, %v913
        %v1490 = vadd.f32 %v1179, %v914
        %v1491 = vadd.f32 %v1179, %v915
        %v1492 = vadd.f32 %v1184, %v916
        %v1493 = vadd.f32 %v1184, %v917
        %v1494 = vadd.f32 %v1184, %v918
        %v1495 = vadd.f32 %v1184, %v919
        %v1496 = vadd.f32 %v1189, %v920
        %v1497 = vadd.f32 %v1189, %v921
        %v1498 = vadd.f32 %v1189, %v922
        %v1499 = vadd.f32 %v1189, %v923
        %v1500 = vadd.f32 %v1194, %v924
        %v1501 = vadd.f32 %v1194, %v925
        %v1502 = vadd.f32 %v1194, %v926
        %v1503 = vadd.f32 %v1194, %v927
        %v1504 = vadd.f32 %v1199, %v928
        %v1505 = vadd.f32 %v1199, %v929
        %v1506 = vadd.f32 %v1199, %v930
        %v1507 = vadd.f32 %v1199, %v931
        %v1508 = vadd.f32 %v1204, %v932
        %v1509 = vadd.f32 %v1204, %v933
        %v1510 = vadd.f32 %v1204, %v934
        %v1511 = vadd.f32 %v1204, %v935
        %v1512 = vadd.f32 %v1209, %v936
        %v1513 = vadd.f32 %v1209, %v937
        %v1514 = vadd.f32 %v1209, %v938
        %v1515 = vadd.f32 %v1209, %v939
        %v1516 = vadd.f32 %v1214, %v940
        %v1517 = vadd.f32 %v1214, %v941
        %v1518 = vadd.f32 %v1214, %v942
        %v1519 = vadd.f32 %v1214, %v943
        %v1520 = vadd.f32 %v1219, %v944
        %v1521 = vadd.f32 %v1219, %v945
        %v1522 = vadd.f32 %v1219, %v946
        %v1523 = vadd.f32 %v1219, %v947
        %v1524 = vadd.f32 %v1224, %v948
        %v1525 = vadd.f32 %v1224, %v949
        %v1526 = vadd.f32 %v1224, %v950
        %v1527 = vadd.f32 %v1224, %v951
        %v1528 = vadd.f32 %v1229, %v952
        %v1529 = vadd.f32 %v1229, %v953
        %v1530 = vadd.f32 %v1229, %v954
        %v1531 = vadd.f32 %v1229, %v955
        %v1532 = vadd.f32 %v1234, %v956
        %v1533 = vadd.f32 %v1234, %v957
        %v1534 = vadd.f32 %v1234, %v958
        %v1535 = vadd.f32 %v1234, %v959
        %v1536 = vadd.f32 %v1239, %v960
        %v1537 = vadd.f32 %v1239, %v961
        %v1538 = vadd.f32 %v1239, %v962
        %v1539 = vadd.f32 %v1239, %v963
        %v1540 = vadd.f32 %v1244, %v964
        %v1541 = vadd.f32 %v1244, %v965
        %v1542 = vadd.f32 %v1244, %v966
        %v1543 = vadd.f32 %v1244, %v967
        %v1544 = vadd.f32 %v1249, %v968
        %v1545 = vadd.f32 %v1249, %v969
        %v1546 = vadd.f32 %v1249, %v970
        %v1547 = vadd.f32 %v1249, %v971
        %v1548 = vadd.f32 %v1254, %v972
        %v1549 = vadd.f32 %v1254, %v973
        %v1550 = vadd.f32 %v1254, %v974
        %v1551 = vadd.f32 %v1254, %v975
        %v1552 = vadd.f32 %v1259, %v976
        %v1553 = vadd.f32 %v1259, %v977
        %v1554 = vadd.f32 %v1259, %v978
        %v1555 = vadd.f32 %v1259, %v979
        %v1556 = vadd.f32 %v1264, %v980
        %v1557 = vadd.f32 %v1264, %v981
        %v1558 = vadd.f32 %v1264, %v982
        %v1559 = vadd.f32 %v1264, %v983
        %v1560 = vadd.f32 %v1269, %v984
        %v1561 = vadd.f32 %v1269, %v985
        %v1562 = vadd.f32 %v1269, %v986
        %v1563 = vadd.f32 %v1269, %v987
        %v1564 = vadd.f32 %v1274, %v988
        %v1565 = vadd.f32 %v1274, %v989
        %v1566 = vadd.f32 %v1274, %v990
        %v1567 = vadd.f32 %v1274, %v991
        %v1568 = vadd.f32 %v1279, %v992
        %v1569 = vadd.f32 %v1279, %v993
        %v1570 = vadd.f32 %v1279, %v994
        %v1571 = vadd.f32 %v1279, %v995
        %v1572 = vadd.f32 %v1284, %v996
        %v1573 = vadd.f32 %v1284, %v997
        %v1574 = vadd.f32 %v1284, %v998
        %v1575 = vadd.f32 %v1284, %v999
        %v1576 = vadd.f32 %v1289, %v1000
        %v1577 = vadd.f32 %v1289, %v1001
        %v1578 = vadd.f32 %v1289, %v1002
        %v1579 = vadd.f32 %v1289, %v1003
        %v1580 = vadd.f32 %v1294, %v1004
        %v1581 = vadd.f32 %v1294, %v1005
        %v1582 = vadd.f32 %v1294, %v1006
        %v1583 = vadd.f32 %v1294, %v1007
        %v1584 = vadd.f32 %v1299, %v1008
        %v1585 = vadd.f32 %v1299, %v1009
        %v1586 = vadd.f32 %v1299, %v1010
        %v1587 = vadd.f32 %v1299, %v1011
        %v1588 = vadd.f32 %v1304, %v1012
        %v1589 = vadd.f32 %v1304, %v1013
        %v1590 = vadd.f32 %v1304, %v1014
        %v1591 = vadd.f32 %v1304, %v1015
        %v1592 = vadd.f32 %v1309, %v1016
        %v1593 = vadd.f32 %v1309, %v1017
        %v1594 = vadd.f32 %v1309, %v1018
        %v1595 = vadd.f32 %v1309, %v1019
        %v1596 = vadd.f32 %v1314, %v1020
        %v1597 = vadd.f32 %v1314, %v1021
        %v1598 = vadd.f32 %v1314, %v1022
        %v1599 = vadd.f32 %v1314, %v1023
        %v1600 = vadd.f32 %v1319, %v1024
        %v1601 = vadd.f32 %v1319, %v1025
        %v1602 = vadd.f32 %v1319, %v1026
        %v1603 = vadd.f32 %v1319, %v1027
        %v1604 = vadd.f32 %v1324, %v1028
        %v1605 = vadd.f32 %v1324, %v1029
        %v1606 = vadd.f32 %v1324, %v1030
        %v1607 = vadd.f32 %v1324, %v1031
        %v1608 = vadd.f32 %v1329, %v1032
        %v1609 = vadd.f32 %v1329, %v1033
        %v1610 = vadd.f32 %v1329, %v1034
        %v1611 = vadd.f32 %v1329, %v1035
        %v1612 = vadd.f32 %v1334, %v1036
        %v1613 = vadd.f32 %v1334, %v1037
        %v1614 = vadd.f32 %v1334, %v1038
        %v1615 = vadd.f32 %v1334, %v1039
        %v1616 = vadd.f32 %v1339, %v1040
        %v1617 = vadd.f32 %v1339, %v1041
        %v1618 = vadd.f32 %v1339, %v1042
        %v1619 = vadd.f32 %v1339, %v1043
        %v1620 = vadd.f32 %v1344, %v1044
        %v1621 = vadd.f32 %v1344, %v1045
        %v1622 = vadd.f32 %v1344, %v1046
        %v1623 = vadd.f32 %v1344, %v1047
        %v1624 = vadd.f32 %v1349, %v1048
        %v1625 = vadd.f32 %v1349, %v1049
        %v1626 = vadd.f32 %v1349, %v1050
        %v1627 = vadd.f32 %v1349, %v1051
        %v1628 = vadd.f32 %v1354, %v1052
        %v1629 = vadd.f32 %v1354, %v1053
        %v1630 = vadd.f32 %v1354, %v1054
        %v1631 = vadd.f32 %v1354, %v1055
        %v1632 = vadd.f32 %v1359, %v1056
        %v1633 = vadd.f32 %v1359, %v1057
        %v1634 = vadd.f32 %v1359, %v1058
        %v1635 = vadd.f32 %v1359, %v1059
        %v1636 = vadd.f32 %v1364, %v1060
        %v1637 = vadd.f32 %v1364, %v1061
        %v1638 = vadd.f32 %v1364, %v1062
        %v1639 = vadd.f32 %v1364, %v1063
        %v1640 = vadd.f32 %v1369, %v1064
        %v1641 = vadd.f32 %v1369, %v1065
        %v1642 = vadd.f32 %v1369, %v1066
        %v1643 = vadd.f32 %v1369, %v1067
        %v1644 = vadd.f32 %v1374, %v1068
        %v1645 = vadd.f32 %v1374, %v1069
        %v1646 = vadd.f32 %v1374, %v1070
        %v1647 = vadd.f32 %v1374, %v1071
        %v1648 = vadd.f32 %v1379, %v1072
        %v1649 = vadd.f32 %v1379, %v1073
        %v1650 = vadd.f32 %v1379, %v1074
        %v1651 = vadd.f32 %v1379, %v1075
        %v1652 = vadd.f32 %v1384, %v1076
        %v1653 = vadd.f32 %v1384, %v1077
        %v1654 = vadd.f32 %v1384, %v1078
        %v1655 = vadd.f32 %v1384, %v1079
        %v1656 = vadd.f32 %v1389, %v1080
        %v1657 = vadd.f32 %v1389, %v1081
        %v1658 = vadd.f32 %v1389, %v1082
        %v1659 = vadd.f32 %v1389, %v1083
        %v1660 = vadd.f32 %v1394, %v1084
        %v1661 = vadd.f32 %v1394, %v1085
        %v1662 = vadd.f32 %v1394, %v1086
        %v1663 = vadd.f32 %v1394, %v1087
        %v1664 = vadd.f32 %v1399, %v1088
        %v1665 = vadd.f32 %v1399, %v1089
        %v1666 = vadd.f32 %v1399, %v1090
        %v1667 = vadd.f32 %v1399, %v1091
        %v1668 = vadd.f32 %v1404, %v1092
        %v1669 = vadd.f32 %v1404, %v1093
        %v1670 = vadd.f32 %v1404, %v1094
        %v1671 = vadd.f32 %v1404, %v1095
        %v1672 = vadd.f32 %v1409, %v1096
        %v1673 = vadd.f32 %v1409, %v1097
        %v1674 = vadd.f32 %v1409, %v1098
        %v1675 = vadd.f32 %v1409, %v1099
        %v1676 = vadd.f32 %v1414, %v1100
        %v1677 = vadd.f32 %v1414, %v1101
        %v1678 = vadd.f32 %v1414, %v1102
        %v1679 = vadd.f32 %v1414, %v1103
        %v1680 = vadd.f32 %v1419, %v1104
        %v1681 = vadd.f32 %v1419, %v1105
        %v1682 = vadd.f32 %v1419, %v1106
        %v1683 = vadd.f32 %v1419, %v1107
        %v1684 = vadd.f32 %v1424, %v1108
        %v1685 = vadd.f32 %v1424, %v1109
        %v1686 = vadd.f32 %v1424, %v1110
        %v1687 = vadd.f32 %v1424, %v1111
        %v1688 = vadd.f32 %v1429, %v1112
        %v1689 = vadd.f32 %v1429, %v1113
        %v1690 = vadd.f32 %v1429, %v1114
        %v1691 = vadd.f32 %v1429, %v1115
        %v1692 = vadd.f32 %v1434, %v1116
        %v1693 = vadd.f32 %v1434, %v1117
        %v1694 = vadd.f32 %v1434, %v1118
        %v1695 = vadd.f32 %v1434, %v1119
        %v1696 = vadd.f32 %v1439, %v1120
        %v1697 = vadd.f32 %v1439, %v1121
        %v1698 = vadd.f32 %v1439, %v1122
        %v1699 = vadd.f32 %v1439, %v1123
        %v1700 = vadd.f32 %v1444, %v1124
        %v1701 = vadd.f32 %v1444, %v1125
        %v1702 = vadd.f32 %v1444, %v1126
        %v1703 = vadd.f32 %v1444, %v1127
        %v1704 = vadd.f32 %v1449, %v1128
        %v1705 = vadd.f32 %v1449, %v1129
        %v1706 = vadd.f32 %v1449, %v1130
        %v1707 = vadd.f32 %v1449, %v1131
        %v1708 = vadd.f32 %v1454, %v1132
        %v1709 = vadd.f32 %v1454, %v1133
        %v1710 = vadd.f32 %v1454, %v1134
        %v1711 = vadd.f32 %v1454, %v1135
        %1712 = vset.pattern.permute.xlu0 1
        %1713 = vperm.xlu0 %1712, %v482
        %v1714 = vpop.permute.xlu0 %1713
        %1716 = vset.pattern.permute.xlu0 1
        %1717 = vperm.xlu0 %1716, %v483
        %v1718 = vpop.permute.xlu0 %1717
        %1720 = vset.pattern.permute.xlu0 1
        %1721 = vperm.xlu0 %1720, %v484
        %v1722 = vpop.permute.xlu0 %1721
        %1724 = vset.pattern.permute.xlu0 1
        %1725 = vperm.xlu0 %1724, %v485
        %v1726 = vpop.permute.xlu0 %1725
        %1728 = vset.pattern.permute.xlu0 1
        %1729 = vperm.xlu0 %1728, %v486
        %v1730 = vpop.permute.xlu0 %1729
        %1732 = vset.pattern.permute.xlu0 1
        %1733 = vperm.xlu0 %1732, %v487
        %v1734 = vpop.permute.xlu0 %1733
        %1736 = vset.pattern.permute.xlu0 1
        %1737 = vperm.xlu0 %1736, %v488
        %v1738 = vpop.permute.xlu0 %1737
        %1740 = vset.pattern.permute.xlu0 1
        %1741 = vperm.xlu0 %1740, %v489
        %v1742 = vpop.permute.xlu0 %1741
        %1744 = vset.pattern.permute.xlu0 1
        %1745 = vperm.xlu0 %1744, %v490
        %v1746 = vpop.permute.xlu0 %1745
        %1748 = vset.pattern.permute.xlu0 1
        %1749 = vperm.xlu0 %1748, %v491
        %v1750 = vpop.permute.xlu0 %1749
        %1752 = vset.pattern.permute.xlu0 1
        %1753 = vperm.xlu0 %1752, %v492
        %v1754 = vpop.permute.xlu0 %1753
        %1756 = vset.pattern.permute.xlu0 1
        %1757 = vperm.xlu0 %1756, %v493
        %v1758 = vpop.permute.xlu0 %1757
        %1760 = vset.pattern.permute.xlu0 1
        %1761 = vperm.xlu0 %1760, %v494
        %v1762 = vpop.permute.xlu0 %1761
        %1764 = vset.pattern.permute.xlu0 1
        %1765 = vperm.xlu0 %1764, %v495
        %v1766 = vpop.permute.xlu0 %1765
        %1768 = vset.pattern.permute.xlu0 1
        %1769 = vperm.xlu0 %1768, %v496
        %v1770 = vpop.permute.xlu0 %1769
        %1772 = vset.pattern.permute.xlu0 1
        %1773 = vperm.xlu0 %1772, %v497
        %v1774 = vpop.permute.xlu0 %1773
        %1776 = vset.pattern.permute.xlu0 1
        %1777 = vperm.xlu0 %1776, %v498
        %v1778 = vpop.permute.xlu0 %1777
        %1780 = vset.pattern.permute.xlu0 1
        %1781 = vperm.xlu0 %1780, %v499
        %v1782 = vpop.permute.xlu0 %1781
        %1784 = vset.pattern.permute.xlu0 1
        %1785 = vperm.xlu0 %1784, %v500
        %v1786 = vpop.permute.xlu0 %1785
        %1788 = vset.pattern.permute.xlu0 1
        %1789 = vperm.xlu0 %1788, %v501
        %v1790 = vpop.permute.xlu0 %1789
        %1792 = vset.pattern.permute.xlu0 1
        %1793 = vperm.xlu0 %1792, %v502
        %v1794 = vpop.permute.xlu0 %1793
        %1796 = vset.pattern.permute.xlu0 1
        %1797 = vperm.xlu0 %1796, %v503
        %v1798 = vpop.permute.xlu0 %1797
        %1800 = vset.pattern.permute.xlu0 1
        %1801 = vperm.xlu0 %1800, %v504
        %v1802 = vpop.permute.xlu0 %1801
        %1804 = vset.pattern.permute.xlu0 1
        %1805 = vperm.xlu0 %1804, %v505
        %v1806 = vpop.permute.xlu0 %1805
        %1808 = vset.pattern.permute.xlu0 1
        %1809 = vperm.xlu0 %1808, %v506
        %v1810 = vpop.permute.xlu0 %1809
        %1812 = vset.pattern.permute.xlu0 1
        %1813 = vperm.xlu0 %1812, %v507
        %v1814 = vpop.permute.xlu0 %1813
        %1816 = vset.pattern.permute.xlu0 1
        %1817 = vperm.xlu0 %1816, %v508
        %v1818 = vpop.permute.xlu0 %1817
        %1820 = vset.pattern.permute.xlu0 1
        %1821 = vperm.xlu0 %1820, %v509
        %v1822 = vpop.permute.xlu0 %1821
        %1824 = vset.pattern.permute.xlu0 1
        %1825 = vperm.xlu0 %1824, %v510
        %v1826 = vpop.permute.xlu0 %1825
        %1828 = vset.pattern.permute.xlu0 1
        %1829 = vperm.xlu0 %1828, %v511
        %v1830 = vpop.permute.xlu0 %1829
        %1832 = vset.pattern.permute.xlu0 1
        %1833 = vperm.xlu0 %1832, %v512
        %v1834 = vpop.permute.xlu0 %1833
        %1836 = vset.pattern.permute.xlu0 1
        %1837 = vperm.xlu0 %1836, %v513
        %v1838 = vpop.permute.xlu0 %1837
        %1840 = vset.pattern.permute.xlu0 1
        %1841 = vperm.xlu0 %1840, %v514
        %v1842 = vpop.permute.xlu0 %1841
        %1844 = vset.pattern.permute.xlu0 1
        %1845 = vperm.xlu0 %1844, %v515
        %v1846 = vpop.permute.xlu0 %1845
        %1848 = vset.pattern.permute.xlu0 1
        %1849 = vperm.xlu0 %1848, %v516
        %v1850 = vpop.permute.xlu0 %1849
        %1852 = vset.pattern.permute.xlu0 1
        %1853 = vperm.xlu0 %1852, %v517
        %v1854 = vpop.permute.xlu0 %1853
        %1856 = vset.pattern.permute.xlu0 1
        %1857 = vperm.xlu0 %1856, %v518
        %v1858 = vpop.permute.xlu0 %1857
        %1860 = vset.pattern.permute.xlu0 1
        %1861 = vperm.xlu0 %1860, %v519
        %v1862 = vpop.permute.xlu0 %1861
        %1864 = vset.pattern.permute.xlu0 1
        %1865 = vperm.xlu0 %1864, %v520
        %v1866 = vpop.permute.xlu0 %1865
        %1868 = vset.pattern.permute.xlu0 1
        %1869 = vperm.xlu0 %1868, %v521
        %v1870 = vpop.permute.xlu0 %1869
        %1872 = vset.pattern.permute.xlu0 1
        %1873 = vperm.xlu0 %1872, %v522
        %v1874 = vpop.permute.xlu0 %1873
        %1876 = vset.pattern.permute.xlu0 1
        %1877 = vperm.xlu0 %1876, %v523
        %v1878 = vpop.permute.xlu0 %1877
        %1880 = vset.pattern.permute.xlu0 1
        %1881 = vperm.xlu0 %1880, %v524
        %v1882 = vpop.permute.xlu0 %1881
        %1884 = vset.pattern.permute.xlu0 1
        %1885 = vperm.xlu0 %1884, %v525
        %v1886 = vpop.permute.xlu0 %1885
        %1888 = vset.pattern.permute.xlu0 1
        %1889 = vperm.xlu0 %1888, %v526
        %v1890 = vpop.permute.xlu0 %1889
        %1892 = vset.pattern.permute.xlu0 1
        %1893 = vperm.xlu0 %1892, %v527
        %v1894 = vpop.permute.xlu0 %1893
        %1896 = vset.pattern.permute.xlu0 1
        %1897 = vperm.xlu0 %1896, %v528
        %v1898 = vpop.permute.xlu0 %1897
        %1900 = vset.pattern.permute.xlu0 1
        %1901 = vperm.xlu0 %1900, %v529
        %v1902 = vpop.permute.xlu0 %1901
        %1904 = vset.pattern.permute.xlu0 1
        %1905 = vperm.xlu0 %1904, %v530
        %v1906 = vpop.permute.xlu0 %1905
        %1908 = vset.pattern.permute.xlu0 1
        %1909 = vperm.xlu0 %1908, %v531
        %v1910 = vpop.permute.xlu0 %1909
        %1912 = vset.pattern.permute.xlu0 1
        %1913 = vperm.xlu0 %1912, %v532
        %v1914 = vpop.permute.xlu0 %1913
        %1916 = vset.pattern.permute.xlu0 1
        %1917 = vperm.xlu0 %1916, %v533
        %v1918 = vpop.permute.xlu0 %1917
        %1920 = vset.pattern.permute.xlu0 1
        %1921 = vperm.xlu0 %1920, %v534
        %v1922 = vpop.permute.xlu0 %1921
        %1924 = vset.pattern.permute.xlu0 1
        %1925 = vperm.xlu0 %1924, %v535
        %v1926 = vpop.permute.xlu0 %1925
        %1928 = vset.pattern.permute.xlu0 1
        %1929 = vperm.xlu0 %1928, %v536
        %v1930 = vpop.permute.xlu0 %1929
        %1932 = vset.pattern.permute.xlu0 1
        %1933 = vperm.xlu0 %1932, %v537
        %v1934 = vpop.permute.xlu0 %1933
        %1936 = vset.pattern.permute.xlu0 1
        %1937 = vperm.xlu0 %1936, %v538
        %v1938 = vpop.permute.xlu0 %1937
        %1940 = vset.pattern.permute.xlu0 1
        %1941 = vperm.xlu0 %1940, %v539
        %v1942 = vpop.permute.xlu0 %1941
        %1944 = vset.pattern.permute.xlu0 1
        %1945 = vperm.xlu0 %1944, %v540
        %v1946 = vpop.permute.xlu0 %1945
        %1948 = vset.pattern.permute.xlu0 1
        %1949 = vperm.xlu0 %1948, %v541
        %v1950 = vpop.permute.xlu0 %1949
        %1952 = vset.pattern.permute.xlu0 1
        %1953 = vperm.xlu0 %1952, %v542
        %v1954 = vpop.permute.xlu0 %1953
        %1956 = vset.pattern.permute.xlu0 1
        %1957 = vperm.xlu0 %1956, %v543
        %v1958 = vpop.permute.xlu0 %1957
        %1960 = vset.pattern.permute.xlu0 1
        %1961 = vperm.xlu0 %1960, %v544
        %v1962 = vpop.permute.xlu0 %1961
        %1964 = vset.pattern.permute.xlu0 1
        %1965 = vperm.xlu0 %1964, %v545
        %v1966 = vpop.permute.xlu0 %1965
        %v1968 = vperm.slane %v416, 1
        %v1969 = vperm.slane %v416, 5
        %v1970 = vperm.slane %v417, 1
        %v1971 = vperm.slane %v417, 5
        %v1976 = vperm.slane %v1968, 1
        %v1977 = vperm.slane %v1969, 1
        %v1978 = vperm.slane %v1970, 1
        %v1979 = vperm.slane %v1971, 1
        %v1980 = vmul.f32 %v1714, %v1976
        %v1981 = vmul.f32 %v1714, %v1977
        %v1982 = vmul.f32 %v1714, %v1978
        %v1983 = vmul.f32 %v1714, %v1979
        %v1984 = vmul.f32 %v1718, %v1976
        %v1985 = vmul.f32 %v1718, %v1977
        %v1986 = vmul.f32 %v1718, %v1978
        %v1987 = vmul.f32 %v1718, %v1979
        %v1988 = vmul.f32 %v1722, %v1976
        %v1989 = vmul.f32 %v1722, %v1977
        %v1990 = vmul.f32 %v1722, %v1978
        %v1991 = vmul.f32 %v1722, %v1979
        %v1992 = vmul.f32 %v1726, %v1976
        %v1993 = vmul.f32 %v1726, %v1977
        %v1994 = vmul.f32 %v1726, %v1978
        %v1995 = vmul.f32 %v1726, %v1979
        %v1996 = vmul.f32 %v1730, %v1976
        %v1997 = vmul.f32 %v1730, %v1977
        %v1998 = vmul.f32 %v1730, %v1978
        %v1999 = vmul.f32 %v1730, %v1979
        %v2000 = vmul.f32 %v1734, %v1976
        %v2001 = vmul.f32 %v1734, %v1977
        %v2002 = vmul.f32 %v1734, %v1978
        %v2003 = vmul.f32 %v1734, %v1979
        %v2004 = vmul.f32 %v1738, %v1976
        %v2005 = vmul.f32 %v1738, %v1977
        %v2006 = vmul.f32 %v1738, %v1978
        %v2007 = vmul.f32 %v1738, %v1979
        %v2008 = vmul.f32 %v1742, %v1976
        %v2009 = vmul.f32 %v1742, %v1977
        %v2010 = vmul.f32 %v1742, %v1978
        %v2011 = vmul.f32 %v1742, %v1979
        %v2012 = vmul.f32 %v1746, %v1976
        %v2013 = vmul.f32 %v1746, %v1977
        %v2014 = vmul.f32 %v1746, %v1978
        %v2015 = vmul.f32 %v1746, %v1979
        %v2016 = vmul.f32 %v1750, %v1976
        %v2017 = vmul.f32 %v1750, %v1977
        %v2018 = vmul.f32 %v1750, %v1978
        %v2019 = vmul.f32 %v1750, %v1979
        %v2020 = vmul.f32 %v1754, %v1976
        %v2021 = vmul.f32 %v1754, %v1977
        %v2022 = vmul.f32 %v1754, %v1978
        %v2023 = vmul.f32 %v1754, %v1979
        %v2024 = vmul.f32 %v1758, %v1976
        %v2025 = vmul.f32 %v1758, %v1977
        %v2026 = vmul.f32 %v1758, %v1978
        %v2027 = vmul.f32 %v1758, %v1979
        %v2028 = vmul.f32 %v1762, %v1976
        %v2029 = vmul.f32 %v1762, %v1977
        %v2030 = vmul.f32 %v1762, %v1978
        %v2031 = vmul.f32 %v1762, %v1979
        %v2032 = vmul.f32 %v1766, %v1976
        %v2033 = vmul.f32 %v1766, %v1977
        %v2034 = vmul.f32 %v1766, %v1978
        %v2035 = vmul.f32 %v1766, %v1979
        %v2036 = vmul.f32 %v1770, %v1976
        %v2037 = vmul.f32 %v1770, %v1977
        %v2038 = vmul.f32 %v1770, %v1978
        %v2039 = vmul.f32 %v1770, %v1979
        %v2040 = vmul.f32 %v1774, %v1976
        %v2041 = vmul.f32 %v1774, %v1977
        %v2042 = vmul.f32 %v1774, %v1978
        %v2043 = vmul.f32 %v1774, %v1979
        %v2044 = vmul.f32 %v1778, %v1976
        %v2045 = vmul.f32 %v1778, %v1977
        %v2046 = vmul.f32 %v1778, %v1978
        %v2047 = vmul.f32 %v1778, %v1979
        %v2048 = vmul.f32 %v1782, %v1976
        %v2049 = vmul.f32 %v1782, %v1977
        %v2050 = vmul.f32 %v1782, %v1978
        %v2051 = vmul.f32 %v1782, %v1979
        %v2052 = vmul.f32 %v1786, %v1976
        %v2053 = vmul.f32 %v1786, %v1977
        %v2054 = vmul.f32 %v1786, %v1978
        %v2055 = vmul.f32 %v1786, %v1979
        %v2056 = vmul.f32 %v1790, %v1976
        %v2057 = vmul.f32 %v1790, %v1977
        %v2058 = vmul.f32 %v1790, %v1978
        %v2059 = vmul.f32 %v1790, %v1979
        %v2060 = vmul.f32 %v1794, %v1976
        %v2061 = vmul.f32 %v1794, %v1977
        %v2062 = vmul.f32 %v1794, %v1978
        %v2063 = vmul.f32 %v1794, %v1979
        %v2064 = vmul.f32 %v1798, %v1976
        %v2065 = vmul.f32 %v1798, %v1977
        %v2066 = vmul.f32 %v1798, %v1978
        %v2067 = vmul.f32 %v1798, %v1979
        %v2068 = vmul.f32 %v1802, %v1976
        %v2069 = vmul.f32 %v1802, %v1977
        %v2070 = vmul.f32 %v1802, %v1978
        %v2071 = vmul.f32 %v1802, %v1979
        %v2072 = vmul.f32 %v1806, %v1976
        %v2073 = vmul.f32 %v1806, %v1977
        %v2074 = vmul.f32 %v1806, %v1978
        %v2075 = vmul.f32 %v1806, %v1979
        %v2076 = vmul.f32 %v1810, %v1976
        %v2077 = vmul.f32 %v1810, %v1977
        %v2078 = vmul.f32 %v1810, %v1978
        %v2079 = vmul.f32 %v1810, %v1979
        %v2080 = vmul.f32 %v1814, %v1976
        %v2081 = vmul.f32 %v1814, %v1977
        %v2082 = vmul.f32 %v1814, %v1978
        %v2083 = vmul.f32 %v1814, %v1979
        %v2084 = vmul.f32 %v1818, %v1976
        %v2085 = vmul.f32 %v1818, %v1977
        %v2086 = vmul.f32 %v1818, %v1978
        %v2087 = vmul.f32 %v1818, %v1979
        %v2088 = vmul.f32 %v1822, %v1976
        %v2089 = vmul.f32 %v1822, %v1977
        %v2090 = vmul.f32 %v1822, %v1978
        %v2091 = vmul.f32 %v1822, %v1979
        %v2092 = vmul.f32 %v1826, %v1976
        %v2093 = vmul.f32 %v1826, %v1977
        %v2094 = vmul.f32 %v1826, %v1978
        %v2095 = vmul.f32 %v1826, %v1979
        %v2096 = vmul.f32 %v1830, %v1976
        %v2097 = vmul.f32 %v1830, %v1977
        %v2098 = vmul.f32 %v1830, %v1978
        %v2099 = vmul.f32 %v1830, %v1979
        %v2100 = vmul.f32 %v1834, %v1976
        %v2101 = vmul.f32 %v1834, %v1977
        %v2102 = vmul.f32 %v1834, %v1978
        %v2103 = vmul.f32 %v1834, %v1979
        %v2104 = vmul.f32 %v1838, %v1976
        %v2105 = vmul.f32 %v1838, %v1977
        %v2106 = vmul.f32 %v1838, %v1978
        %v2107 = vmul.f32 %v1838, %v1979
        %v2108 = vmul.f32 %v1842, %v1976
        %v2109 = vmul.f32 %v1842, %v1977
        %v2110 = vmul.f32 %v1842, %v1978
        %v2111 = vmul.f32 %v1842, %v1979
        %v2112 = vmul.f32 %v1846, %v1976
        %v2113 = vmul.f32 %v1846, %v1977
        %v2114 = vmul.f32 %v1846, %v1978
        %v2115 = vmul.f32 %v1846, %v1979
        %v2116 = vmul.f32 %v1850, %v1976
        %v2117 = vmul.f32 %v1850, %v1977
        %v2118 = vmul.f32 %v1850, %v1978
        %v2119 = vmul.f32 %v1850, %v1979
        %v2120 = vmul.f32 %v1854, %v1976
        %v2121 = vmul.f32 %v1854, %v1977
        %v2122 = vmul.f32 %v1854, %v1978
        %v2123 = vmul.f32 %v1854, %v1979
        %v2124 = vmul.f32 %v1858, %v1976
        %v2125 = vmul.f32 %v1858, %v1977
        %v2126 = vmul.f32 %v1858, %v1978
        %v2127 = vmul.f32 %v1858, %v1979
        %v2128 = vmul.f32 %v1862, %v1976
        %v2129 = vmul.f32 %v1862, %v1977
        %v2130 = vmul.f32 %v1862, %v1978
        %v2131 = vmul.f32 %v1862, %v1979
        %v2132 = vmul.f32 %v1866, %v1976
        %v2133 = vmul.f32 %v1866, %v1977
        %v2134 = vmul.f32 %v1866, %v1978
        %v2135 = vmul.f32 %v1866, %v1979
        %v2136 = vmul.f32 %v1870, %v1976
        %v2137 = vmul.f32 %v1870, %v1977
        %v2138 = vmul.f32 %v1870, %v1978
        %v2139 = vmul.f32 %v1870, %v1979
        %v2140 = vmul.f32 %v1874, %v1976
        %v2141 = vmul.f32 %v1874, %v1977
        %v2142 = vmul.f32 %v1874, %v1978
        %v2143 = vmul.f32 %v1874, %v1979
        %v2144 = vmul.f32 %v1878, %v1976
        %v2145 = vmul.f32 %v1878, %v1977
        %v2146 = vmul.f32 %v1878, %v1978
        %v2147 = vmul.f32 %v1878, %v1979
        %v2148 = vmul.f32 %v1882, %v1976
        %v2149 = vmul.f32 %v1882, %v1977
        %v2150 = vmul.f32 %v1882, %v1978
        %v2151 = vmul.f32 %v1882, %v1979
        %v2152 = vmul.f32 %v1886, %v1976
        %v2153 = vmul.f32 %v1886, %v1977
        %v2154 = vmul.f32 %v1886, %v1978
        %v2155 = vmul.f32 %v1886, %v1979
        %v2156 = vmul.f32 %v1890, %v1976
        %v2157 = vmul.f32 %v1890, %v1977
        %v2158 = vmul.f32 %v1890, %v1978
        %v2159 = vmul.f32 %v1890, %v1979
        %v2160 = vmul.f32 %v1894, %v1976
        %v2161 = vmul.f32 %v1894, %v1977
        %v2162 = vmul.f32 %v1894, %v1978
        %v2163 = vmul.f32 %v1894, %v1979
        %v2164 = vmul.f32 %v1898, %v1976
        %v2165 = vmul.f32 %v1898, %v1977
        %v2166 = vmul.f32 %v1898, %v1978
        %v2167 = vmul.f32 %v1898, %v1979
        %v2168 = vmul.f32 %v1902, %v1976
        %v2169 = vmul.f32 %v1902, %v1977
        %v2170 = vmul.f32 %v1902, %v1978
        %v2171 = vmul.f32 %v1902, %v1979
        %v2172 = vmul.f32 %v1906, %v1976
        %v2173 = vmul.f32 %v1906, %v1977
        %v2174 = vmul.f32 %v1906, %v1978
        %v2175 = vmul.f32 %v1906, %v1979
        %v2176 = vmul.f32 %v1910, %v1976
        %v2177 = vmul.f32 %v1910, %v1977
        %v2178 = vmul.f32 %v1910, %v1978
        %v2179 = vmul.f32 %v1910, %v1979
        %v2180 = vmul.f32 %v1914, %v1976
        %v2181 = vmul.f32 %v1914, %v1977
        %v2182 = vmul.f32 %v1914, %v1978
        %v2183 = vmul.f32 %v1914, %v1979
        %v2184 = vmul.f32 %v1918, %v1976
        %v2185 = vmul.f32 %v1918, %v1977
        %v2186 = vmul.f32 %v1918, %v1978
        %v2187 = vmul.f32 %v1918, %v1979
        %v2188 = vmul.f32 %v1922, %v1976
        %v2189 = vmul.f32 %v1922, %v1977
        %v2190 = vmul.f32 %v1922, %v1978
        %v2191 = vmul.f32 %v1922, %v1979
        %v2192 = vmul.f32 %v1926, %v1976
        %v2193 = vmul.f32 %v1926, %v1977
        %v2194 = vmul.f32 %v1926, %v1978
        %v2195 = vmul.f32 %v1926, %v1979
        %v2196 = vmul.f32 %v1930, %v1976
        %v2197 = vmul.f32 %v1930, %v1977
        %v2198 = vmul.f32 %v1930, %v1978
        %v2199 = vmul.f32 %v1930, %v1979
        %v2200 = vmul.f32 %v1934, %v1976
        %v2201 = vmul.f32 %v1934, %v1977
        %v2202 = vmul.f32 %v1934, %v1978
        %v2203 = vmul.f32 %v1934, %v1979
        %v2204 = vmul.f32 %v1938, %v1976
        %v2205 = vmul.f32 %v1938, %v1977
        %v2206 = vmul.f32 %v1938, %v1978
        %v2207 = vmul.f32 %v1938, %v1979
        %v2208 = vmul.f32 %v1942, %v1976
        %v2209 = vmul.f32 %v1942, %v1977
        %v2210 = vmul.f32 %v1942, %v1978
        %v2211 = vmul.f32 %v1942, %v1979
        %v2212 = vmul.f32 %v1946, %v1976
        %v2213 = vmul.f32 %v1946, %v1977
        %v2214 = vmul.f32 %v1946, %v1978
        %v2215 = vmul.f32 %v1946, %v1979
        %v2216 = vmul.f32 %v1950, %v1976
        %v2217 = vmul.f32 %v1950, %v1977
        %v2218 = vmul.f32 %v1950, %v1978
        %v2219 = vmul.f32 %v1950, %v1979
        %v2220 = vmul.f32 %v1954, %v1976
        %v2221 = vmul.f32 %v1954, %v1977
        %v2222 = vmul.f32 %v1954, %v1978
        %v2223 = vmul.f32 %v1954, %v1979
        %v2224 = vmul.f32 %v1958, %v1976
        %v2225 = vmul.f32 %v1958, %v1977
        %v2226 = vmul.f32 %v1958, %v1978
        %v2227 = vmul.f32 %v1958, %v1979
        %v2228 = vmul.f32 %v1962, %v1976
        %v2229 = vmul.f32 %v1962, %v1977
        %v2230 = vmul.f32 %v1962, %v1978
        %v2231 = vmul.f32 %v1962, %v1979
        %v2232 = vmul.f32 %v1966, %v1976
        %v2233 = vmul.f32 %v1966, %v1977
        %v2234 = vmul.f32 %v1966, %v1978
        %v2235 = vmul.f32 %v1966, %v1979
        %v2236 = vadd.f32 %v1456, %v1980
        %v2237 = vadd.f32 %v1457, %v1981
        %v2238 = vadd.f32 %v1458, %v1982
        %v2239 = vadd.f32 %v1459, %v1983
        %v2240 = vadd.f32 %v1460, %v1984
        %v2241 = vadd.f32 %v1461, %v1985
        %v2242 = vadd.f32 %v1462, %v1986
        %v2243 = vadd.f32 %v1463, %v1987
        %v2244 = vadd.f32 %v1464, %v1988
        %v2245 = vadd.f32 %v1465, %v1989
        %v2246 = vadd.f32 %v1466, %v1990
        %v2247 = vadd.f32 %v1467, %v1991
        %v2248 = vadd.f32 %v1468, %v1992
        %v2249 = vadd.f32 %v1469, %v1993
        %v2250 = vadd.f32 %v1470, %v1994
        %v2251 = vadd.f32 %v1471, %v1995
        %v2252 = vadd.f32 %v1472, %v1996
        %v2253 = vadd.f32 %v1473, %v1997
        %v2254 = vadd.f32 %v1474, %v1998
        %v2255 = vadd.f32 %v1475, %v1999
        %v2256 = vadd.f32 %v1476, %v2000
        %v2257 = vadd.f32 %v1477, %v2001
        %v2258 = vadd.f32 %v1478, %v2002
        %v2259 = vadd.f32 %v1479, %v2003
        %v2260 = vadd.f32 %v1480, %v2004
        %v2261 = vadd.f32 %v1481, %v2005
        %v2262 = vadd.f32 %v1482, %v2006
        %v2263 = vadd.f32 %v1483, %v2007
        %v2264 = vadd.f32 %v1484, %v2008
        %v2265 = vadd.f32 %v1485, %v2009
        %v2266 = vadd.f32 %v1486, %v2010
        %v2267 = vadd.f32 %v1487, %v2011
        %v2268 = vadd.f32 %v1488, %v2012
        %v2269 = vadd.f32 %v1489, %v2013
        %v2270 = vadd.f32 %v1490, %v2014
        %v2271 = vadd.f32 %v1491, %v2015
        %v2272 = vadd.f32 %v1492, %v2016
        %v2273 = vadd.f32 %v1493, %v2017
        %v2274 = vadd.f32 %v1494, %v2018
        %v2275 = vadd.f32 %v1495, %v2019
        %v2276 = vadd.f32 %v1496, %v2020
        %v2277 = vadd.f32 %v1497, %v2021
        %v2278 = vadd.f32 %v1498, %v2022
        %v2279 = vadd.f32 %v1499, %v2023
        %v2280 = vadd.f32 %v1500, %v2024
        %v2281 = vadd.f32 %v1501, %v2025
        %v2282 = vadd.f32 %v1502, %v2026
        %v2283 = vadd.f32 %v1503, %v2027
        %v2284 = vadd.f32 %v1504, %v2028
        %v2285 = vadd.f32 %v1505, %v2029
        %v2286 = vadd.f32 %v1506, %v2030
        %v2287 = vadd.f32 %v1507, %v2031
        %v2288 = vadd.f32 %v1508, %v2032
        %v2289 = vadd.f32 %v1509, %v2033
        %v2290 = vadd.f32 %v1510, %v2034
        %v2291 = vadd.f32 %v1511, %v2035
        %v2292 = vadd.f32 %v1512, %v2036
        %v2293 = vadd.f32 %v1513, %v2037
        %v2294 = vadd.f32 %v1514, %v2038
        %v2295 = vadd.f32 %v1515, %v2039
        %v2296 = vadd.f32 %v1516, %v2040
        %v2297 = vadd.f32 %v1517, %v2041
        %v2298 = vadd.f32 %v1518, %v2042
        %v2299 = vadd.f32 %v1519, %v2043
        %v2300 = vadd.f32 %v1520, %v2044
        %v2301 = vadd.f32 %v1521, %v2045
        %v2302 = vadd.f32 %v1522, %v2046
        %v2303 = vadd.f32 %v1523, %v2047
        %v2304 = vadd.f32 %v1524, %v2048
        %v2305 = vadd.f32 %v1525, %v2049
        %v2306 = vadd.f32 %v1526, %v2050
        %v2307 = vadd.f32 %v1527, %v2051
        %v2308 = vadd.f32 %v1528, %v2052
        %v2309 = vadd.f32 %v1529, %v2053
        %v2310 = vadd.f32 %v1530, %v2054
        %v2311 = vadd.f32 %v1531, %v2055
        %v2312 = vadd.f32 %v1532, %v2056
        %v2313 = vadd.f32 %v1533, %v2057
        %v2314 = vadd.f32 %v1534, %v2058
        %v2315 = vadd.f32 %v1535, %v2059
        %v2316 = vadd.f32 %v1536, %v2060
        %v2317 = vadd.f32 %v1537, %v2061
        %v2318 = vadd.f32 %v1538, %v2062
        %v2319 = vadd.f32 %v1539, %v2063
        %v2320 = vadd.f32 %v1540, %v2064
        %v2321 = vadd.f32 %v1541, %v2065
        %v2322 = vadd.f32 %v1542, %v2066
        %v2323 = vadd.f32 %v1543, %v2067
        %v2324 = vadd.f32 %v1544, %v2068
        %v2325 = vadd.f32 %v1545, %v2069
        %v2326 = vadd.f32 %v1546, %v2070
        %v2327 = vadd.f32 %v1547, %v2071
        %v2328 = vadd.f32 %v1548, %v2072
        %v2329 = vadd.f32 %v1549, %v2073
        %v2330 = vadd.f32 %v1550, %v2074
        %v2331 = vadd.f32 %v1551, %v2075
        %v2332 = vadd.f32 %v1552, %v2076
        %v2333 = vadd.f32 %v1553, %v2077
        %v2334 = vadd.f32 %v1554, %v2078
        %v2335 = vadd.f32 %v1555, %v2079
        %v2336 = vadd.f32 %v1556, %v2080
        %v2337 = vadd.f32 %v1557, %v2081
        %v2338 = vadd.f32 %v1558, %v2082
        %v2339 = vadd.f32 %v1559, %v2083
        %v2340 = vadd.f32 %v1560, %v2084
        %v2341 = vadd.f32 %v1561, %v2085
        %v2342 = vadd.f32 %v1562, %v2086
        %v2343 = vadd.f32 %v1563, %v2087
        %v2344 = vadd.f32 %v1564, %v2088
        %v2345 = vadd.f32 %v1565, %v2089
        %v2346 = vadd.f32 %v1566, %v2090
        %v2347 = vadd.f32 %v1567, %v2091
        %v2348 = vadd.f32 %v1568, %v2092
        %v2349 = vadd.f32 %v1569, %v2093
        %v2350 = vadd.f32 %v1570, %v2094
        %v2351 = vadd.f32 %v1571, %v2095
        %v2352 = vadd.f32 %v1572, %v2096
        %v2353 = vadd.f32 %v1573, %v2097
        %v2354 = vadd.f32 %v1574, %v2098
        %v2355 = vadd.f32 %v1575, %v2099
        %v2356 = vadd.f32 %v1576, %v2100
        %v2357 = vadd.f32 %v1577, %v2101
        %v2358 = vadd.f32 %v1578, %v2102
        %v2359 = vadd.f32 %v1579, %v2103
        %v2360 = vadd.f32 %v1580, %v2104
        %v2361 = vadd.f32 %v1581, %v2105
        %v2362 = vadd.f32 %v1582, %v2106
        %v2363 = vadd.f32 %v1583, %v2107
        %v2364 = vadd.f32 %v1584, %v2108
        %v2365 = vadd.f32 %v1585, %v2109
        %v2366 = vadd.f32 %v1586, %v2110
        %v2367 = vadd.f32 %v1587, %v2111
        %v2368 = vadd.f32 %v1588, %v2112
        %v2369 = vadd.f32 %v1589, %v2113
        %v2370 = vadd.f32 %v1590, %v2114
        %v2371 = vadd.f32 %v1591, %v2115
        %v2372 = vadd.f32 %v1592, %v2116
        %v2373 = vadd.f32 %v1593, %v2117
        %v2374 = vadd.f32 %v1594, %v2118
        %v2375 = vadd.f32 %v1595, %v2119
        %v2376 = vadd.f32 %v1596, %v2120
        %v2377 = vadd.f32 %v1597, %v2121
        %v2378 = vadd.f32 %v1598, %v2122
        %v2379 = vadd.f32 %v1599, %v2123
        %v2380 = vadd.f32 %v1600, %v2124
        %v2381 = vadd.f32 %v1601, %v2125
        %v2382 = vadd.f32 %v1602, %v2126
        %v2383 = vadd.f32 %v1603, %v2127
        %v2384 = vadd.f32 %v1604, %v2128
        %v2385 = vadd.f32 %v1605, %v2129
        %v2386 = vadd.f32 %v1606, %v2130
        %v2387 = vadd.f32 %v1607, %v2131
        %v2388 = vadd.f32 %v1608, %v2132
        %v2389 = vadd.f32 %v1609, %v2133
        %v2390 = vadd.f32 %v1610, %v2134
        %v2391 = vadd.f32 %v1611, %v2135
        %v2392 = vadd.f32 %v1612, %v2136
        %v2393 = vadd.f32 %v1613, %v2137
        %v2394 = vadd.f32 %v1614, %v2138
        %v2395 = vadd.f32 %v1615, %v2139
        %v2396 = vadd.f32 %v1616, %v2140
        %v2397 = vadd.f32 %v1617, %v2141
        %v2398 = vadd.f32 %v1618, %v2142
        %v2399 = vadd.f32 %v1619, %v2143
        %v2400 = vadd.f32 %v1620, %v2144
        %v2401 = vadd.f32 %v1621, %v2145
        %v2402 = vadd.f32 %v1622, %v2146
        %v2403 = vadd.f32 %v1623, %v2147
        %v2404 = vadd.f32 %v1624, %v2148
        %v2405 = vadd.f32 %v1625, %v2149
        %v2406 = vadd.f32 %v1626, %v2150
        %v2407 = vadd.f32 %v1627, %v2151
        %v2408 = vadd.f32 %v1628, %v2152
        %v2409 = vadd.f32 %v1629, %v2153
        %v2410 = vadd.f32 %v1630, %v2154
        %v2411 = vadd.f32 %v1631, %v2155
        %v2412 = vadd.f32 %v1632, %v2156
        %v2413 = vadd.f32 %v1633, %v2157
        %v2414 = vadd.f32 %v1634, %v2158
        %v2415 = vadd.f32 %v1635, %v2159
        %v2416 = vadd.f32 %v1636, %v2160
        %v2417 = vadd.f32 %v1637, %v2161
        %v2418 = vadd.f32 %v1638, %v2162
        %v2419 = vadd.f32 %v1639, %v2163
        %v2420 = vadd.f32 %v1640, %v2164
        %v2421 = vadd.f32 %v1641, %v2165
        %v2422 = vadd.f32 %v1642, %v2166
        %v2423 = vadd.f32 %v1643, %v2167
        %v2424 = vadd.f32 %v1644, %v2168
        %v2425 = vadd.f32 %v1645, %v2169
        %v2426 = vadd.f32 %v1646, %v2170
        %v2427 = vadd.f32 %v1647, %v2171
        %v2428 = vadd.f32 %v1648, %v2172
        %v2429 = vadd.f32 %v1649, %v2173
        %v2430 = vadd.f32 %v1650, %v2174
        %v2431 = vadd.f32 %v1651, %v2175
        %v2432 = vadd.f32 %v1652, %v2176
        %v2433 = vadd.f32 %v1653, %v2177
        %v2434 = vadd.f32 %v1654, %v2178
        %v2435 = vadd.f32 %v1655, %v2179
        %v2436 = vadd.f32 %v1656, %v2180
        %v2437 = vadd.f32 %v1657, %v2181
        %v2438 = vadd.f32 %v1658, %v2182
        %v2439 = vadd.f32 %v1659, %v2183
        %v2440 = vadd.f32 %v1660, %v2184
        %v2441 = vadd.f32 %v1661, %v2185
        %v2442 = vadd.f32 %v1662, %v2186
        %v2443 = vadd.f32 %v1663, %v2187
        %v2444 = vadd.f32 %v1664, %v2188
        %v2445 = vadd.f32 %v1665, %v2189
        %v2446 = vadd.f32 %v1666, %v2190
        %v2447 = vadd.f32 %v1667, %v2191
        %v2448 = vadd.f32 %v1668, %v2192
        %v2449 = vadd.f32 %v1669, %v2193
        %v2450 = vadd.f32 %v1670, %v2194
        %v2451 = vadd.f32 %v1671, %v2195
        %v2452 = vadd.f32 %v1672, %v2196
        %v2453 = vadd.f32 %v1673, %v2197
        %v2454 = vadd.f32 %v1674, %v2198
        %v2455 = vadd.f32 %v1675, %v2199
        %v2456 = vadd.f32 %v1676, %v2200
        %v2457 = vadd.f32 %v1677, %v2201
        %v2458 = vadd.f32 %v1678, %v2202
        %v2459 = vadd.f32 %v1679, %v2203
        %v2460 = vadd.f32 %v1680, %v2204
        %v2461 = vadd.f32 %v1681, %v2205
        %v2462 = vadd.f32 %v1682, %v2206
        %v2463 = vadd.f32 %v1683, %v2207
        %v2464 = vadd.f32 %v1684, %v2208
        %v2465 = vadd.f32 %v1685, %v2209
        %v2466 = vadd.f32 %v1686, %v2210
        %v2467 = vadd.f32 %v1687, %v2211
        %v2468 = vadd.f32 %v1688, %v2212
        %v2469 = vadd.f32 %v1689, %v2213
        %v2470 = vadd.f32 %v1690, %v2214
        %v2471 = vadd.f32 %v1691, %v2215
        %v2472 = vadd.f32 %v1692, %v2216
        %v2473 = vadd.f32 %v1693, %v2217
        %v2474 = vadd.f32 %v1694, %v2218
        %v2475 = vadd.f32 %v1695, %v2219
        %v2476 = vadd.f32 %v1696, %v2220
        %v2477 = vadd.f32 %v1697, %v2221
        %v2478 = vadd.f32 %v1698, %v2222
        %v2479 = vadd.f32 %v1699, %v2223
        %v2480 = vadd.f32 %v1700, %v2224
        %v2481 = vadd.f32 %v1701, %v2225
        %v2482 = vadd.f32 %v1702, %v2226
        %v2483 = vadd.f32 %v1703, %v2227
        %v2484 = vadd.f32 %v1704, %v2228
        %v2485 = vadd.f32 %v1705, %v2229
        %v2486 = vadd.f32 %v1706, %v2230
        %v2487 = vadd.f32 %v1707, %v2231
        %v2488 = vadd.f32 %v1708, %v2232
        %v2489 = vadd.f32 %v1709, %v2233
        %v2490 = vadd.f32 %v1710, %v2234
        %v2491 = vadd.f32 %v1711, %v2235
        %2492 = vset.pattern.permute.xlu0 2
        %2493 = vperm.xlu0 %2492, %v482
        %v2494 = vpop.permute.xlu0 %2493
        %2496 = vset.pattern.permute.xlu0 2
        %2497 = vperm.xlu0 %2496, %v483
        %v2498 = vpop.permute.xlu0 %2497
        %2500 = vset.pattern.permute.xlu0 2
        %2501 = vperm.xlu0 %2500, %v484
        %v2502 = vpop.permute.xlu0 %2501
        %2504 = vset.pattern.permute.xlu0 2
        %2505 = vperm.xlu0 %2504, %v485
        %v2506 = vpop.permute.xlu0 %2505
        %2508 = vset.pattern.permute.xlu0 2
        %2509 = vperm.xlu0 %2508, %v486
        %v2510 = vpop.permute.xlu0 %2509
        %2512 = vset.pattern.permute.xlu0 2
        %2513 = vperm.xlu0 %2512, %v487
        %v2514 = vpop.permute.xlu0 %2513
        %2516 = vset.pattern.permute.xlu0 2
        %2517 = vperm.xlu0 %2516, %v488
        %v2518 = vpop.permute.xlu0 %2517
        %2520 = vset.pattern.permute.xlu0 2
        %2521 = vperm.xlu0 %2520, %v489
        %v2522 = vpop.permute.xlu0 %2521
        %2524 = vset.pattern.permute.xlu0 2
        %2525 = vperm.xlu0 %2524, %v490
        %v2526 = vpop.permute.xlu0 %2525
        %2528 = vset.pattern.permute.xlu0 2
        %2529 = vperm.xlu0 %2528, %v491
        %v2530 = vpop.permute.xlu0 %2529
        %2532 = vset.pattern.permute.xlu0 2
        %2533 = vperm.xlu0 %2532, %v492
        %v2534 = vpop.permute.xlu0 %2533
        %2536 = vset.pattern.permute.xlu0 2
        %2537 = vperm.xlu0 %2536, %v493
        %v2538 = vpop.permute.xlu0 %2537
        %2540 = vset.pattern.permute.xlu0 2
        %2541 = vperm.xlu0 %2540, %v494
        %v2542 = vpop.permute.xlu0 %2541
        %2544 = vset.pattern.permute.xlu0 2
        %2545 = vperm.xlu0 %2544, %v495
        %v2546 = vpop.permute.xlu0 %2545
        %2548 = vset.pattern.permute.xlu0 2
        %2549 = vperm.xlu0 %2548, %v496
        %v2550 = vpop.permute.xlu0 %2549
        %2552 = vset.pattern.permute.xlu0 2
        %2553 = vperm.xlu0 %2552, %v497
        %v2554 = vpop.permute.xlu0 %2553
        %2556 = vset.pattern.permute.xlu0 2
        %2557 = vperm.xlu0 %2556, %v498
        %v2558 = vpop.permute.xlu0 %2557
        %2560 = vset.pattern.permute.xlu0 2
        %2561 = vperm.xlu0 %2560, %v499
        %v2562 = vpop.permute.xlu0 %2561
        %2564 = vset.pattern.permute.xlu0 2
        %2565 = vperm.xlu0 %2564, %v500
        %v2566 = vpop.permute.xlu0 %2565
        %2568 = vset.pattern.permute.xlu0 2
        %2569 = vperm.xlu0 %2568, %v501
        %v2570 = vpop.permute.xlu0 %2569
        %2572 = vset.pattern.permute.xlu0 2
        %2573 = vperm.xlu0 %2572, %v502
        %v2574 = vpop.permute.xlu0 %2573
        %2576 = vset.pattern.permute.xlu0 2
        %2577 = vperm.xlu0 %2576, %v503
        %v2578 = vpop.permute.xlu0 %2577
        %2580 = vset.pattern.permute.xlu0 2
        %2581 = vperm.xlu0 %2580, %v504
        %v2582 = vpop.permute.xlu0 %2581
        %2584 = vset.pattern.permute.xlu0 2
        %2585 = vperm.xlu0 %2584, %v505
        %v2586 = vpop.permute.xlu0 %2585
        %2588 = vset.pattern.permute.xlu0 2
        %2589 = vperm.xlu0 %2588, %v506
        %v2590 = vpop.permute.xlu0 %2589
        %2592 = vset.pattern.permute.xlu0 2
        %2593 = vperm.xlu0 %2592, %v507
        %v2594 = vpop.permute.xlu0 %2593
        %2596 = vset.pattern.permute.xlu0 2
        %2597 = vperm.xlu0 %2596, %v508
        %v2598 = vpop.permute.xlu0 %2597
        %2600 = vset.pattern.permute.xlu0 2
        %2601 = vperm.xlu0 %2600, %v509
        %v2602 = vpop.permute.xlu0 %2601
        %2604 = vset.pattern.permute.xlu0 2
        %2605 = vperm.xlu0 %2604, %v510
        %v2606 = vpop.permute.xlu0 %2605
        %2608 = vset.pattern.permute.xlu0 2
        %2609 = vperm.xlu0 %2608, %v511
        %v2610 = vpop.permute.xlu0 %2609
        %2612 = vset.pattern.permute.xlu0 2
        %2613 = vperm.xlu0 %2612, %v512
        %v2614 = vpop.permute.xlu0 %2613
        %2616 = vset.pattern.permute.xlu0 2
        %2617 = vperm.xlu0 %2616, %v513
        %v2618 = vpop.permute.xlu0 %2617
        %2620 = vset.pattern.permute.xlu0 2
        %2621 = vperm.xlu0 %2620, %v514
        %v2622 = vpop.permute.xlu0 %2621
        %2624 = vset.pattern.permute.xlu0 2
        %2625 = vperm.xlu0 %2624, %v515
        %v2626 = vpop.permute.xlu0 %2625
        %2628 = vset.pattern.permute.xlu0 2
        %2629 = vperm.xlu0 %2628, %v516
        %v2630 = vpop.permute.xlu0 %2629
        %2632 = vset.pattern.permute.xlu0 2
        %2633 = vperm.xlu0 %2632, %v517
        %v2634 = vpop.permute.xlu0 %2633
        %2636 = vset.pattern.permute.xlu0 2
        %2637 = vperm.xlu0 %2636, %v518
        %v2638 = vpop.permute.xlu0 %2637
        %2640 = vset.pattern.permute.xlu0 2
        %2641 = vperm.xlu0 %2640, %v519
        %v2642 = vpop.permute.xlu0 %2641
        %2644 = vset.pattern.permute.xlu0 2
        %2645 = vperm.xlu0 %2644, %v520
        %v2646 = vpop.permute.xlu0 %2645
        %2648 = vset.pattern.permute.xlu0 2
        %2649 = vperm.xlu0 %2648, %v521
        %v2650 = vpop.permute.xlu0 %2649
        %2652 = vset.pattern.permute.xlu0 2
        %2653 = vperm.xlu0 %2652, %v522
        %v2654 = vpop.permute.xlu0 %2653
        %2656 = vset.pattern.permute.xlu0 2
        %2657 = vperm.xlu0 %2656, %v523
        %v2658 = vpop.permute.xlu0 %2657
        %2660 = vset.pattern.permute.xlu0 2
        %2661 = vperm.xlu0 %2660, %v524
        %v2662 = vpop.permute.xlu0 %2661
        %2664 = vset.pattern.permute.xlu0 2
        %2665 = vperm.xlu0 %2664, %v525
        %v2666 = vpop.permute.xlu0 %2665
        %2668 = vset.pattern.permute.xlu0 2
        %2669 = vperm.xlu0 %2668, %v526
        %v2670 = vpop.permute.xlu0 %2669
        %2672 = vset.pattern.permute.xlu0 2
        %2673 = vperm.xlu0 %2672, %v527
        %v2674 = vpop.permute.xlu0 %2673
        %2676 = vset.pattern.permute.xlu0 2
        %2677 = vperm.xlu0 %2676, %v528
        %v2678 = vpop.permute.xlu0 %2677
        %2680 = vset.pattern.permute.xlu0 2
        %2681 = vperm.xlu0 %2680, %v529
        %v2682 = vpop.permute.xlu0 %2681
        %2684 = vset.pattern.permute.xlu0 2
        %2685 = vperm.xlu0 %2684, %v530
        %v2686 = vpop.permute.xlu0 %2685
        %2688 = vset.pattern.permute.xlu0 2
        %2689 = vperm.xlu0 %2688, %v531
        %v2690 = vpop.permute.xlu0 %2689
        %2692 = vset.pattern.permute.xlu0 2
        %2693 = vperm.xlu0 %2692, %v532
        %v2694 = vpop.permute.xlu0 %2693
        %2696 = vset.pattern.permute.xlu0 2
        %2697 = vperm.xlu0 %2696, %v533
        %v2698 = vpop.permute.xlu0 %2697
        %2700 = vset.pattern.permute.xlu0 2
        %2701 = vperm.xlu0 %2700, %v534
        %v2702 = vpop.permute.xlu0 %2701
        %2704 = vset.pattern.permute.xlu0 2
        %2705 = vperm.xlu0 %2704, %v535
        %v2706 = vpop.permute.xlu0 %2705
        %2708 = vset.pattern.permute.xlu0 2
        %2709 = vperm.xlu0 %2708, %v536
        %v2710 = vpop.permute.xlu0 %2709
        %2712 = vset.pattern.permute.xlu0 2
        %2713 = vperm.xlu0 %2712, %v537
        %v2714 = vpop.permute.xlu0 %2713
        %2716 = vset.pattern.permute.xlu0 2
        %2717 = vperm.xlu0 %2716, %v538
        %v2718 = vpop.permute.xlu0 %2717
        %2720 = vset.pattern.permute.xlu0 2
        %2721 = vperm.xlu0 %2720, %v539
        %v2722 = vpop.permute.xlu0 %2721
        %2724 = vset.pattern.permute.xlu0 2
        %2725 = vperm.xlu0 %2724, %v540
        %v2726 = vpop.permute.xlu0 %2725
        %2728 = vset.pattern.permute.xlu0 2
        %2729 = vperm.xlu0 %2728, %v541
        %v2730 = vpop.permute.xlu0 %2729
        %2732 = vset.pattern.permute.xlu0 2
        %2733 = vperm.xlu0 %2732, %v542
        %v2734 = vpop.permute.xlu0 %2733
        %2736 = vset.pattern.permute.xlu0 2
        %2737 = vperm.xlu0 %2736, %v543
        %v2738 = vpop.permute.xlu0 %2737
        %2740 = vset.pattern.permute.xlu0 2
        %2741 = vperm.xlu0 %2740, %v544
        %v2742 = vpop.permute.xlu0 %2741
        %2744 = vset.pattern.permute.xlu0 2
        %2745 = vperm.xlu0 %2744, %v545
        %v2746 = vpop.permute.xlu0 %2745
        %v2748 = vperm.slane %v416, 2
        %v2749 = vperm.slane %v416, 6
        %v2750 = vperm.slane %v417, 2
        %v2751 = vperm.slane %v417, 6
        %v2756 = vperm.slane %v2748, 2
        %v2757 = vperm.slane %v2749, 2
        %v2758 = vperm.slane %v2750, 2
        %v2759 = vperm.slane %v2751, 2
        %v2760 = vmul.f32 %v2494, %v2756
        %v2761 = vmul.f32 %v2494, %v2757
        %v2762 = vmul.f32 %v2494, %v2758
        %v2763 = vmul.f32 %v2494, %v2759
        %v2764 = vmul.f32 %v2498, %v2756
        %v2765 = vmul.f32 %v2498, %v2757
        %v2766 = vmul.f32 %v2498, %v2758
        %v2767 = vmul.f32 %v2498, %v2759
        %v2768 = vmul.f32 %v2502, %v2756
        %v2769 = vmul.f32 %v2502, %v2757
        %v2770 = vmul.f32 %v2502, %v2758
        %v2771 = vmul.f32 %v2502, %v2759
        %v2772 = vmul.f32 %v2506, %v2756
        %v2773 = vmul.f32 %v2506, %v2757
        %v2774 = vmul.f32 %v2506, %v2758
        %v2775 = vmul.f32 %v2506, %v2759
        %v2776 = vmul.f32 %v2510, %v2756
        %v2777 = vmul.f32 %v2510, %v2757
        %v2778 = vmul.f32 %v2510, %v2758
        %v2779 = vmul.f32 %v2510, %v2759
        %v2780 = vmul.f32 %v2514, %v2756
        %v2781 = vmul.f32 %v2514, %v2757
        %v2782 = vmul.f32 %v2514, %v2758
        %v2783 = vmul.f32 %v2514, %v2759
        %v2784 = vmul.f32 %v2518, %v2756
        %v2785 = vmul.f32 %v2518, %v2757
        %v2786 = vmul.f32 %v2518, %v2758
        %v2787 = vmul.f32 %v2518, %v2759
        %v2788 = vmul.f32 %v2522, %v2756
        %v2789 = vmul.f32 %v2522, %v2757
        %v2790 = vmul.f32 %v2522, %v2758
        %v2791 = vmul.f32 %v2522, %v2759
        %v2792 = vmul.f32 %v2526, %v2756
        %v2793 = vmul.f32 %v2526, %v2757
        %v2794 = vmul.f32 %v2526, %v2758
        %v2795 = vmul.f32 %v2526, %v2759
        %v2796 = vmul.f32 %v2530, %v2756
        %v2797 = vmul.f32 %v2530, %v2757
        %v2798 = vmul.f32 %v2530, %v2758
        %v2799 = vmul.f32 %v2530, %v2759
        %v2800 = vmul.f32 %v2534, %v2756
        %v2801 = vmul.f32 %v2534, %v2757
        %v2802 = vmul.f32 %v2534, %v2758
        %v2803 = vmul.f32 %v2534, %v2759
        %v2804 = vmul.f32 %v2538, %v2756
        %v2805 = vmul.f32 %v2538, %v2757
        %v2806 = vmul.f32 %v2538, %v2758
        %v2807 = vmul.f32 %v2538, %v2759
        %v2808 = vmul.f32 %v2542, %v2756
        %v2809 = vmul.f32 %v2542, %v2757
        %v2810 = vmul.f32 %v2542, %v2758
        %v2811 = vmul.f32 %v2542, %v2759
        %v2812 = vmul.f32 %v2546, %v2756
        %v2813 = vmul.f32 %v2546, %v2757
        %v2814 = vmul.f32 %v2546, %v2758
        %v2815 = vmul.f32 %v2546, %v2759
        %v2816 = vmul.f32 %v2550, %v2756
        %v2817 = vmul.f32 %v2550, %v2757
        %v2818 = vmul.f32 %v2550, %v2758
        %v2819 = vmul.f32 %v2550, %v2759
        %v2820 = vmul.f32 %v2554, %v2756
        %v2821 = vmul.f32 %v2554, %v2757
        %v2822 = vmul.f32 %v2554, %v2758
        %v2823 = vmul.f32 %v2554, %v2759
        %v2824 = vmul.f32 %v2558, %v2756
        %v2825 = vmul.f32 %v2558, %v2757
        %v2826 = vmul.f32 %v2558, %v2758
        %v2827 = vmul.f32 %v2558, %v2759
        %v2828 = vmul.f32 %v2562, %v2756
        %v2829 = vmul.f32 %v2562, %v2757
        %v2830 = vmul.f32 %v2562, %v2758
        %v2831 = vmul.f32 %v2562, %v2759
        %v2832 = vmul.f32 %v2566, %v2756
        %v2833 = vmul.f32 %v2566, %v2757
        %v2834 = vmul.f32 %v2566, %v2758
        %v2835 = vmul.f32 %v2566, %v2759
        %v2836 = vmul.f32 %v2570, %v2756
        %v2837 = vmul.f32 %v2570, %v2757
        %v2838 = vmul.f32 %v2570, %v2758
        %v2839 = vmul.f32 %v2570, %v2759
        %v2840 = vmul.f32 %v2574, %v2756
        %v2841 = vmul.f32 %v2574, %v2757
        %v2842 = vmul.f32 %v2574, %v2758
        %v2843 = vmul.f32 %v2574, %v2759
        %v2844 = vmul.f32 %v2578, %v2756
        %v2845 = vmul.f32 %v2578, %v2757
        %v2846 = vmul.f32 %v2578, %v2758
        %v2847 = vmul.f32 %v2578, %v2759
        %v2848 = vmul.f32 %v2582, %v2756
        %v2849 = vmul.f32 %v2582, %v2757
        %v2850 = vmul.f32 %v2582, %v2758
        %v2851 = vmul.f32 %v2582, %v2759
        %v2852 = vmul.f32 %v2586, %v2756
        %v2853 = vmul.f32 %v2586, %v2757
        %v2854 = vmul.f32 %v2586, %v2758
        %v2855 = vmul.f32 %v2586, %v2759
        %v2856 = vmul.f32 %v2590, %v2756
        %v2857 = vmul.f32 %v2590, %v2757
        %v2858 = vmul.f32 %v2590, %v2758
        %v2859 = vmul.f32 %v2590, %v2759
        %v2860 = vmul.f32 %v2594, %v2756
        %v2861 = vmul.f32 %v2594, %v2757
        %v2862 = vmul.f32 %v2594, %v2758
        %v2863 = vmul.f32 %v2594, %v2759
        %v2864 = vmul.f32 %v2598, %v2756
        %v2865 = vmul.f32 %v2598, %v2757
        %v2866 = vmul.f32 %v2598, %v2758
        %v2867 = vmul.f32 %v2598, %v2759
        %v2868 = vmul.f32 %v2602, %v2756
        %v2869 = vmul.f32 %v2602, %v2757
        %v2870 = vmul.f32 %v2602, %v2758
        %v2871 = vmul.f32 %v2602, %v2759
        %v2872 = vmul.f32 %v2606, %v2756
        %v2873 = vmul.f32 %v2606, %v2757
        %v2874 = vmul.f32 %v2606, %v2758
        %v2875 = vmul.f32 %v2606, %v2759
        %v2876 = vmul.f32 %v2610, %v2756
        %v2877 = vmul.f32 %v2610, %v2757
        %v2878 = vmul.f32 %v2610, %v2758
        %v2879 = vmul.f32 %v2610, %v2759
        %v2880 = vmul.f32 %v2614, %v2756
        %v2881 = vmul.f32 %v2614, %v2757
        %v2882 = vmul.f32 %v2614, %v2758
        %v2883 = vmul.f32 %v2614, %v2759
        %v2884 = vmul.f32 %v2618, %v2756
        %v2885 = vmul.f32 %v2618, %v2757
        %v2886 = vmul.f32 %v2618, %v2758
        %v2887 = vmul.f32 %v2618, %v2759
        %v2888 = vmul.f32 %v2622, %v2756
        %v2889 = vmul.f32 %v2622, %v2757
        %v2890 = vmul.f32 %v2622, %v2758
        %v2891 = vmul.f32 %v2622, %v2759
        %v2892 = vmul.f32 %v2626, %v2756
        %v2893 = vmul.f32 %v2626, %v2757
        %v2894 = vmul.f32 %v2626, %v2758
        %v2895 = vmul.f32 %v2626, %v2759
        %v2896 = vmul.f32 %v2630, %v2756
        %v2897 = vmul.f32 %v2630, %v2757
        %v2898 = vmul.f32 %v2630, %v2758
        %v2899 = vmul.f32 %v2630, %v2759
        %v2900 = vmul.f32 %v2634, %v2756
        %v2901 = vmul.f32 %v2634, %v2757
        %v2902 = vmul.f32 %v2634, %v2758
        %v2903 = vmul.f32 %v2634, %v2759
        %v2904 = vmul.f32 %v2638, %v2756
        %v2905 = vmul.f32 %v2638, %v2757
        %v2906 = vmul.f32 %v2638, %v2758
        %v2907 = vmul.f32 %v2638, %v2759
        %v2908 = vmul.f32 %v2642, %v2756
        %v2909 = vmul.f32 %v2642, %v2757
        %v2910 = vmul.f32 %v2642, %v2758
        %v2911 = vmul.f32 %v2642, %v2759
        %v2912 = vmul.f32 %v2646, %v2756
        %v2913 = vmul.f32 %v2646, %v2757
        %v2914 = vmul.f32 %v2646, %v2758
        %v2915 = vmul.f32 %v2646, %v2759
        %v2916 = vmul.f32 %v2650, %v2756
        %v2917 = vmul.f32 %v2650, %v2757
        %v2918 = vmul.f32 %v2650, %v2758
        %v2919 = vmul.f32 %v2650, %v2759
        %v2920 = vmul.f32 %v2654, %v2756
        %v2921 = vmul.f32 %v2654, %v2757
        %v2922 = vmul.f32 %v2654, %v2758
        %v2923 = vmul.f32 %v2654, %v2759
        %v2924 = vmul.f32 %v2658, %v2756
        %v2925 = vmul.f32 %v2658, %v2757
        %v2926 = vmul.f32 %v2658, %v2758
        %v2927 = vmul.f32 %v2658, %v2759
        %v2928 = vmul.f32 %v2662, %v2756
        %v2929 = vmul.f32 %v2662, %v2757
        %v2930 = vmul.f32 %v2662, %v2758
        %v2931 = vmul.f32 %v2662, %v2759
        %v2932 = vmul.f32 %v2666, %v2756
        %v2933 = vmul.f32 %v2666, %v2757
        %v2934 = vmul.f32 %v2666, %v2758
        %v2935 = vmul.f32 %v2666, %v2759
        %v2936 = vmul.f32 %v2670, %v2756
        %v2937 = vmul.f32 %v2670, %v2757
        %v2938 = vmul.f32 %v2670, %v2758
        %v2939 = vmul.f32 %v2670, %v2759
        %v2940 = vmul.f32 %v2674, %v2756
        %v2941 = vmul.f32 %v2674, %v2757
        %v2942 = vmul.f32 %v2674, %v2758
        %v2943 = vmul.f32 %v2674, %v2759
        %v2944 = vmul.f32 %v2678, %v2756
        %v2945 = vmul.f32 %v2678, %v2757
        %v2946 = vmul.f32 %v2678, %v2758
        %v2947 = vmul.f32 %v2678, %v2759
        %v2948 = vmul.f32 %v2682, %v2756
        %v2949 = vmul.f32 %v2682, %v2757
        %v2950 = vmul.f32 %v2682, %v2758
        %v2951 = vmul.f32 %v2682, %v2759
        %v2952 = vmul.f32 %v2686, %v2756
        %v2953 = vmul.f32 %v2686, %v2757
        %v2954 = vmul.f32 %v2686, %v2758
        %v2955 = vmul.f32 %v2686, %v2759
        %v2956 = vmul.f32 %v2690, %v2756
        %v2957 = vmul.f32 %v2690, %v2757
        %v2958 = vmul.f32 %v2690, %v2758
        %v2959 = vmul.f32 %v2690, %v2759
        %v2960 = vmul.f32 %v2694, %v2756
        %v2961 = vmul.f32 %v2694, %v2757
        %v2962 = vmul.f32 %v2694, %v2758
        %v2963 = vmul.f32 %v2694, %v2759
        %v2964 = vmul.f32 %v2698, %v2756
        %v2965 = vmul.f32 %v2698, %v2757
        %v2966 = vmul.f32 %v2698, %v2758
        %v2967 = vmul.f32 %v2698, %v2759
        %v2968 = vmul.f32 %v2702, %v2756
        %v2969 = vmul.f32 %v2702, %v2757
        %v2970 = vmul.f32 %v2702, %v2758
        %v2971 = vmul.f32 %v2702, %v2759
        %v2972 = vmul.f32 %v2706, %v2756
        %v2973 = vmul.f32 %v2706, %v2757
        %v2974 = vmul.f32 %v2706, %v2758
        %v2975 = vmul.f32 %v2706, %v2759
        %v2976 = vmul.f32 %v2710, %v2756
        %v2977 = vmul.f32 %v2710, %v2757
        %v2978 = vmul.f32 %v2710, %v2758
        %v2979 = vmul.f32 %v2710, %v2759
        %v2980 = vmul.f32 %v2714, %v2756
        %v2981 = vmul.f32 %v2714, %v2757
        %v2982 = vmul.f32 %v2714, %v2758
        %v2983 = vmul.f32 %v2714, %v2759
        %v2984 = vmul.f32 %v2718, %v2756
        %v2985 = vmul.f32 %v2718, %v2757
        %v2986 = vmul.f32 %v2718, %v2758
        %v2987 = vmul.f32 %v2718, %v2759
        %v2988 = vmul.f32 %v2722, %v2756
        %v2989 = vmul.f32 %v2722, %v2757
        %v2990 = vmul.f32 %v2722, %v2758
        %v2991 = vmul.f32 %v2722, %v2759
        %v2992 = vmul.f32 %v2726, %v2756
        %v2993 = vmul.f32 %v2726, %v2757
        %v2994 = vmul.f32 %v2726, %v2758
        %v2995 = vmul.f32 %v2726, %v2759
        %v2996 = vmul.f32 %v2730, %v2756
        %v2997 = vmul.f32 %v2730, %v2757
        %v2998 = vmul.f32 %v2730, %v2758
        %v2999 = vmul.f32 %v2730, %v2759
        %v3000 = vmul.f32 %v2734, %v2756
        %v3001 = vmul.f32 %v2734, %v2757
        %v3002 = vmul.f32 %v2734, %v2758
        %v3003 = vmul.f32 %v2734, %v2759
        %v3004 = vmul.f32 %v2738, %v2756
        %v3005 = vmul.f32 %v2738, %v2757
        %v3006 = vmul.f32 %v2738, %v2758
        %v3007 = vmul.f32 %v2738, %v2759
        %v3008 = vmul.f32 %v2742, %v2756
        %v3009 = vmul.f32 %v2742, %v2757
        %v3010 = vmul.f32 %v2742, %v2758
        %v3011 = vmul.f32 %v2742, %v2759
        %v3012 = vmul.f32 %v2746, %v2756
        %v3013 = vmul.f32 %v2746, %v2757
        %v3014 = vmul.f32 %v2746, %v2758
        %v3015 = vmul.f32 %v2746, %v2759
        %v3016 = vadd.f32 %v2236, %v2760
        %v3017 = vadd.f32 %v2237, %v2761
        %v3018 = vadd.f32 %v2238, %v2762
        %v3019 = vadd.f32 %v2239, %v2763
        %v3020 = vadd.f32 %v2240, %v2764
        %v3021 = vadd.f32 %v2241, %v2765
        %v3022 = vadd.f32 %v2242, %v2766
        %v3023 = vadd.f32 %v2243, %v2767
        %v3024 = vadd.f32 %v2244, %v2768
        %v3025 = vadd.f32 %v2245, %v2769
        %v3026 = vadd.f32 %v2246, %v2770
        %v3027 = vadd.f32 %v2247, %v2771
        %v3028 = vadd.f32 %v2248, %v2772
        %v3029 = vadd.f32 %v2249, %v2773
        %v3030 = vadd.f32 %v2250, %v2774
        %v3031 = vadd.f32 %v2251, %v2775
        %v3032 = vadd.f32 %v2252, %v2776
        %v3033 = vadd.f32 %v2253, %v2777
        %v3034 = vadd.f32 %v2254, %v2778
        %v3035 = vadd.f32 %v2255, %v2779
        %v3036 = vadd.f32 %v2256, %v2780
        %v3037 = vadd.f32 %v2257, %v2781
        %v3038 = vadd.f32 %v2258, %v2782
        %v3039 = vadd.f32 %v2259, %v2783
        %v3040 = vadd.f32 %v2260, %v2784
        %v3041 = vadd.f32 %v2261, %v2785
        %v3042 = vadd.f32 %v2262, %v2786
        %v3043 = vadd.f32 %v2263, %v2787
        %v3044 = vadd.f32 %v2264, %v2788
        %v3045 = vadd.f32 %v2265, %v2789
        %v3046 = vadd.f32 %v2266, %v2790
        %v3047 = vadd.f32 %v2267, %v2791
        %v3048 = vadd.f32 %v2268, %v2792
        %v3049 = vadd.f32 %v2269, %v2793
        %v3050 = vadd.f32 %v2270, %v2794
        %v3051 = vadd.f32 %v2271, %v2795
        %v3052 = vadd.f32 %v2272, %v2796
        %v3053 = vadd.f32 %v2273, %v2797
        %v3054 = vadd.f32 %v2274, %v2798
        %v3055 = vadd.f32 %v2275, %v2799
        %v3056 = vadd.f32 %v2276, %v2800
        %v3057 = vadd.f32 %v2277, %v2801
        %v3058 = vadd.f32 %v2278, %v2802
        %v3059 = vadd.f32 %v2279, %v2803
        %v3060 = vadd.f32 %v2280, %v2804
        %v3061 = vadd.f32 %v2281, %v2805
        %v3062 = vadd.f32 %v2282, %v2806
        %v3063 = vadd.f32 %v2283, %v2807
        %v3064 = vadd.f32 %v2284, %v2808
        %v3065 = vadd.f32 %v2285, %v2809
        %v3066 = vadd.f32 %v2286, %v2810
        %v3067 = vadd.f32 %v2287, %v2811
        %v3068 = vadd.f32 %v2288, %v2812
        %v3069 = vadd.f32 %v2289, %v2813
        %v3070 = vadd.f32 %v2290, %v2814
        %v3071 = vadd.f32 %v2291, %v2815
        %v3072 = vadd.f32 %v2292, %v2816
        %v3073 = vadd.f32 %v2293, %v2817
        %v3074 = vadd.f32 %v2294, %v2818
        %v3075 = vadd.f32 %v2295, %v2819
        %v3076 = vadd.f32 %v2296, %v2820
        %v3077 = vadd.f32 %v2297, %v2821
        %v3078 = vadd.f32 %v2298, %v2822
        %v3079 = vadd.f32 %v2299, %v2823
        %v3080 = vadd.f32 %v2300, %v2824
        %v3081 = vadd.f32 %v2301, %v2825
        %v3082 = vadd.f32 %v2302, %v2826
        %v3083 = vadd.f32 %v2303, %v2827
        %v3084 = vadd.f32 %v2304, %v2828
        %v3085 = vadd.f32 %v2305, %v2829
        %v3086 = vadd.f32 %v2306, %v2830
        %v3087 = vadd.f32 %v2307, %v2831
        %v3088 = vadd.f32 %v2308, %v2832
        %v3089 = vadd.f32 %v2309, %v2833
        %v3090 = vadd.f32 %v2310, %v2834
        %v3091 = vadd.f32 %v2311, %v2835
        %v3092 = vadd.f32 %v2312, %v2836
        %v3093 = vadd.f32 %v2313, %v2837
        %v3094 = vadd.f32 %v2314, %v2838
        %v3095 = vadd.f32 %v2315, %v2839
        %v3096 = vadd.f32 %v2316, %v2840
        %v3097 = vadd.f32 %v2317, %v2841
        %v3098 = vadd.f32 %v2318, %v2842
        %v3099 = vadd.f32 %v2319, %v2843
        %v3100 = vadd.f32 %v2320, %v2844
        %v3101 = vadd.f32 %v2321, %v2845
        %v3102 = vadd.f32 %v2322, %v2846
        %v3103 = vadd.f32 %v2323, %v2847
        %v3104 = vadd.f32 %v2324, %v2848
        %v3105 = vadd.f32 %v2325, %v2849
        %v3106 = vadd.f32 %v2326, %v2850
        %v3107 = vadd.f32 %v2327, %v2851
        %v3108 = vadd.f32 %v2328, %v2852
        %v3109 = vadd.f32 %v2329, %v2853
        %v3110 = vadd.f32 %v2330, %v2854
        %v3111 = vadd.f32 %v2331, %v2855
        %v3112 = vadd.f32 %v2332, %v2856
        %v3113 = vadd.f32 %v2333, %v2857
        %v3114 = vadd.f32 %v2334, %v2858
        %v3115 = vadd.f32 %v2335, %v2859
        %v3116 = vadd.f32 %v2336, %v2860
        %v3117 = vadd.f32 %v2337, %v2861
        %v3118 = vadd.f32 %v2338, %v2862
        %v3119 = vadd.f32 %v2339, %v2863
        %v3120 = vadd.f32 %v2340, %v2864
        %v3121 = vadd.f32 %v2341, %v2865
        %v3122 = vadd.f32 %v2342, %v2866
        %v3123 = vadd.f32 %v2343, %v2867
        %v3124 = vadd.f32 %v2344, %v2868
        %v3125 = vadd.f32 %v2345, %v2869
        %v3126 = vadd.f32 %v2346, %v2870
        %v3127 = vadd.f32 %v2347, %v2871
        %v3128 = vadd.f32 %v2348, %v2872
        %v3129 = vadd.f32 %v2349, %v2873
        %v3130 = vadd.f32 %v2350, %v2874
        %v3131 = vadd.f32 %v2351, %v2875
        %v3132 = vadd.f32 %v2352, %v2876
        %v3133 = vadd.f32 %v2353, %v2877
        %v3134 = vadd.f32 %v2354, %v2878
        %v3135 = vadd.f32 %v2355, %v2879
        %v3136 = vadd.f32 %v2356, %v2880
        %v3137 = vadd.f32 %v2357, %v2881
        %v3138 = vadd.f32 %v2358, %v2882
        %v3139 = vadd.f32 %v2359, %v2883
        %v3140 = vadd.f32 %v2360, %v2884
        %v3141 = vadd.f32 %v2361, %v2885
        %v3142 = vadd.f32 %v2362, %v2886
        %v3143 = vadd.f32 %v2363, %v2887
        %v3144 = vadd.f32 %v2364, %v2888
        %v3145 = vadd.f32 %v2365, %v2889
        %v3146 = vadd.f32 %v2366, %v2890
        %v3147 = vadd.f32 %v2367, %v2891
        %v3148 = vadd.f32 %v2368, %v2892
        %v3149 = vadd.f32 %v2369, %v2893
        %v3150 = vadd.f32 %v2370, %v2894
        %v3151 = vadd.f32 %v2371, %v2895
        %v3152 = vadd.f32 %v2372, %v2896
        %v3153 = vadd.f32 %v2373, %v2897
        %v3154 = vadd.f32 %v2374, %v2898
        %v3155 = vadd.f32 %v2375, %v2899
        %v3156 = vadd.f32 %v2376, %v2900
        %v3157 = vadd.f32 %v2377, %v2901
        %v3158 = vadd.f32 %v2378, %v2902
        %v3159 = vadd.f32 %v2379, %v2903
        %v3160 = vadd.f32 %v2380, %v2904
        %v3161 = vadd.f32 %v2381, %v2905
        %v3162 = vadd.f32 %v2382, %v2906
        %v3163 = vadd.f32 %v2383, %v2907
        %v3164 = vadd.f32 %v2384, %v2908
        %v3165 = vadd.f32 %v2385, %v2909
        %v3166 = vadd.f32 %v2386, %v2910
        %v3167 = vadd.f32 %v2387, %v2911
        %v3168 = vadd.f32 %v2388, %v2912
        %v3169 = vadd.f32 %v2389, %v2913
        %v3170 = vadd.f32 %v2390, %v2914
        %v3171 = vadd.f32 %v2391, %v2915
        %v3172 = vadd.f32 %v2392, %v2916
        %v3173 = vadd.f32 %v2393, %v2917
        %v3174 = vadd.f32 %v2394, %v2918
        %v3175 = vadd.f32 %v2395, %v2919
        %v3176 = vadd.f32 %v2396, %v2920
        %v3177 = vadd.f32 %v2397, %v2921
        %v3178 = vadd.f32 %v2398, %v2922
        %v3179 = vadd.f32 %v2399, %v2923
        %v3180 = vadd.f32 %v2400, %v2924
        %v3181 = vadd.f32 %v2401, %v2925
        %v3182 = vadd.f32 %v2402, %v2926
        %v3183 = vadd.f32 %v2403, %v2927
        %v3184 = vadd.f32 %v2404, %v2928
        %v3185 = vadd.f32 %v2405, %v2929
        %v3186 = vadd.f32 %v2406, %v2930
        %v3187 = vadd.f32 %v2407, %v2931
        %v3188 = vadd.f32 %v2408, %v2932
        %v3189 = vadd.f32 %v2409, %v2933
        %v3190 = vadd.f32 %v2410, %v2934
        %v3191 = vadd.f32 %v2411, %v2935
        %v3192 = vadd.f32 %v2412, %v2936
        %v3193 = vadd.f32 %v2413, %v2937
        %v3194 = vadd.f32 %v2414, %v2938
        %v3195 = vadd.f32 %v2415, %v2939
        %v3196 = vadd.f32 %v2416, %v2940
        %v3197 = vadd.f32 %v2417, %v2941
        %v3198 = vadd.f32 %v2418, %v2942
        %v3199 = vadd.f32 %v2419, %v2943
        %v3200 = vadd.f32 %v2420, %v2944
        %v3201 = vadd.f32 %v2421, %v2945
        %v3202 = vadd.f32 %v2422, %v2946
        %v3203 = vadd.f32 %v2423, %v2947
        %v3204 = vadd.f32 %v2424, %v2948
        %v3205 = vadd.f32 %v2425, %v2949
        %v3206 = vadd.f32 %v2426, %v2950
        %v3207 = vadd.f32 %v2427, %v2951
        %v3208 = vadd.f32 %v2428, %v2952
        %v3209 = vadd.f32 %v2429, %v2953
        %v3210 = vadd.f32 %v2430, %v2954
        %v3211 = vadd.f32 %v2431, %v2955
        %v3212 = vadd.f32 %v2432, %v2956
        %v3213 = vadd.f32 %v2433, %v2957
        %v3214 = vadd.f32 %v2434, %v2958
        %v3215 = vadd.f32 %v2435, %v2959
        %v3216 = vadd.f32 %v2436, %v2960
        %v3217 = vadd.f32 %v2437, %v2961
        %v3218 = vadd.f32 %v2438, %v2962
        %v3219 = vadd.f32 %v2439, %v2963
        %v3220 = vadd.f32 %v2440, %v2964
        %v3221 = vadd.f32 %v2441, %v2965
        %v3222 = vadd.f32 %v2442, %v2966
        %v3223 = vadd.f32 %v2443, %v2967
        %v3224 = vadd.f32 %v2444, %v2968
        %v3225 = vadd.f32 %v2445, %v2969
        %v3226 = vadd.f32 %v2446, %v2970
        %v3227 = vadd.f32 %v2447, %v2971
        %v3228 = vadd.f32 %v2448, %v2972
        %v3229 = vadd.f32 %v2449, %v2973
        %v3230 = vadd.f32 %v2450, %v2974
        %v3231 = vadd.f32 %v2451, %v2975
        %v3232 = vadd.f32 %v2452, %v2976
        %v3233 = vadd.f32 %v2453, %v2977
        %v3234 = vadd.f32 %v2454, %v2978
        %v3235 = vadd.f32 %v2455, %v2979
        %v3236 = vadd.f32 %v2456, %v2980
        %v3237 = vadd.f32 %v2457, %v2981
        %v3238 = vadd.f32 %v2458, %v2982
        %v3239 = vadd.f32 %v2459, %v2983
        %v3240 = vadd.f32 %v2460, %v2984
        %v3241 = vadd.f32 %v2461, %v2985
        %v3242 = vadd.f32 %v2462, %v2986
        %v3243 = vadd.f32 %v2463, %v2987
        %v3244 = vadd.f32 %v2464, %v2988
        %v3245 = vadd.f32 %v2465, %v2989
        %v3246 = vadd.f32 %v2466, %v2990
        %v3247 = vadd.f32 %v2467, %v2991
        %v3248 = vadd.f32 %v2468, %v2992
        %v3249 = vadd.f32 %v2469, %v2993
        %v3250 = vadd.f32 %v2470, %v2994
        %v3251 = vadd.f32 %v2471, %v2995
        %v3252 = vadd.f32 %v2472, %v2996
        %v3253 = vadd.f32 %v2473, %v2997
        %v3254 = vadd.f32 %v2474, %v2998
        %v3255 = vadd.f32 %v2475, %v2999
        %v3256 = vadd.f32 %v2476, %v3000
        %v3257 = vadd.f32 %v2477, %v3001
        %v3258 = vadd.f32 %v2478, %v3002
        %v3259 = vadd.f32 %v2479, %v3003
        %v3260 = vadd.f32 %v2480, %v3004
        %v3261 = vadd.f32 %v2481, %v3005
        %v3262 = vadd.f32 %v2482, %v3006
        %v3263 = vadd.f32 %v2483, %v3007
        %v3264 = vadd.f32 %v2484, %v3008
        %v3265 = vadd.f32 %v2485, %v3009
        %v3266 = vadd.f32 %v2486, %v3010
        %v3267 = vadd.f32 %v2487, %v3011
        %v3268 = vadd.f32 %v2488, %v3012
        %v3269 = vadd.f32 %v2489, %v3013
        %v3270 = vadd.f32 %v2490, %v3014
        %v3271 = vadd.f32 %v2491, %v3015
        %v3272 = vmax.f32 %v3016, 0.0
        %v3273 = vmax.f32 %v3017, 0.0
        %v3274 = vmax.f32 %v3018, 0.0
        %v3275 = vmax.f32 %v3019, 0.0
        %v3276 = vmax.f32 %v3020, 0.0
        %v3277 = vmax.f32 %v3021, 0.0
        %v3278 = vmax.f32 %v3022, 0.0
        %v3279 = vmax.f32 %v3023, 0.0
        %v3280 = vmax.f32 %v3024, 0.0
        %v3281 = vmax.f32 %v3025, 0.0
        %v3282 = vmax.f32 %v3026, 0.0
        %v3283 = vmax.f32 %v3027, 0.0
        %v3284 = vmax.f32 %v3028, 0.0
        %v3285 = vmax.f32 %v3029, 0.0
        %v3286 = vmax.f32 %v3030, 0.0
        %v3287 = vmax.f32 %v3031, 0.0
        %v3288 = vmax.f32 %v3032, 0.0
        %v3289 = vmax.f32 %v3033, 0.0
        %v3290 = vmax.f32 %v3034, 0.0
        %v3291 = vmax.f32 %v3035, 0.0
        %v3292 = vmax.f32 %v3036, 0.0
        %v3293 = vmax.f32 %v3037, 0.0
        %v3294 = vmax.f32 %v3038, 0.0
        %v3295 = vmax.f32 %v3039, 0.0
        %v3296 = vmax.f32 %v3040, 0.0
        %v3297 = vmax.f32 %v3041, 0.0
        %v3298 = vmax.f32 %v3042, 0.0
        %v3299 = vmax.f32 %v3043, 0.0
        %v3300 = vmax.f32 %v3044, 0.0
        %v3301 = vmax.f32 %v3045, 0.0
        %v3302 = vmax.f32 %v3046, 0.0
        %v3303 = vmax.f32 %v3047, 0.0
        %v3304 = vmax.f32 %v3048, 0.0
        %v3305 = vmax.f32 %v3049, 0.0
        %v3306 = vmax.f32 %v3050, 0.0
        %v3307 = vmax.f32 %v3051, 0.0
        %v3308 = vmax.f32 %v3052, 0.0
        %v3309 = vmax.f32 %v3053, 0.0
        %v3310 = vmax.f32 %v3054, 0.0
        %v3311 = vmax.f32 %v3055, 0.0
        %v3312 = vmax.f32 %v3056, 0.0
        %v3313 = vmax.f32 %v3057, 0.0
        %v3314 = vmax.f32 %v3058, 0.0
        %v3315 = vmax.f32 %v3059, 0.0
        %v3316 = vmax.f32 %v3060, 0.0
        %v3317 = vmax.f32 %v3061, 0.0
        %v3318 = vmax.f32 %v3062, 0.0
        %v3319 = vmax.f32 %v3063, 0.0
        %v3320 = vmax.f32 %v3064, 0.0
        %v3321 = vmax.f32 %v3065, 0.0
        %v3322 = vmax.f32 %v3066, 0.0
        %v3323 = vmax.f32 %v3067, 0.0
        %v3324 = vmax.f32 %v3068, 0.0
        %v3325 = vmax.f32 %v3069, 0.0
        %v3326 = vmax.f32 %v3070, 0.0
        %v3327 = vmax.f32 %v3071, 0.0
        %v3328 = vmax.f32 %v3072, 0.0
        %v3329 = vmax.f32 %v3073, 0.0
        %v3330 = vmax.f32 %v3074, 0.0
        %v3331 = vmax.f32 %v3075, 0.0
        %v3332 = vmax.f32 %v3076, 0.0
        %v3333 = vmax.f32 %v3077, 0.0
        %v3334 = vmax.f32 %v3078, 0.0
        %v3335 = vmax.f32 %v3079, 0.0
        %v3336 = vmax.f32 %v3080, 0.0
        %v3337 = vmax.f32 %v3081, 0.0
        %v3338 = vmax.f32 %v3082, 0.0
        %v3339 = vmax.f32 %v3083, 0.0
        %v3340 = vmax.f32 %v3084, 0.0
        %v3341 = vmax.f32 %v3085, 0.0
        %v3342 = vmax.f32 %v3086, 0.0
        %v3343 = vmax.f32 %v3087, 0.0
        %v3344 = vmax.f32 %v3088, 0.0
        %v3345 = vmax.f32 %v3089, 0.0
        %v3346 = vmax.f32 %v3090, 0.0
        %v3347 = vmax.f32 %v3091, 0.0
        %v3348 = vmax.f32 %v3092, 0.0
        %v3349 = vmax.f32 %v3093, 0.0
        %v3350 = vmax.f32 %v3094, 0.0
        %v3351 = vmax.f32 %v3095, 0.0
        %v3352 = vmax.f32 %v3096, 0.0
        %v3353 = vmax.f32 %v3097, 0.0
        %v3354 = vmax.f32 %v3098, 0.0
        %v3355 = vmax.f32 %v3099, 0.0
        %v3356 = vmax.f32 %v3100, 0.0
        %v3357 = vmax.f32 %v3101, 0.0
        %v3358 = vmax.f32 %v3102, 0.0
        %v3359 = vmax.f32 %v3103, 0.0
        %v3360 = vmax.f32 %v3104, 0.0
        %v3361 = vmax.f32 %v3105, 0.0
        %v3362 = vmax.f32 %v3106, 0.0
        %v3363 = vmax.f32 %v3107, 0.0
        %v3364 = vmax.f32 %v3108, 0.0
        %v3365 = vmax.f32 %v3109, 0.0
        %v3366 = vmax.f32 %v3110, 0.0
        %v3367 = vmax.f32 %v3111, 0.0
        %v3368 = vmax.f32 %v3112, 0.0
        %v3369 = vmax.f32 %v3113, 0.0
        %v3370 = vmax.f32 %v3114, 0.0
        %v3371 = vmax.f32 %v3115, 0.0
        %v3372 = vmax.f32 %v3116, 0.0
        %v3373 = vmax.f32 %v3117, 0.0
        %v3374 = vmax.f32 %v3118, 0.0
        %v3375 = vmax.f32 %v3119, 0.0
        %v3376 = vmax.f32 %v3120, 0.0
        %v3377 = vmax.f32 %v3121, 0.0
        %v3378 = vmax.f32 %v3122, 0.0
        %v3379 = vmax.f32 %v3123, 0.0
        %v3380 = vmax.f32 %v3124, 0.0
        %v3381 = vmax.f32 %v3125, 0.0
        %v3382 = vmax.f32 %v3126, 0.0
        %v3383 = vmax.f32 %v3127, 0.0
        %v3384 = vmax.f32 %v3128, 0.0
        %v3385 = vmax.f32 %v3129, 0.0
        %v3386 = vmax.f32 %v3130, 0.0
        %v3387 = vmax.f32 %v3131, 0.0
        %v3388 = vmax.f32 %v3132, 0.0
        %v3389 = vmax.f32 %v3133, 0.0
        %v3390 = vmax.f32 %v3134, 0.0
        %v3391 = vmax.f32 %v3135, 0.0
        %v3392 = vmax.f32 %v3136, 0.0
        %v3393 = vmax.f32 %v3137, 0.0
        %v3394 = vmax.f32 %v3138, 0.0
        %v3395 = vmax.f32 %v3139, 0.0
        %v3396 = vmax.f32 %v3140, 0.0
        %v3397 = vmax.f32 %v3141, 0.0
        %v3398 = vmax.f32 %v3142, 0.0
        %v3399 = vmax.f32 %v3143, 0.0
        %v3400 = vmax.f32 %v3144, 0.0
        %v3401 = vmax.f32 %v3145, 0.0
        %v3402 = vmax.f32 %v3146, 0.0
        %v3403 = vmax.f32 %v3147, 0.0
        %v3404 = vmax.f32 %v3148, 0.0
        %v3405 = vmax.f32 %v3149, 0.0
        %v3406 = vmax.f32 %v3150, 0.0
        %v3407 = vmax.f32 %v3151, 0.0
        %v3408 = vmax.f32 %v3152, 0.0
        %v3409 = vmax.f32 %v3153, 0.0
        %v3410 = vmax.f32 %v3154, 0.0
        %v3411 = vmax.f32 %v3155, 0.0
        %v3412 = vmax.f32 %v3156, 0.0
        %v3413 = vmax.f32 %v3157, 0.0
        %v3414 = vmax.f32 %v3158, 0.0
        %v3415 = vmax.f32 %v3159, 0.0
        %v3416 = vmax.f32 %v3160, 0.0
        %v3417 = vmax.f32 %v3161, 0.0
        %v3418 = vmax.f32 %v3162, 0.0
        %v3419 = vmax.f32 %v3163, 0.0
        %v3420 = vmax.f32 %v3164, 0.0
        %v3421 = vmax.f32 %v3165, 0.0
        %v3422 = vmax.f32 %v3166, 0.0
        %v3423 = vmax.f32 %v3167, 0.0
        %v3424 = vmax.f32 %v3168, 0.0
        %v3425 = vmax.f32 %v3169, 0.0
        %v3426 = vmax.f32 %v3170, 0.0
        %v3427 = vmax.f32 %v3171, 0.0
        %v3428 = vmax.f32 %v3172, 0.0
        %v3429 = vmax.f32 %v3173, 0.0
        %v3430 = vmax.f32 %v3174, 0.0
        %v3431 = vmax.f32 %v3175, 0.0
        %v3432 = vmax.f32 %v3176, 0.0
        %v3433 = vmax.f32 %v3177, 0.0
        %v3434 = vmax.f32 %v3178, 0.0
        %v3435 = vmax.f32 %v3179, 0.0
        %v3436 = vmax.f32 %v3180, 0.0
        %v3437 = vmax.f32 %v3181, 0.0
        %v3438 = vmax.f32 %v3182, 0.0
        %v3439 = vmax.f32 %v3183, 0.0
        %v3440 = vmax.f32 %v3184, 0.0
        %v3441 = vmax.f32 %v3185, 0.0
        %v3442 = vmax.f32 %v3186, 0.0
        %v3443 = vmax.f32 %v3187, 0.0
        %v3444 = vmax.f32 %v3188, 0.0
        %v3445 = vmax.f32 %v3189, 0.0
        %v3446 = vmax.f32 %v3190, 0.0
        %v3447 = vmax.f32 %v3191, 0.0
        %v3448 = vmax.f32 %v3192, 0.0
        %v3449 = vmax.f32 %v3193, 0.0
        %v3450 = vmax.f32 %v3194, 0.0
        %v3451 = vmax.f32 %v3195, 0.0
        %v3452 = vmax.f32 %v3196, 0.0
        %v3453 = vmax.f32 %v3197, 0.0
        %v3454 = vmax.f32 %v3198, 0.0
        %v3455 = vmax.f32 %v3199, 0.0
        %v3456 = vmax.f32 %v3200, 0.0
        %v3457 = vmax.f32 %v3201, 0.0
        %v3458 = vmax.f32 %v3202, 0.0
        %v3459 = vmax.f32 %v3203, 0.0
        %v3460 = vmax.f32 %v3204, 0.0
        %v3461 = vmax.f32 %v3205, 0.0
        %v3462 = vmax.f32 %v3206, 0.0
        %v3463 = vmax.f32 %v3207, 0.0
        %v3464 = vmax.f32 %v3208, 0.0
        %v3465 = vmax.f32 %v3209, 0.0
        %v3466 = vmax.f32 %v3210, 0.0
        %v3467 = vmax.f32 %v3211, 0.0
        %v3468 = vmax.f32 %v3212, 0.0
        %v3469 = vmax.f32 %v3213, 0.0
        %v3470 = vmax.f32 %v3214, 0.0
        %v3471 = vmax.f32 %v3215, 0.0
        %v3472 = vmax.f32 %v3216, 0.0
        %v3473 = vmax.f32 %v3217, 0.0
        %v3474 = vmax.f32 %v3218, 0.0
        %v3475 = vmax.f32 %v3219, 0.0
        %v3476 = vmax.f32 %v3220, 0.0
        %v3477 = vmax.f32 %v3221, 0.0
        %v3478 = vmax.f32 %v3222, 0.0
        %v3479 = vmax.f32 %v3223, 0.0
        %v3480 = vmax.f32 %v3224, 0.0
        %v3481 = vmax.f32 %v3225, 0.0
        %v3482 = vmax.f32 %v3226, 0.0
        %v3483 = vmax.f32 %v3227, 0.0
        %v3484 = vmax.f32 %v3228, 0.0
        %v3485 = vmax.f32 %v3229, 0.0
        %v3486 = vmax.f32 %v3230, 0.0
        %v3487 = vmax.f32 %v3231, 0.0
        %v3488 = vmax.f32 %v3232, 0.0
        %v3489 = vmax.f32 %v3233, 0.0
        %v3490 = vmax.f32 %v3234, 0.0
        %v3491 = vmax.f32 %v3235, 0.0
        %v3492 = vmax.f32 %v3236, 0.0
        %v3493 = vmax.f32 %v3237, 0.0
        %v3494 = vmax.f32 %v3238, 0.0
        %v3495 = vmax.f32 %v3239, 0.0
        %v3496 = vmax.f32 %v3240, 0.0
        %v3497 = vmax.f32 %v3241, 0.0
        %v3498 = vmax.f32 %v3242, 0.0
        %v3499 = vmax.f32 %v3243, 0.0
        %v3500 = vmax.f32 %v3244, 0.0
        %v3501 = vmax.f32 %v3245, 0.0
        %v3502 = vmax.f32 %v3246, 0.0
        %v3503 = vmax.f32 %v3247, 0.0
        %v3504 = vmax.f32 %v3248, 0.0
        %v3505 = vmax.f32 %v3249, 0.0
        %v3506 = vmax.f32 %v3250, 0.0
        %v3507 = vmax.f32 %v3251, 0.0
        %v3508 = vmax.f32 %v3252, 0.0
        %v3509 = vmax.f32 %v3253, 0.0
        %v3510 = vmax.f32 %v3254, 0.0
        %v3511 = vmax.f32 %v3255, 0.0
        %v3512 = vmax.f32 %v3256, 0.0
        %v3513 = vmax.f32 %v3257, 0.0
        %v3514 = vmax.f32 %v3258, 0.0
        %v3515 = vmax.f32 %v3259, 0.0
        %v3516 = vmax.f32 %v3260, 0.0
        %v3517 = vmax.f32 %v3261, 0.0
        %v3518 = vmax.f32 %v3262, 0.0
        %v3519 = vmax.f32 %v3263, 0.0
        %v3520 = vmax.f32 %v3264, 0.0
        %v3521 = vmax.f32 %v3265, 0.0
        %v3522 = vmax.f32 %v3266, 0.0
        %v3523 = vmax.f32 %v3267, 0.0
        %v3524 = vmax.f32 %v3268, 0.0
        %v3525 = vmax.f32 %v3269, 0.0
        %v3526 = vmax.f32 %v3270, 0.0
        %v3527 = vmax.f32 %v3271, 0.0
        %v3528 = vpack.c.bf16 %v3276, %v3272
        %v3529 = vpack.c.bf16 %v3277, %v3273
        %v3530 = vpack.c.bf16 %v3278, %v3274
        %v3531 = vpack.c.bf16 %v3279, %v3275
        %v3532 = vpack.c.bf16 %v3284, %v3280
        %v3533 = vpack.c.bf16 %v3285, %v3281
        %v3534 = vpack.c.bf16 %v3286, %v3282
        %v3535 = vpack.c.bf16 %v3287, %v3283
        %v3536 = vpack.c.bf16 %v3292, %v3288
        %v3537 = vpack.c.bf16 %v3293, %v3289
        %v3538 = vpack.c.bf16 %v3294, %v3290
        %v3539 = vpack.c.bf16 %v3295, %v3291
        %v3540 = vpack.c.bf16 %v3300, %v3296
        %v3541 = vpack.c.bf16 %v3301, %v3297
        %v3542 = vpack.c.bf16 %v3302, %v3298
        %v3543 = vpack.c.bf16 %v3303, %v3299
        %v3544 = vpack.c.bf16 %v3308, %v3304
        %v3545 = vpack.c.bf16 %v3309, %v3305
        %v3546 = vpack.c.bf16 %v3310, %v3306
        %v3547 = vpack.c.bf16 %v3311, %v3307
        %v3548 = vpack.c.bf16 %v3316, %v3312
        %v3549 = vpack.c.bf16 %v3317, %v3313
        %v3550 = vpack.c.bf16 %v3318, %v3314
        %v3551 = vpack.c.bf16 %v3319, %v3315
        %v3552 = vpack.c.bf16 %v3324, %v3320
        %v3553 = vpack.c.bf16 %v3325, %v3321
        %v3554 = vpack.c.bf16 %v3326, %v3322
        %v3555 = vpack.c.bf16 %v3327, %v3323
        %v3556 = vpack.c.bf16 %v3332, %v3328
        %v3557 = vpack.c.bf16 %v3333, %v3329
        %v3558 = vpack.c.bf16 %v3334, %v3330
        %v3559 = vpack.c.bf16 %v3335, %v3331
        %v3560 = vpack.c.bf16 %v3340, %v3336
        %v3561 = vpack.c.bf16 %v3341, %v3337
        %v3562 = vpack.c.bf16 %v3342, %v3338
        %v3563 = vpack.c.bf16 %v3343, %v3339
        %v3564 = vpack.c.bf16 %v3348, %v3344
        %v3565 = vpack.c.bf16 %v3349, %v3345
        %v3566 = vpack.c.bf16 %v3350, %v3346
        %v3567 = vpack.c.bf16 %v3351, %v3347
        %v3568 = vpack.c.bf16 %v3356, %v3352
        %v3569 = vpack.c.bf16 %v3357, %v3353
        %v3570 = vpack.c.bf16 %v3358, %v3354
        %v3571 = vpack.c.bf16 %v3359, %v3355
        %v3572 = vpack.c.bf16 %v3364, %v3360
        %v3573 = vpack.c.bf16 %v3365, %v3361
        %v3574 = vpack.c.bf16 %v3366, %v3362
        %v3575 = vpack.c.bf16 %v3367, %v3363
        %v3576 = vpack.c.bf16 %v3372, %v3368
        %v3577 = vpack.c.bf16 %v3373, %v3369
        %v3578 = vpack.c.bf16 %v3374, %v3370
        %v3579 = vpack.c.bf16 %v3375, %v3371
        %v3580 = vpack.c.bf16 %v3380, %v3376
        %v3581 = vpack.c.bf16 %v3381, %v3377
        %v3582 = vpack.c.bf16 %v3382, %v3378
        %v3583 = vpack.c.bf16 %v3383, %v3379
        %v3584 = vpack.c.bf16 %v3388, %v3384
        %v3585 = vpack.c.bf16 %v3389, %v3385
        %v3586 = vpack.c.bf16 %v3390, %v3386
        %v3587 = vpack.c.bf16 %v3391, %v3387
        %v3588 = vpack.c.bf16 %v3396, %v3392
        %v3589 = vpack.c.bf16 %v3397, %v3393
        %v3590 = vpack.c.bf16 %v3398, %v3394
        %v3591 = vpack.c.bf16 %v3399, %v3395
        %v3592 = vpack.c.bf16 %v3404, %v3400
        %v3593 = vpack.c.bf16 %v3405, %v3401
        %v3594 = vpack.c.bf16 %v3406, %v3402
        %v3595 = vpack.c.bf16 %v3407, %v3403
        %v3596 = vpack.c.bf16 %v3412, %v3408
        %v3597 = vpack.c.bf16 %v3413, %v3409
        %v3598 = vpack.c.bf16 %v3414, %v3410
        %v3599 = vpack.c.bf16 %v3415, %v3411
        %v3600 = vpack.c.bf16 %v3420, %v3416
        %v3601 = vpack.c.bf16 %v3421, %v3417
        %v3602 = vpack.c.bf16 %v3422, %v3418
        %v3603 = vpack.c.bf16 %v3423, %v3419
        %v3604 = vpack.c.bf16 %v3428, %v3424
        %v3605 = vpack.c.bf16 %v3429, %v3425
        %v3606 = vpack.c.bf16 %v3430, %v3426
        %v3607 = vpack.c.bf16 %v3431, %v3427
        %v3608 = vpack.c.bf16 %v3436, %v3432
        %v3609 = vpack.c.bf16 %v3437, %v3433
        %v3610 = vpack.c.bf16 %v3438, %v3434
        %v3611 = vpack.c.bf16 %v3439, %v3435
        %v3612 = vpack.c.bf16 %v3444, %v3440
        %v3613 = vpack.c.bf16 %v3445, %v3441
        %v3614 = vpack.c.bf16 %v3446, %v3442
        %v3615 = vpack.c.bf16 %v3447, %v3443
        %v3616 = vpack.c.bf16 %v3452, %v3448
        %v3617 = vpack.c.bf16 %v3453, %v3449
        %v3618 = vpack.c.bf16 %v3454, %v3450
        %v3619 = vpack.c.bf16 %v3455, %v3451
        %v3620 = vpack.c.bf16 %v3460, %v3456
        %v3621 = vpack.c.bf16 %v3461, %v3457
        %v3622 = vpack.c.bf16 %v3462, %v3458
        %v3623 = vpack.c.bf16 %v3463, %v3459
        %v3624 = vpack.c.bf16 %v3468, %v3464
        %v3625 = vpack.c.bf16 %v3469, %v3465
        %v3626 = vpack.c.bf16 %v3470, %v3466
        %v3627 = vpack.c.bf16 %v3471, %v3467
        %v3628 = vpack.c.bf16 %v3476, %v3472
        %v3629 = vpack.c.bf16 %v3477, %v3473
        %v3630 = vpack.c.bf16 %v3478, %v3474
        %v3631 = vpack.c.bf16 %v3479, %v3475
        %v3632 = vpack.c.bf16 %v3484, %v3480
        %v3633 = vpack.c.bf16 %v3485, %v3481
        %v3634 = vpack.c.bf16 %v3486, %v3482
        %v3635 = vpack.c.bf16 %v3487, %v3483
        %v3636 = vpack.c.bf16 %v3492, %v3488
        %v3637 = vpack.c.bf16 %v3493, %v3489
        %v3638 = vpack.c.bf16 %v3494, %v3490
        %v3639 = vpack.c.bf16 %v3495, %v3491
        %v3640 = vpack.c.bf16 %v3500, %v3496
        %v3641 = vpack.c.bf16 %v3501, %v3497
        %v3642 = vpack.c.bf16 %v3502, %v3498
        %v3643 = vpack.c.bf16 %v3503, %v3499
        %v3644 = vpack.c.bf16 %v3508, %v3504
        %v3645 = vpack.c.bf16 %v3509, %v3505
        %v3646 = vpack.c.bf16 %v3510, %v3506
        %v3647 = vpack.c.bf16 %v3511, %v3507
        %v3648 = vpack.c.bf16 %v3516, %v3512
        %v3649 = vpack.c.bf16 %v3517, %v3513
        %v3650 = vpack.c.bf16 %v3518, %v3514
        %v3651 = vpack.c.bf16 %v3519, %v3515
        %v3652 = vpack.c.bf16 %v3524, %v3520
        %v3653 = vpack.c.bf16 %v3525, %v3521
        %v3654 = vpack.c.bf16 %v3526, %v3522
        %v3655 = vpack.c.bf16 %v3527, %v3523
        %v3656 = vld [vmem:[%s3] sm:$0xff]
        %v3657 = vld [vmem:[%s3 + $0x8] sm:$0xff]
        %v3658 = vld [vmem:[%s3 + $0x10] sm:$0xff]
        %v3659 = vld [vmem:[%s3 + $0x18] sm:$0xff]
        %v3660 = vld [vmem:[%s3 + $0x20] sm:$0xff]
        %v3661 = vld [vmem:[%s3 + $0x28] sm:$0xff]
        %v3662 = vld [vmem:[%s3 + $0x30] sm:$0xff]
        %v3663 = vld [vmem:[%s3 + $0x38] sm:$0xff]
        %v3664 = vld [vmem:[%s3 + $0x40] sm:$0xff]
        %v3665 = vld [vmem:[%s3 + $0x48] sm:$0xff]
        %v3666 = vld [vmem:[%s3 + $0x50] sm:$0xff]
        %v3667 = vld [vmem:[%s3 + $0x58] sm:$0xff]
        %v3668 = vld [vmem:[%s3 + $0x60] sm:$0xff]
        %v3669 = vld [vmem:[%s3 + $0x68] sm:$0xff]
        %v3670 = vld [vmem:[%s3 + $0x70] sm:$0xff]
        %v3671 = vld [vmem:[%s3 + $0x78] sm:$0xff]
        %v3672 = vld [vmem:[%s3 + $0x80] sm:$0xff]
        %v3673 = vld [vmem:[%s3 + $0x88] sm:$0xff]
        %v3674 = vld [vmem:[%s3 + $0x90] sm:$0xff]
        %v3675 = vld [vmem:[%s3 + $0x98] sm:$0xff]
        %v3676 = vld [vmem:[%s3 + $0xa0] sm:$0xff]
        %v3677 = vld [vmem:[%s3 + $0xa8] sm:$0xff]
        %v3678 = vld [vmem:[%s3 + $0xb0] sm:$0xff]
        %v3679 = vld [vmem:[%s3 + $0xb8] sm:$0xff]
        %v3680 = vld [vmem:[%s3 + $0xc0] sm:$0xff]
        %v3681 = vld [vmem:[%s3 + $0xc8] sm:$0xff]
        %v3682 = vld [vmem:[%s3 + $0xd0] sm:$0xff]
        %v3683 = vld [vmem:[%s3 + $0xd8] sm:$0xff]
        %v3684 = vld [vmem:[%s3 + $0xe0] sm:$0xff]
        %v3685 = vld [vmem:[%s3 + $0xe8] sm:$0xff]
        %v3686 = vld [vmem:[%s3 + $0xf0] sm:$0xff]
        %v3687 = vld [vmem:[%s3 + $0xf8] sm:$0xff]
        %v3688 = vld [vmem:[%s3 + $0x100] sm:$0xff]
        %v3689 = vld [vmem:[%s3 + $0x108] sm:$0xff]
        %v3690 = vld [vmem:[%s3 + $0x110] sm:$0xff]
        %v3691 = vld [vmem:[%s3 + $0x118] sm:$0xff]
        %v3692 = vld [vmem:[%s3 + $0x120] sm:$0xff]
        %v3693 = vld [vmem:[%s3 + $0x128] sm:$0xff]
        %v3694 = vld [vmem:[%s3 + $0x130] sm:$0xff]
        %v3695 = vld [vmem:[%s3 + $0x138] sm:$0xff]
        %v3696 = vld [vmem:[%s3 + $0x140] sm:$0xff]
        %v3697 = vld [vmem:[%s3 + $0x148] sm:$0xff]
        %v3698 = vld [vmem:[%s3 + $0x150] sm:$0xff]
        %v3699 = vld [vmem:[%s3 + $0x158] sm:$0xff]
        %v3700 = vld [vmem:[%s3 + $0x160] sm:$0xff]
        %v3701 = vld [vmem:[%s3 + $0x168] sm:$0xff]
        %v3702 = vld [vmem:[%s3 + $0x170] sm:$0xff]
        %v3703 = vld [vmem:[%s3 + $0x178] sm:$0xff]
        %v3704 = vld [vmem:[%s3 + $0x180] sm:$0xff]
        %v3705 = vld [vmem:[%s3 + $0x188] sm:$0xff]
        %v3706 = vld [vmem:[%s3 + $0x190] sm:$0xff]
        %v3707 = vld [vmem:[%s3 + $0x198] sm:$0xff]
        %v3708 = vld [vmem:[%s3 + $0x1a0] sm:$0xff]
        %v3709 = vld [vmem:[%s3 + $0x1a8] sm:$0xff]
        %v3710 = vld [vmem:[%s3 + $0x1b0] sm:$0xff]
        %v3711 = vld [vmem:[%s3 + $0x1b8] sm:$0xff]
        %v3712 = vld [vmem:[%s3 + $0x1c0] sm:$0xff]
        %v3713 = vld [vmem:[%s3 + $0x1c8] sm:$0xff]
        %v3714 = vld [vmem:[%s3 + $0x1d0] sm:$0xff]
        %v3715 = vld [vmem:[%s3 + $0x1d8] sm:$0xff]
        %v3716 = vld [vmem:[%s3 + $0x1e0] sm:$0xff]
        %v3717 = vld [vmem:[%s3 + $0x1e8] sm:$0xff]
        %v3718 = vld [vmem:[%s3 + $0x1f0] sm:$0xff]
        %v3719 = vld [vmem:[%s3 + $0x1f8] sm:$0xff]
        %v3720 = vld [vmem:[%s4] sm:$0xff]
        %v3721 = vld [vmem:[%s4 + $0x8] sm:$0xff]
        %v3722 = vld [vmem:[%s4 + $0x10] sm:$0xff]
        %v3723 = vld [vmem:[%s4 + $0x18] sm:$0xff]
        %v3724 = vld [vmem:[%s4 + $0x20] sm:$0xff]
        %v3725 = vld [vmem:[%s4 + $0x28] sm:$0xff]
        %v3726 = vld [vmem:[%s4 + $0x30] sm:$0xff]
        %v3727 = vld [vmem:[%s4 + $0x38] sm:$0xff]
        %v3728 = vld [vmem:[%s4 + $0x40] sm:$0xff]
        %v3729 = vld [vmem:[%s4 + $0x48] sm:$0xff]
        %v3730 = vld [vmem:[%s4 + $0x50] sm:$0xff]
        %v3731 = vld [vmem:[%s4 + $0x58] sm:$0xff]
        %v3732 = vld [vmem:[%s4 + $0x60] sm:$0xff]
        %v3733 = vld [vmem:[%s4 + $0x68] sm:$0xff]
        %v3734 = vld [vmem:[%s4 + $0x70] sm:$0xff]
        %v3735 = vld [vmem:[%s4 + $0x78] sm:$0xff]
        %v3736 = vld [vmem:[%s4 + $0x80] sm:$0xff]
        %v3737 = vld [vmem:[%s4 + $0x88] sm:$0xff]
        %v3738 = vld [vmem:[%s4 + $0x90] sm:$0xff]
        %v3739 = vld [vmem:[%s4 + $0x98] sm:$0xff]
        %v3740 = vld [vmem:[%s4 + $0xa0] sm:$0xff]
        %v3741 = vld [vmem:[%s4 + $0xa8] sm:$0xff]
        %v3742 = vld [vmem:[%s4 + $0xb0] sm:$0xff]
        %v3743 = vld [vmem:[%s4 + $0xb8] sm:$0xff]
        %v3744 = vld [vmem:[%s4 + $0xc0] sm:$0xff]
        %v3745 = vld [vmem:[%s4 + $0xc8] sm:$0xff]
        %v3746 = vld [vmem:[%s4 + $0xd0] sm:$0xff]
        %v3747 = vld [vmem:[%s4 + $0xd8] sm:$0xff]
        %v3748 = vld [vmem:[%s4 + $0xe0] sm:$0xff]
        %v3749 = vld [vmem:[%s4 + $0xe8] sm:$0xff]
        %v3750 = vld [vmem:[%s4 + $0xf0] sm:$0xff]
        %v3751 = vld [vmem:[%s4 + $0xf8] sm:$0xff]
        %3753 = vset.pattern.permute.xlu0 0
        %3754 = vperm.xlu0 %3753, %v3720
        %v3755 = vpop.permute.xlu0 %3754
        %3758 = vset.pattern.permute.xlu0 0
        %3759 = vperm.xlu0 %3758, %v3721
        %v3760 = vpop.permute.xlu0 %3759
        %3763 = vset.pattern.permute.xlu0 0
        %3764 = vperm.xlu0 %3763, %v3722
        %v3765 = vpop.permute.xlu0 %3764
        %3768 = vset.pattern.permute.xlu0 0
        %3769 = vperm.xlu0 %3768, %v3723
        %v3770 = vpop.permute.xlu0 %3769
        %3773 = vset.pattern.permute.xlu0 0
        %3774 = vperm.xlu0 %3773, %v3724
        %v3775 = vpop.permute.xlu0 %3774
        %3778 = vset.pattern.permute.xlu0 0
        %3779 = vperm.xlu0 %3778, %v3725
        %v3780 = vpop.permute.xlu0 %3779
        %3783 = vset.pattern.permute.xlu0 0
        %3784 = vperm.xlu0 %3783, %v3726
        %v3785 = vpop.permute.xlu0 %3784
        %3788 = vset.pattern.permute.xlu0 0
        %3789 = vperm.xlu0 %3788, %v3727
        %v3790 = vpop.permute.xlu0 %3789
        %3793 = vset.pattern.permute.xlu0 0
        %3794 = vperm.xlu0 %3793, %v3728
        %v3795 = vpop.permute.xlu0 %3794
        %3798 = vset.pattern.permute.xlu0 0
        %3799 = vperm.xlu0 %3798, %v3729
        %v3800 = vpop.permute.xlu0 %3799
        %3803 = vset.pattern.permute.xlu0 0
        %3804 = vperm.xlu0 %3803, %v3730
        %v3805 = vpop.permute.xlu0 %3804
        %3808 = vset.pattern.permute.xlu0 0
        %3809 = vperm.xlu0 %3808, %v3731
        %v3810 = vpop.permute.xlu0 %3809
        %3813 = vset.pattern.permute.xlu0 0
        %3814 = vperm.xlu0 %3813, %v3732
        %v3815 = vpop.permute.xlu0 %3814
        %3818 = vset.pattern.permute.xlu0 0
        %3819 = vperm.xlu0 %3818, %v3733
        %v3820 = vpop.permute.xlu0 %3819
        %3823 = vset.pattern.permute.xlu0 0
        %3824 = vperm.xlu0 %3823, %v3734
        %v3825 = vpop.permute.xlu0 %3824
        %3828 = vset.pattern.permute.xlu0 0
        %3829 = vperm.xlu0 %3828, %v3735
        %v3830 = vpop.permute.xlu0 %3829
        %3833 = vset.pattern.permute.xlu0 0
        %3834 = vperm.xlu0 %3833, %v3736
        %v3835 = vpop.permute.xlu0 %3834
        %3838 = vset.pattern.permute.xlu0 0
        %3839 = vperm.xlu0 %3838, %v3737
        %v3840 = vpop.permute.xlu0 %3839
        %3843 = vset.pattern.permute.xlu0 0
        %3844 = vperm.xlu0 %3843, %v3738
        %v3845 = vpop.permute.xlu0 %3844
        %3848 = vset.pattern.permute.xlu0 0
        %3849 = vperm.xlu0 %3848, %v3739
        %v3850 = vpop.permute.xlu0 %3849
        %3853 = vset.pattern.permute.xlu0 0
        %3854 = vperm.xlu0 %3853, %v3740
        %v3855 = vpop.permute.xlu0 %3854
        %3858 = vset.pattern.permute.xlu0 0
        %3859 = vperm.xlu0 %3858, %v3741
        %v3860 = vpop.permute.xlu0 %3859
        %3863 = vset.pattern.permute.xlu0 0
        %3864 = vperm.xlu0 %3863, %v3742
        %v3865 = vpop.permute.xlu0 %3864
        %3868 = vset.pattern.permute.xlu0 0
        %3869 = vperm.xlu0 %3868, %v3743
        %v3870 = vpop.permute.xlu0 %3869
        %3873 = vset.pattern.permute.xlu0 0
        %3874 = vperm.xlu0 %3873, %v3744
        %v3875 = vpop.permute.xlu0 %3874
        %3878 = vset.pattern.permute.xlu0 0
        %3879 = vperm.xlu0 %3878, %v3745
        %v3880 = vpop.permute.xlu0 %3879
        %3883 = vset.pattern.permute.xlu0 0
        %3884 = vperm.xlu0 %3883, %v3746
        %v3885 = vpop.permute.xlu0 %3884
        %3888 = vset.pattern.permute.xlu0 0
        %3889 = vperm.xlu0 %3888, %v3747
        %v3890 = vpop.permute.xlu0 %3889
        %3893 = vset.pattern.permute.xlu0 0
        %3894 = vperm.xlu0 %3893, %v3748
        %v3895 = vpop.permute.xlu0 %3894
        %3898 = vset.pattern.permute.xlu0 0
        %3899 = vperm.xlu0 %3898, %v3749
        %v3900 = vpop.permute.xlu0 %3899
        %3903 = vset.pattern.permute.xlu0 0
        %3904 = vperm.xlu0 %3903, %v3750
        %v3905 = vpop.permute.xlu0 %3904
        %3908 = vset.pattern.permute.xlu0 0
        %3909 = vperm.xlu0 %3908, %v3751
        %v3910 = vpop.permute.xlu0 %3909
        %v3976 = vunpack.c.l.b16 %v3656
        %v3977 = vunpack.c.h.b16 %v3656
        %v3978 = vunpack.c.l.b16 %v3657
        %v3979 = vunpack.c.h.b16 %v3657
        %v3980 = vunpack.c.l.b16 %v3658
        %v3981 = vunpack.c.h.b16 %v3658
        %v3982 = vunpack.c.l.b16 %v3659
        %v3983 = vunpack.c.h.b16 %v3659
        %v3984 = vunpack.c.l.b16 %v3660
        %v3985 = vunpack.c.h.b16 %v3660
        %v3986 = vunpack.c.l.b16 %v3661
        %v3987 = vunpack.c.h.b16 %v3661
        %v3988 = vunpack.c.l.b16 %v3662
        %v3989 = vunpack.c.h.b16 %v3662
        %v3990 = vunpack.c.l.b16 %v3663
        %v3991 = vunpack.c.h.b16 %v3663
        %v3992 = vunpack.c.l.b16 %v3664
        %v3993 = vunpack.c.h.b16 %v3664
        %v3994 = vunpack.c.l.b16 %v3665
        %v3995 = vunpack.c.h.b16 %v3665
        %v3996 = vunpack.c.l.b16 %v3666
        %v3997 = vunpack.c.h.b16 %v3666
        %v3998 = vunpack.c.l.b16 %v3667
        %v3999 = vunpack.c.h.b16 %v3667
        %v4000 = vunpack.c.l.b16 %v3668
        %v4001 = vunpack.c.h.b16 %v3668
        %v4002 = vunpack.c.l.b16 %v3669
        %v4003 = vunpack.c.h.b16 %v3669
        %v4004 = vunpack.c.l.b16 %v3670
        %v4005 = vunpack.c.h.b16 %v3670
        %v4006 = vunpack.c.l.b16 %v3671
        %v4007 = vunpack.c.h.b16 %v3671
        %v4008 = vunpack.c.l.b16 %v3672
        %v4009 = vunpack.c.h.b16 %v3672
        %v4010 = vunpack.c.l.b16 %v3673
        %v4011 = vunpack.c.h.b16 %v3673
        %v4012 = vunpack.c.l.b16 %v3674
        %v4013 = vunpack.c.h.b16 %v3674
        %v4014 = vunpack.c.l.b16 %v3675
        %v4015 = vunpack.c.h.b16 %v3675
        %v4016 = vunpack.c.l.b16 %v3676
        %v4017 = vunpack.c.h.b16 %v3676
        %v4018 = vunpack.c.l.b16 %v3677
        %v4019 = vunpack.c.h.b16 %v3677
        %v4020 = vunpack.c.l.b16 %v3678
        %v4021 = vunpack.c.h.b16 %v3678
        %v4022 = vunpack.c.l.b16 %v3679
        %v4023 = vunpack.c.h.b16 %v3679
        %v4024 = vunpack.c.l.b16 %v3680
        %v4025 = vunpack.c.h.b16 %v3680
        %v4026 = vunpack.c.l.b16 %v3681
        %v4027 = vunpack.c.h.b16 %v3681
        %v4028 = vunpack.c.l.b16 %v3682
        %v4029 = vunpack.c.h.b16 %v3682
        %v4030 = vunpack.c.l.b16 %v3683
        %v4031 = vunpack.c.h.b16 %v3683
        %v4032 = vunpack.c.l.b16 %v3684
        %v4033 = vunpack.c.h.b16 %v3684
        %v4034 = vunpack.c.l.b16 %v3685
        %v4035 = vunpack.c.h.b16 %v3685
        %v4036 = vunpack.c.l.b16 %v3686
        %v4037 = vunpack.c.h.b16 %v3686
        %v4038 = vunpack.c.l.b16 %v3687
        %v4039 = vunpack.c.h.b16 %v3687
        %v4040 = vunpack.c.l.b16 %v3688
        %v4041 = vunpack.c.h.b16 %v3688
        %v4042 = vunpack.c.l.b16 %v3689
        %v4043 = vunpack.c.h.b16 %v3689
        %v4044 = vunpack.c.l.b16 %v3690
        %v4045 = vunpack.c.h.b16 %v3690
        %v4046 = vunpack.c.l.b16 %v3691
        %v4047 = vunpack.c.h.b16 %v3691
        %v4048 = vunpack.c.l.b16 %v3692
        %v4049 = vunpack.c.h.b16 %v3692
        %v4050 = vunpack.c.l.b16 %v3693
        %v4051 = vunpack.c.h.b16 %v3693
        %v4052 = vunpack.c.l.b16 %v3694
        %v4053 = vunpack.c.h.b16 %v3694
        %v4054 = vunpack.c.l.b16 %v3695
        %v4055 = vunpack.c.h.b16 %v3695
        %v4056 = vunpack.c.l.b16 %v3696
        %v4057 = vunpack.c.h.b16 %v3696
        %v4058 = vunpack.c.l.b16 %v3697
        %v4059 = vunpack.c.h.b16 %v3697
        %v4060 = vunpack.c.l.b16 %v3698
        %v4061 = vunpack.c.h.b16 %v3698
        %v4062 = vunpack.c.l.b16 %v3699
        %v4063 = vunpack.c.h.b16 %v3699
        %v4064 = vunpack.c.l.b16 %v3700
        %v4065 = vunpack.c.h.b16 %v3700
        %v4066 = vunpack.c.l.b16 %v3701
        %v4067 = vunpack.c.h.b16 %v3701
        %v4068 = vunpack.c.l.b16 %v3702
        %v4069 = vunpack.c.h.b16 %v3702
        %v4070 = vunpack.c.l.b16 %v3703
        %v4071 = vunpack.c.h.b16 %v3703
        %v4072 = vunpack.c.l.b16 %v3704
        %v4073 = vunpack.c.h.b16 %v3704
        %v4074 = vunpack.c.l.b16 %v3705
        %v4075 = vunpack.c.h.b16 %v3705
        %v4076 = vunpack.c.l.b16 %v3706
        %v4077 = vunpack.c.h.b16 %v3706
        %v4078 = vunpack.c.l.b16 %v3707
        %v4079 = vunpack.c.h.b16 %v3707
        %v4080 = vunpack.c.l.b16 %v3708
        %v4081 = vunpack.c.h.b16 %v3708
        %v4082 = vunpack.c.l.b16 %v3709
        %v4083 = vunpack.c.h.b16 %v3709
        %v4084 = vunpack.c.l.b16 %v3710
        %v4085 = vunpack.c.h.b16 %v3710
        %v4086 = vunpack.c.l.b16 %v3711
        %v4087 = vunpack.c.h.b16 %v3711
        %v4088 = vunpack.c.l.b16 %v3712
        %v4089 = vunpack.c.h.b16 %v3712
        %v4090 = vunpack.c.l.b16 %v3713
        %v4091 = vunpack.c.h.b16 %v3713
        %v4092 = vunpack.c.l.b16 %v3714
        %v4093 = vunpack.c.h.b16 %v3714
        %v4094 = vunpack.c.l.b16 %v3715
        %v4095 = vunpack.c.h.b16 %v3715
        %v4096 = vunpack.c.l.b16 %v3716
        %v4097 = vunpack.c.h.b16 %v3716
        %v4098 = vunpack.c.l.b16 %v3717
        %v4099 = vunpack.c.h.b16 %v3717
        %v4100 = vunpack.c.l.b16 %v3718
        %v4101 = vunpack.c.h.b16 %v3718
        %v4102 = vunpack.c.l.b16 %v3719
        %v4103 = vunpack.c.h.b16 %v3719
        %v4104 = vpack.c.b16 %v3980, %v3976
        %v4105 = vpack.c.b16 %v3981, %v3977
        %v4106 = vpack.c.b16 %v3982, %v3978
        %v4107 = vpack.c.b16 %v3983, %v3979
        %v4108 = vpack.c.b16 %v3988, %v3984
        %v4109 = vpack.c.b16 %v3989, %v3985
        %v4110 = vpack.c.b16 %v3990, %v3986
        %v4111 = vpack.c.b16 %v3991, %v3987
        %v4112 = vpack.c.b16 %v3996, %v3992
        %v4113 = vpack.c.b16 %v3997, %v3993
        %v4114 = vpack.c.b16 %v3998, %v3994
        %v4115 = vpack.c.b16 %v3999, %v3995
        %v4116 = vpack.c.b16 %v4004, %v4000
        %v4117 = vpack.c.b16 %v4005, %v4001
        %v4118 = vpack.c.b16 %v4006, %v4002
        %v4119 = vpack.c.b16 %v4007, %v4003
        %v4120 = vpack.c.b16 %v4012, %v4008
        %v4121 = vpack.c.b16 %v4013, %v4009
        %v4122 = vpack.c.b16 %v4014, %v4010
        %v4123 = vpack.c.b16 %v4015, %v4011
        %v4124 = vpack.c.b16 %v4020, %v4016
        %v4125 = vpack.c.b16 %v4021, %v4017
        %v4126 = vpack.c.b16 %v4022, %v4018
        %v4127 = vpack.c.b16 %v4023, %v4019
        %v4128 = vpack.c.b16 %v4028, %v4024
        %v4129 = vpack.c.b16 %v4029, %v4025
        %v4130 = vpack.c.b16 %v4030, %v4026
        %v4131 = vpack.c.b16 %v4031, %v4027
        %v4132 = vpack.c.b16 %v4036, %v4032
        %v4133 = vpack.c.b16 %v4037, %v4033
        %v4134 = vpack.c.b16 %v4038, %v4034
        %v4135 = vpack.c.b16 %v4039, %v4035
        %v4136 = vpack.c.b16 %v4044, %v4040
        %v4137 = vpack.c.b16 %v4045, %v4041
        %v4138 = vpack.c.b16 %v4046, %v4042
        %v4139 = vpack.c.b16 %v4047, %v4043
        %v4140 = vpack.c.b16 %v4052, %v4048
        %v4141 = vpack.c.b16 %v4053, %v4049
        %v4142 = vpack.c.b16 %v4054, %v4050
        %v4143 = vpack.c.b16 %v4055, %v4051
        %v4144 = vpack.c.b16 %v4060, %v4056
        %v4145 = vpack.c.b16 %v4061, %v4057
        %v4146 = vpack.c.b16 %v4062, %v4058
        %v4147 = vpack.c.b16 %v4063, %v4059
        %v4148 = vpack.c.b16 %v4068, %v4064
        %v4149 = vpack.c.b16 %v4069, %v4065
        %v4150 = vpack.c.b16 %v4070, %v4066
        %v4151 = vpack.c.b16 %v4071, %v4067
        %v4152 = vpack.c.b16 %v4076, %v4072
        %v4153 = vpack.c.b16 %v4077, %v4073
        %v4154 = vpack.c.b16 %v4078, %v4074
        %v4155 = vpack.c.b16 %v4079, %v4075
        %v4156 = vpack.c.b16 %v4084, %v4080
        %v4157 = vpack.c.b16 %v4085, %v4081
        %v4158 = vpack.c.b16 %v4086, %v4082
        %v4159 = vpack.c.b16 %v4087, %v4083
        %v4160 = vpack.c.b16 %v4092, %v4088
        %v4161 = vpack.c.b16 %v4093, %v4089
        %v4162 = vpack.c.b16 %v4094, %v4090
        %v4163 = vpack.c.b16 %v4095, %v4091
        %v4164 = vpack.c.b16 %v4100, %v4096
        %v4165 = vpack.c.b16 %v4101, %v4097
        %v4166 = vpack.c.b16 %v4102, %v4098
        %v4167 = vpack.c.b16 %v4103, %v4099
        %4232 = vmatpush.bf16.msra.mxu0 %v3556
        %4233 = vmatpush.bf16.msra.mxu0 %v3552
        %4234 = vmatpush.bf16.msra.mxu0 %v3548
        %4235 = vmatpush.bf16.msra.mxu0 %v3544
        %4236 = vmatpush.bf16.msra.mxu0 %v3540
        %4237 = vmatpush.bf16.msra.mxu0 %v3536
        %4238 = vmatpush.bf16.msra.mxu0 %v3532
        %4239 = vmatpush.bf16.msra.mxu0 %v3528
        %4240 = vmatmul.bf16.gmra.mxu0 %v4104
        %v4241 = vpop.f32.mrf.mxu0
        %v4242 = vadd.f32 %v3755, %v4241
        %v4243 = vpop.f32.mrf.mxu0
        %v4244 = vadd.f32 %v3760, %v4243
        %4245 = vmatmul.bf16.gmra.mxu0 %v4108
        %v4246 = vpop.f32.mrf.mxu0
        %v4247 = vadd.f32 %v3765, %v4246
        %v4248 = vpop.f32.mrf.mxu0
        %v4249 = vadd.f32 %v3770, %v4248
        %4250 = vmatmul.bf16.gmra.mxu0 %v4112
        %v4251 = vpop.f32.mrf.mxu0
        %v4252 = vadd.f32 %v3775, %v4251
        %v4253 = vpop.f32.mrf.mxu0
        %v4254 = vadd.f32 %v3780, %v4253
        %4255 = vmatmul.bf16.gmra.mxu0 %v4116
        %v4256 = vpop.f32.mrf.mxu0
        %v4257 = vadd.f32 %v3785, %v4256
        %v4258 = vpop.f32.mrf.mxu0
        %v4259 = vadd.f32 %v3790, %v4258
        %4260 = vmatmul.bf16.gmra.mxu0 %v4120
        %v4261 = vpop.f32.mrf.mxu0
        %v4262 = vadd.f32 %v3795, %v4261
        %v4263 = vpop.f32.mrf.mxu0
        %v4264 = vadd.f32 %v3800, %v4263
        %4265 = vmatmul.bf16.gmra.mxu0 %v4124
        %v4266 = vpop.f32.mrf.mxu0
        %v4267 = vadd.f32 %v3805, %v4266
        %v4268 = vpop.f32.mrf.mxu0
        %v4269 = vadd.f32 %v3810, %v4268
        %4270 = vmatmul.bf16.gmra.mxu0 %v4128
        %v4271 = vpop.f32.mrf.mxu0
        %v4272 = vadd.f32 %v3815, %v4271
        %v4273 = vpop.f32.mrf.mxu0
        %v4274 = vadd.f32 %v3820, %v4273
        %4275 = vmatmul.bf16.gmra.mxu0 %v4132
        %v4276 = vpop.f32.mrf.mxu0
        %v4277 = vadd.f32 %v3825, %v4276
        %v4278 = vpop.f32.mrf.mxu0
        %v4279 = vadd.f32 %v3830, %v4278
        %4280 = vmatmul.bf16.gmra.mxu0 %v4136
        %v4281 = vpop.f32.mrf.mxu0
        %v4282 = vadd.f32 %v3835, %v4281
        %v4283 = vpop.f32.mrf.mxu0
        %v4284 = vadd.f32 %v3840, %v4283
        %4285 = vmatmul.bf16.gmra.mxu0 %v4140
        %v4286 = vpop.f32.mrf.mxu0
        %v4287 = vadd.f32 %v3845, %v4286
        %v4288 = vpop.f32.mrf.mxu0
        %v4289 = vadd.f32 %v3850, %v4288
        %4290 = vmatmul.bf16.gmra.mxu0 %v4144
        %v4291 = vpop.f32.mrf.mxu0
        %v4292 = vadd.f32 %v3855, %v4291
        %v4293 = vpop.f32.mrf.mxu0
        %v4294 = vadd.f32 %v3860, %v4293
        %4295 = vmatmul.bf16.gmra.mxu0 %v4148
        %v4296 = vpop.f32.mrf.mxu0
        %v4297 = vadd.f32 %v3865, %v4296
        %v4298 = vpop.f32.mrf.mxu0
        %v4299 = vadd.f32 %v3870, %v4298
        %4300 = vmatmul.bf16.gmra.mxu0 %v4152
        %v4301 = vpop.f32.mrf.mxu0
        %v4302 = vadd.f32 %v3875, %v4301
        %v4303 = vpop.f32.mrf.mxu0
        %v4304 = vadd.f32 %v3880, %v4303
        %4305 = vmatmul.bf16.gmra.mxu0 %v4156
        %v4306 = vpop.f32.mrf.mxu0
        %v4307 = vadd.f32 %v3885, %v4306
        %v4308 = vpop.f32.mrf.mxu0
        %v4309 = vadd.f32 %v3890, %v4308
        %4310 = vmatmul.bf16.gmra.mxu0 %v4160
        %v4311 = vpop.f32.mrf.mxu0
        %v4312 = vadd.f32 %v3895, %v4311
        %v4313 = vpop.f32.mrf.mxu0
        %v4314 = vadd.f32 %v3900, %v4313
        %4315 = vmatmul.bf16.gmra.mxu0 %v4164
        %v4316 = vpop.f32.mrf.mxu0
        %v4317 = vadd.f32 %v3905, %v4316
        %v4318 = vpop.f32.mrf.mxu0
        %v4319 = vadd.f32 %v3910, %v4318
        %4320 = vdwg.mxu0
        %4321 = vmatpush.bf16.msra.mxu0 %v3588
        %4322 = vmatpush.bf16.msra.mxu0 %v3584
        %4323 = vmatpush.bf16.msra.mxu0 %v3580
        %4324 = vmatpush.bf16.msra.mxu0 %v3576
        %4325 = vmatpush.bf16.msra.mxu0 %v3572
        %4326 = vmatpush.bf16.msra.mxu0 %v3568
        %4327 = vmatpush.bf16.msra.mxu0 %v3564
        %4328 = vmatpush.bf16.msra.mxu0 %v3560
        %4329 = vmatmul.bf16.gmra.mxu0 %v4105
        %v4330 = vpop.f32.mrf.mxu0
        %v4331 = vadd.f32 %v4242, %v4330
        %v4332 = vpop.f32.mrf.mxu0
        %v4333 = vadd.f32 %v4244, %v4332
        %4334 = vmatmul.bf16.gmra.mxu0 %v4109
        %v4335 = vpop.f32.mrf.mxu0
        %v4336 = vadd.f32 %v4247, %v4335
        %v4337 = vpop.f32.mrf.mxu0
        %v4338 = vadd.f32 %v4249, %v4337
        %4339 = vmatmul.bf16.gmra.mxu0 %v4113
        %v4340 = vpop.f32.mrf.mxu0
        %v4341 = vadd.f32 %v4252, %v4340
        %v4342 = vpop.f32.mrf.mxu0
        %v4343 = vadd.f32 %v4254, %v4342
        %4344 = vmatmul.bf16.gmra.mxu0 %v4117
        %v4345 = vpop.f32.mrf.mxu0
        %v4346 = vadd.f32 %v4257, %v4345
        %v4347 = vpop.f32.mrf.mxu0
        %v4348 = vadd.f32 %v4259, %v4347
        %4349 = vmatmul.bf16.gmra.mxu0 %v4121
        %v4350 = vpop.f32.mrf.mxu0
        %v4351 = vadd.f32 %v4262, %v4350
        %v4352 = vpop.f32.mrf.mxu0
        %v4353 = vadd.f32 %v4264, %v4352
        %4354 = vmatmul.bf16.gmra.mxu0 %v4125
        %v4355 = vpop.f32.mrf.mxu0
        %v4356 = vadd.f32 %v4267, %v4355
        %v4357 = vpop.f32.mrf.mxu0
        %v4358 = vadd.f32 %v4269, %v4357
        %4359 = vmatmul.bf16.gmra.mxu0 %v4129
        %v4360 = vpop.f32.mrf.mxu0
        %v4361 = vadd.f32 %v4272, %v4360
        %v4362 = vpop.f32.mrf.mxu0
        %v4363 = vadd.f32 %v4274, %v4362
        %4364 = vmatmul.bf16.gmra.mxu0 %v4133
        %v4365 = vpop.f32.mrf.mxu0
        %v4366 = vadd.f32 %v4277, %v4365
        %v4367 = vpop.f32.mrf.mxu0
        %v4368 = vadd.f32 %v4279, %v4367
        %4369 = vmatmul.bf16.gmra.mxu0 %v4137
        %v4370 = vpop.f32.mrf.mxu0
        %v4371 = vadd.f32 %v4282, %v4370
        %v4372 = vpop.f32.mrf.mxu0
        %v4373 = vadd.f32 %v4284, %v4372
        %4374 = vmatmul.bf16.gmra.mxu0 %v4141
        %v4375 = vpop.f32.mrf.mxu0
        %v4376 = vadd.f32 %v4287, %v4375
        %v4377 = vpop.f32.mrf.mxu0
        %v4378 = vadd.f32 %v4289, %v4377
        %4379 = vmatmul.bf16.gmra.mxu0 %v4145
        %v4380 = vpop.f32.mrf.mxu0
        %v4381 = vadd.f32 %v4292, %v4380
        %v4382 = vpop.f32.mrf.mxu0
        %v4383 = vadd.f32 %v4294, %v4382
        %4384 = vmatmul.bf16.gmra.mxu0 %v4149
        %v4385 = vpop.f32.mrf.mxu0
        %v4386 = vadd.f32 %v4297, %v4385
        %v4387 = vpop.f32.mrf.mxu0
        %v4388 = vadd.f32 %v4299, %v4387
        %4389 = vmatmul.bf16.gmra.mxu0 %v4153
        %v4390 = vpop.f32.mrf.mxu0
        %v4391 = vadd.f32 %v4302, %v4390
        %v4392 = vpop.f32.mrf.mxu0
        %v4393 = vadd.f32 %v4304, %v4392
        %4394 = vmatmul.bf16.gmra.mxu0 %v4157
        %v4395 = vpop.f32.mrf.mxu0
        %v4396 = vadd.f32 %v4307, %v4395
        %v4397 = vpop.f32.mrf.mxu0
        %v4398 = vadd.f32 %v4309, %v4397
        %4399 = vmatmul.bf16.gmra.mxu0 %v4161
        %v4400 = vpop.f32.mrf.mxu0
        %v4401 = vadd.f32 %v4312, %v4400
        %v4402 = vpop.f32.mrf.mxu0
        %v4403 = vadd.f32 %v4314, %v4402
        %4404 = vmatmul.bf16.gmra.mxu0 %v4165
        %v4405 = vpop.f32.mrf.mxu0
        %v4406 = vadd.f32 %v4317, %v4405
        %v4407 = vpop.f32.mrf.mxu0
        %v4408 = vadd.f32 %v4319, %v4407
        %4409 = vdwg.mxu0
        %4410 = vmatpush.bf16.msra.mxu0 %v3620
        %4411 = vmatpush.bf16.msra.mxu0 %v3616
        %4412 = vmatpush.bf16.msra.mxu0 %v3612
        %4413 = vmatpush.bf16.msra.mxu0 %v3608
        %4414 = vmatpush.bf16.msra.mxu0 %v3604
        %4415 = vmatpush.bf16.msra.mxu0 %v3600
        %4416 = vmatpush.bf16.msra.mxu0 %v3596
        %4417 = vmatpush.bf16.msra.mxu0 %v3592
        %4418 = vmatmul.bf16.gmra.mxu0 %v4106
        %v4419 = vpop.f32.mrf.mxu0
        %v4420 = vadd.f32 %v4331, %v4419
        %v4421 = vpop.f32.mrf.mxu0
        %v4422 = vadd.f32 %v4333, %v4421
        %4423 = vmatmul.bf16.gmra.mxu0 %v4110
        %v4424 = vpop.f32.mrf.mxu0
        %v4425 = vadd.f32 %v4336, %v4424
        %v4426 = vpop.f32.mrf.mxu0
        %v4427 = vadd.f32 %v4338, %v4426
        %4428 = vmatmul.bf16.gmra.mxu0 %v4114
        %v4429 = vpop.f32.mrf.mxu0
        %v4430 = vadd.f32 %v4341, %v4429
        %v4431 = vpop.f32.mrf.mxu0
        %v4432 = vadd.f32 %v4343, %v4431
        %4433 = vmatmul.bf16.gmra.mxu0 %v4118
        %v4434 = vpop.f32.mrf.mxu0
        %v4435 = vadd.f32 %v4346, %v4434
        %v4436 = vpop.f32.mrf.mxu0
        %v4437 = vadd.f32 %v4348, %v4436
        %4438 = vmatmul.bf16.gmra.mxu0 %v4122
        %v4439 = vpop.f32.mrf.mxu0
        %v4440 = vadd.f32 %v4351, %v4439
        %v4441 = vpop.f32.mrf.mxu0
        %v4442 = vadd.f32 %v4353, %v4441
        %4443 = vmatmul.bf16.gmra.mxu0 %v4126
        %v4444 = vpop.f32.mrf.mxu0
        %v4445 = vadd.f32 %v4356, %v4444
        %v4446 = vpop.f32.mrf.mxu0
        %v4447 = vadd.f32 %v4358, %v4446
        %4448 = vmatmul.bf16.gmra.mxu0 %v4130
        %v4449 = vpop.f32.mrf.mxu0
        %v4450 = vadd.f32 %v4361, %v4449
        %v4451 = vpop.f32.mrf.mxu0
        %v4452 = vadd.f32 %v4363, %v4451
        %4453 = vmatmul.bf16.gmra.mxu0 %v4134
        %v4454 = vpop.f32.mrf.mxu0
        %v4455 = vadd.f32 %v4366, %v4454
        %v4456 = vpop.f32.mrf.mxu0
        %v4457 = vadd.f32 %v4368, %v4456
        %4458 = vmatmul.bf16.gmra.mxu0 %v4138
        %v4459 = vpop.f32.mrf.mxu0
        %v4460 = vadd.f32 %v4371, %v4459
        %v4461 = vpop.f32.mrf.mxu0
        %v4462 = vadd.f32 %v4373, %v4461
        %4463 = vmatmul.bf16.gmra.mxu0 %v4142
        %v4464 = vpop.f32.mrf.mxu0
        %v4465 = vadd.f32 %v4376, %v4464
        %v4466 = vpop.f32.mrf.mxu0
        %v4467 = vadd.f32 %v4378, %v4466
        %4468 = vmatmul.bf16.gmra.mxu0 %v4146
        %v4469 = vpop.f32.mrf.mxu0
        %v4470 = vadd.f32 %v4381, %v4469
        %v4471 = vpop.f32.mrf.mxu0
        %v4472 = vadd.f32 %v4383, %v4471
        %4473 = vmatmul.bf16.gmra.mxu0 %v4150
        %v4474 = vpop.f32.mrf.mxu0
        %v4475 = vadd.f32 %v4386, %v4474
        %v4476 = vpop.f32.mrf.mxu0
        %v4477 = vadd.f32 %v4388, %v4476
        %4478 = vmatmul.bf16.gmra.mxu0 %v4154
        %v4479 = vpop.f32.mrf.mxu0
        %v4480 = vadd.f32 %v4391, %v4479
        %v4481 = vpop.f32.mrf.mxu0
        %v4482 = vadd.f32 %v4393, %v4481
        %4483 = vmatmul.bf16.gmra.mxu0 %v4158
        %v4484 = vpop.f32.mrf.mxu0
        %v4485 = vadd.f32 %v4396, %v4484
        %v4486 = vpop.f32.mrf.mxu0
        %v4487 = vadd.f32 %v4398, %v4486
        %4488 = vmatmul.bf16.gmra.mxu0 %v4162
        %v4489 = vpop.f32.mrf.mxu0
        %v4490 = vadd.f32 %v4401, %v4489
        %v4491 = vpop.f32.mrf.mxu0
        %v4492 = vadd.f32 %v4403, %v4491
        %4493 = vmatmul.bf16.gmra.mxu0 %v4166
        %v4494 = vpop.f32.mrf.mxu0
        %v4495 = vadd.f32 %v4406, %v4494
        %v4496 = vpop.f32.mrf.mxu0
        %v4497 = vadd.f32 %v4408, %v4496
        %4498 = vdwg.mxu0
        %4499 = vmatpush.bf16.msra.mxu0 %v3652
        %4500 = vmatpush.bf16.msra.mxu0 %v3648
        %4501 = vmatpush.bf16.msra.mxu0 %v3644
        %4502 = vmatpush.bf16.msra.mxu0 %v3640
        %4503 = vmatpush.bf16.msra.mxu0 %v3636
        %4504 = vmatpush.bf16.msra.mxu0 %v3632
        %4505 = vmatpush.bf16.msra.mxu0 %v3628
        %4506 = vmatpush.bf16.msra.mxu0 %v3624
        %4507 = vmatmul.bf16.gmra.mxu0 %v4107
        %v4508 = vpop.f32.mrf.mxu0
        %v4509 = vadd.f32 %v4420, %v4508
        %v4510 = vpop.f32.mrf.mxu0
        %v4511 = vadd.f32 %v4422, %v4510
        %4512 = vmatmul.bf16.gmra.mxu0 %v4111
        %v4513 = vpop.f32.mrf.mxu0
        %v4514 = vadd.f32 %v4425, %v4513
        %v4515 = vpop.f32.mrf.mxu0
        %v4516 = vadd.f32 %v4427, %v4515
        %4517 = vmatmul.bf16.gmra.mxu0 %v4115
        %v4518 = vpop.f32.mrf.mxu0
        %v4519 = vadd.f32 %v4430, %v4518
        %v4520 = vpop.f32.mrf.mxu0
        %v4521 = vadd.f32 %v4432, %v4520
        %4522 = vmatmul.bf16.gmra.mxu0 %v4119
        %v4523 = vpop.f32.mrf.mxu0
        %v4524 = vadd.f32 %v4435, %v4523
        %v4525 = vpop.f32.mrf.mxu0
        %v4526 = vadd.f32 %v4437, %v4525
        %4527 = vmatmul.bf16.gmra.mxu0 %v4123
        %v4528 = vpop.f32.mrf.mxu0
        %v4529 = vadd.f32 %v4440, %v4528
        %v4530 = vpop.f32.mrf.mxu0
        %v4531 = vadd.f32 %v4442, %v4530
        %4532 = vmatmul.bf16.gmra.mxu0 %v4127
        %v4533 = vpop.f32.mrf.mxu0
        %v4534 = vadd.f32 %v4445, %v4533
        %v4535 = vpop.f32.mrf.mxu0
        %v4536 = vadd.f32 %v4447, %v4535
        %4537 = vmatmul.bf16.gmra.mxu0 %v4131
        %v4538 = vpop.f32.mrf.mxu0
        %v4539 = vadd.f32 %v4450, %v4538
        %v4540 = vpop.f32.mrf.mxu0
        %v4541 = vadd.f32 %v4452, %v4540
        %4542 = vmatmul.bf16.gmra.mxu0 %v4135
        %v4543 = vpop.f32.mrf.mxu0
        %v4544 = vadd.f32 %v4455, %v4543
        %v4545 = vpop.f32.mrf.mxu0
        %v4546 = vadd.f32 %v4457, %v4545
        %4547 = vmatmul.bf16.gmra.mxu0 %v4139
        %v4548 = vpop.f32.mrf.mxu0
        %v4549 = vadd.f32 %v4460, %v4548
        %v4550 = vpop.f32.mrf.mxu0
        %v4551 = vadd.f32 %v4462, %v4550
        %4552 = vmatmul.bf16.gmra.mxu0 %v4143
        %v4553 = vpop.f32.mrf.mxu0
        %v4554 = vadd.f32 %v4465, %v4553
        %v4555 = vpop.f32.mrf.mxu0
        %v4556 = vadd.f32 %v4467, %v4555
        %4557 = vmatmul.bf16.gmra.mxu0 %v4147
        %v4558 = vpop.f32.mrf.mxu0
        %v4559 = vadd.f32 %v4470, %v4558
        %v4560 = vpop.f32.mrf.mxu0
        %v4561 = vadd.f32 %v4472, %v4560
        %4562 = vmatmul.bf16.gmra.mxu0 %v4151
        %v4563 = vpop.f32.mrf.mxu0
        %v4564 = vadd.f32 %v4475, %v4563
        %v4565 = vpop.f32.mrf.mxu0
        %v4566 = vadd.f32 %v4477, %v4565
        %4567 = vmatmul.bf16.gmra.mxu0 %v4155
        %v4568 = vpop.f32.mrf.mxu0
        %v4569 = vadd.f32 %v4480, %v4568
        %v4570 = vpop.f32.mrf.mxu0
        %v4571 = vadd.f32 %v4482, %v4570
        %4572 = vmatmul.bf16.gmra.mxu0 %v4159
        %v4573 = vpop.f32.mrf.mxu0
        %v4574 = vadd.f32 %v4485, %v4573
        %v4575 = vpop.f32.mrf.mxu0
        %v4576 = vadd.f32 %v4487, %v4575
        %4577 = vmatmul.bf16.gmra.mxu0 %v4163
        %v4578 = vpop.f32.mrf.mxu0
        %v4579 = vadd.f32 %v4490, %v4578
        %v4580 = vpop.f32.mrf.mxu0
        %v4581 = vadd.f32 %v4492, %v4580
        %4582 = vmatmul.bf16.gmra.mxu0 %v4167
        %v4583 = vpop.f32.mrf.mxu0
        %v4584 = vadd.f32 %v4495, %v4583
        %v4585 = vpop.f32.mrf.mxu0
        %v4586 = vadd.f32 %v4497, %v4585
        %4587 = vdwg.mxu0
        %4588 = vmatpush.bf16.msra.mxu0 %v3557
        %4589 = vmatpush.bf16.msra.mxu0 %v3553
        %4590 = vmatpush.bf16.msra.mxu0 %v3549
        %4591 = vmatpush.bf16.msra.mxu0 %v3545
        %4592 = vmatpush.bf16.msra.mxu0 %v3541
        %4593 = vmatpush.bf16.msra.mxu0 %v3537
        %4594 = vmatpush.bf16.msra.mxu0 %v3533
        %4595 = vmatpush.bf16.msra.mxu0 %v3529
        %4596 = vmatmul.bf16.gmra.mxu0 %v4104
        %v4597 = vpop.f32.mrf.mxu0
        %v4598 = vadd.f32 %v3755, %v4597
        %v4599 = vpop.f32.mrf.mxu0
        %v4600 = vadd.f32 %v3760, %v4599
        %4601 = vmatmul.bf16.gmra.mxu0 %v4108
        %v4602 = vpop.f32.mrf.mxu0
        %v4603 = vadd.f32 %v3765, %v4602
        %v4604 = vpop.f32.mrf.mxu0
        %v4605 = vadd.f32 %v3770, %v4604
        %4606 = vmatmul.bf16.gmra.mxu0 %v4112
        %v4607 = vpop.f32.mrf.mxu0
        %v4608 = vadd.f32 %v3775, %v4607
        %v4609 = vpop.f32.mrf.mxu0
        %v4610 = vadd.f32 %v3780, %v4609
        %4611 = vmatmul.bf16.gmra.mxu0 %v4116
        %v4612 = vpop.f32.mrf.mxu0
        %v4613 = vadd.f32 %v3785, %v4612
        %v4614 = vpop.f32.mrf.mxu0
        %v4615 = vadd.f32 %v3790, %v4614
        %4616 = vmatmul.bf16.gmra.mxu0 %v4120
        %v4617 = vpop.f32.mrf.mxu0
        %v4618 = vadd.f32 %v3795, %v4617
        %v4619 = vpop.f32.mrf.mxu0
        %v4620 = vadd.f32 %v3800, %v4619
        %4621 = vmatmul.bf16.gmra.mxu0 %v4124
        %v4622 = vpop.f32.mrf.mxu0
        %v4623 = vadd.f32 %v3805, %v4622
        %v4624 = vpop.f32.mrf.mxu0
        %v4625 = vadd.f32 %v3810, %v4624
        %4626 = vmatmul.bf16.gmra.mxu0 %v4128
        %v4627 = vpop.f32.mrf.mxu0
        %v4628 = vadd.f32 %v3815, %v4627
        %v4629 = vpop.f32.mrf.mxu0
        %v4630 = vadd.f32 %v3820, %v4629
        %4631 = vmatmul.bf16.gmra.mxu0 %v4132
        %v4632 = vpop.f32.mrf.mxu0
        %v4633 = vadd.f32 %v3825, %v4632
        %v4634 = vpop.f32.mrf.mxu0
        %v4635 = vadd.f32 %v3830, %v4634
        %4636 = vmatmul.bf16.gmra.mxu0 %v4136
        %v4637 = vpop.f32.mrf.mxu0
        %v4638 = vadd.f32 %v3835, %v4637
        %v4639 = vpop.f32.mrf.mxu0
        %v4640 = vadd.f32 %v3840, %v4639
        %4641 = vmatmul.bf16.gmra.mxu0 %v4140
        %v4642 = vpop.f32.mrf.mxu0
        %v4643 = vadd.f32 %v3845, %v4642
        %v4644 = vpop.f32.mrf.mxu0
        %v4645 = vadd.f32 %v3850, %v4644
        %4646 = vmatmul.bf16.gmra.mxu0 %v4144
        %v4647 = vpop.f32.mrf.mxu0
        %v4648 = vadd.f32 %v3855, %v4647
        %v4649 = vpop.f32.mrf.mxu0
        %v4650 = vadd.f32 %v3860, %v4649
        %4651 = vmatmul.bf16.gmra.mxu0 %v4148
        %v4652 = vpop.f32.mrf.mxu0
        %v4653 = vadd.f32 %v3865, %v4652
        %v4654 = vpop.f32.mrf.mxu0
        %v4655 = vadd.f32 %v3870, %v4654
        %4656 = vmatmul.bf16.gmra.mxu0 %v4152
        %v4657 = vpop.f32.mrf.mxu0
        %v4658 = vadd.f32 %v3875, %v4657
        %v4659 = vpop.f32.mrf.mxu0
        %v4660 = vadd.f32 %v3880, %v4659
        %4661 = vmatmul.bf16.gmra.mxu0 %v4156
        %v4662 = vpop.f32.mrf.mxu0
        %v4663 = vadd.f32 %v3885, %v4662
        %v4664 = vpop.f32.mrf.mxu0
        %v4665 = vadd.f32 %v3890, %v4664
        %4666 = vmatmul.bf16.gmra.mxu0 %v4160
        %v4667 = vpop.f32.mrf.mxu0
        %v4668 = vadd.f32 %v3895, %v4667
        %v4669 = vpop.f32.mrf.mxu0
        %v4670 = vadd.f32 %v3900, %v4669
        %4671 = vmatmul.bf16.gmra.mxu0 %v4164
        %v4672 = vpop.f32.mrf.mxu0
        %v4673 = vadd.f32 %v3905, %v4672
        %v4674 = vpop.f32.mrf.mxu0
        %v4675 = vadd.f32 %v3910, %v4674
        %4676 = vdwg.mxu0
        %4677 = vmatpush.bf16.msra.mxu0 %v3589
        %4678 = vmatpush.bf16.msra.mxu0 %v3585
        %4679 = vmatpush.bf16.msra.mxu0 %v3581
        %4680 = vmatpush.bf16.msra.mxu0 %v3577
        %4681 = vmatpush.bf16.msra.mxu0 %v3573
        %4682 = vmatpush.bf16.msra.mxu0 %v3569
        %4683 = vmatpush.bf16.msra.mxu0 %v3565
        %4684 = vmatpush.bf16.msra.mxu0 %v3561
        %4685 = vmatmul.bf16.gmra.mxu0 %v4105
        %v4686 = vpop.f32.mrf.mxu0
        %v4687 = vadd.f32 %v4598, %v4686
        %v4688 = vpop.f32.mrf.mxu0
        %v4689 = vadd.f32 %v4600, %v4688
        %4690 = vmatmul.bf16.gmra.mxu0 %v4109
        %v4691 = vpop.f32.mrf.mxu0
        %v4692 = vadd.f32 %v4603, %v4691
        %v4693 = vpop.f32.mrf.mxu0
        %v4694 = vadd.f32 %v4605, %v4693
        %4695 = vmatmul.bf16.gmra.mxu0 %v4113
        %v4696 = vpop.f32.mrf.mxu0
        %v4697 = vadd.f32 %v4608, %v4696
        %v4698 = vpop.f32.mrf.mxu0
        %v4699 = vadd.f32 %v4610, %v4698
        %4700 = vmatmul.bf16.gmra.mxu0 %v4117
        %v4701 = vpop.f32.mrf.mxu0
        %v4702 = vadd.f32 %v4613, %v4701
        %v4703 = vpop.f32.mrf.mxu0
        %v4704 = vadd.f32 %v4615, %v4703
        %4705 = vmatmul.bf16.gmra.mxu0 %v4121
        %v4706 = vpop.f32.mrf.mxu0
        %v4707 = vadd.f32 %v4618, %v4706
        %v4708 = vpop.f32.mrf.mxu0
        %v4709 = vadd.f32 %v4620, %v4708
        %4710 = vmatmul.bf16.gmra.mxu0 %v4125
        %v4711 = vpop.f32.mrf.mxu0
        %v4712 = vadd.f32 %v4623, %v4711
        %v4713 = vpop.f32.mrf.mxu0
        %v4714 = vadd.f32 %v4625, %v4713
        %4715 = vmatmul.bf16.gmra.mxu0 %v4129
        %v4716 = vpop.f32.mrf.mxu0
        %v4717 = vadd.f32 %v4628, %v4716
        %v4718 = vpop.f32.mrf.mxu0
        %v4719 = vadd.f32 %v4630, %v4718
        %4720 = vmatmul.bf16.gmra.mxu0 %v4133
        %v4721 = vpop.f32.mrf.mxu0
        %v4722 = vadd.f32 %v4633, %v4721
        %v4723 = vpop.f32.mrf.mxu0
        %v4724 = vadd.f32 %v4635, %v4723
        %4725 = vmatmul.bf16.gmra.mxu0 %v4137
        %v4726 = vpop.f32.mrf.mxu0
        %v4727 = vadd.f32 %v4638, %v4726
        %v4728 = vpop.f32.mrf.mxu0
        %v4729 = vadd.f32 %v4640, %v4728
        %4730 = vmatmul.bf16.gmra.mxu0 %v4141
        %v4731 = vpop.f32.mrf.mxu0
        %v4732 = vadd.f32 %v4643, %v4731
        %v4733 = vpop.f32.mrf.mxu0
        %v4734 = vadd.f32 %v4645, %v4733
        %4735 = vmatmul.bf16.gmra.mxu0 %v4145
        %v4736 = vpop.f32.mrf.mxu0
        %v4737 = vadd.f32 %v4648, %v4736
        %v4738 = vpop.f32.mrf.mxu0
        %v4739 = vadd.f32 %v4650, %v4738
        %4740 = vmatmul.bf16.gmra.mxu0 %v4149
        %v4741 = vpop.f32.mrf.mxu0
        %v4742 = vadd.f32 %v4653, %v4741
        %v4743 = vpop.f32.mrf.mxu0
        %v4744 = vadd.f32 %v4655, %v4743
        %4745 = vmatmul.bf16.gmra.mxu0 %v4153
        %v4746 = vpop.f32.mrf.mxu0
        %v4747 = vadd.f32 %v4658, %v4746
        %v4748 = vpop.f32.mrf.mxu0
        %v4749 = vadd.f32 %v4660, %v4748
        %4750 = vmatmul.bf16.gmra.mxu0 %v4157
        %v4751 = vpop.f32.mrf.mxu0
        %v4752 = vadd.f32 %v4663, %v4751
        %v4753 = vpop.f32.mrf.mxu0
        %v4754 = vadd.f32 %v4665, %v4753
        %4755 = vmatmul.bf16.gmra.mxu0 %v4161
        %v4756 = vpop.f32.mrf.mxu0
        %v4757 = vadd.f32 %v4668, %v4756
        %v4758 = vpop.f32.mrf.mxu0
        %v4759 = vadd.f32 %v4670, %v4758
        %4760 = vmatmul.bf16.gmra.mxu0 %v4165
        %v4761 = vpop.f32.mrf.mxu0
        %v4762 = vadd.f32 %v4673, %v4761
        %v4763 = vpop.f32.mrf.mxu0
        %v4764 = vadd.f32 %v4675, %v4763
        %4765 = vdwg.mxu0
        %4766 = vmatpush.bf16.msra.mxu0 %v3621
        %4767 = vmatpush.bf16.msra.mxu0 %v3617
        %4768 = vmatpush.bf16.msra.mxu0 %v3613
        %4769 = vmatpush.bf16.msra.mxu0 %v3609
        %4770 = vmatpush.bf16.msra.mxu0 %v3605
        %4771 = vmatpush.bf16.msra.mxu0 %v3601
        %4772 = vmatpush.bf16.msra.mxu0 %v3597
        %4773 = vmatpush.bf16.msra.mxu0 %v3593
        %4774 = vmatmul.bf16.gmra.mxu0 %v4106
        %v4775 = vpop.f32.mrf.mxu0
        %v4776 = vadd.f32 %v4687, %v4775
        %v4777 = vpop.f32.mrf.mxu0
        %v4778 = vadd.f32 %v4689, %v4777
        %4779 = vmatmul.bf16.gmra.mxu0 %v4110
        %v4780 = vpop.f32.mrf.mxu0
        %v4781 = vadd.f32 %v4692, %v4780
        %v4782 = vpop.f32.mrf.mxu0
        %v4783 = vadd.f32 %v4694, %v4782
        %4784 = vmatmul.bf16.gmra.mxu0 %v4114
        %v4785 = vpop.f32.mrf.mxu0
        %v4786 = vadd.f32 %v4697, %v4785
        %v4787 = vpop.f32.mrf.mxu0
        %v4788 = vadd.f32 %v4699, %v4787
        %4789 = vmatmul.bf16.gmra.mxu0 %v4118
        %v4790 = vpop.f32.mrf.mxu0
        %v4791 = vadd.f32 %v4702, %v4790
        %v4792 = vpop.f32.mrf.mxu0
        %v4793 = vadd.f32 %v4704, %v4792
        %4794 = vmatmul.bf16.gmra.mxu0 %v4122
        %v4795 = vpop.f32.mrf.mxu0
        %v4796 = vadd.f32 %v4707, %v4795
        %v4797 = vpop.f32.mrf.mxu0
        %v4798 = vadd.f32 %v4709, %v4797
        %4799 = vmatmul.bf16.gmra.mxu0 %v4126
        %v4800 = vpop.f32.mrf.mxu0
        %v4801 = vadd.f32 %v4712, %v4800
        %v4802 = vpop.f32.mrf.mxu0
        %v4803 = vadd.f32 %v4714, %v4802
        %4804 = vmatmul.bf16.gmra.mxu0 %v4130
        %v4805 = vpop.f32.mrf.mxu0
        %v4806 = vadd.f32 %v4717, %v4805
        %v4807 = vpop.f32.mrf.mxu0
        %v4808 = vadd.f32 %v4719, %v4807
        %4809 = vmatmul.bf16.gmra.mxu0 %v4134
        %v4810 = vpop.f32.mrf.mxu0
        %v4811 = vadd.f32 %v4722, %v4810
        %v4812 = vpop.f32.mrf.mxu0
        %v4813 = vadd.f32 %v4724, %v4812
        %4814 = vmatmul.bf16.gmra.mxu0 %v4138
        %v4815 = vpop.f32.mrf.mxu0
        %v4816 = vadd.f32 %v4727, %v4815
        %v4817 = vpop.f32.mrf.mxu0
        %v4818 = vadd.f32 %v4729, %v4817
        %4819 = vmatmul.bf16.gmra.mxu0 %v4142
        %v4820 = vpop.f32.mrf.mxu0
        %v4821 = vadd.f32 %v4732, %v4820
        %v4822 = vpop.f32.mrf.mxu0
        %v4823 = vadd.f32 %v4734, %v4822
        %4824 = vmatmul.bf16.gmra.mxu0 %v4146
        %v4825 = vpop.f32.mrf.mxu0
        %v4826 = vadd.f32 %v4737, %v4825
        %v4827 = vpop.f32.mrf.mxu0
        %v4828 = vadd.f32 %v4739, %v4827
        %4829 = vmatmul.bf16.gmra.mxu0 %v4150
        %v4830 = vpop.f32.mrf.mxu0
        %v4831 = vadd.f32 %v4742, %v4830
        %v4832 = vpop.f32.mrf.mxu0
        %v4833 = vadd.f32 %v4744, %v4832
        %4834 = vmatmul.bf16.gmra.mxu0 %v4154
        %v4835 = vpop.f32.mrf.mxu0
        %v4836 = vadd.f32 %v4747, %v4835
        %v4837 = vpop.f32.mrf.mxu0
        %v4838 = vadd.f32 %v4749, %v4837
        %4839 = vmatmul.bf16.gmra.mxu0 %v4158
        %v4840 = vpop.f32.mrf.mxu0
        %v4841 = vadd.f32 %v4752, %v4840
        %v4842 = vpop.f32.mrf.mxu0
        %v4843 = vadd.f32 %v4754, %v4842
        %4844 = vmatmul.bf16.gmra.mxu0 %v4162
        %v4845 = vpop.f32.mrf.mxu0
        %v4846 = vadd.f32 %v4757, %v4845
        %v4847 = vpop.f32.mrf.mxu0
        %v4848 = vadd.f32 %v4759, %v4847
        %4849 = vmatmul.bf16.gmra.mxu0 %v4166
        %v4850 = vpop.f32.mrf.mxu0
        %v4851 = vadd.f32 %v4762, %v4850
        %v4852 = vpop.f32.mrf.mxu0
        %v4853 = vadd.f32 %v4764, %v4852
        %4854 = vdwg.mxu0
        %4855 = vmatpush.bf16.msra.mxu0 %v3653
        %4856 = vmatpush.bf16.msra.mxu0 %v3649
        %4857 = vmatpush.bf16.msra.mxu0 %v3645
        %4858 = vmatpush.bf16.msra.mxu0 %v3641
        %4859 = vmatpush.bf16.msra.mxu0 %v3637
        %4860 = vmatpush.bf16.msra.mxu0 %v3633
        %4861 = vmatpush.bf16.msra.mxu0 %v3629
        %4862 = vmatpush.bf16.msra.mxu0 %v3625
        %4863 = vmatmul.bf16.gmra.mxu0 %v4107
        %v4864 = vpop.f32.mrf.mxu0
        %v4865 = vadd.f32 %v4776, %v4864
        %v4866 = vpop.f32.mrf.mxu0
        %v4867 = vadd.f32 %v4778, %v4866
        %4868 = vmatmul.bf16.gmra.mxu0 %v4111
        %v4869 = vpop.f32.mrf.mxu0
        %v4870 = vadd.f32 %v4781, %v4869
        %v4871 = vpop.f32.mrf.mxu0
        %v4872 = vadd.f32 %v4783, %v4871
        %4873 = vmatmul.bf16.gmra.mxu0 %v4115
        %v4874 = vpop.f32.mrf.mxu0
        %v4875 = vadd.f32 %v4786, %v4874
        %v4876 = vpop.f32.mrf.mxu0
        %v4877 = vadd.f32 %v4788, %v4876
        %4878 = vmatmul.bf16.gmra.mxu0 %v4119
        %v4879 = vpop.f32.mrf.mxu0
        %v4880 = vadd.f32 %v4791, %v4879
        %v4881 = vpop.f32.mrf.mxu0
        %v4882 = vadd.f32 %v4793, %v4881
        %4883 = vmatmul.bf16.gmra.mxu0 %v4123
        %v4884 = vpop.f32.mrf.mxu0
        %v4885 = vadd.f32 %v4796, %v4884
        %v4886 = vpop.f32.mrf.mxu0
        %v4887 = vadd.f32 %v4798, %v4886
        %4888 = vmatmul.bf16.gmra.mxu0 %v4127
        %v4889 = vpop.f32.mrf.mxu0
        %v4890 = vadd.f32 %v4801, %v4889
        %v4891 = vpop.f32.mrf.mxu0
        %v4892 = vadd.f32 %v4803, %v4891
        %4893 = vmatmul.bf16.gmra.mxu0 %v4131
        %v4894 = vpop.f32.mrf.mxu0
        %v4895 = vadd.f32 %v4806, %v4894
        %v4896 = vpop.f32.mrf.mxu0
        %v4897 = vadd.f32 %v4808, %v4896
        %4898 = vmatmul.bf16.gmra.mxu0 %v4135
        %v4899 = vpop.f32.mrf.mxu0
        %v4900 = vadd.f32 %v4811, %v4899
        %v4901 = vpop.f32.mrf.mxu0
        %v4902 = vadd.f32 %v4813, %v4901
        %4903 = vmatmul.bf16.gmra.mxu0 %v4139
        %v4904 = vpop.f32.mrf.mxu0
        %v4905 = vadd.f32 %v4816, %v4904
        %v4906 = vpop.f32.mrf.mxu0
        %v4907 = vadd.f32 %v4818, %v4906
        %4908 = vmatmul.bf16.gmra.mxu0 %v4143
        %v4909 = vpop.f32.mrf.mxu0
        %v4910 = vadd.f32 %v4821, %v4909
        %v4911 = vpop.f32.mrf.mxu0
        %v4912 = vadd.f32 %v4823, %v4911
        %4913 = vmatmul.bf16.gmra.mxu0 %v4147
        %v4914 = vpop.f32.mrf.mxu0
        %v4915 = vadd.f32 %v4826, %v4914
        %v4916 = vpop.f32.mrf.mxu0
        %v4917 = vadd.f32 %v4828, %v4916
        %4918 = vmatmul.bf16.gmra.mxu0 %v4151
        %v4919 = vpop.f32.mrf.mxu0
        %v4920 = vadd.f32 %v4831, %v4919
        %v4921 = vpop.f32.mrf.mxu0
        %v4922 = vadd.f32 %v4833, %v4921
        %4923 = vmatmul.bf16.gmra.mxu0 %v4155
        %v4924 = vpop.f32.mrf.mxu0
        %v4925 = vadd.f32 %v4836, %v4924
        %v4926 = vpop.f32.mrf.mxu0
        %v4927 = vadd.f32 %v4838, %v4926
        %4928 = vmatmul.bf16.gmra.mxu0 %v4159
        %v4929 = vpop.f32.mrf.mxu0
        %v4930 = vadd.f32 %v4841, %v4929
        %v4931 = vpop.f32.mrf.mxu0
        %v4932 = vadd.f32 %v4843, %v4931
        %4933 = vmatmul.bf16.gmra.mxu0 %v4163
        %v4934 = vpop.f32.mrf.mxu0
        %v4935 = vadd.f32 %v4846, %v4934
        %v4936 = vpop.f32.mrf.mxu0
        %v4937 = vadd.f32 %v4848, %v4936
        %4938 = vmatmul.bf16.gmra.mxu0 %v4167
        %v4939 = vpop.f32.mrf.mxu0
        %v4940 = vadd.f32 %v4851, %v4939
        %v4941 = vpop.f32.mrf.mxu0
        %v4942 = vadd.f32 %v4853, %v4941
        %4943 = vdwg.mxu0
        %4944 = vmatpush.bf16.msra.mxu0 %v3558
        %4945 = vmatpush.bf16.msra.mxu0 %v3554
        %4946 = vmatpush.bf16.msra.mxu0 %v3550
        %4947 = vmatpush.bf16.msra.mxu0 %v3546
        %4948 = vmatpush.bf16.msra.mxu0 %v3542
        %4949 = vmatpush.bf16.msra.mxu0 %v3538
        %4950 = vmatpush.bf16.msra.mxu0 %v3534
        %4951 = vmatpush.bf16.msra.mxu0 %v3530
        %4952 = vmatmul.bf16.gmra.mxu0 %v4104
        %v4953 = vpop.f32.mrf.mxu0
        %v4954 = vadd.f32 %v3755, %v4953
        %v4955 = vpop.f32.mrf.mxu0
        %v4956 = vadd.f32 %v3760, %v4955
        %4957 = vmatmul.bf16.gmra.mxu0 %v4108
        %v4958 = vpop.f32.mrf.mxu0
        %v4959 = vadd.f32 %v3765, %v4958
        %v4960 = vpop.f32.mrf.mxu0
        %v4961 = vadd.f32 %v3770, %v4960
        %4962 = vmatmul.bf16.gmra.mxu0 %v4112
        %v4963 = vpop.f32.mrf.mxu0
        %v4964 = vadd.f32 %v3775, %v4963
        %v4965 = vpop.f32.mrf.mxu0
        %v4966 = vadd.f32 %v3780, %v4965
        %4967 = vmatmul.bf16.gmra.mxu0 %v4116
        %v4968 = vpop.f32.mrf.mxu0
        %v4969 = vadd.f32 %v3785, %v4968
        %v4970 = vpop.f32.mrf.mxu0
        %v4971 = vadd.f32 %v3790, %v4970
        %4972 = vmatmul.bf16.gmra.mxu0 %v4120
        %v4973 = vpop.f32.mrf.mxu0
        %v4974 = vadd.f32 %v3795, %v4973
        %v4975 = vpop.f32.mrf.mxu0
        %v4976 = vadd.f32 %v3800, %v4975
        %4977 = vmatmul.bf16.gmra.mxu0 %v4124
        %v4978 = vpop.f32.mrf.mxu0
        %v4979 = vadd.f32 %v3805, %v4978
        %v4980 = vpop.f32.mrf.mxu0
        %v4981 = vadd.f32 %v3810, %v4980
        %4982 = vmatmul.bf16.gmra.mxu0 %v4128
        %v4983 = vpop.f32.mrf.mxu0
        %v4984 = vadd.f32 %v3815, %v4983
        %v4985 = vpop.f32.mrf.mxu0
        %v4986 = vadd.f32 %v3820, %v4985
        %4987 = vmatmul.bf16.gmra.mxu0 %v4132
        %v4988 = vpop.f32.mrf.mxu0
        %v4989 = vadd.f32 %v3825, %v4988
        %v4990 = vpop.f32.mrf.mxu0
        %v4991 = vadd.f32 %v3830, %v4990
        %4992 = vmatmul.bf16.gmra.mxu0 %v4136
        %v4993 = vpop.f32.mrf.mxu0
        %v4994 = vadd.f32 %v3835, %v4993
        %v4995 = vpop.f32.mrf.mxu0
        %v4996 = vadd.f32 %v3840, %v4995
        %4997 = vmatmul.bf16.gmra.mxu0 %v4140
        %v4998 = vpop.f32.mrf.mxu0
        %v4999 = vadd.f32 %v3845, %v4998
        %v5000 = vpop.f32.mrf.mxu0
        %v5001 = vadd.f32 %v3850, %v5000
        %5002 = vmatmul.bf16.gmra.mxu0 %v4144
        %v5003 = vpop.f32.mrf.mxu0
        %v5004 = vadd.f32 %v3855, %v5003
        %v5005 = vpop.f32.mrf.mxu0
        %v5006 = vadd.f32 %v3860, %v5005
        %5007 = vmatmul.bf16.gmra.mxu0 %v4148
        %v5008 = vpop.f32.mrf.mxu0
        %v5009 = vadd.f32 %v3865, %v5008
        %v5010 = vpop.f32.mrf.mxu0
        %v5011 = vadd.f32 %v3870, %v5010
        %5012 = vmatmul.bf16.gmra.mxu0 %v4152
        %v5013 = vpop.f32.mrf.mxu0
        %v5014 = vadd.f32 %v3875, %v5013
        %v5015 = vpop.f32.mrf.mxu0
        %v5016 = vadd.f32 %v3880, %v5015
        %5017 = vmatmul.bf16.gmra.mxu0 %v4156
        %v5018 = vpop.f32.mrf.mxu0
        %v5019 = vadd.f32 %v3885, %v5018
        %v5020 = vpop.f32.mrf.mxu0
        %v5021 = vadd.f32 %v3890, %v5020
        %5022 = vmatmul.bf16.gmra.mxu0 %v4160
        %v5023 = vpop.f32.mrf.mxu0
        %v5024 = vadd.f32 %v3895, %v5023
        %v5025 = vpop.f32.mrf.mxu0
        %v5026 = vadd.f32 %v3900, %v5025
        %5027 = vmatmul.bf16.gmra.mxu0 %v4164
        %v5028 = vpop.f32.mrf.mxu0
        %v5029 = vadd.f32 %v3905, %v5028
        %v5030 = vpop.f32.mrf.mxu0
        %v5031 = vadd.f32 %v3910, %v5030
        %5032 = vdwg.mxu0
        %5033 = vmatpush.bf16.msra.mxu0 %v3590
        %5034 = vmatpush.bf16.msra.mxu0 %v3586
        %5035 = vmatpush.bf16.msra.mxu0 %v3582
        %5036 = vmatpush.bf16.msra.mxu0 %v3578
        %5037 = vmatpush.bf16.msra.mxu0 %v3574
        %5038 = vmatpush.bf16.msra.mxu0 %v3570
        %5039 = vmatpush.bf16.msra.mxu0 %v3566
        %5040 = vmatpush.bf16.msra.mxu0 %v3562
        %5041 = vmatmul.bf16.gmra.mxu0 %v4105
        %v5042 = vpop.f32.mrf.mxu0
        %v5043 = vadd.f32 %v4954, %v5042
        %v5044 = vpop.f32.mrf.mxu0
        %v5045 = vadd.f32 %v4956, %v5044
        %5046 = vmatmul.bf16.gmra.mxu0 %v4109
        %v5047 = vpop.f32.mrf.mxu0
        %v5048 = vadd.f32 %v4959, %v5047
        %v5049 = vpop.f32.mrf.mxu0
        %v5050 = vadd.f32 %v4961, %v5049
        %5051 = vmatmul.bf16.gmra.mxu0 %v4113
        %v5052 = vpop.f32.mrf.mxu0
        %v5053 = vadd.f32 %v4964, %v5052
        %v5054 = vpop.f32.mrf.mxu0
        %v5055 = vadd.f32 %v4966, %v5054
        %5056 = vmatmul.bf16.gmra.mxu0 %v4117
        %v5057 = vpop.f32.mrf.mxu0
        %v5058 = vadd.f32 %v4969, %v5057
        %v5059 = vpop.f32.mrf.mxu0
        %v5060 = vadd.f32 %v4971, %v5059
        %5061 = vmatmul.bf16.gmra.mxu0 %v4121
        %v5062 = vpop.f32.mrf.mxu0
        %v5063 = vadd.f32 %v4974, %v5062
        %v5064 = vpop.f32.mrf.mxu0
        %v5065 = vadd.f32 %v4976, %v5064
        %5066 = vmatmul.bf16.gmra.mxu0 %v4125
        %v5067 = vpop.f32.mrf.mxu0
        %v5068 = vadd.f32 %v4979, %v5067
        %v5069 = vpop.f32.mrf.mxu0
        %v5070 = vadd.f32 %v4981, %v5069
        %5071 = vmatmul.bf16.gmra.mxu0 %v4129
        %v5072 = vpop.f32.mrf.mxu0
        %v5073 = vadd.f32 %v4984, %v5072
        %v5074 = vpop.f32.mrf.mxu0
        %v5075 = vadd.f32 %v4986, %v5074
        %5076 = vmatmul.bf16.gmra.mxu0 %v4133
        %v5077 = vpop.f32.mrf.mxu0
        %v5078 = vadd.f32 %v4989, %v5077
        %v5079 = vpop.f32.mrf.mxu0
        %v5080 = vadd.f32 %v4991, %v5079
        %5081 = vmatmul.bf16.gmra.mxu0 %v4137
        %v5082 = vpop.f32.mrf.mxu0
        %v5083 = vadd.f32 %v4994, %v5082
        %v5084 = vpop.f32.mrf.mxu0
        %v5085 = vadd.f32 %v4996, %v5084
        %5086 = vmatmul.bf16.gmra.mxu0 %v4141
        %v5087 = vpop.f32.mrf.mxu0
        %v5088 = vadd.f32 %v4999, %v5087
        %v5089 = vpop.f32.mrf.mxu0
        %v5090 = vadd.f32 %v5001, %v5089
        %5091 = vmatmul.bf16.gmra.mxu0 %v4145
        %v5092 = vpop.f32.mrf.mxu0
        %v5093 = vadd.f32 %v5004, %v5092
        %v5094 = vpop.f32.mrf.mxu0
        %v5095 = vadd.f32 %v5006, %v5094
        %5096 = vmatmul.bf16.gmra.mxu0 %v4149
        %v5097 = vpop.f32.mrf.mxu0
        %v5098 = vadd.f32 %v5009, %v5097
        %v5099 = vpop.f32.mrf.mxu0
        %v5100 = vadd.f32 %v5011, %v5099
        %5101 = vmatmul.bf16.gmra.mxu0 %v4153
        %v5102 = vpop.f32.mrf.mxu0
        %v5103 = vadd.f32 %v5014, %v5102
        %v5104 = vpop.f32.mrf.mxu0
        %v5105 = vadd.f32 %v5016, %v5104
        %5106 = vmatmul.bf16.gmra.mxu0 %v4157
        %v5107 = vpop.f32.mrf.mxu0
        %v5108 = vadd.f32 %v5019, %v5107
        %v5109 = vpop.f32.mrf.mxu0
        %v5110 = vadd.f32 %v5021, %v5109
        %5111 = vmatmul.bf16.gmra.mxu0 %v4161
        %v5112 = vpop.f32.mrf.mxu0
        %v5113 = vadd.f32 %v5024, %v5112
        %v5114 = vpop.f32.mrf.mxu0
        %v5115 = vadd.f32 %v5026, %v5114
        %5116 = vmatmul.bf16.gmra.mxu0 %v4165
        %v5117 = vpop.f32.mrf.mxu0
        %v5118 = vadd.f32 %v5029, %v5117
        %v5119 = vpop.f32.mrf.mxu0
        %v5120 = vadd.f32 %v5031, %v5119
        %5121 = vdwg.mxu0
        %5122 = vmatpush.bf16.msra.mxu0 %v3622
        %5123 = vmatpush.bf16.msra.mxu0 %v3618
        %5124 = vmatpush.bf16.msra.mxu0 %v3614
        %5125 = vmatpush.bf16.msra.mxu0 %v3610
        %5126 = vmatpush.bf16.msra.mxu0 %v3606
        %5127 = vmatpush.bf16.msra.mxu0 %v3602
        %5128 = vmatpush.bf16.msra.mxu0 %v3598
        %5129 = vmatpush.bf16.msra.mxu0 %v3594
        %5130 = vmatmul.bf16.gmra.mxu0 %v4106
        %v5131 = vpop.f32.mrf.mxu0
        %v5132 = vadd.f32 %v5043, %v5131
        %v5133 = vpop.f32.mrf.mxu0
        %v5134 = vadd.f32 %v5045, %v5133
        %5135 = vmatmul.bf16.gmra.mxu0 %v4110
        %v5136 = vpop.f32.mrf.mxu0
        %v5137 = vadd.f32 %v5048, %v5136
        %v5138 = vpop.f32.mrf.mxu0
        %v5139 = vadd.f32 %v5050, %v5138
        %5140 = vmatmul.bf16.gmra.mxu0 %v4114
        %v5141 = vpop.f32.mrf.mxu0
        %v5142 = vadd.f32 %v5053, %v5141
        %v5143 = vpop.f32.mrf.mxu0
        %v5144 = vadd.f32 %v5055, %v5143
        %5145 = vmatmul.bf16.gmra.mxu0 %v4118
        %v5146 = vpop.f32.mrf.mxu0
        %v5147 = vadd.f32 %v5058, %v5146
        %v5148 = vpop.f32.mrf.mxu0
        %v5149 = vadd.f32 %v5060, %v5148
        %5150 = vmatmul.bf16.gmra.mxu0 %v4122
        %v5151 = vpop.f32.mrf.mxu0
        %v5152 = vadd.f32 %v5063, %v5151
        %v5153 = vpop.f32.mrf.mxu0
        %v5154 = vadd.f32 %v5065, %v5153
        %5155 = vmatmul.bf16.gmra.mxu0 %v4126
        %v5156 = vpop.f32.mrf.mxu0
        %v5157 = vadd.f32 %v5068, %v5156
        %v5158 = vpop.f32.mrf.mxu0
        %v5159 = vadd.f32 %v5070, %v5158
        %5160 = vmatmul.bf16.gmra.mxu0 %v4130
        %v5161 = vpop.f32.mrf.mxu0
        %v5162 = vadd.f32 %v5073, %v5161
        %v5163 = vpop.f32.mrf.mxu0
        %v5164 = vadd.f32 %v5075, %v5163
        %5165 = vmatmul.bf16.gmra.mxu0 %v4134
        %v5166 = vpop.f32.mrf.mxu0
        %v5167 = vadd.f32 %v5078, %v5166
        %v5168 = vpop.f32.mrf.mxu0
        %v5169 = vadd.f32 %v5080, %v5168
        %5170 = vmatmul.bf16.gmra.mxu0 %v4138
        %v5171 = vpop.f32.mrf.mxu0
        %v5172 = vadd.f32 %v5083, %v5171
        %v5173 = vpop.f32.mrf.mxu0
        %v5174 = vadd.f32 %v5085, %v5173
        %5175 = vmatmul.bf16.gmra.mxu0 %v4142
        %v5176 = vpop.f32.mrf.mxu0
        %v5177 = vadd.f32 %v5088, %v5176
        %v5178 = vpop.f32.mrf.mxu0
        %v5179 = vadd.f32 %v5090, %v5178
        %5180 = vmatmul.bf16.gmra.mxu0 %v4146
        %v5181 = vpop.f32.mrf.mxu0
        %v5182 = vadd.f32 %v5093, %v5181
        %v5183 = vpop.f32.mrf.mxu0
        %v5184 = vadd.f32 %v5095, %v5183
        %5185 = vmatmul.bf16.gmra.mxu0 %v4150
        %v5186 = vpop.f32.mrf.mxu0
        %v5187 = vadd.f32 %v5098, %v5186
        %v5188 = vpop.f32.mrf.mxu0
        %v5189 = vadd.f32 %v5100, %v5188
        %5190 = vmatmul.bf16.gmra.mxu0 %v4154
        %v5191 = vpop.f32.mrf.mxu0
        %v5192 = vadd.f32 %v5103, %v5191
        %v5193 = vpop.f32.mrf.mxu0
        %v5194 = vadd.f32 %v5105, %v5193
        %5195 = vmatmul.bf16.gmra.mxu0 %v4158
        %v5196 = vpop.f32.mrf.mxu0
        %v5197 = vadd.f32 %v5108, %v5196
        %v5198 = vpop.f32.mrf.mxu0
        %v5199 = vadd.f32 %v5110, %v5198
        %5200 = vmatmul.bf16.gmra.mxu0 %v4162
        %v5201 = vpop.f32.mrf.mxu0
        %v5202 = vadd.f32 %v5113, %v5201
        %v5203 = vpop.f32.mrf.mxu0
        %v5204 = vadd.f32 %v5115, %v5203
        %5205 = vmatmul.bf16.gmra.mxu0 %v4166
        %v5206 = vpop.f32.mrf.mxu0
        %v5207 = vadd.f32 %v5118, %v5206
        %v5208 = vpop.f32.mrf.mxu0
        %v5209 = vadd.f32 %v5120, %v5208
        %5210 = vdwg.mxu0
        %5211 = vmatpush.bf16.msra.mxu0 %v3654
        %5212 = vmatpush.bf16.msra.mxu0 %v3650
        %5213 = vmatpush.bf16.msra.mxu0 %v3646
        %5214 = vmatpush.bf16.msra.mxu0 %v3642
        %5215 = vmatpush.bf16.msra.mxu0 %v3638
        %5216 = vmatpush.bf16.msra.mxu0 %v3634
        %5217 = vmatpush.bf16.msra.mxu0 %v3630
        %5218 = vmatpush.bf16.msra.mxu0 %v3626
        %5219 = vmatmul.bf16.gmra.mxu0 %v4107
        %v5220 = vpop.f32.mrf.mxu0
        %v5221 = vadd.f32 %v5132, %v5220
        %v5222 = vpop.f32.mrf.mxu0
        %v5223 = vadd.f32 %v5134, %v5222
        %5224 = vmatmul.bf16.gmra.mxu0 %v4111
        %v5225 = vpop.f32.mrf.mxu0
        %v5226 = vadd.f32 %v5137, %v5225
        %v5227 = vpop.f32.mrf.mxu0
        %v5228 = vadd.f32 %v5139, %v5227
        %5229 = vmatmul.bf16.gmra.mxu0 %v4115
        %v5230 = vpop.f32.mrf.mxu0
        %v5231 = vadd.f32 %v5142, %v5230
        %v5232 = vpop.f32.mrf.mxu0
        %v5233 = vadd.f32 %v5144, %v5232
        %5234 = vmatmul.bf16.gmra.mxu0 %v4119
        %v5235 = vpop.f32.mrf.mxu0
        %v5236 = vadd.f32 %v5147, %v5235
        %v5237 = vpop.f32.mrf.mxu0
        %v5238 = vadd.f32 %v5149, %v5237
        %5239 = vmatmul.bf16.gmra.mxu0 %v4123
        %v5240 = vpop.f32.mrf.mxu0
        %v5241 = vadd.f32 %v5152, %v5240
        %v5242 = vpop.f32.mrf.mxu0
        %v5243 = vadd.f32 %v5154, %v5242
        %5244 = vmatmul.bf16.gmra.mxu0 %v4127
        %v5245 = vpop.f32.mrf.mxu0
        %v5246 = vadd.f32 %v5157, %v5245
        %v5247 = vpop.f32.mrf.mxu0
        %v5248 = vadd.f32 %v5159, %v5247
        %5249 = vmatmul.bf16.gmra.mxu0 %v4131
        %v5250 = vpop.f32.mrf.mxu0
        %v5251 = vadd.f32 %v5162, %v5250
        %v5252 = vpop.f32.mrf.mxu0
        %v5253 = vadd.f32 %v5164, %v5252
        %5254 = vmatmul.bf16.gmra.mxu0 %v4135
        %v5255 = vpop.f32.mrf.mxu0
        %v5256 = vadd.f32 %v5167, %v5255
        %v5257 = vpop.f32.mrf.mxu0
        %v5258 = vadd.f32 %v5169, %v5257
        %5259 = vmatmul.bf16.gmra.mxu0 %v4139
        %v5260 = vpop.f32.mrf.mxu0
        %v5261 = vadd.f32 %v5172, %v5260
        %v5262 = vpop.f32.mrf.mxu0
        %v5263 = vadd.f32 %v5174, %v5262
        %5264 = vmatmul.bf16.gmra.mxu0 %v4143
        %v5265 = vpop.f32.mrf.mxu0
        %v5266 = vadd.f32 %v5177, %v5265
        %v5267 = vpop.f32.mrf.mxu0
        %v5268 = vadd.f32 %v5179, %v5267
        %5269 = vmatmul.bf16.gmra.mxu0 %v4147
        %v5270 = vpop.f32.mrf.mxu0
        %v5271 = vadd.f32 %v5182, %v5270
        %v5272 = vpop.f32.mrf.mxu0
        %v5273 = vadd.f32 %v5184, %v5272
        %5274 = vmatmul.bf16.gmra.mxu0 %v4151
        %v5275 = vpop.f32.mrf.mxu0
        %v5276 = vadd.f32 %v5187, %v5275
        %v5277 = vpop.f32.mrf.mxu0
        %v5278 = vadd.f32 %v5189, %v5277
        %5279 = vmatmul.bf16.gmra.mxu0 %v4155
        %v5280 = vpop.f32.mrf.mxu0
        %v5281 = vadd.f32 %v5192, %v5280
        %v5282 = vpop.f32.mrf.mxu0
        %v5283 = vadd.f32 %v5194, %v5282
        %5284 = vmatmul.bf16.gmra.mxu0 %v4159
        %v5285 = vpop.f32.mrf.mxu0
        %v5286 = vadd.f32 %v5197, %v5285
        %v5287 = vpop.f32.mrf.mxu0
        %v5288 = vadd.f32 %v5199, %v5287
        %5289 = vmatmul.bf16.gmra.mxu0 %v4163
        %v5290 = vpop.f32.mrf.mxu0
        %v5291 = vadd.f32 %v5202, %v5290
        %v5292 = vpop.f32.mrf.mxu0
        %v5293 = vadd.f32 %v5204, %v5292
        %5294 = vmatmul.bf16.gmra.mxu0 %v4167
        %v5295 = vpop.f32.mrf.mxu0
        %v5296 = vadd.f32 %v5207, %v5295
        %v5297 = vpop.f32.mrf.mxu0
        %v5298 = vadd.f32 %v5209, %v5297
        %5299 = vdwg.mxu0
        %5300 = vmatpush.bf16.msra.mxu0 %v3559
        %5301 = vmatpush.bf16.msra.mxu0 %v3555
        %5302 = vmatpush.bf16.msra.mxu0 %v3551
        %5303 = vmatpush.bf16.msra.mxu0 %v3547
        %5304 = vmatpush.bf16.msra.mxu0 %v3543
        %5305 = vmatpush.bf16.msra.mxu0 %v3539
        %5306 = vmatpush.bf16.msra.mxu0 %v3535
        %5307 = vmatpush.bf16.msra.mxu0 %v3531
        %5308 = vmatmul.bf16.gmra.mxu0 %v4104
        %v5309 = vpop.f32.mrf.mxu0
        %v5310 = vadd.f32 %v3755, %v5309
        %v5311 = vpop.f32.mrf.mxu0
        %v5312 = vadd.f32 %v3760, %v5311
        %5313 = vmatmul.bf16.gmra.mxu0 %v4108
        %v5314 = vpop.f32.mrf.mxu0
        %v5315 = vadd.f32 %v3765, %v5314
        %v5316 = vpop.f32.mrf.mxu0
        %v5317 = vadd.f32 %v3770, %v5316
        %5318 = vmatmul.bf16.gmra.mxu0 %v4112
        %v5319 = vpop.f32.mrf.mxu0
        %v5320 = vadd.f32 %v3775, %v5319
        %v5321 = vpop.f32.mrf.mxu0
        %v5322 = vadd.f32 %v3780, %v5321
        %5323 = vmatmul.bf16.gmra.mxu0 %v4116
        %v5324 = vpop.f32.mrf.mxu0
        %v5325 = vadd.f32 %v3785, %v5324
        %v5326 = vpop.f32.mrf.mxu0
        %v5327 = vadd.f32 %v3790, %v5326
        %5328 = vmatmul.bf16.gmra.mxu0 %v4120
        %v5329 = vpop.f32.mrf.mxu0
        %v5330 = vadd.f32 %v3795, %v5329
        %v5331 = vpop.f32.mrf.mxu0
        %v5332 = vadd.f32 %v3800, %v5331
        %5333 = vmatmul.bf16.gmra.mxu0 %v4124
        %v5334 = vpop.f32.mrf.mxu0
        %v5335 = vadd.f32 %v3805, %v5334
        %v5336 = vpop.f32.mrf.mxu0
        %v5337 = vadd.f32 %v3810, %v5336
        %5338 = vmatmul.bf16.gmra.mxu0 %v4128
        %v5339 = vpop.f32.mrf.mxu0
        %v5340 = vadd.f32 %v3815, %v5339
        %v5341 = vpop.f32.mrf.mxu0
        %v5342 = vadd.f32 %v3820, %v5341
        %5343 = vmatmul.bf16.gmra.mxu0 %v4132
        %v5344 = vpop.f32.mrf.mxu0
        %v5345 = vadd.f32 %v3825, %v5344
        %v5346 = vpop.f32.mrf.mxu0
        %v5347 = vadd.f32 %v3830, %v5346
        %5348 = vmatmul.bf16.gmra.mxu0 %v4136
        %v5349 = vpop.f32.mrf.mxu0
        %v5350 = vadd.f32 %v3835, %v5349
        %v5351 = vpop.f32.mrf.mxu0
        %v5352 = vadd.f32 %v3840, %v5351
        %5353 = vmatmul.bf16.gmra.mxu0 %v4140
        %v5354 = vpop.f32.mrf.mxu0
        %v5355 = vadd.f32 %v3845, %v5354
        %v5356 = vpop.f32.mrf.mxu0
        %v5357 = vadd.f32 %v3850, %v5356
        %5358 = vmatmul.bf16.gmra.mxu0 %v4144
        %v5359 = vpop.f32.mrf.mxu0
        %v5360 = vadd.f32 %v3855, %v5359
        %v5361 = vpop.f32.mrf.mxu0
        %v5362 = vadd.f32 %v3860, %v5361
        %5363 = vmatmul.bf16.gmra.mxu0 %v4148
        %v5364 = vpop.f32.mrf.mxu0
        %v5365 = vadd.f32 %v3865, %v5364
        %v5366 = vpop.f32.mrf.mxu0
        %v5367 = vadd.f32 %v3870, %v5366
        %5368 = vmatmul.bf16.gmra.mxu0 %v4152
        %v5369 = vpop.f32.mrf.mxu0
        %v5370 = vadd.f32 %v3875, %v5369
        %v5371 = vpop.f32.mrf.mxu0
        %v5372 = vadd.f32 %v3880, %v5371
        %5373 = vmatmul.bf16.gmra.mxu0 %v4156
        %v5374 = vpop.f32.mrf.mxu0
        %v5375 = vadd.f32 %v3885, %v5374
        %v5376 = vpop.f32.mrf.mxu0
        %v5377 = vadd.f32 %v3890, %v5376
        %5378 = vmatmul.bf16.gmra.mxu0 %v4160
        %v5379 = vpop.f32.mrf.mxu0
        %v5380 = vadd.f32 %v3895, %v5379
        %v5381 = vpop.f32.mrf.mxu0
        %v5382 = vadd.f32 %v3900, %v5381
        %5383 = vmatmul.bf16.gmra.mxu0 %v4164
        %v5384 = vpop.f32.mrf.mxu0
        %v5385 = vadd.f32 %v3905, %v5384
        %v5386 = vpop.f32.mrf.mxu0
        %v5387 = vadd.f32 %v3910, %v5386
        %5388 = vdwg.mxu0
        %5389 = vmatpush.bf16.msra.mxu0 %v3591
        %5390 = vmatpush.bf16.msra.mxu0 %v3587
        %5391 = vmatpush.bf16.msra.mxu0 %v3583
        %5392 = vmatpush.bf16.msra.mxu0 %v3579
        %5393 = vmatpush.bf16.msra.mxu0 %v3575
        %5394 = vmatpush.bf16.msra.mxu0 %v3571
        %5395 = vmatpush.bf16.msra.mxu0 %v3567
        %5396 = vmatpush.bf16.msra.mxu0 %v3563
        %5397 = vmatmul.bf16.gmra.mxu0 %v4105
        %v5398 = vpop.f32.mrf.mxu0
        %v5399 = vadd.f32 %v5310, %v5398
        %v5400 = vpop.f32.mrf.mxu0
        %v5401 = vadd.f32 %v5312, %v5400
        %5402 = vmatmul.bf16.gmra.mxu0 %v4109
        %v5403 = vpop.f32.mrf.mxu0
        %v5404 = vadd.f32 %v5315, %v5403
        %v5405 = vpop.f32.mrf.mxu0
        %v5406 = vadd.f32 %v5317, %v5405
        %5407 = vmatmul.bf16.gmra.mxu0 %v4113
        %v5408 = vpop.f32.mrf.mxu0
        %v5409 = vadd.f32 %v5320, %v5408
        %v5410 = vpop.f32.mrf.mxu0
        %v5411 = vadd.f32 %v5322, %v5410
        %5412 = vmatmul.bf16.gmra.mxu0 %v4117
        %v5413 = vpop.f32.mrf.mxu0
        %v5414 = vadd.f32 %v5325, %v5413
        %v5415 = vpop.f32.mrf.mxu0
        %v5416 = vadd.f32 %v5327, %v5415
        %5417 = vmatmul.bf16.gmra.mxu0 %v4121
        %v5418 = vpop.f32.mrf.mxu0
        %v5419 = vadd.f32 %v5330, %v5418
        %v5420 = vpop.f32.mrf.mxu0
        %v5421 = vadd.f32 %v5332, %v5420
        %5422 = vmatmul.bf16.gmra.mxu0 %v4125
        %v5423 = vpop.f32.mrf.mxu0
        %v5424 = vadd.f32 %v5335, %v5423
        %v5425 = vpop.f32.mrf.mxu0
        %v5426 = vadd.f32 %v5337, %v5425
        %5427 = vmatmul.bf16.gmra.mxu0 %v4129
        %v5428 = vpop.f32.mrf.mxu0
        %v5429 = vadd.f32 %v5340, %v5428
        %v5430 = vpop.f32.mrf.mxu0
        %v5431 = vadd.f32 %v5342, %v5430
        %5432 = vmatmul.bf16.gmra.mxu0 %v4133
        %v5433 = vpop.f32.mrf.mxu0
        %v5434 = vadd.f32 %v5345, %v5433
        %v5435 = vpop.f32.mrf.mxu0
        %v5436 = vadd.f32 %v5347, %v5435
        %5437 = vmatmul.bf16.gmra.mxu0 %v4137
        %v5438 = vpop.f32.mrf.mxu0
        %v5439 = vadd.f32 %v5350, %v5438
        %v5440 = vpop.f32.mrf.mxu0
        %v5441 = vadd.f32 %v5352, %v5440
        %5442 = vmatmul.bf16.gmra.mxu0 %v4141
        %v5443 = vpop.f32.mrf.mxu0
        %v5444 = vadd.f32 %v5355, %v5443
        %v5445 = vpop.f32.mrf.mxu0
        %v5446 = vadd.f32 %v5357, %v5445
        %5447 = vmatmul.bf16.gmra.mxu0 %v4145
        %v5448 = vpop.f32.mrf.mxu0
        %v5449 = vadd.f32 %v5360, %v5448
        %v5450 = vpop.f32.mrf.mxu0
        %v5451 = vadd.f32 %v5362, %v5450
        %5452 = vmatmul.bf16.gmra.mxu0 %v4149
        %v5453 = vpop.f32.mrf.mxu0
        %v5454 = vadd.f32 %v5365, %v5453
        %v5455 = vpop.f32.mrf.mxu0
        %v5456 = vadd.f32 %v5367, %v5455
        %5457 = vmatmul.bf16.gmra.mxu0 %v4153
        %v5458 = vpop.f32.mrf.mxu0
        %v5459 = vadd.f32 %v5370, %v5458
        %v5460 = vpop.f32.mrf.mxu0
        %v5461 = vadd.f32 %v5372, %v5460
        %5462 = vmatmul.bf16.gmra.mxu0 %v4157
        %v5463 = vpop.f32.mrf.mxu0
        %v5464 = vadd.f32 %v5375, %v5463
        %v5465 = vpop.f32.mrf.mxu0
        %v5466 = vadd.f32 %v5377, %v5465
        %5467 = vmatmul.bf16.gmra.mxu0 %v4161
        %v5468 = vpop.f32.mrf.mxu0
        %v5469 = vadd.f32 %v5380, %v5468
        %v5470 = vpop.f32.mrf.mxu0
        %v5471 = vadd.f32 %v5382, %v5470
        %5472 = vmatmul.bf16.gmra.mxu0 %v4165
        %v5473 = vpop.f32.mrf.mxu0
        %v5474 = vadd.f32 %v5385, %v5473
        %v5475 = vpop.f32.mrf.mxu0
        %v5476 = vadd.f32 %v5387, %v5475
        %5477 = vdwg.mxu0
        %5478 = vmatpush.bf16.msra.mxu0 %v3623
        %5479 = vmatpush.bf16.msra.mxu0 %v3619
        %5480 = vmatpush.bf16.msra.mxu0 %v3615
        %5481 = vmatpush.bf16.msra.mxu0 %v3611
        %5482 = vmatpush.bf16.msra.mxu0 %v3607
        %5483 = vmatpush.bf16.msra.mxu0 %v3603
        %5484 = vmatpush.bf16.msra.mxu0 %v3599
        %5485 = vmatpush.bf16.msra.mxu0 %v3595
        %5486 = vmatmul.bf16.gmra.mxu0 %v4106
        %v5487 = vpop.f32.mrf.mxu0
        %v5488 = vadd.f32 %v5399, %v5487
        %v5489 = vpop.f32.mrf.mxu0
        %v5490 = vadd.f32 %v5401, %v5489
        %5491 = vmatmul.bf16.gmra.mxu0 %v4110
        %v5492 = vpop.f32.mrf.mxu0
        %v5493 = vadd.f32 %v5404, %v5492
        %v5494 = vpop.f32.mrf.mxu0
        %v5495 = vadd.f32 %v5406, %v5494
        %5496 = vmatmul.bf16.gmra.mxu0 %v4114
        %v5497 = vpop.f32.mrf.mxu0
        %v5498 = vadd.f32 %v5409, %v5497
        %v5499 = vpop.f32.mrf.mxu0
        %v5500 = vadd.f32 %v5411, %v5499
        %5501 = vmatmul.bf16.gmra.mxu0 %v4118
        %v5502 = vpop.f32.mrf.mxu0
        %v5503 = vadd.f32 %v5414, %v5502
        %v5504 = vpop.f32.mrf.mxu0
        %v5505 = vadd.f32 %v5416, %v5504
        %5506 = vmatmul.bf16.gmra.mxu0 %v4122
        %v5507 = vpop.f32.mrf.mxu0
        %v5508 = vadd.f32 %v5419, %v5507
        %v5509 = vpop.f32.mrf.mxu0
        %v5510 = vadd.f32 %v5421, %v5509
        %5511 = vmatmul.bf16.gmra.mxu0 %v4126
        %v5512 = vpop.f32.mrf.mxu0
        %v5513 = vadd.f32 %v5424, %v5512
        %v5514 = vpop.f32.mrf.mxu0
        %v5515 = vadd.f32 %v5426, %v5514
        %5516 = vmatmul.bf16.gmra.mxu0 %v4130
        %v5517 = vpop.f32.mrf.mxu0
        %v5518 = vadd.f32 %v5429, %v5517
        %v5519 = vpop.f32.mrf.mxu0
        %v5520 = vadd.f32 %v5431, %v5519
        %5521 = vmatmul.bf16.gmra.mxu0 %v4134
        %v5522 = vpop.f32.mrf.mxu0
        %v5523 = vadd.f32 %v5434, %v5522
        %v5524 = vpop.f32.mrf.mxu0
        %v5525 = vadd.f32 %v5436, %v5524
        %5526 = vmatmul.bf16.gmra.mxu0 %v4138
        %v5527 = vpop.f32.mrf.mxu0
        %v5528 = vadd.f32 %v5439, %v5527
        %v5529 = vpop.f32.mrf.mxu0
        %v5530 = vadd.f32 %v5441, %v5529
        %5531 = vmatmul.bf16.gmra.mxu0 %v4142
        %v5532 = vpop.f32.mrf.mxu0
        %v5533 = vadd.f32 %v5444, %v5532
        %v5534 = vpop.f32.mrf.mxu0
        %v5535 = vadd.f32 %v5446, %v5534
        %5536 = vmatmul.bf16.gmra.mxu0 %v4146
        %v5537 = vpop.f32.mrf.mxu0
        %v5538 = vadd.f32 %v5449, %v5537
        %v5539 = vpop.f32.mrf.mxu0
        %v5540 = vadd.f32 %v5451, %v5539
        %5541 = vmatmul.bf16.gmra.mxu0 %v4150
        %v5542 = vpop.f32.mrf.mxu0
        %v5543 = vadd.f32 %v5454, %v5542
        %v5544 = vpop.f32.mrf.mxu0
        %v5545 = vadd.f32 %v5456, %v5544
        %5546 = vmatmul.bf16.gmra.mxu0 %v4154
        %v5547 = vpop.f32.mrf.mxu0
        %v5548 = vadd.f32 %v5459, %v5547
        %v5549 = vpop.f32.mrf.mxu0
        %v5550 = vadd.f32 %v5461, %v5549
        %5551 = vmatmul.bf16.gmra.mxu0 %v4158
        %v5552 = vpop.f32.mrf.mxu0
        %v5553 = vadd.f32 %v5464, %v5552
        %v5554 = vpop.f32.mrf.mxu0
        %v5555 = vadd.f32 %v5466, %v5554
        %5556 = vmatmul.bf16.gmra.mxu0 %v4162
        %v5557 = vpop.f32.mrf.mxu0
        %v5558 = vadd.f32 %v5469, %v5557
        %v5559 = vpop.f32.mrf.mxu0
        %v5560 = vadd.f32 %v5471, %v5559
        %5561 = vmatmul.bf16.gmra.mxu0 %v4166
        %v5562 = vpop.f32.mrf.mxu0
        %v5563 = vadd.f32 %v5474, %v5562
        %v5564 = vpop.f32.mrf.mxu0
        %v5565 = vadd.f32 %v5476, %v5564
        %5566 = vdwg.mxu0
        %5567 = vmatpush.bf16.msra.mxu0 %v3655
        %5568 = vmatpush.bf16.msra.mxu0 %v3651
        %5569 = vmatpush.bf16.msra.mxu0 %v3647
        %5570 = vmatpush.bf16.msra.mxu0 %v3643
        %5571 = vmatpush.bf16.msra.mxu0 %v3639
        %5572 = vmatpush.bf16.msra.mxu0 %v3635
        %5573 = vmatpush.bf16.msra.mxu0 %v3631
        %5574 = vmatpush.bf16.msra.mxu0 %v3627
        %5575 = vmatmul.bf16.gmra.mxu0 %v4107
        %v5576 = vpop.f32.mrf.mxu0
        %v5577 = vadd.f32 %v5488, %v5576
        %v5578 = vpop.f32.mrf.mxu0
        %v5579 = vadd.f32 %v5490, %v5578
        %5580 = vmatmul.bf16.gmra.mxu0 %v4111
        %v5581 = vpop.f32.mrf.mxu0
        %v5582 = vadd.f32 %v5493, %v5581
        %v5583 = vpop.f32.mrf.mxu0
        %v5584 = vadd.f32 %v5495, %v5583
        %5585 = vmatmul.bf16.gmra.mxu0 %v4115
        %v5586 = vpop.f32.mrf.mxu0
        %v5587 = vadd.f32 %v5498, %v5586
        %v5588 = vpop.f32.mrf.mxu0
        %v5589 = vadd.f32 %v5500, %v5588
        %5590 = vmatmul.bf16.gmra.mxu0 %v4119
        %v5591 = vpop.f32.mrf.mxu0
        %v5592 = vadd.f32 %v5503, %v5591
        %v5593 = vpop.f32.mrf.mxu0
        %v5594 = vadd.f32 %v5505, %v5593
        %5595 = vmatmul.bf16.gmra.mxu0 %v4123
        %v5596 = vpop.f32.mrf.mxu0
        %v5597 = vadd.f32 %v5508, %v5596
        %v5598 = vpop.f32.mrf.mxu0
        %v5599 = vadd.f32 %v5510, %v5598
        %5600 = vmatmul.bf16.gmra.mxu0 %v4127
        %v5601 = vpop.f32.mrf.mxu0
        %v5602 = vadd.f32 %v5513, %v5601
        %v5603 = vpop.f32.mrf.mxu0
        %v5604 = vadd.f32 %v5515, %v5603
        %5605 = vmatmul.bf16.gmra.mxu0 %v4131
        %v5606 = vpop.f32.mrf.mxu0
        %v5607 = vadd.f32 %v5518, %v5606
        %v5608 = vpop.f32.mrf.mxu0
        %v5609 = vadd.f32 %v5520, %v5608
        %5610 = vmatmul.bf16.gmra.mxu0 %v4135
        %v5611 = vpop.f32.mrf.mxu0
        %v5612 = vadd.f32 %v5523, %v5611
        %v5613 = vpop.f32.mrf.mxu0
        %v5614 = vadd.f32 %v5525, %v5613
        %5615 = vmatmul.bf16.gmra.mxu0 %v4139
        %v5616 = vpop.f32.mrf.mxu0
        %v5617 = vadd.f32 %v5528, %v5616
        %v5618 = vpop.f32.mrf.mxu0
        %v5619 = vadd.f32 %v5530, %v5618
        %5620 = vmatmul.bf16.gmra.mxu0 %v4143
        %v5621 = vpop.f32.mrf.mxu0
        %v5622 = vadd.f32 %v5533, %v5621
        %v5623 = vpop.f32.mrf.mxu0
        %v5624 = vadd.f32 %v5535, %v5623
        %5625 = vmatmul.bf16.gmra.mxu0 %v4147
        %v5626 = vpop.f32.mrf.mxu0
        %v5627 = vadd.f32 %v5538, %v5626
        %v5628 = vpop.f32.mrf.mxu0
        %v5629 = vadd.f32 %v5540, %v5628
        %5630 = vmatmul.bf16.gmra.mxu0 %v4151
        %v5631 = vpop.f32.mrf.mxu0
        %v5632 = vadd.f32 %v5543, %v5631
        %v5633 = vpop.f32.mrf.mxu0
        %v5634 = vadd.f32 %v5545, %v5633
        %5635 = vmatmul.bf16.gmra.mxu0 %v4155
        %v5636 = vpop.f32.mrf.mxu0
        %v5637 = vadd.f32 %v5548, %v5636
        %v5638 = vpop.f32.mrf.mxu0
        %v5639 = vadd.f32 %v5550, %v5638
        %5640 = vmatmul.bf16.gmra.mxu0 %v4159
        %v5641 = vpop.f32.mrf.mxu0
        %v5642 = vadd.f32 %v5553, %v5641
        %v5643 = vpop.f32.mrf.mxu0
        %v5644 = vadd.f32 %v5555, %v5643
        %5645 = vmatmul.bf16.gmra.mxu0 %v4163
        %v5646 = vpop.f32.mrf.mxu0
        %v5647 = vadd.f32 %v5558, %v5646
        %v5648 = vpop.f32.mrf.mxu0
        %v5649 = vadd.f32 %v5560, %v5648
        %5650 = vmatmul.bf16.gmra.mxu0 %v4167
        %v5651 = vpop.f32.mrf.mxu0
        %v5652 = vadd.f32 %v5563, %v5651
        %v5653 = vpop.f32.mrf.mxu0
        %v5654 = vadd.f32 %v5565, %v5653
        %5655 = vdwg.mxu0
        %v5656 = vmax.f32 %v4509, 0.0
        %v5657 = vmax.f32 %v4865, 0.0
        %v5658 = vmax.f32 %v5221, 0.0
        %v5659 = vmax.f32 %v5577, 0.0
        %v5660 = vmax.f32 %v4511, 0.0
        %v5661 = vmax.f32 %v4867, 0.0
        %v5662 = vmax.f32 %v5223, 0.0
        %v5663 = vmax.f32 %v5579, 0.0
        %v5664 = vmax.f32 %v4514, 0.0
        %v5665 = vmax.f32 %v4870, 0.0
        %v5666 = vmax.f32 %v5226, 0.0
        %v5667 = vmax.f32 %v5582, 0.0
        %v5668 = vmax.f32 %v4516, 0.0
        %v5669 = vmax.f32 %v4872, 0.0
        %v5670 = vmax.f32 %v5228, 0.0
        %v5671 = vmax.f32 %v5584, 0.0
        %v5672 = vmax.f32 %v4519, 0.0
        %v5673 = vmax.f32 %v4875, 0.0
        %v5674 = vmax.f32 %v5231, 0.0
        %v5675 = vmax.f32 %v5587, 0.0
        %v5676 = vmax.f32 %v4521, 0.0
        %v5677 = vmax.f32 %v4877, 0.0
        %v5678 = vmax.f32 %v5233, 0.0
        %v5679 = vmax.f32 %v5589, 0.0
        %v5680 = vmax.f32 %v4524, 0.0
        %v5681 = vmax.f32 %v4880, 0.0
        %v5682 = vmax.f32 %v5236, 0.0
        %v5683 = vmax.f32 %v5592, 0.0
        %v5684 = vmax.f32 %v4526, 0.0
        %v5685 = vmax.f32 %v4882, 0.0
        %v5686 = vmax.f32 %v5238, 0.0
        %v5687 = vmax.f32 %v5594, 0.0
        %v5688 = vmax.f32 %v4529, 0.0
        %v5689 = vmax.f32 %v4885, 0.0
        %v5690 = vmax.f32 %v5241, 0.0
        %v5691 = vmax.f32 %v5597, 0.0
        %v5692 = vmax.f32 %v4531, 0.0
        %v5693 = vmax.f32 %v4887, 0.0
        %v5694 = vmax.f32 %v5243, 0.0
        %v5695 = vmax.f32 %v5599, 0.0
        %v5696 = vmax.f32 %v4534, 0.0
        %v5697 = vmax.f32 %v4890, 0.0
        %v5698 = vmax.f32 %v5246, 0.0
        %v5699 = vmax.f32 %v5602, 0.0
        %v5700 = vmax.f32 %v4536, 0.0
        %v5701 = vmax.f32 %v4892, 0.0
        %v5702 = vmax.f32 %v5248, 0.0
        %v5703 = vmax.f32 %v5604, 0.0
        %v5704 = vmax.f32 %v4539, 0.0
        %v5705 = vmax.f32 %v4895, 0.0
        %v5706 = vmax.f32 %v5251, 0.0
        %v5707 = vmax.f32 %v5607, 0.0
        %v5708 = vmax.f32 %v4541, 0.0
        %v5709 = vmax.f32 %v4897, 0.0
        %v5710 = vmax.f32 %v5253, 0.0
        %v5711 = vmax.f32 %v5609, 0.0
        %v5712 = vmax.f32 %v4544, 0.0
        %v5713 = vmax.f32 %v4900, 0.0
        %v5714 = vmax.f32 %v5256, 0.0
        %v5715 = vmax.f32 %v5612, 0.0
        %v5716 = vmax.f32 %v4546, 0.0
        %v5717 = vmax.f32 %v4902, 0.0
        %v5718 = vmax.f32 %v5258, 0.0
        %v5719 = vmax.f32 %v5614, 0.0
        %v5720 = vmax.f32 %v4549, 0.0
        %v5721 = vmax.f32 %v4905, 0.0
        %v5722 = vmax.f32 %v5261, 0.0
        %v5723 = vmax.f32 %v5617, 0.0
        %v5724 = vmax.f32 %v4551, 0.0
        %v5725 = vmax.f32 %v4907, 0.0
        %v5726 = vmax.f32 %v5263, 0.0
        %v5727 = vmax.f32 %v5619, 0.0
        %v5728 = vmax.f32 %v4554, 0.0
        %v5729 = vmax.f32 %v4910, 0.0
        %v5730 = vmax.f32 %v5266, 0.0
        %v5731 = vmax.f32 %v5622, 0.0
        %v5732 = vmax.f32 %v4556, 0.0
        %v5733 = vmax.f32 %v4912, 0.0
        %v5734 = vmax.f32 %v5268, 0.0
        %v5735 = vmax.f32 %v5624, 0.0
        %v5736 = vmax.f32 %v4559, 0.0
        %v5737 = vmax.f32 %v4915, 0.0
        %v5738 = vmax.f32 %v5271, 0.0
        %v5739 = vmax.f32 %v5627, 0.0
        %v5740 = vmax.f32 %v4561, 0.0
        %v5741 = vmax.f32 %v4917, 0.0
        %v5742 = vmax.f32 %v5273, 0.0
        %v5743 = vmax.f32 %v5629, 0.0
        %v5744 = vmax.f32 %v4564, 0.0
        %v5745 = vmax.f32 %v4920, 0.0
        %v5746 = vmax.f32 %v5276, 0.0
        %v5747 = vmax.f32 %v5632, 0.0
        %v5748 = vmax.f32 %v4566, 0.0
        %v5749 = vmax.f32 %v4922, 0.0
        %v5750 = vmax.f32 %v5278, 0.0
        %v5751 = vmax.f32 %v5634, 0.0
        %v5752 = vmax.f32 %v4569, 0.0
        %v5753 = vmax.f32 %v4925, 0.0
        %v5754 = vmax.f32 %v5281, 0.0
        %v5755 = vmax.f32 %v5637, 0.0
        %v5756 = vmax.f32 %v4571, 0.0
        %v5757 = vmax.f32 %v4927, 0.0
        %v5758 = vmax.f32 %v5283, 0.0
        %v5759 = vmax.f32 %v5639, 0.0
        %v5760 = vmax.f32 %v4574, 0.0
        %v5761 = vmax.f32 %v4930, 0.0
        %v5762 = vmax.f32 %v5286, 0.0
        %v5763 = vmax.f32 %v5642, 0.0
        %v5764 = vmax.f32 %v4576, 0.0
        %v5765 = vmax.f32 %v4932, 0.0
        %v5766 = vmax.f32 %v5288, 0.0
        %v5767 = vmax.f32 %v5644, 0.0
        %v5768 = vmax.f32 %v4579, 0.0
        %v5769 = vmax.f32 %v4935, 0.0
        %v5770 = vmax.f32 %v5291, 0.0
        %v5771 = vmax.f32 %v5647, 0.0
        %v5772 = vmax.f32 %v4581, 0.0
        %v5773 = vmax.f32 %v4937, 0.0
        %v5774 = vmax.f32 %v5293, 0.0
        %v5775 = vmax.f32 %v5649, 0.0
        %v5776 = vmax.f32 %v4584, 0.0
        %v5777 = vmax.f32 %v4940, 0.0
        %v5778 = vmax.f32 %v5296, 0.0
        %v5779 = vmax.f32 %v5652, 0.0
        %v5780 = vmax.f32 %v4586, 0.0
        %v5781 = vmax.f32 %v4942, 0.0
        %v5782 = vmax.f32 %v5298, 0.0
        %v5783 = vmax.f32 %v5654, 0.0
        %v5784 = vpack.c.bf16 %v5660, %v5656
        %v5785 = vpack.c.bf16 %v5661, %v5657
        %v5786 = vpack.c.bf16 %v5662, %v5658
        %v5787 = vpack.c.bf16 %v5663, %v5659
        %v5788 = vpack.c.bf16 %v5668, %v5664
        %v5789 = vpack.c.bf16 %v5669, %v5665
        %v5790 = vpack.c.bf16 %v5670, %v5666
        %v5791 = vpack.c.bf16 %v5671, %v5667
        %v5792 = vpack.c.bf16 %v5676, %v5672
        %v5793 = vpack.c.bf16 %v5677, %v5673
        %v5794 = vpack.c.bf16 %v5678, %v5674
        %v5795 = vpack.c.bf16 %v5679, %v5675
        %v5796 = vpack.c.bf16 %v5684, %v5680
        %v5797 = vpack.c.bf16 %v5685, %v5681
        %v5798 = vpack.c.bf16 %v5686, %v5682
        %v5799 = vpack.c.bf16 %v5687, %v5683
        %v5800 = vpack.c.bf16 %v5692, %v5688
        %v5801 = vpack.c.bf16 %v5693, %v5689
        %v5802 = vpack.c.bf16 %v5694, %v5690
        %v5803 = vpack.c.bf16 %v5695, %v5691
        %v5804 = vpack.c.bf16 %v5700, %v5696
        %v5805 = vpack.c.bf16 %v5701, %v5697
        %v5806 = vpack.c.bf16 %v5702, %v5698
        %v5807 = vpack.c.bf16 %v5703, %v5699
        %v5808 = vpack.c.bf16 %v5708, %v5704
        %v5809 = vpack.c.bf16 %v5709, %v5705
        %v5810 = vpack.c.bf16 %v5710, %v5706
        %v5811 = vpack.c.bf16 %v5711, %v5707
        %v5812 = vpack.c.bf16 %v5716, %v5712
        %v5813 = vpack.c.bf16 %v5717, %v5713
        %v5814 = vpack.c.bf16 %v5718, %v5714
        %v5815 = vpack.c.bf16 %v5719, %v5715
        %v5816 = vpack.c.bf16 %v5724, %v5720
        %v5817 = vpack.c.bf16 %v5725, %v5721
        %v5818 = vpack.c.bf16 %v5726, %v5722
        %v5819 = vpack.c.bf16 %v5727, %v5723
        %v5820 = vpack.c.bf16 %v5732, %v5728
        %v5821 = vpack.c.bf16 %v5733, %v5729
        %v5822 = vpack.c.bf16 %v5734, %v5730
        %v5823 = vpack.c.bf16 %v5735, %v5731
        %v5824 = vpack.c.bf16 %v5740, %v5736
        %v5825 = vpack.c.bf16 %v5741, %v5737
        %v5826 = vpack.c.bf16 %v5742, %v5738
        %v5827 = vpack.c.bf16 %v5743, %v5739
        %v5828 = vpack.c.bf16 %v5748, %v5744
        %v5829 = vpack.c.bf16 %v5749, %v5745
        %v5830 = vpack.c.bf16 %v5750, %v5746
        %v5831 = vpack.c.bf16 %v5751, %v5747
        %v5832 = vpack.c.bf16 %v5756, %v5752
        %v5833 = vpack.c.bf16 %v5757, %v5753
        %v5834 = vpack.c.bf16 %v5758, %v5754
        %v5835 = vpack.c.bf16 %v5759, %v5755
        %v5836 = vpack.c.bf16 %v5764, %v5760
        %v5837 = vpack.c.bf16 %v5765, %v5761
        %v5838 = vpack.c.bf16 %v5766, %v5762
        %v5839 = vpack.c.bf16 %v5767, %v5763
        %v5840 = vpack.c.bf16 %v5772, %v5768
        %v5841 = vpack.c.bf16 %v5773, %v5769
        %v5842 = vpack.c.bf16 %v5774, %v5770
        %v5843 = vpack.c.bf16 %v5775, %v5771
        %v5844 = vpack.c.bf16 %v5780, %v5776
        %v5845 = vpack.c.bf16 %v5781, %v5777
        %v5846 = vpack.c.bf16 %v5782, %v5778
        %v5847 = vpack.c.bf16 %v5783, %v5779
        %v5848 = vld [vmem:[%s5] sm:$0xff]
        %v5849 = vld [vmem:[%s5 + $0x8] sm:$0xff]
        %v5850 = vld [vmem:[%s5 + $0x10] sm:$0xff]
        %v5851 = vld [vmem:[%s5 + $0x18] sm:$0xff]
        %v5852 = vld [vmem:[%s5 + $0x20] sm:$0xff]
        %v5853 = vld [vmem:[%s5 + $0x28] sm:$0xff]
        %v5854 = vld [vmem:[%s5 + $0x30] sm:$0xff]
        %v5855 = vld [vmem:[%s5 + $0x38] sm:$0xff]
        %v5856 = vld [vmem:[%s5 + $0x40] sm:$0xff]
        %v5857 = vld [vmem:[%s5 + $0x48] sm:$0xff]
        %v5858 = vld [vmem:[%s5 + $0x50] sm:$0xff]
        %v5859 = vld [vmem:[%s5 + $0x58] sm:$0xff]
        %v5860 = vld [vmem:[%s5 + $0x60] sm:$0xff]
        %v5861 = vld [vmem:[%s5 + $0x68] sm:$0xff]
        %v5862 = vld [vmem:[%s5 + $0x70] sm:$0xff]
        %v5863 = vld [vmem:[%s5 + $0x78] sm:$0xff]
        %v5864 = vld [vmem:[%s5 + $0x80] sm:$0xff]
        %v5865 = vld [vmem:[%s5 + $0x88] sm:$0xff]
        %v5866 = vld [vmem:[%s5 + $0x90] sm:$0xff]
        %v5867 = vld [vmem:[%s5 + $0x98] sm:$0xff]
        %v5868 = vld [vmem:[%s5 + $0xa0] sm:$0xff]
        %v5869 = vld [vmem:[%s5 + $0xa8] sm:$0xff]
        %v5870 = vld [vmem:[%s5 + $0xb0] sm:$0xff]
        %v5871 = vld [vmem:[%s5 + $0xb8] sm:$0xff]
        %v5872 = vld [vmem:[%s5 + $0xc0] sm:$0xff]
        %v5873 = vld [vmem:[%s5 + $0xc8] sm:$0xff]
        %v5874 = vld [vmem:[%s5 + $0xd0] sm:$0xff]
        %v5875 = vld [vmem:[%s5 + $0xd8] sm:$0xff]
        %v5876 = vld [vmem:[%s5 + $0xe0] sm:$0xff]
        %v5877 = vld [vmem:[%s5 + $0xe8] sm:$0xff]
        %v5878 = vld [vmem:[%s5 + $0xf0] sm:$0xff]
        %v5879 = vld [vmem:[%s5 + $0xf8] sm:$0xff]
        %v5880 = vld [vmem:[%s6] sm:$0xff]
        %v5881 = vld [vmem:[%s6 + $0x8] sm:$0xff]
        %v5882 = vld [vmem:[%s6 + $0x10] sm:$0xff]
        %v5883 = vld [vmem:[%s6 + $0x18] sm:$0xff]
        %v5884 = vld [vmem:[%s6 + $0x20] sm:$0xff]
        %v5885 = vld [vmem:[%s6 + $0x28] sm:$0xff]
        %v5886 = vld [vmem:[%s6 + $0x30] sm:$0xff]
        %v5887 = vld [vmem:[%s6 + $0x38] sm:$0xff]
        %v5888 = vld [vmem:[%s6 + $0x40] sm:$0xff]
        %v5889 = vld [vmem:[%s6 + $0x48] sm:$0xff]
        %v5890 = vld [vmem:[%s6 + $0x50] sm:$0xff]
        %v5891 = vld [vmem:[%s6 + $0x58] sm:$0xff]
        %v5892 = vld [vmem:[%s6 + $0x60] sm:$0xff]
        %v5893 = vld [vmem:[%s6 + $0x68] sm:$0xff]
        %v5894 = vld [vmem:[%s6 + $0x70] sm:$0xff]
        %v5895 = vld [vmem:[%s6 + $0x78] sm:$0xff]
        %v5896 = vld [vmem:[%s6 + $0x80] sm:$0xff]
        %v5897 = vld [vmem:[%s6 + $0x88] sm:$0xff]
        %v5898 = vld [vmem:[%s6 + $0x90] sm:$0xff]
        %v5899 = vld [vmem:[%s6 + $0x98] sm:$0xff]
        %v5900 = vld [vmem:[%s6 + $0xa0] sm:$0xff]
        %v5901 = vld [vmem:[%s6 + $0xa8] sm:$0xff]
        %v5902 = vld [vmem:[%s6 + $0xb0] sm:$0xff]
        %v5903 = vld [vmem:[%s6 + $0xb8] sm:$0xff]
        %v5904 = vld [vmem:[%s6 + $0xc0] sm:$0xff]
        %v5905 = vld [vmem:[%s6 + $0xc8] sm:$0xff]
        %v5906 = vld [vmem:[%s6 + $0xd0] sm:$0xff]
        %v5907 = vld [vmem:[%s6 + $0xd8] sm:$0xff]
        %v5908 = vld [vmem:[%s6 + $0xe0] sm:$0xff]
        %v5909 = vld [vmem:[%s6 + $0xe8] sm:$0xff]
        %v5910 = vld [vmem:[%s6 + $0xf0] sm:$0xff]
        %v5911 = vld [vmem:[%s6 + $0xf8] sm:$0xff]
        %5913 = vset.pattern.permute.xlu0 0
        %5914 = vperm.xlu0 %5913, %v5880
        %v5915 = vpop.permute.xlu0 %5914
        %5918 = vset.pattern.permute.xlu0 0
        %5919 = vperm.xlu0 %5918, %v5881
        %v5920 = vpop.permute.xlu0 %5919
        %5923 = vset.pattern.permute.xlu0 0
        %5924 = vperm.xlu0 %5923, %v5882
        %v5925 = vpop.permute.xlu0 %5924
        %5928 = vset.pattern.permute.xlu0 0
        %5929 = vperm.xlu0 %5928, %v5883
        %v5930 = vpop.permute.xlu0 %5929
        %5933 = vset.pattern.permute.xlu0 0
        %5934 = vperm.xlu0 %5933, %v5884
        %v5935 = vpop.permute.xlu0 %5934
        %5938 = vset.pattern.permute.xlu0 0
        %5939 = vperm.xlu0 %5938, %v5885
        %v5940 = vpop.permute.xlu0 %5939
        %5943 = vset.pattern.permute.xlu0 0
        %5944 = vperm.xlu0 %5943, %v5886
        %v5945 = vpop.permute.xlu0 %5944
        %5948 = vset.pattern.permute.xlu0 0
        %5949 = vperm.xlu0 %5948, %v5887
        %v5950 = vpop.permute.xlu0 %5949
        %5953 = vset.pattern.permute.xlu0 0
        %5954 = vperm.xlu0 %5953, %v5888
        %v5955 = vpop.permute.xlu0 %5954
        %5958 = vset.pattern.permute.xlu0 0
        %5959 = vperm.xlu0 %5958, %v5889
        %v5960 = vpop.permute.xlu0 %5959
        %5963 = vset.pattern.permute.xlu0 0
        %5964 = vperm.xlu0 %5963, %v5890
        %v5965 = vpop.permute.xlu0 %5964
        %5968 = vset.pattern.permute.xlu0 0
        %5969 = vperm.xlu0 %5968, %v5891
        %v5970 = vpop.permute.xlu0 %5969
        %5973 = vset.pattern.permute.xlu0 0
        %5974 = vperm.xlu0 %5973, %v5892
        %v5975 = vpop.permute.xlu0 %5974
        %5978 = vset.pattern.permute.xlu0 0
        %5979 = vperm.xlu0 %5978, %v5893
        %v5980 = vpop.permute.xlu0 %5979
        %5983 = vset.pattern.permute.xlu0 0
        %5984 = vperm.xlu0 %5983, %v5894
        %v5985 = vpop.permute.xlu0 %5984
        %5988 = vset.pattern.permute.xlu0 0
        %5989 = vperm.xlu0 %5988, %v5895
        %v5990 = vpop.permute.xlu0 %5989
        %5993 = vset.pattern.permute.xlu0 0
        %5994 = vperm.xlu0 %5993, %v5896
        %v5995 = vpop.permute.xlu0 %5994
        %5998 = vset.pattern.permute.xlu0 0
        %5999 = vperm.xlu0 %5998, %v5897
        %v6000 = vpop.permute.xlu0 %5999
        %6003 = vset.pattern.permute.xlu0 0
        %6004 = vperm.xlu0 %6003, %v5898
        %v6005 = vpop.permute.xlu0 %6004
        %6008 = vset.pattern.permute.xlu0 0
        %6009 = vperm.xlu0 %6008, %v5899
        %v6010 = vpop.permute.xlu0 %6009
        %6013 = vset.pattern.permute.xlu0 0
        %6014 = vperm.xlu0 %6013, %v5900
        %v6015 = vpop.permute.xlu0 %6014
        %6018 = vset.pattern.permute.xlu0 0
        %6019 = vperm.xlu0 %6018, %v5901
        %v6020 = vpop.permute.xlu0 %6019
        %6023 = vset.pattern.permute.xlu0 0
        %6024 = vperm.xlu0 %6023, %v5902
        %v6025 = vpop.permute.xlu0 %6024
        %6028 = vset.pattern.permute.xlu0 0
        %6029 = vperm.xlu0 %6028, %v5903
        %v6030 = vpop.permute.xlu0 %6029
        %6033 = vset.pattern.permute.xlu0 0
        %6034 = vperm.xlu0 %6033, %v5904
        %v6035 = vpop.permute.xlu0 %6034
        %6038 = vset.pattern.permute.xlu0 0
        %6039 = vperm.xlu0 %6038, %v5905
        %v6040 = vpop.permute.xlu0 %6039
        %6043 = vset.pattern.permute.xlu0 0
        %6044 = vperm.xlu0 %6043, %v5906
        %v6045 = vpop.permute.xlu0 %6044
        %6048 = vset.pattern.permute.xlu0 0
        %6049 = vperm.xlu0 %6048, %v5907
        %v6050 = vpop.permute.xlu0 %6049
        %6053 = vset.pattern.permute.xlu0 0
        %6054 = vperm.xlu0 %6053, %v5908
        %v6055 = vpop.permute.xlu0 %6054
        %6058 = vset.pattern.permute.xlu0 0
        %6059 = vperm.xlu0 %6058, %v5909
        %v6060 = vpop.permute.xlu0 %6059
        %6063 = vset.pattern.permute.xlu0 0
        %6064 = vperm.xlu0 %6063, %v5910
        %v6065 = vpop.permute.xlu0 %6064
        %6068 = vset.pattern.permute.xlu0 0
        %6069 = vperm.xlu0 %6068, %v5911
        %v6070 = vpop.permute.xlu0 %6069
        %v6104 = vunpack.c.l.b16 %v5848
        %v6105 = vunpack.c.h.b16 %v5848
        %v6106 = vunpack.c.l.b16 %v5849
        %v6107 = vunpack.c.h.b16 %v5849
        %v6108 = vunpack.c.l.b16 %v5850
        %v6109 = vunpack.c.h.b16 %v5850
        %v6110 = vunpack.c.l.b16 %v5851
        %v6111 = vunpack.c.h.b16 %v5851
        %v6112 = vunpack.c.l.b16 %v5852
        %v6113 = vunpack.c.h.b16 %v5852
        %v6114 = vunpack.c.l.b16 %v5853
        %v6115 = vunpack.c.h.b16 %v5853
        %v6116 = vunpack.c.l.b16 %v5854
        %v6117 = vunpack.c.h.b16 %v5854
        %v6118 = vunpack.c.l.b16 %v5855
        %v6119 = vunpack.c.h.b16 %v5855
        %v6120 = vunpack.c.l.b16 %v5856
        %v6121 = vunpack.c.h.b16 %v5856
        %v6122 = vunpack.c.l.b16 %v5857
        %v6123 = vunpack.c.h.b16 %v5857
        %v6124 = vunpack.c.l.b16 %v5858
        %v6125 = vunpack.c.h.b16 %v5858
        %v6126 = vunpack.c.l.b16 %v5859
        %v6127 = vunpack.c.h.b16 %v5859
        %v6128 = vunpack.c.l.b16 %v5860
        %v6129 = vunpack.c.h.b16 %v5860
        %v6130 = vunpack.c.l.b16 %v5861
        %v6131 = vunpack.c.h.b16 %v5861
        %v6132 = vunpack.c.l.b16 %v5862
        %v6133 = vunpack.c.h.b16 %v5862
        %v6134 = vunpack.c.l.b16 %v5863
        %v6135 = vunpack.c.h.b16 %v5863
        %v6136 = vunpack.c.l.b16 %v5864
        %v6137 = vunpack.c.h.b16 %v5864
        %v6138 = vunpack.c.l.b16 %v5865
        %v6139 = vunpack.c.h.b16 %v5865
        %v6140 = vunpack.c.l.b16 %v5866
        %v6141 = vunpack.c.h.b16 %v5866
        %v6142 = vunpack.c.l.b16 %v5867
        %v6143 = vunpack.c.h.b16 %v5867
        %v6144 = vunpack.c.l.b16 %v5868
        %v6145 = vunpack.c.h.b16 %v5868
        %v6146 = vunpack.c.l.b16 %v5869
        %v6147 = vunpack.c.h.b16 %v5869
        %v6148 = vunpack.c.l.b16 %v5870
        %v6149 = vunpack.c.h.b16 %v5870
        %v6150 = vunpack.c.l.b16 %v5871
        %v6151 = vunpack.c.h.b16 %v5871
        %v6152 = vunpack.c.l.b16 %v5872
        %v6153 = vunpack.c.h.b16 %v5872
        %v6154 = vunpack.c.l.b16 %v5873
        %v6155 = vunpack.c.h.b16 %v5873
        %v6156 = vunpack.c.l.b16 %v5874
        %v6157 = vunpack.c.h.b16 %v5874
        %v6158 = vunpack.c.l.b16 %v5875
        %v6159 = vunpack.c.h.b16 %v5875
        %v6160 = vunpack.c.l.b16 %v5876
        %v6161 = vunpack.c.h.b16 %v5876
        %v6162 = vunpack.c.l.b16 %v5877
        %v6163 = vunpack.c.h.b16 %v5877
        %v6164 = vunpack.c.l.b16 %v5878
        %v6165 = vunpack.c.h.b16 %v5878
        %v6166 = vunpack.c.l.b16 %v5879
        %v6167 = vunpack.c.h.b16 %v5879
        %v6168 = vpack.c.b16 %v6106, %v6104
        %v6169 = vpack.c.b16 %v6107, %v6105
        %v6170 = vpack.c.b16 %v6110, %v6108
        %v6171 = vpack.c.b16 %v6111, %v6109
        %v6172 = vpack.c.b16 %v6114, %v6112
        %v6173 = vpack.c.b16 %v6115, %v6113
        %v6174 = vpack.c.b16 %v6118, %v6116
        %v6175 = vpack.c.b16 %v6119, %v6117
        %v6176 = vpack.c.b16 %v6122, %v6120
        %v6177 = vpack.c.b16 %v6123, %v6121
        %v6178 = vpack.c.b16 %v6126, %v6124
        %v6179 = vpack.c.b16 %v6127, %v6125
        %v6180 = vpack.c.b16 %v6130, %v6128
        %v6181 = vpack.c.b16 %v6131, %v6129
        %v6182 = vpack.c.b16 %v6134, %v6132
        %v6183 = vpack.c.b16 %v6135, %v6133
        %v6184 = vpack.c.b16 %v6138, %v6136
        %v6185 = vpack.c.b16 %v6139, %v6137
        %v6186 = vpack.c.b16 %v6142, %v6140
        %v6187 = vpack.c.b16 %v6143, %v6141
        %v6188 = vpack.c.b16 %v6146, %v6144
        %v6189 = vpack.c.b16 %v6147, %v6145
        %v6190 = vpack.c.b16 %v6150, %v6148
        %v6191 = vpack.c.b16 %v6151, %v6149
        %v6192 = vpack.c.b16 %v6154, %v6152
        %v6193 = vpack.c.b16 %v6155, %v6153
        %v6194 = vpack.c.b16 %v6158, %v6156
        %v6195 = vpack.c.b16 %v6159, %v6157
        %v6196 = vpack.c.b16 %v6162, %v6160
        %v6197 = vpack.c.b16 %v6163, %v6161
        %v6198 = vpack.c.b16 %v6166, %v6164
        %v6199 = vpack.c.b16 %v6167, %v6165
        %6232 = vmatpush.bf16.msra.mxu0 %v5812
        %6233 = vmatpush.bf16.msra.mxu0 %v5808
        %6234 = vmatpush.bf16.msra.mxu0 %v5804
        %6235 = vmatpush.bf16.msra.mxu0 %v5800
        %6236 = vmatpush.bf16.msra.mxu0 %v5796
        %6237 = vmatpush.bf16.msra.mxu0 %v5792
        %6238 = vmatpush.bf16.msra.mxu0 %v5788
        %6239 = vmatpush.bf16.msra.mxu0 %v5784
        %6240 = vmatmul.bf16.gmra.mxu0 %v6168
        %v6241 = vpop.f32.mrf.mxu0
        %v6242 = vadd.f32 %v5915, %v6241
        %v6243 = vpop.f32.mrf.mxu0
        %v6244 = vadd.f32 %v5920, %v6243
        %6245 = vmatmul.bf16.gmra.mxu0 %v6170
        %v6246 = vpop.f32.mrf.mxu0
        %v6247 = vadd.f32 %v5925, %v6246
        %v6248 = vpop.f32.mrf.mxu0
        %v6249 = vadd.f32 %v5930, %v6248
        %6250 = vmatmul.bf16.gmra.mxu0 %v6172
        %v6251 = vpop.f32.mrf.mxu0
        %v6252 = vadd.f32 %v5935, %v6251
        %v6253 = vpop.f32.mrf.mxu0
        %v6254 = vadd.f32 %v5940, %v6253
        %6255 = vmatmul.bf16.gmra.mxu0 %v6174
        %v6256 = vpop.f32.mrf.mxu0
        %v6257 = vadd.f32 %v5945, %v6256
        %v6258 = vpop.f32.mrf.mxu0
        %v6259 = vadd.f32 %v5950, %v6258
        %6260 = vmatmul.bf16.gmra.mxu0 %v6176
        %v6261 = vpop.f32.mrf.mxu0
        %v6262 = vadd.f32 %v5955, %v6261
        %v6263 = vpop.f32.mrf.mxu0
        %v6264 = vadd.f32 %v5960, %v6263
        %6265 = vmatmul.bf16.gmra.mxu0 %v6178
        %v6266 = vpop.f32.mrf.mxu0
        %v6267 = vadd.f32 %v5965, %v6266
        %v6268 = vpop.f32.mrf.mxu0
        %v6269 = vadd.f32 %v5970, %v6268
        %6270 = vmatmul.bf16.gmra.mxu0 %v6180
        %v6271 = vpop.f32.mrf.mxu0
        %v6272 = vadd.f32 %v5975, %v6271
        %v6273 = vpop.f32.mrf.mxu0
        %v6274 = vadd.f32 %v5980, %v6273
        %6275 = vmatmul.bf16.gmra.mxu0 %v6182
        %v6276 = vpop.f32.mrf.mxu0
        %v6277 = vadd.f32 %v5985, %v6276
        %v6278 = vpop.f32.mrf.mxu0
        %v6279 = vadd.f32 %v5990, %v6278
        %6280 = vmatmul.bf16.gmra.mxu0 %v6184
        %v6281 = vpop.f32.mrf.mxu0
        %v6282 = vadd.f32 %v5995, %v6281
        %v6283 = vpop.f32.mrf.mxu0
        %v6284 = vadd.f32 %v6000, %v6283
        %6285 = vmatmul.bf16.gmra.mxu0 %v6186
        %v6286 = vpop.f32.mrf.mxu0
        %v6287 = vadd.f32 %v6005, %v6286
        %v6288 = vpop.f32.mrf.mxu0
        %v6289 = vadd.f32 %v6010, %v6288
        %6290 = vmatmul.bf16.gmra.mxu0 %v6188
        %v6291 = vpop.f32.mrf.mxu0
        %v6292 = vadd.f32 %v6015, %v6291
        %v6293 = vpop.f32.mrf.mxu0
        %v6294 = vadd.f32 %v6020, %v6293
        %6295 = vmatmul.bf16.gmra.mxu0 %v6190
        %v6296 = vpop.f32.mrf.mxu0
        %v6297 = vadd.f32 %v6025, %v6296
        %v6298 = vpop.f32.mrf.mxu0
        %v6299 = vadd.f32 %v6030, %v6298
        %6300 = vmatmul.bf16.gmra.mxu0 %v6192
        %v6301 = vpop.f32.mrf.mxu0
        %v6302 = vadd.f32 %v6035, %v6301
        %v6303 = vpop.f32.mrf.mxu0
        %v6304 = vadd.f32 %v6040, %v6303
        %6305 = vmatmul.bf16.gmra.mxu0 %v6194
        %v6306 = vpop.f32.mrf.mxu0
        %v6307 = vadd.f32 %v6045, %v6306
        %v6308 = vpop.f32.mrf.mxu0
        %v6309 = vadd.f32 %v6050, %v6308
        %6310 = vmatmul.bf16.gmra.mxu0 %v6196
        %v6311 = vpop.f32.mrf.mxu0
        %v6312 = vadd.f32 %v6055, %v6311
        %v6313 = vpop.f32.mrf.mxu0
        %v6314 = vadd.f32 %v6060, %v6313
        %6315 = vmatmul.bf16.gmra.mxu0 %v6198
        %v6316 = vpop.f32.mrf.mxu0
        %v6317 = vadd.f32 %v6065, %v6316
        %v6318 = vpop.f32.mrf.mxu0
        %v6319 = vadd.f32 %v6070, %v6318
        %6320 = vdwg.mxu0
        %6321 = vmatpush.bf16.msra.mxu0 %v5844
        %6322 = vmatpush.bf16.msra.mxu0 %v5840
        %6323 = vmatpush.bf16.msra.mxu0 %v5836
        %6324 = vmatpush.bf16.msra.mxu0 %v5832
        %6325 = vmatpush.bf16.msra.mxu0 %v5828
        %6326 = vmatpush.bf16.msra.mxu0 %v5824
        %6327 = vmatpush.bf16.msra.mxu0 %v5820
        %6328 = vmatpush.bf16.msra.mxu0 %v5816
        %6329 = vmatmul.bf16.gmra.mxu0 %v6169
        %v6330 = vpop.f32.mrf.mxu0
        %v6331 = vadd.f32 %v6242, %v6330
        %v6332 = vpop.f32.mrf.mxu0
        %v6333 = vadd.f32 %v6244, %v6332
        %6334 = vmatmul.bf16.gmra.mxu0 %v6171
        %v6335 = vpop.f32.mrf.mxu0
        %v6336 = vadd.f32 %v6247, %v6335
        %v6337 = vpop.f32.mrf.mxu0
        %v6338 = vadd.f32 %v6249, %v6337
        %6339 = vmatmul.bf16.gmra.mxu0 %v6173
        %v6340 = vpop.f32.mrf.mxu0
        %v6341 = vadd.f32 %v6252, %v6340
        %v6342 = vpop.f32.mrf.mxu0
        %v6343 = vadd.f32 %v6254, %v6342
        %6344 = vmatmul.bf16.gmra.mxu0 %v6175
        %v6345 = vpop.f32.mrf.mxu0
        %v6346 = vadd.f32 %v6257, %v6345
        %v6347 = vpop.f32.mrf.mxu0
        %v6348 = vadd.f32 %v6259, %v6347
        %6349 = vmatmul.bf16.gmra.mxu0 %v6177
        %v6350 = vpop.f32.mrf.mxu0
        %v6351 = vadd.f32 %v6262, %v6350
        %v6352 = vpop.f32.mrf.mxu0
        %v6353 = vadd.f32 %v6264, %v6352
        %6354 = vmatmul.bf16.gmra.mxu0 %v6179
        %v6355 = vpop.f32.mrf.mxu0
        %v6356 = vadd.f32 %v6267, %v6355
        %v6357 = vpop.f32.mrf.mxu0
        %v6358 = vadd.f32 %v6269, %v6357
        %6359 = vmatmul.bf16.gmra.mxu0 %v6181
        %v6360 = vpop.f32.mrf.mxu0
        %v6361 = vadd.f32 %v6272, %v6360
        %v6362 = vpop.f32.mrf.mxu0
        %v6363 = vadd.f32 %v6274, %v6362
        %6364 = vmatmul.bf16.gmra.mxu0 %v6183
        %v6365 = vpop.f32.mrf.mxu0
        %v6366 = vadd.f32 %v6277, %v6365
        %v6367 = vpop.f32.mrf.mxu0
        %v6368 = vadd.f32 %v6279, %v6367
        %6369 = vmatmul.bf16.gmra.mxu0 %v6185
        %v6370 = vpop.f32.mrf.mxu0
        %v6371 = vadd.f32 %v6282, %v6370
        %v6372 = vpop.f32.mrf.mxu0
        %v6373 = vadd.f32 %v6284, %v6372
        %6374 = vmatmul.bf16.gmra.mxu0 %v6187
        %v6375 = vpop.f32.mrf.mxu0
        %v6376 = vadd.f32 %v6287, %v6375
        %v6377 = vpop.f32.mrf.mxu0
        %v6378 = vadd.f32 %v6289, %v6377
        %6379 = vmatmul.bf16.gmra.mxu0 %v6189
        %v6380 = vpop.f32.mrf.mxu0
        %v6381 = vadd.f32 %v6292, %v6380
        %v6382 = vpop.f32.mrf.mxu0
        %v6383 = vadd.f32 %v6294, %v6382
        %6384 = vmatmul.bf16.gmra.mxu0 %v6191
        %v6385 = vpop.f32.mrf.mxu0
        %v6386 = vadd.f32 %v6297, %v6385
        %v6387 = vpop.f32.mrf.mxu0
        %v6388 = vadd.f32 %v6299, %v6387
        %6389 = vmatmul.bf16.gmra.mxu0 %v6193
        %v6390 = vpop.f32.mrf.mxu0
        %v6391 = vadd.f32 %v6302, %v6390
        %v6392 = vpop.f32.mrf.mxu0
        %v6393 = vadd.f32 %v6304, %v6392
        %6394 = vmatmul.bf16.gmra.mxu0 %v6195
        %v6395 = vpop.f32.mrf.mxu0
        %v6396 = vadd.f32 %v6307, %v6395
        %v6397 = vpop.f32.mrf.mxu0
        %v6398 = vadd.f32 %v6309, %v6397
        %6399 = vmatmul.bf16.gmra.mxu0 %v6197
        %v6400 = vpop.f32.mrf.mxu0
        %v6401 = vadd.f32 %v6312, %v6400
        %v6402 = vpop.f32.mrf.mxu0
        %v6403 = vadd.f32 %v6314, %v6402
        %6404 = vmatmul.bf16.gmra.mxu0 %v6199
        %v6405 = vpop.f32.mrf.mxu0
        %v6406 = vadd.f32 %v6317, %v6405
        %v6407 = vpop.f32.mrf.mxu0
        %v6408 = vadd.f32 %v6319, %v6407
        %6409 = vdwg.mxu0
        %6410 = vmatpush.bf16.msra.mxu0 %v5813
        %6411 = vmatpush.bf16.msra.mxu0 %v5809
        %6412 = vmatpush.bf16.msra.mxu0 %v5805
        %6413 = vmatpush.bf16.msra.mxu0 %v5801
        %6414 = vmatpush.bf16.msra.mxu0 %v5797
        %6415 = vmatpush.bf16.msra.mxu0 %v5793
        %6416 = vmatpush.bf16.msra.mxu0 %v5789
        %6417 = vmatpush.bf16.msra.mxu0 %v5785
        %6418 = vmatmul.bf16.gmra.mxu0 %v6168
        %v6419 = vpop.f32.mrf.mxu0
        %v6420 = vadd.f32 %v5915, %v6419
        %v6421 = vpop.f32.mrf.mxu0
        %v6422 = vadd.f32 %v5920, %v6421
        %6423 = vmatmul.bf16.gmra.mxu0 %v6170
        %v6424 = vpop.f32.mrf.mxu0
        %v6425 = vadd.f32 %v5925, %v6424
        %v6426 = vpop.f32.mrf.mxu0
        %v6427 = vadd.f32 %v5930, %v6426
        %6428 = vmatmul.bf16.gmra.mxu0 %v6172
        %v6429 = vpop.f32.mrf.mxu0
        %v6430 = vadd.f32 %v5935, %v6429
        %v6431 = vpop.f32.mrf.mxu0
        %v6432 = vadd.f32 %v5940, %v6431
        %6433 = vmatmul.bf16.gmra.mxu0 %v6174
        %v6434 = vpop.f32.mrf.mxu0
        %v6435 = vadd.f32 %v5945, %v6434
        %v6436 = vpop.f32.mrf.mxu0
        %v6437 = vadd.f32 %v5950, %v6436
        %6438 = vmatmul.bf16.gmra.mxu0 %v6176
        %v6439 = vpop.f32.mrf.mxu0
        %v6440 = vadd.f32 %v5955, %v6439
        %v6441 = vpop.f32.mrf.mxu0
        %v6442 = vadd.f32 %v5960, %v6441
        %6443 = vmatmul.bf16.gmra.mxu0 %v6178
        %v6444 = vpop.f32.mrf.mxu0
        %v6445 = vadd.f32 %v5965, %v6444
        %v6446 = vpop.f32.mrf.mxu0
        %v6447 = vadd.f32 %v5970, %v6446
        %6448 = vmatmul.bf16.gmra.mxu0 %v6180
        %v6449 = vpop.f32.mrf.mxu0
        %v6450 = vadd.f32 %v5975, %v6449
        %v6451 = vpop.f32.mrf.mxu0
        %v6452 = vadd.f32 %v5980, %v6451
        %6453 = vmatmul.bf16.gmra.mxu0 %v6182
        %v6454 = vpop.f32.mrf.mxu0
        %v6455 = vadd.f32 %v5985, %v6454
        %v6456 = vpop.f32.mrf.mxu0
        %v6457 = vadd.f32 %v5990, %v6456
        %6458 = vmatmul.bf16.gmra.mxu0 %v6184
        %v6459 = vpop.f32.mrf.mxu0
        %v6460 = vadd.f32 %v5995, %v6459
        %v6461 = vpop.f32.mrf.mxu0
        %v6462 = vadd.f32 %v6000, %v6461
        %6463 = vmatmul.bf16.gmra.mxu0 %v6186
        %v6464 = vpop.f32.mrf.mxu0
        %v6465 = vadd.f32 %v6005, %v6464
        %v6466 = vpop.f32.mrf.mxu0
        %v6467 = vadd.f32 %v6010, %v6466
        %6468 = vmatmul.bf16.gmra.mxu0 %v6188
        %v6469 = vpop.f32.mrf.mxu0
        %v6470 = vadd.f32 %v6015, %v6469
        %v6471 = vpop.f32.mrf.mxu0
        %v6472 = vadd.f32 %v6020, %v6471
        %6473 = vmatmul.bf16.gmra.mxu0 %v6190
        %v6474 = vpop.f32.mrf.mxu0
        %v6475 = vadd.f32 %v6025, %v6474
        %v6476 = vpop.f32.mrf.mxu0
        %v6477 = vadd.f32 %v6030, %v6476
        %6478 = vmatmul.bf16.gmra.mxu0 %v6192
        %v6479 = vpop.f32.mrf.mxu0
        %v6480 = vadd.f32 %v6035, %v6479
        %v6481 = vpop.f32.mrf.mxu0
        %v6482 = vadd.f32 %v6040, %v6481
        %6483 = vmatmul.bf16.gmra.mxu0 %v6194
        %v6484 = vpop.f32.mrf.mxu0
        %v6485 = vadd.f32 %v6045, %v6484
        %v6486 = vpop.f32.mrf.mxu0
        %v6487 = vadd.f32 %v6050, %v6486
        %6488 = vmatmul.bf16.gmra.mxu0 %v6196
        %v6489 = vpop.f32.mrf.mxu0
        %v6490 = vadd.f32 %v6055, %v6489
        %v6491 = vpop.f32.mrf.mxu0
        %v6492 = vadd.f32 %v6060, %v6491
        %6493 = vmatmul.bf16.gmra.mxu0 %v6198
        %v6494 = vpop.f32.mrf.mxu0
        %v6495 = vadd.f32 %v6065, %v6494
        %v6496 = vpop.f32.mrf.mxu0
        %v6497 = vadd.f32 %v6070, %v6496
        %6498 = vdwg.mxu0
        %6499 = vmatpush.bf16.msra.mxu0 %v5845
        %6500 = vmatpush.bf16.msra.mxu0 %v5841
        %6501 = vmatpush.bf16.msra.mxu0 %v5837
        %6502 = vmatpush.bf16.msra.mxu0 %v5833
        %6503 = vmatpush.bf16.msra.mxu0 %v5829
        %6504 = vmatpush.bf16.msra.mxu0 %v5825
        %6505 = vmatpush.bf16.msra.mxu0 %v5821
        %6506 = vmatpush.bf16.msra.mxu0 %v5817
        %6507 = vmatmul.bf16.gmra.mxu0 %v6169
        %v6508 = vpop.f32.mrf.mxu0
        %v6509 = vadd.f32 %v6420, %v6508
        %v6510 = vpop.f32.mrf.mxu0
        %v6511 = vadd.f32 %v6422, %v6510
        %6512 = vmatmul.bf16.gmra.mxu0 %v6171
        %v6513 = vpop.f32.mrf.mxu0
        %v6514 = vadd.f32 %v6425, %v6513
        %v6515 = vpop.f32.mrf.mxu0
        %v6516 = vadd.f32 %v6427, %v6515
        %6517 = vmatmul.bf16.gmra.mxu0 %v6173
        %v6518 = vpop.f32.mrf.mxu0
        %v6519 = vadd.f32 %v6430, %v6518
        %v6520 = vpop.f32.mrf.mxu0
        %v6521 = vadd.f32 %v6432, %v6520
        %6522 = vmatmul.bf16.gmra.mxu0 %v6175
        %v6523 = vpop.f32.mrf.mxu0
        %v6524 = vadd.f32 %v6435, %v6523
        %v6525 = vpop.f32.mrf.mxu0
        %v6526 = vadd.f32 %v6437, %v6525
        %6527 = vmatmul.bf16.gmra.mxu0 %v6177
        %v6528 = vpop.f32.mrf.mxu0
        %v6529 = vadd.f32 %v6440, %v6528
        %v6530 = vpop.f32.mrf.mxu0
        %v6531 = vadd.f32 %v6442, %v6530
        %6532 = vmatmul.bf16.gmra.mxu0 %v6179
        %v6533 = vpop.f32.mrf.mxu0
        %v6534 = vadd.f32 %v6445, %v6533
        %v6535 = vpop.f32.mrf.mxu0
        %v6536 = vadd.f32 %v6447, %v6535
        %6537 = vmatmul.bf16.gmra.mxu0 %v6181
        %v6538 = vpop.f32.mrf.mxu0
        %v6539 = vadd.f32 %v6450, %v6538
        %v6540 = vpop.f32.mrf.mxu0
        %v6541 = vadd.f32 %v6452, %v6540
        %6542 = vmatmul.bf16.gmra.mxu0 %v6183
        %v6543 = vpop.f32.mrf.mxu0
        %v6544 = vadd.f32 %v6455, %v6543
        %v6545 = vpop.f32.mrf.mxu0
        %v6546 = vadd.f32 %v6457, %v6545
        %6547 = vmatmul.bf16.gmra.mxu0 %v6185
        %v6548 = vpop.f32.mrf.mxu0
        %v6549 = vadd.f32 %v6460, %v6548
        %v6550 = vpop.f32.mrf.mxu0
        %v6551 = vadd.f32 %v6462, %v6550
        %6552 = vmatmul.bf16.gmra.mxu0 %v6187
        %v6553 = vpop.f32.mrf.mxu0
        %v6554 = vadd.f32 %v6465, %v6553
        %v6555 = vpop.f32.mrf.mxu0
        %v6556 = vadd.f32 %v6467, %v6555
        %6557 = vmatmul.bf16.gmra.mxu0 %v6189
        %v6558 = vpop.f32.mrf.mxu0
        %v6559 = vadd.f32 %v6470, %v6558
        %v6560 = vpop.f32.mrf.mxu0
        %v6561 = vadd.f32 %v6472, %v6560
        %6562 = vmatmul.bf16.gmra.mxu0 %v6191
        %v6563 = vpop.f32.mrf.mxu0
        %v6564 = vadd.f32 %v6475, %v6563
        %v6565 = vpop.f32.mrf.mxu0
        %v6566 = vadd.f32 %v6477, %v6565
        %6567 = vmatmul.bf16.gmra.mxu0 %v6193
        %v6568 = vpop.f32.mrf.mxu0
        %v6569 = vadd.f32 %v6480, %v6568
        %v6570 = vpop.f32.mrf.mxu0
        %v6571 = vadd.f32 %v6482, %v6570
        %6572 = vmatmul.bf16.gmra.mxu0 %v6195
        %v6573 = vpop.f32.mrf.mxu0
        %v6574 = vadd.f32 %v6485, %v6573
        %v6575 = vpop.f32.mrf.mxu0
        %v6576 = vadd.f32 %v6487, %v6575
        %6577 = vmatmul.bf16.gmra.mxu0 %v6197
        %v6578 = vpop.f32.mrf.mxu0
        %v6579 = vadd.f32 %v6490, %v6578
        %v6580 = vpop.f32.mrf.mxu0
        %v6581 = vadd.f32 %v6492, %v6580
        %6582 = vmatmul.bf16.gmra.mxu0 %v6199
        %v6583 = vpop.f32.mrf.mxu0
        %v6584 = vadd.f32 %v6495, %v6583
        %v6585 = vpop.f32.mrf.mxu0
        %v6586 = vadd.f32 %v6497, %v6585
        %6587 = vdwg.mxu0
        %6588 = vmatpush.bf16.msra.mxu0 %v5814
        %6589 = vmatpush.bf16.msra.mxu0 %v5810
        %6590 = vmatpush.bf16.msra.mxu0 %v5806
        %6591 = vmatpush.bf16.msra.mxu0 %v5802
        %6592 = vmatpush.bf16.msra.mxu0 %v5798
        %6593 = vmatpush.bf16.msra.mxu0 %v5794
        %6594 = vmatpush.bf16.msra.mxu0 %v5790
        %6595 = vmatpush.bf16.msra.mxu0 %v5786
        %6596 = vmatmul.bf16.gmra.mxu0 %v6168
        %v6597 = vpop.f32.mrf.mxu0
        %v6598 = vadd.f32 %v5915, %v6597
        %v6599 = vpop.f32.mrf.mxu0
        %v6600 = vadd.f32 %v5920, %v6599
        %6601 = vmatmul.bf16.gmra.mxu0 %v6170
        %v6602 = vpop.f32.mrf.mxu0
        %v6603 = vadd.f32 %v5925, %v6602
        %v6604 = vpop.f32.mrf.mxu0
        %v6605 = vadd.f32 %v5930, %v6604
        %6606 = vmatmul.bf16.gmra.mxu0 %v6172
        %v6607 = vpop.f32.mrf.mxu0
        %v6608 = vadd.f32 %v5935, %v6607
        %v6609 = vpop.f32.mrf.mxu0
        %v6610 = vadd.f32 %v5940, %v6609
        %6611 = vmatmul.bf16.gmra.mxu0 %v6174
        %v6612 = vpop.f32.mrf.mxu0
        %v6613 = vadd.f32 %v5945, %v6612
        %v6614 = vpop.f32.mrf.mxu0
        %v6615 = vadd.f32 %v5950, %v6614
        %6616 = vmatmul.bf16.gmra.mxu0 %v6176
        %v6617 = vpop.f32.mrf.mxu0
        %v6618 = vadd.f32 %v5955, %v6617
        %v6619 = vpop.f32.mrf.mxu0
        %v6620 = vadd.f32 %v5960, %v6619
        %6621 = vmatmul.bf16.gmra.mxu0 %v6178
        %v6622 = vpop.f32.mrf.mxu0
        %v6623 = vadd.f32 %v5965, %v6622
        %v6624 = vpop.f32.mrf.mxu0
        %v6625 = vadd.f32 %v5970, %v6624
        %6626 = vmatmul.bf16.gmra.mxu0 %v6180
        %v6627 = vpop.f32.mrf.mxu0
        %v6628 = vadd.f32 %v5975, %v6627
        %v6629 = vpop.f32.mrf.mxu0
        %v6630 = vadd.f32 %v5980, %v6629
        %6631 = vmatmul.bf16.gmra.mxu0 %v6182
        %v6632 = vpop.f32.mrf.mxu0
        %v6633 = vadd.f32 %v5985, %v6632
        %v6634 = vpop.f32.mrf.mxu0
        %v6635 = vadd.f32 %v5990, %v6634
        %6636 = vmatmul.bf16.gmra.mxu0 %v6184
        %v6637 = vpop.f32.mrf.mxu0
        %v6638 = vadd.f32 %v5995, %v6637
        %v6639 = vpop.f32.mrf.mxu0
        %v6640 = vadd.f32 %v6000, %v6639
        %6641 = vmatmul.bf16.gmra.mxu0 %v6186
        %v6642 = vpop.f32.mrf.mxu0
        %v6643 = vadd.f32 %v6005, %v6642
        %v6644 = vpop.f32.mrf.mxu0
        %v6645 = vadd.f32 %v6010, %v6644
        %6646 = vmatmul.bf16.gmra.mxu0 %v6188
        %v6647 = vpop.f32.mrf.mxu0
        %v6648 = vadd.f32 %v6015, %v6647
        %v6649 = vpop.f32.mrf.mxu0
        %v6650 = vadd.f32 %v6020, %v6649
        %6651 = vmatmul.bf16.gmra.mxu0 %v6190
        %v6652 = vpop.f32.mrf.mxu0
        %v6653 = vadd.f32 %v6025, %v6652
        %v6654 = vpop.f32.mrf.mxu0
        %v6655 = vadd.f32 %v6030, %v6654
        %6656 = vmatmul.bf16.gmra.mxu0 %v6192
        %v6657 = vpop.f32.mrf.mxu0
        %v6658 = vadd.f32 %v6035, %v6657
        %v6659 = vpop.f32.mrf.mxu0
        %v6660 = vadd.f32 %v6040, %v6659
        %6661 = vmatmul.bf16.gmra.mxu0 %v6194
        %v6662 = vpop.f32.mrf.mxu0
        %v6663 = vadd.f32 %v6045, %v6662
        %v6664 = vpop.f32.mrf.mxu0
        %v6665 = vadd.f32 %v6050, %v6664
        %6666 = vmatmul.bf16.gmra.mxu0 %v6196
        %v6667 = vpop.f32.mrf.mxu0
        %v6668 = vadd.f32 %v6055, %v6667
        %v6669 = vpop.f32.mrf.mxu0
        %v6670 = vadd.f32 %v6060, %v6669
        %6671 = vmatmul.bf16.gmra.mxu0 %v6198
        %v6672 = vpop.f32.mrf.mxu0
        %v6673 = vadd.f32 %v6065, %v6672
        %v6674 = vpop.f32.mrf.mxu0
        %v6675 = vadd.f32 %v6070, %v6674
        %6676 = vdwg.mxu0
        %6677 = vmatpush.bf16.msra.mxu0 %v5846
        %6678 = vmatpush.bf16.msra.mxu0 %v5842
        %6679 = vmatpush.bf16.msra.mxu0 %v5838
        %6680 = vmatpush.bf16.msra.mxu0 %v5834
        %6681 = vmatpush.bf16.msra.mxu0 %v5830
        %6682 = vmatpush.bf16.msra.mxu0 %v5826
        %6683 = vmatpush.bf16.msra.mxu0 %v5822
        %6684 = vmatpush.bf16.msra.mxu0 %v5818
        %6685 = vmatmul.bf16.gmra.mxu0 %v6169
        %v6686 = vpop.f32.mrf.mxu0
        %v6687 = vadd.f32 %v6598, %v6686
        %v6688 = vpop.f32.mrf.mxu0
        %v6689 = vadd.f32 %v6600, %v6688
        %6690 = vmatmul.bf16.gmra.mxu0 %v6171
        %v6691 = vpop.f32.mrf.mxu0
        %v6692 = vadd.f32 %v6603, %v6691
        %v6693 = vpop.f32.mrf.mxu0
        %v6694 = vadd.f32 %v6605, %v6693
        %6695 = vmatmul.bf16.gmra.mxu0 %v6173
        %v6696 = vpop.f32.mrf.mxu0
        %v6697 = vadd.f32 %v6608, %v6696
        %v6698 = vpop.f32.mrf.mxu0
        %v6699 = vadd.f32 %v6610, %v6698
        %6700 = vmatmul.bf16.gmra.mxu0 %v6175
        %v6701 = vpop.f32.mrf.mxu0
        %v6702 = vadd.f32 %v6613, %v6701
        %v6703 = vpop.f32.mrf.mxu0
        %v6704 = vadd.f32 %v6615, %v6703
        %6705 = vmatmul.bf16.gmra.mxu0 %v6177
        %v6706 = vpop.f32.mrf.mxu0
        %v6707 = vadd.f32 %v6618, %v6706
        %v6708 = vpop.f32.mrf.mxu0
        %v6709 = vadd.f32 %v6620, %v6708
        %6710 = vmatmul.bf16.gmra.mxu0 %v6179
        %v6711 = vpop.f32.mrf.mxu0
        %v6712 = vadd.f32 %v6623, %v6711
        %v6713 = vpop.f32.mrf.mxu0
        %v6714 = vadd.f32 %v6625, %v6713
        %6715 = vmatmul.bf16.gmra.mxu0 %v6181
        %v6716 = vpop.f32.mrf.mxu0
        %v6717 = vadd.f32 %v6628, %v6716
        %v6718 = vpop.f32.mrf.mxu0
        %v6719 = vadd.f32 %v6630, %v6718
        %6720 = vmatmul.bf16.gmra.mxu0 %v6183
        %v6721 = vpop.f32.mrf.mxu0
        %v6722 = vadd.f32 %v6633, %v6721
        %v6723 = vpop.f32.mrf.mxu0
        %v6724 = vadd.f32 %v6635, %v6723
        %6725 = vmatmul.bf16.gmra.mxu0 %v6185
        %v6726 = vpop.f32.mrf.mxu0
        %v6727 = vadd.f32 %v6638, %v6726
        %v6728 = vpop.f32.mrf.mxu0
        %v6729 = vadd.f32 %v6640, %v6728
        %6730 = vmatmul.bf16.gmra.mxu0 %v6187
        %v6731 = vpop.f32.mrf.mxu0
        %v6732 = vadd.f32 %v6643, %v6731
        %v6733 = vpop.f32.mrf.mxu0
        %v6734 = vadd.f32 %v6645, %v6733
        %6735 = vmatmul.bf16.gmra.mxu0 %v6189
        %v6736 = vpop.f32.mrf.mxu0
        %v6737 = vadd.f32 %v6648, %v6736
        %v6738 = vpop.f32.mrf.mxu0
        %v6739 = vadd.f32 %v6650, %v6738
        %6740 = vmatmul.bf16.gmra.mxu0 %v6191
        %v6741 = vpop.f32.mrf.mxu0
        %v6742 = vadd.f32 %v6653, %v6741
        %v6743 = vpop.f32.mrf.mxu0
        %v6744 = vadd.f32 %v6655, %v6743
        %6745 = vmatmul.bf16.gmra.mxu0 %v6193
        %v6746 = vpop.f32.mrf.mxu0
        %v6747 = vadd.f32 %v6658, %v6746
        %v6748 = vpop.f32.mrf.mxu0
        %v6749 = vadd.f32 %v6660, %v6748
        %6750 = vmatmul.bf16.gmra.mxu0 %v6195
        %v6751 = vpop.f32.mrf.mxu0
        %v6752 = vadd.f32 %v6663, %v6751
        %v6753 = vpop.f32.mrf.mxu0
        %v6754 = vadd.f32 %v6665, %v6753
        %6755 = vmatmul.bf16.gmra.mxu0 %v6197
        %v6756 = vpop.f32.mrf.mxu0
        %v6757 = vadd.f32 %v6668, %v6756
        %v6758 = vpop.f32.mrf.mxu0
        %v6759 = vadd.f32 %v6670, %v6758
        %6760 = vmatmul.bf16.gmra.mxu0 %v6199
        %v6761 = vpop.f32.mrf.mxu0
        %v6762 = vadd.f32 %v6673, %v6761
        %v6763 = vpop.f32.mrf.mxu0
        %v6764 = vadd.f32 %v6675, %v6763
        %6765 = vdwg.mxu0
        %6766 = vmatpush.bf16.msra.mxu0 %v5815
        %6767 = vmatpush.bf16.msra.mxu0 %v5811
        %6768 = vmatpush.bf16.msra.mxu0 %v5807
        %6769 = vmatpush.bf16.msra.mxu0 %v5803
        %6770 = vmatpush.bf16.msra.mxu0 %v5799
        %6771 = vmatpush.bf16.msra.mxu0 %v5795
        %6772 = vmatpush.bf16.msra.mxu0 %v5791
        %6773 = vmatpush.bf16.msra.mxu0 %v5787
        %6774 = vmatmul.bf16.gmra.mxu0 %v6168
        %v6775 = vpop.f32.mrf.mxu0
        %v6776 = vadd.f32 %v5915, %v6775
        %v6777 = vpop.f32.mrf.mxu0
        %v6778 = vadd.f32 %v5920, %v6777
        %6779 = vmatmul.bf16.gmra.mxu0 %v6170
        %v6780 = vpop.f32.mrf.mxu0
        %v6781 = vadd.f32 %v5925, %v6780
        %v6782 = vpop.f32.mrf.mxu0
        %v6783 = vadd.f32 %v5930, %v6782
        %6784 = vmatmul.bf16.gmra.mxu0 %v6172
        %v6785 = vpop.f32.mrf.mxu0
        %v6786 = vadd.f32 %v5935, %v6785
        %v6787 = vpop.f32.mrf.mxu0
        %v6788 = vadd.f32 %v5940, %v6787
        %6789 = vmatmul.bf16.gmra.mxu0 %v6174
        %v6790 = vpop.f32.mrf.mxu0
        %v6791 = vadd.f32 %v5945, %v6790
        %v6792 = vpop.f32.mrf.mxu0
        %v6793 = vadd.f32 %v5950, %v6792
        %6794 = vmatmul.bf16.gmra.mxu0 %v6176
        %v6795 = vpop.f32.mrf.mxu0
        %v6796 = vadd.f32 %v5955, %v6795
        %v6797 = vpop.f32.mrf.mxu0
        %v6798 = vadd.f32 %v5960, %v6797
        %6799 = vmatmul.bf16.gmra.mxu0 %v6178
        %v6800 = vpop.f32.mrf.mxu0
        %v6801 = vadd.f32 %v5965, %v6800
        %v6802 = vpop.f32.mrf.mxu0
        %v6803 = vadd.f32 %v5970, %v6802
        %6804 = vmatmul.bf16.gmra.mxu0 %v6180
        %v6805 = vpop.f32.mrf.mxu0
        %v6806 = vadd.f32 %v5975, %v6805
        %v6807 = vpop.f32.mrf.mxu0
        %v6808 = vadd.f32 %v5980, %v6807
        %6809 = vmatmul.bf16.gmra.mxu0 %v6182
        %v6810 = vpop.f32.mrf.mxu0
        %v6811 = vadd.f32 %v5985, %v6810
        %v6812 = vpop.f32.mrf.mxu0
        %v6813 = vadd.f32 %v5990, %v6812
        %6814 = vmatmul.bf16.gmra.mxu0 %v6184
        %v6815 = vpop.f32.mrf.mxu0
        %v6816 = vadd.f32 %v5995, %v6815
        %v6817 = vpop.f32.mrf.mxu0
        %v6818 = vadd.f32 %v6000, %v6817
        %6819 = vmatmul.bf16.gmra.mxu0 %v6186
        %v6820 = vpop.f32.mrf.mxu0
        %v6821 = vadd.f32 %v6005, %v6820
        %v6822 = vpop.f32.mrf.mxu0
        %v6823 = vadd.f32 %v6010, %v6822
        %6824 = vmatmul.bf16.gmra.mxu0 %v6188
        %v6825 = vpop.f32.mrf.mxu0
        %v6826 = vadd.f32 %v6015, %v6825
        %v6827 = vpop.f32.mrf.mxu0
        %v6828 = vadd.f32 %v6020, %v6827
        %6829 = vmatmul.bf16.gmra.mxu0 %v6190
        %v6830 = vpop.f32.mrf.mxu0
        %v6831 = vadd.f32 %v6025, %v6830
        %v6832 = vpop.f32.mrf.mxu0
        %v6833 = vadd.f32 %v6030, %v6832
        %6834 = vmatmul.bf16.gmra.mxu0 %v6192
        %v6835 = vpop.f32.mrf.mxu0
        %v6836 = vadd.f32 %v6035, %v6835
        %v6837 = vpop.f32.mrf.mxu0
        %v6838 = vadd.f32 %v6040, %v6837
        %6839 = vmatmul.bf16.gmra.mxu0 %v6194
        %v6840 = vpop.f32.mrf.mxu0
        %v6841 = vadd.f32 %v6045, %v6840
        %v6842 = vpop.f32.mrf.mxu0
        %v6843 = vadd.f32 %v6050, %v6842
        %6844 = vmatmul.bf16.gmra.mxu0 %v6196
        %v6845 = vpop.f32.mrf.mxu0
        %v6846 = vadd.f32 %v6055, %v6845
        %v6847 = vpop.f32.mrf.mxu0
        %v6848 = vadd.f32 %v6060, %v6847
        %6849 = vmatmul.bf16.gmra.mxu0 %v6198
        %v6850 = vpop.f32.mrf.mxu0
        %v6851 = vadd.f32 %v6065, %v6850
        %v6852 = vpop.f32.mrf.mxu0
        %v6853 = vadd.f32 %v6070, %v6852
        %6854 = vdwg.mxu0
        %6855 = vmatpush.bf16.msra.mxu0 %v5847
        %6856 = vmatpush.bf16.msra.mxu0 %v5843
        %6857 = vmatpush.bf16.msra.mxu0 %v5839
        %6858 = vmatpush.bf16.msra.mxu0 %v5835
        %6859 = vmatpush.bf16.msra.mxu0 %v5831
        %6860 = vmatpush.bf16.msra.mxu0 %v5827
        %6861 = vmatpush.bf16.msra.mxu0 %v5823
        %6862 = vmatpush.bf16.msra.mxu0 %v5819
        %6863 = vmatmul.bf16.gmra.mxu0 %v6169
        %v6864 = vpop.f32.mrf.mxu0
        %v6865 = vadd.f32 %v6776, %v6864
        %v6866 = vpop.f32.mrf.mxu0
        %v6867 = vadd.f32 %v6778, %v6866
        %6868 = vmatmul.bf16.gmra.mxu0 %v6171
        %v6869 = vpop.f32.mrf.mxu0
        %v6870 = vadd.f32 %v6781, %v6869
        %v6871 = vpop.f32.mrf.mxu0
        %v6872 = vadd.f32 %v6783, %v6871
        %6873 = vmatmul.bf16.gmra.mxu0 %v6173
        %v6874 = vpop.f32.mrf.mxu0
        %v6875 = vadd.f32 %v6786, %v6874
        %v6876 = vpop.f32.mrf.mxu0
        %v6877 = vadd.f32 %v6788, %v6876
        %6878 = vmatmul.bf16.gmra.mxu0 %v6175
        %v6879 = vpop.f32.mrf.mxu0
        %v6880 = vadd.f32 %v6791, %v6879
        %v6881 = vpop.f32.mrf.mxu0
        %v6882 = vadd.f32 %v6793, %v6881
        %6883 = vmatmul.bf16.gmra.mxu0 %v6177
        %v6884 = vpop.f32.mrf.mxu0
        %v6885 = vadd.f32 %v6796, %v6884
        %v6886 = vpop.f32.mrf.mxu0
        %v6887 = vadd.f32 %v6798, %v6886
        %6888 = vmatmul.bf16.gmra.mxu0 %v6179
        %v6889 = vpop.f32.mrf.mxu0
        %v6890 = vadd.f32 %v6801, %v6889
        %v6891 = vpop.f32.mrf.mxu0
        %v6892 = vadd.f32 %v6803, %v6891
        %6893 = vmatmul.bf16.gmra.mxu0 %v6181
        %v6894 = vpop.f32.mrf.mxu0
        %v6895 = vadd.f32 %v6806, %v6894
        %v6896 = vpop.f32.mrf.mxu0
        %v6897 = vadd.f32 %v6808, %v6896
        %6898 = vmatmul.bf16.gmra.mxu0 %v6183
        %v6899 = vpop.f32.mrf.mxu0
        %v6900 = vadd.f32 %v6811, %v6899
        %v6901 = vpop.f32.mrf.mxu0
        %v6902 = vadd.f32 %v6813, %v6901
        %6903 = vmatmul.bf16.gmra.mxu0 %v6185
        %v6904 = vpop.f32.mrf.mxu0
        %v6905 = vadd.f32 %v6816, %v6904
        %v6906 = vpop.f32.mrf.mxu0
        %v6907 = vadd.f32 %v6818, %v6906
        %6908 = vmatmul.bf16.gmra.mxu0 %v6187
        %v6909 = vpop.f32.mrf.mxu0
        %v6910 = vadd.f32 %v6821, %v6909
        %v6911 = vpop.f32.mrf.mxu0
        %v6912 = vadd.f32 %v6823, %v6911
        %6913 = vmatmul.bf16.gmra.mxu0 %v6189
        %v6914 = vpop.f32.mrf.mxu0
        %v6915 = vadd.f32 %v6826, %v6914
        %v6916 = vpop.f32.mrf.mxu0
        %v6917 = vadd.f32 %v6828, %v6916
        %6918 = vmatmul.bf16.gmra.mxu0 %v6191
        %v6919 = vpop.f32.mrf.mxu0
        %v6920 = vadd.f32 %v6831, %v6919
        %v6921 = vpop.f32.mrf.mxu0
        %v6922 = vadd.f32 %v6833, %v6921
        %6923 = vmatmul.bf16.gmra.mxu0 %v6193
        %v6924 = vpop.f32.mrf.mxu0
        %v6925 = vadd.f32 %v6836, %v6924
        %v6926 = vpop.f32.mrf.mxu0
        %v6927 = vadd.f32 %v6838, %v6926
        %6928 = vmatmul.bf16.gmra.mxu0 %v6195
        %v6929 = vpop.f32.mrf.mxu0
        %v6930 = vadd.f32 %v6841, %v6929
        %v6931 = vpop.f32.mrf.mxu0
        %v6932 = vadd.f32 %v6843, %v6931
        %6933 = vmatmul.bf16.gmra.mxu0 %v6197
        %v6934 = vpop.f32.mrf.mxu0
        %v6935 = vadd.f32 %v6846, %v6934
        %v6936 = vpop.f32.mrf.mxu0
        %v6937 = vadd.f32 %v6848, %v6936
        %6938 = vmatmul.bf16.gmra.mxu0 %v6199
        %v6939 = vpop.f32.mrf.mxu0
        %v6940 = vadd.f32 %v6851, %v6939
        %v6941 = vpop.f32.mrf.mxu0
        %v6942 = vadd.f32 %v6853, %v6941
        %6943 = vdwg.mxu0
        %v6944 = vmax.f32 %v6331, 0.0
        %v6945 = vmax.f32 %v6509, 0.0
        %v6946 = vmax.f32 %v6687, 0.0
        %v6947 = vmax.f32 %v6865, 0.0
        %v6948 = vmax.f32 %v6333, 0.0
        %v6949 = vmax.f32 %v6511, 0.0
        %v6950 = vmax.f32 %v6689, 0.0
        %v6951 = vmax.f32 %v6867, 0.0
        %v6952 = vmax.f32 %v6336, 0.0
        %v6953 = vmax.f32 %v6514, 0.0
        %v6954 = vmax.f32 %v6692, 0.0
        %v6955 = vmax.f32 %v6870, 0.0
        %v6956 = vmax.f32 %v6338, 0.0
        %v6957 = vmax.f32 %v6516, 0.0
        %v6958 = vmax.f32 %v6694, 0.0
        %v6959 = vmax.f32 %v6872, 0.0
        %v6960 = vmax.f32 %v6341, 0.0
        %v6961 = vmax.f32 %v6519, 0.0
        %v6962 = vmax.f32 %v6697, 0.0
        %v6963 = vmax.f32 %v6875, 0.0
        %v6964 = vmax.f32 %v6343, 0.0
        %v6965 = vmax.f32 %v6521, 0.0
        %v6966 = vmax.f32 %v6699, 0.0
        %v6967 = vmax.f32 %v6877, 0.0
        %v6968 = vmax.f32 %v6346, 0.0
        %v6969 = vmax.f32 %v6524, 0.0
        %v6970 = vmax.f32 %v6702, 0.0
        %v6971 = vmax.f32 %v6880, 0.0
        %v6972 = vmax.f32 %v6348, 0.0
        %v6973 = vmax.f32 %v6526, 0.0
        %v6974 = vmax.f32 %v6704, 0.0
        %v6975 = vmax.f32 %v6882, 0.0
        %v6976 = vmax.f32 %v6351, 0.0
        %v6977 = vmax.f32 %v6529, 0.0
        %v6978 = vmax.f32 %v6707, 0.0
        %v6979 = vmax.f32 %v6885, 0.0
        %v6980 = vmax.f32 %v6353, 0.0
        %v6981 = vmax.f32 %v6531, 0.0
        %v6982 = vmax.f32 %v6709, 0.0
        %v6983 = vmax.f32 %v6887, 0.0
        %v6984 = vmax.f32 %v6356, 0.0
        %v6985 = vmax.f32 %v6534, 0.0
        %v6986 = vmax.f32 %v6712, 0.0
        %v6987 = vmax.f32 %v6890, 0.0
        %v6988 = vmax.f32 %v6358, 0.0
        %v6989 = vmax.f32 %v6536, 0.0
        %v6990 = vmax.f32 %v6714, 0.0
        %v6991 = vmax.f32 %v6892, 0.0
        %v6992 = vmax.f32 %v6361, 0.0
        %v6993 = vmax.f32 %v6539, 0.0
        %v6994 = vmax.f32 %v6717, 0.0
        %v6995 = vmax.f32 %v6895, 0.0
        %v6996 = vmax.f32 %v6363, 0.0
        %v6997 = vmax.f32 %v6541, 0.0
        %v6998 = vmax.f32 %v6719, 0.0
        %v6999 = vmax.f32 %v6897, 0.0
        %v7000 = vmax.f32 %v6366, 0.0
        %v7001 = vmax.f32 %v6544, 0.0
        %v7002 = vmax.f32 %v6722, 0.0
        %v7003 = vmax.f32 %v6900, 0.0
        %v7004 = vmax.f32 %v6368, 0.0
        %v7005 = vmax.f32 %v6546, 0.0
        %v7006 = vmax.f32 %v6724, 0.0
        %v7007 = vmax.f32 %v6902, 0.0
        %v7008 = vmax.f32 %v6371, 0.0
        %v7009 = vmax.f32 %v6549, 0.0
        %v7010 = vmax.f32 %v6727, 0.0
        %v7011 = vmax.f32 %v6905, 0.0
        %v7012 = vmax.f32 %v6373, 0.0
        %v7013 = vmax.f32 %v6551, 0.0
        %v7014 = vmax.f32 %v6729, 0.0
        %v7015 = vmax.f32 %v6907, 0.0
        %v7016 = vmax.f32 %v6376, 0.0
        %v7017 = vmax.f32 %v6554, 0.0
        %v7018 = vmax.f32 %v6732, 0.0
        %v7019 = vmax.f32 %v6910, 0.0
        %v7020 = vmax.f32 %v6378, 0.0
        %v7021 = vmax.f32 %v6556, 0.0
        %v7022 = vmax.f32 %v6734, 0.0
        %v7023 = vmax.f32 %v6912, 0.0
        %v7024 = vmax.f32 %v6381, 0.0
        %v7025 = vmax.f32 %v6559, 0.0
        %v7026 = vmax.f32 %v6737, 0.0
        %v7027 = vmax.f32 %v6915, 0.0
        %v7028 = vmax.f32 %v6383, 0.0
        %v7029 = vmax.f32 %v6561, 0.0
        %v7030 = vmax.f32 %v6739, 0.0
        %v7031 = vmax.f32 %v6917, 0.0
        %v7032 = vmax.f32 %v6386, 0.0
        %v7033 = vmax.f32 %v6564, 0.0
        %v7034 = vmax.f32 %v6742, 0.0
        %v7035 = vmax.f32 %v6920, 0.0
        %v7036 = vmax.f32 %v6388, 0.0
        %v7037 = vmax.f32 %v6566, 0.0
        %v7038 = vmax.f32 %v6744, 0.0
        %v7039 = vmax.f32 %v6922, 0.0
        %v7040 = vmax.f32 %v6391, 0.0
        %v7041 = vmax.f32 %v6569, 0.0
        %v7042 = vmax.f32 %v6747, 0.0
        %v7043 = vmax.f32 %v6925, 0.0
        %v7044 = vmax.f32 %v6393, 0.0
        %v7045 = vmax.f32 %v6571, 0.0
        %v7046 = vmax.f32 %v6749, 0.0
        %v7047 = vmax.f32 %v6927, 0.0
        %v7048 = vmax.f32 %v6396, 0.0
        %v7049 = vmax.f32 %v6574, 0.0
        %v7050 = vmax.f32 %v6752, 0.0
        %v7051 = vmax.f32 %v6930, 0.0
        %v7052 = vmax.f32 %v6398, 0.0
        %v7053 = vmax.f32 %v6576, 0.0
        %v7054 = vmax.f32 %v6754, 0.0
        %v7055 = vmax.f32 %v6932, 0.0
        %v7056 = vmax.f32 %v6401, 0.0
        %v7057 = vmax.f32 %v6579, 0.0
        %v7058 = vmax.f32 %v6757, 0.0
        %v7059 = vmax.f32 %v6935, 0.0
        %v7060 = vmax.f32 %v6403, 0.0
        %v7061 = vmax.f32 %v6581, 0.0
        %v7062 = vmax.f32 %v6759, 0.0
        %v7063 = vmax.f32 %v6937, 0.0
        %v7064 = vmax.f32 %v6406, 0.0
        %v7065 = vmax.f32 %v6584, 0.0
        %v7066 = vmax.f32 %v6762, 0.0
        %v7067 = vmax.f32 %v6940, 0.0
        %v7068 = vmax.f32 %v6408, 0.0
        %v7069 = vmax.f32 %v6586, 0.0
        %v7070 = vmax.f32 %v6764, 0.0
        %v7071 = vmax.f32 %v6942, 0.0
        %v7072 = vpack.c.bf16 %v6948, %v6944
        %v7073 = vpack.c.bf16 %v6949, %v6945
        %v7074 = vpack.c.bf16 %v6950, %v6946
        %v7075 = vpack.c.bf16 %v6951, %v6947
        %v7076 = vpack.c.bf16 %v6956, %v6952
        %v7077 = vpack.c.bf16 %v6957, %v6953
        %v7078 = vpack.c.bf16 %v6958, %v6954
        %v7079 = vpack.c.bf16 %v6959, %v6955
        %v7080 = vpack.c.bf16 %v6964, %v6960
        %v7081 = vpack.c.bf16 %v6965, %v6961
        %v7082 = vpack.c.bf16 %v6966, %v6962
        %v7083 = vpack.c.bf16 %v6967, %v6963
        %v7084 = vpack.c.bf16 %v6972, %v6968
        %v7085 = vpack.c.bf16 %v6973, %v6969
        %v7086 = vpack.c.bf16 %v6974, %v6970
        %v7087 = vpack.c.bf16 %v6975, %v6971
        %v7088 = vpack.c.bf16 %v6980, %v6976
        %v7089 = vpack.c.bf16 %v6981, %v6977
        %v7090 = vpack.c.bf16 %v6982, %v6978
        %v7091 = vpack.c.bf16 %v6983, %v6979
        %v7092 = vpack.c.bf16 %v6988, %v6984
        %v7093 = vpack.c.bf16 %v6989, %v6985
        %v7094 = vpack.c.bf16 %v6990, %v6986
        %v7095 = vpack.c.bf16 %v6991, %v6987
        %v7096 = vpack.c.bf16 %v6996, %v6992
        %v7097 = vpack.c.bf16 %v6997, %v6993
        %v7098 = vpack.c.bf16 %v6998, %v6994
        %v7099 = vpack.c.bf16 %v6999, %v6995
        %v7100 = vpack.c.bf16 %v7004, %v7000
        %v7101 = vpack.c.bf16 %v7005, %v7001
        %v7102 = vpack.c.bf16 %v7006, %v7002
        %v7103 = vpack.c.bf16 %v7007, %v7003
        %v7104 = vpack.c.bf16 %v7012, %v7008
        %v7105 = vpack.c.bf16 %v7013, %v7009
        %v7106 = vpack.c.bf16 %v7014, %v7010
        %v7107 = vpack.c.bf16 %v7015, %v7011
        %v7108 = vpack.c.bf16 %v7020, %v7016
        %v7109 = vpack.c.bf16 %v7021, %v7017
        %v7110 = vpack.c.bf16 %v7022, %v7018
        %v7111 = vpack.c.bf16 %v7023, %v7019
        %v7112 = vpack.c.bf16 %v7028, %v7024
        %v7113 = vpack.c.bf16 %v7029, %v7025
        %v7114 = vpack.c.bf16 %v7030, %v7026
        %v7115 = vpack.c.bf16 %v7031, %v7027
        %v7116 = vpack.c.bf16 %v7036, %v7032
        %v7117 = vpack.c.bf16 %v7037, %v7033
        %v7118 = vpack.c.bf16 %v7038, %v7034
        %v7119 = vpack.c.bf16 %v7039, %v7035
        %v7120 = vpack.c.bf16 %v7044, %v7040
        %v7121 = vpack.c.bf16 %v7045, %v7041
        %v7122 = vpack.c.bf16 %v7046, %v7042
        %v7123 = vpack.c.bf16 %v7047, %v7043
        %v7124 = vpack.c.bf16 %v7052, %v7048
        %v7125 = vpack.c.bf16 %v7053, %v7049
        %v7126 = vpack.c.bf16 %v7054, %v7050
        %v7127 = vpack.c.bf16 %v7055, %v7051
        %v7128 = vpack.c.bf16 %v7060, %v7056
        %v7129 = vpack.c.bf16 %v7061, %v7057
        %v7130 = vpack.c.bf16 %v7062, %v7058
        %v7131 = vpack.c.bf16 %v7063, %v7059
        %v7132 = vpack.c.bf16 %v7068, %v7064
        %v7133 = vpack.c.bf16 %v7069, %v7065
        %v7134 = vpack.c.bf16 %v7070, %v7066
        %v7135 = vpack.c.bf16 %v7071, %v7067
        %v7136 = vld [vmem:[%s7] sm:$0xff]
        %v7137 = vld [vmem:[%s7 + $0x8] sm:$0xff]
        %v7138 = vld [vmem:[%s7 + $0x10] sm:$0xff]
        %v7139 = vld [vmem:[%s7 + $0x18] sm:$0xff]
        %v7140 = vld [vmem:[%s7 + $0x20] sm:$0xff]
        %v7141 = vld [vmem:[%s7 + $0x28] sm:$0xff]
        %v7142 = vld [vmem:[%s7 + $0x30] sm:$0xff]
        %v7143 = vld [vmem:[%s7 + $0x38] sm:$0xff]
        %v7144 = vld [vmem:[%s7 + $0x40] sm:$0xff]
        %v7145 = vld [vmem:[%s7 + $0x48] sm:$0xff]
        %v7146 = vld [vmem:[%s7 + $0x50] sm:$0xff]
        %v7147 = vld [vmem:[%s7 + $0x58] sm:$0xff]
        %v7148 = vld [vmem:[%s7 + $0x60] sm:$0xff]
        %v7149 = vld [vmem:[%s7 + $0x68] sm:$0xff]
        %v7150 = vld [vmem:[%s7 + $0x70] sm:$0xff]
        %v7151 = vld [vmem:[%s7 + $0x78] sm:$0xff]
        %v7152 = vld [vmem:[%s7 + $0x80] sm:$0xff]
        %v7153 = vld [vmem:[%s7 + $0x88] sm:$0xff]
        %v7154 = vld [vmem:[%s7 + $0x90] sm:$0xff]
        %v7155 = vld [vmem:[%s7 + $0x98] sm:$0xff]
        %v7156 = vld [vmem:[%s7 + $0xa0] sm:$0xff]
        %v7157 = vld [vmem:[%s7 + $0xa8] sm:$0xff]
        %v7158 = vld [vmem:[%s7 + $0xb0] sm:$0xff]
        %v7159 = vld [vmem:[%s7 + $0xb8] sm:$0xff]
        %v7160 = vld [vmem:[%s7 + $0xc0] sm:$0xff]
        %v7161 = vld [vmem:[%s7 + $0xc8] sm:$0xff]
        %v7162 = vld [vmem:[%s7 + $0xd0] sm:$0xff]
        %v7163 = vld [vmem:[%s7 + $0xd8] sm:$0xff]
        %v7164 = vld [vmem:[%s7 + $0xe0] sm:$0xff]
        %v7165 = vld [vmem:[%s7 + $0xe8] sm:$0xff]
        %v7166 = vld [vmem:[%s7 + $0xf0] sm:$0xff]
        %v7167 = vld [vmem:[%s7 + $0xf8] sm:$0xff]
        %v7168 = vld [vmem:[%s8] sm:$0xff]
        %v7169 = vld [vmem:[%s8 + $0x8] sm:$0xff]
        %v7170 = vld [vmem:[%s8 + $0x10] sm:$0xff]
        %v7171 = vld [vmem:[%s8 + $0x18] sm:$0xff]
        %v7172 = vld [vmem:[%s8 + $0x20] sm:$0xff]
        %v7173 = vld [vmem:[%s8 + $0x28] sm:$0xff]
        %v7174 = vld [vmem:[%s8 + $0x30] sm:$0xff]
        %v7175 = vld [vmem:[%s8 + $0x38] sm:$0xff]
        %v7176 = vld [vmem:[%s8 + $0x40] sm:$0xff]
        %v7177 = vld [vmem:[%s8 + $0x48] sm:$0xff]
        %v7178 = vld [vmem:[%s8 + $0x50] sm:$0xff]
        %v7179 = vld [vmem:[%s8 + $0x58] sm:$0xff]
        %v7180 = vld [vmem:[%s8 + $0x60] sm:$0xff]
        %v7181 = vld [vmem:[%s8 + $0x68] sm:$0xff]
        %v7182 = vld [vmem:[%s8 + $0x70] sm:$0xff]
        %v7183 = vld [vmem:[%s8 + $0x78] sm:$0xff]
        %v7184 = vld [vmem:[%s8 + $0x80] sm:$0xff]
        %v7185 = vld [vmem:[%s8 + $0x88] sm:$0xff]
        %v7186 = vld [vmem:[%s8 + $0x90] sm:$0xff]
        %v7187 = vld [vmem:[%s8 + $0x98] sm:$0xff]
        %v7188 = vld [vmem:[%s8 + $0xa0] sm:$0xff]
        %v7189 = vld [vmem:[%s8 + $0xa8] sm:$0xff]
        %v7190 = vld [vmem:[%s8 + $0xb0] sm:$0xff]
        %v7191 = vld [vmem:[%s8 + $0xb8] sm:$0xff]
        %v7192 = vld [vmem:[%s8 + $0xc0] sm:$0xff]
        %v7193 = vld [vmem:[%s8 + $0xc8] sm:$0xff]
        %v7194 = vld [vmem:[%s8 + $0xd0] sm:$0xff]
        %v7195 = vld [vmem:[%s8 + $0xd8] sm:$0xff]
        %v7196 = vld [vmem:[%s8 + $0xe0] sm:$0xff]
        %v7197 = vld [vmem:[%s8 + $0xe8] sm:$0xff]
        %v7198 = vld [vmem:[%s8 + $0xf0] sm:$0xff]
        %v7199 = vld [vmem:[%s8 + $0xf8] sm:$0xff]
        %7201 = vset.pattern.permute.xlu0 0
        %7202 = vperm.xlu0 %7201, %v7168
        %v7203 = vpop.permute.xlu0 %7202
        %7206 = vset.pattern.permute.xlu0 0
        %7207 = vperm.xlu0 %7206, %v7169
        %v7208 = vpop.permute.xlu0 %7207
        %7211 = vset.pattern.permute.xlu0 0
        %7212 = vperm.xlu0 %7211, %v7170
        %v7213 = vpop.permute.xlu0 %7212
        %7216 = vset.pattern.permute.xlu0 0
        %7217 = vperm.xlu0 %7216, %v7171
        %v7218 = vpop.permute.xlu0 %7217
        %7221 = vset.pattern.permute.xlu0 0
        %7222 = vperm.xlu0 %7221, %v7172
        %v7223 = vpop.permute.xlu0 %7222
        %7226 = vset.pattern.permute.xlu0 0
        %7227 = vperm.xlu0 %7226, %v7173
        %v7228 = vpop.permute.xlu0 %7227
        %7231 = vset.pattern.permute.xlu0 0
        %7232 = vperm.xlu0 %7231, %v7174
        %v7233 = vpop.permute.xlu0 %7232
        %7236 = vset.pattern.permute.xlu0 0
        %7237 = vperm.xlu0 %7236, %v7175
        %v7238 = vpop.permute.xlu0 %7237
        %7241 = vset.pattern.permute.xlu0 0
        %7242 = vperm.xlu0 %7241, %v7176
        %v7243 = vpop.permute.xlu0 %7242
        %7246 = vset.pattern.permute.xlu0 0
        %7247 = vperm.xlu0 %7246, %v7177
        %v7248 = vpop.permute.xlu0 %7247
        %7251 = vset.pattern.permute.xlu0 0
        %7252 = vperm.xlu0 %7251, %v7178
        %v7253 = vpop.permute.xlu0 %7252
        %7256 = vset.pattern.permute.xlu0 0
        %7257 = vperm.xlu0 %7256, %v7179
        %v7258 = vpop.permute.xlu0 %7257
        %7261 = vset.pattern.permute.xlu0 0
        %7262 = vperm.xlu0 %7261, %v7180
        %v7263 = vpop.permute.xlu0 %7262
        %7266 = vset.pattern.permute.xlu0 0
        %7267 = vperm.xlu0 %7266, %v7181
        %v7268 = vpop.permute.xlu0 %7267
        %7271 = vset.pattern.permute.xlu0 0
        %7272 = vperm.xlu0 %7271, %v7182
        %v7273 = vpop.permute.xlu0 %7272
        %7276 = vset.pattern.permute.xlu0 0
        %7277 = vperm.xlu0 %7276, %v7183
        %v7278 = vpop.permute.xlu0 %7277
        %7281 = vset.pattern.permute.xlu0 0
        %7282 = vperm.xlu0 %7281, %v7184
        %v7283 = vpop.permute.xlu0 %7282
        %7286 = vset.pattern.permute.xlu0 0
        %7287 = vperm.xlu0 %7286, %v7185
        %v7288 = vpop.permute.xlu0 %7287
        %7291 = vset.pattern.permute.xlu0 0
        %7292 = vperm.xlu0 %7291, %v7186
        %v7293 = vpop.permute.xlu0 %7292
        %7296 = vset.pattern.permute.xlu0 0
        %7297 = vperm.xlu0 %7296, %v7187
        %v7298 = vpop.permute.xlu0 %7297
        %7301 = vset.pattern.permute.xlu0 0
        %7302 = vperm.xlu0 %7301, %v7188
        %v7303 = vpop.permute.xlu0 %7302
        %7306 = vset.pattern.permute.xlu0 0
        %7307 = vperm.xlu0 %7306, %v7189
        %v7308 = vpop.permute.xlu0 %7307
        %7311 = vset.pattern.permute.xlu0 0
        %7312 = vperm.xlu0 %7311, %v7190
        %v7313 = vpop.permute.xlu0 %7312
        %7316 = vset.pattern.permute.xlu0 0
        %7317 = vperm.xlu0 %7316, %v7191
        %v7318 = vpop.permute.xlu0 %7317
        %7321 = vset.pattern.permute.xlu0 0
        %7322 = vperm.xlu0 %7321, %v7192
        %v7323 = vpop.permute.xlu0 %7322
        %7326 = vset.pattern.permute.xlu0 0
        %7327 = vperm.xlu0 %7326, %v7193
        %v7328 = vpop.permute.xlu0 %7327
        %7331 = vset.pattern.permute.xlu0 0
        %7332 = vperm.xlu0 %7331, %v7194
        %v7333 = vpop.permute.xlu0 %7332
        %7336 = vset.pattern.permute.xlu0 0
        %7337 = vperm.xlu0 %7336, %v7195
        %v7338 = vpop.permute.xlu0 %7337
        %7341 = vset.pattern.permute.xlu0 0
        %7342 = vperm.xlu0 %7341, %v7196
        %v7343 = vpop.permute.xlu0 %7342
        %7346 = vset.pattern.permute.xlu0 0
        %7347 = vperm.xlu0 %7346, %v7197
        %v7348 = vpop.permute.xlu0 %7347
        %7351 = vset.pattern.permute.xlu0 0
        %7352 = vperm.xlu0 %7351, %v7198
        %v7353 = vpop.permute.xlu0 %7352
        %7356 = vset.pattern.permute.xlu0 0
        %7357 = vperm.xlu0 %7356, %v7199
        %v7358 = vpop.permute.xlu0 %7357
        %v7392 = vunpack.c.l.b16 %v7136
        %v7393 = vunpack.c.h.b16 %v7136
        %v7394 = vunpack.c.l.b16 %v7137
        %v7395 = vunpack.c.h.b16 %v7137
        %v7396 = vunpack.c.l.b16 %v7138
        %v7397 = vunpack.c.h.b16 %v7138
        %v7398 = vunpack.c.l.b16 %v7139
        %v7399 = vunpack.c.h.b16 %v7139
        %v7400 = vunpack.c.l.b16 %v7140
        %v7401 = vunpack.c.h.b16 %v7140
        %v7402 = vunpack.c.l.b16 %v7141
        %v7403 = vunpack.c.h.b16 %v7141
        %v7404 = vunpack.c.l.b16 %v7142
        %v7405 = vunpack.c.h.b16 %v7142
        %v7406 = vunpack.c.l.b16 %v7143
        %v7407 = vunpack.c.h.b16 %v7143
        %v7408 = vunpack.c.l.b16 %v7144
        %v7409 = vunpack.c.h.b16 %v7144
        %v7410 = vunpack.c.l.b16 %v7145
        %v7411 = vunpack.c.h.b16 %v7145
        %v7412 = vunpack.c.l.b16 %v7146
        %v7413 = vunpack.c.h.b16 %v7146
        %v7414 = vunpack.c.l.b16 %v7147
        %v7415 = vunpack.c.h.b16 %v7147
        %v7416 = vunpack.c.l.b16 %v7148
        %v7417 = vunpack.c.h.b16 %v7148
        %v7418 = vunpack.c.l.b16 %v7149
        %v7419 = vunpack.c.h.b16 %v7149
        %v7420 = vunpack.c.l.b16 %v7150
        %v7421 = vunpack.c.h.b16 %v7150
        %v7422 = vunpack.c.l.b16 %v7151
        %v7423 = vunpack.c.h.b16 %v7151
        %v7424 = vunpack.c.l.b16 %v7152
        %v7425 = vunpack.c.h.b16 %v7152
        %v7426 = vunpack.c.l.b16 %v7153
        %v7427 = vunpack.c.h.b16 %v7153
        %v7428 = vunpack.c.l.b16 %v7154
        %v7429 = vunpack.c.h.b16 %v7154
        %v7430 = vunpack.c.l.b16 %v7155
        %v7431 = vunpack.c.h.b16 %v7155
        %v7432 = vunpack.c.l.b16 %v7156
        %v7433 = vunpack.c.h.b16 %v7156
        %v7434 = vunpack.c.l.b16 %v7157
        %v7435 = vunpack.c.h.b16 %v7157
        %v7436 = vunpack.c.l.b16 %v7158
        %v7437 = vunpack.c.h.b16 %v7158
        %v7438 = vunpack.c.l.b16 %v7159
        %v7439 = vunpack.c.h.b16 %v7159
        %v7440 = vunpack.c.l.b16 %v7160
        %v7441 = vunpack.c.h.b16 %v7160
        %v7442 = vunpack.c.l.b16 %v7161
        %v7443 = vunpack.c.h.b16 %v7161
        %v7444 = vunpack.c.l.b16 %v7162
        %v7445 = vunpack.c.h.b16 %v7162
        %v7446 = vunpack.c.l.b16 %v7163
        %v7447 = vunpack.c.h.b16 %v7163
        %v7448 = vunpack.c.l.b16 %v7164
        %v7449 = vunpack.c.h.b16 %v7164
        %v7450 = vunpack.c.l.b16 %v7165
        %v7451 = vunpack.c.h.b16 %v7165
        %v7452 = vunpack.c.l.b16 %v7166
        %v7453 = vunpack.c.h.b16 %v7166
        %v7454 = vunpack.c.l.b16 %v7167
        %v7455 = vunpack.c.h.b16 %v7167
        %v7456 = vpack.c.b16 %v7394, %v7392
        %v7457 = vpack.c.b16 %v7395, %v7393
        %v7458 = vpack.c.b16 %v7398, %v7396
        %v7459 = vpack.c.b16 %v7399, %v7397
        %v7460 = vpack.c.b16 %v7402, %v7400
        %v7461 = vpack.c.b16 %v7403, %v7401
        %v7462 = vpack.c.b16 %v7406, %v7404
        %v7463 = vpack.c.b16 %v7407, %v7405
        %v7464 = vpack.c.b16 %v7410, %v7408
        %v7465 = vpack.c.b16 %v7411, %v7409
        %v7466 = vpack.c.b16 %v7414, %v7412
        %v7467 = vpack.c.b16 %v7415, %v7413
        %v7468 = vpack.c.b16 %v7418, %v7416
        %v7469 = vpack.c.b16 %v7419, %v7417
        %v7470 = vpack.c.b16 %v7422, %v7420
        %v7471 = vpack.c.b16 %v7423, %v7421
        %v7472 = vpack.c.b16 %v7426, %v7424
        %v7473 = vpack.c.b16 %v7427, %v7425
        %v7474 = vpack.c.b16 %v7430, %v7428
        %v7475 = vpack.c.b16 %v7431, %v7429
        %v7476 = vpack.c.b16 %v7434, %v7432
        %v7477 = vpack.c.b16 %v7435, %v7433
        %v7478 = vpack.c.b16 %v7438, %v7436
        %v7479 = vpack.c.b16 %v7439, %v7437
        %v7480 = vpack.c.b16 %v7442, %v7440
        %v7481 = vpack.c.b16 %v7443, %v7441
        %v7482 = vpack.c.b16 %v7446, %v7444
        %v7483 = vpack.c.b16 %v7447, %v7445
        %v7484 = vpack.c.b16 %v7450, %v7448
        %v7485 = vpack.c.b16 %v7451, %v7449
        %v7486 = vpack.c.b16 %v7454, %v7452
        %v7487 = vpack.c.b16 %v7455, %v7453
        %7520 = vmatpush.bf16.msra.mxu0 %v7100
        %7521 = vmatpush.bf16.msra.mxu0 %v7096
        %7522 = vmatpush.bf16.msra.mxu0 %v7092
        %7523 = vmatpush.bf16.msra.mxu0 %v7088
        %7524 = vmatpush.bf16.msra.mxu0 %v7084
        %7525 = vmatpush.bf16.msra.mxu0 %v7080
        %7526 = vmatpush.bf16.msra.mxu0 %v7076
        %7527 = vmatpush.bf16.msra.mxu0 %v7072
        %7528 = vmatmul.bf16.gmra.mxu0 %v7456
        %v7529 = vpop.f32.mrf.mxu0
        %v7530 = vadd.f32 %v7203, %v7529
        %v7531 = vpop.f32.mrf.mxu0
        %v7532 = vadd.f32 %v7208, %v7531
        %7533 = vmatmul.bf16.gmra.mxu0 %v7458
        %v7534 = vpop.f32.mrf.mxu0
        %v7535 = vadd.f32 %v7213, %v7534
        %v7536 = vpop.f32.mrf.mxu0
        %v7537 = vadd.f32 %v7218, %v7536
        %7538 = vmatmul.bf16.gmra.mxu0 %v7460
        %v7539 = vpop.f32.mrf.mxu0
        %v7540 = vadd.f32 %v7223, %v7539
        %v7541 = vpop.f32.mrf.mxu0
        %v7542 = vadd.f32 %v7228, %v7541
        %7543 = vmatmul.bf16.gmra.mxu0 %v7462
        %v7544 = vpop.f32.mrf.mxu0
        %v7545 = vadd.f32 %v7233, %v7544
        %v7546 = vpop.f32.mrf.mxu0
        %v7547 = vadd.f32 %v7238, %v7546
        %7548 = vmatmul.bf16.gmra.mxu0 %v7464
        %v7549 = vpop.f32.mrf.mxu0
        %v7550 = vadd.f32 %v7243, %v7549
        %v7551 = vpop.f32.mrf.mxu0
        %v7552 = vadd.f32 %v7248, %v7551
        %7553 = vmatmul.bf16.gmra.mxu0 %v7466
        %v7554 = vpop.f32.mrf.mxu0
        %v7555 = vadd.f32 %v7253, %v7554
        %v7556 = vpop.f32.mrf.mxu0
        %v7557 = vadd.f32 %v7258, %v7556
        %7558 = vmatmul.bf16.gmra.mxu0 %v7468
        %v7559 = vpop.f32.mrf.mxu0
        %v7560 = vadd.f32 %v7263, %v7559
        %v7561 = vpop.f32.mrf.mxu0
        %v7562 = vadd.f32 %v7268, %v7561
        %7563 = vmatmul.bf16.gmra.mxu0 %v7470
        %v7564 = vpop.f32.mrf.mxu0
        %v7565 = vadd.f32 %v7273, %v7564
        %v7566 = vpop.f32.mrf.mxu0
        %v7567 = vadd.f32 %v7278, %v7566
        %7568 = vmatmul.bf16.gmra.mxu0 %v7472
        %v7569 = vpop.f32.mrf.mxu0
        %v7570 = vadd.f32 %v7283, %v7569
        %v7571 = vpop.f32.mrf.mxu0
        %v7572 = vadd.f32 %v7288, %v7571
        %7573 = vmatmul.bf16.gmra.mxu0 %v7474
        %v7574 = vpop.f32.mrf.mxu0
        %v7575 = vadd.f32 %v7293, %v7574
        %v7576 = vpop.f32.mrf.mxu0
        %v7577 = vadd.f32 %v7298, %v7576
        %7578 = vmatmul.bf16.gmra.mxu0 %v7476
        %v7579 = vpop.f32.mrf.mxu0
        %v7580 = vadd.f32 %v7303, %v7579
        %v7581 = vpop.f32.mrf.mxu0
        %v7582 = vadd.f32 %v7308, %v7581
        %7583 = vmatmul.bf16.gmra.mxu0 %v7478
        %v7584 = vpop.f32.mrf.mxu0
        %v7585 = vadd.f32 %v7313, %v7584
        %v7586 = vpop.f32.mrf.mxu0
        %v7587 = vadd.f32 %v7318, %v7586
        %7588 = vmatmul.bf16.gmra.mxu0 %v7480
        %v7589 = vpop.f32.mrf.mxu0
        %v7590 = vadd.f32 %v7323, %v7589
        %v7591 = vpop.f32.mrf.mxu0
        %v7592 = vadd.f32 %v7328, %v7591
        %7593 = vmatmul.bf16.gmra.mxu0 %v7482
        %v7594 = vpop.f32.mrf.mxu0
        %v7595 = vadd.f32 %v7333, %v7594
        %v7596 = vpop.f32.mrf.mxu0
        %v7597 = vadd.f32 %v7338, %v7596
        %7598 = vmatmul.bf16.gmra.mxu0 %v7484
        %v7599 = vpop.f32.mrf.mxu0
        %v7600 = vadd.f32 %v7343, %v7599
        %v7601 = vpop.f32.mrf.mxu0
        %v7602 = vadd.f32 %v7348, %v7601
        %7603 = vmatmul.bf16.gmra.mxu0 %v7486
        %v7604 = vpop.f32.mrf.mxu0
        %v7605 = vadd.f32 %v7353, %v7604
        %v7606 = vpop.f32.mrf.mxu0
        %v7607 = vadd.f32 %v7358, %v7606
        %7608 = vdwg.mxu0
        %7609 = vmatpush.bf16.msra.mxu0 %v7132
        %7610 = vmatpush.bf16.msra.mxu0 %v7128
        %7611 = vmatpush.bf16.msra.mxu0 %v7124
        %7612 = vmatpush.bf16.msra.mxu0 %v7120
        %7613 = vmatpush.bf16.msra.mxu0 %v7116
        %7614 = vmatpush.bf16.msra.mxu0 %v7112
        %7615 = vmatpush.bf16.msra.mxu0 %v7108
        %7616 = vmatpush.bf16.msra.mxu0 %v7104
        %7617 = vmatmul.bf16.gmra.mxu0 %v7457
        %v7618 = vpop.f32.mrf.mxu0
        %v7619 = vadd.f32 %v7530, %v7618
        %v7620 = vpop.f32.mrf.mxu0
        %v7621 = vadd.f32 %v7532, %v7620
        %7622 = vmatmul.bf16.gmra.mxu0 %v7459
        %v7623 = vpop.f32.mrf.mxu0
        %v7624 = vadd.f32 %v7535, %v7623
        %v7625 = vpop.f32.mrf.mxu0
        %v7626 = vadd.f32 %v7537, %v7625
        %7627 = vmatmul.bf16.gmra.mxu0 %v7461
        %v7628 = vpop.f32.mrf.mxu0
        %v7629 = vadd.f32 %v7540, %v7628
        %v7630 = vpop.f32.mrf.mxu0
        %v7631 = vadd.f32 %v7542, %v7630
        %7632 = vmatmul.bf16.gmra.mxu0 %v7463
        %v7633 = vpop.f32.mrf.mxu0
        %v7634 = vadd.f32 %v7545, %v7633
        %v7635 = vpop.f32.mrf.mxu0
        %v7636 = vadd.f32 %v7547, %v7635
        %7637 = vmatmul.bf16.gmra.mxu0 %v7465
        %v7638 = vpop.f32.mrf.mxu0
        %v7639 = vadd.f32 %v7550, %v7638
        %v7640 = vpop.f32.mrf.mxu0
        %v7641 = vadd.f32 %v7552, %v7640
        %7642 = vmatmul.bf16.gmra.mxu0 %v7467
        %v7643 = vpop.f32.mrf.mxu0
        %v7644 = vadd.f32 %v7555, %v7643
        %v7645 = vpop.f32.mrf.mxu0
        %v7646 = vadd.f32 %v7557, %v7645
        %7647 = vmatmul.bf16.gmra.mxu0 %v7469
        %v7648 = vpop.f32.mrf.mxu0
        %v7649 = vadd.f32 %v7560, %v7648
        %v7650 = vpop.f32.mrf.mxu0
        %v7651 = vadd.f32 %v7562, %v7650
        %7652 = vmatmul.bf16.gmra.mxu0 %v7471
        %v7653 = vpop.f32.mrf.mxu0
        %v7654 = vadd.f32 %v7565, %v7653
        %v7655 = vpop.f32.mrf.mxu0
        %v7656 = vadd.f32 %v7567, %v7655
        %7657 = vmatmul.bf16.gmra.mxu0 %v7473
        %v7658 = vpop.f32.mrf.mxu0
        %v7659 = vadd.f32 %v7570, %v7658
        %v7660 = vpop.f32.mrf.mxu0
        %v7661 = vadd.f32 %v7572, %v7660
        %7662 = vmatmul.bf16.gmra.mxu0 %v7475
        %v7663 = vpop.f32.mrf.mxu0
        %v7664 = vadd.f32 %v7575, %v7663
        %v7665 = vpop.f32.mrf.mxu0
        %v7666 = vadd.f32 %v7577, %v7665
        %7667 = vmatmul.bf16.gmra.mxu0 %v7477
        %v7668 = vpop.f32.mrf.mxu0
        %v7669 = vadd.f32 %v7580, %v7668
        %v7670 = vpop.f32.mrf.mxu0
        %v7671 = vadd.f32 %v7582, %v7670
        %7672 = vmatmul.bf16.gmra.mxu0 %v7479
        %v7673 = vpop.f32.mrf.mxu0
        %v7674 = vadd.f32 %v7585, %v7673
        %v7675 = vpop.f32.mrf.mxu0
        %v7676 = vadd.f32 %v7587, %v7675
        %7677 = vmatmul.bf16.gmra.mxu0 %v7481
        %v7678 = vpop.f32.mrf.mxu0
        %v7679 = vadd.f32 %v7590, %v7678
        %v7680 = vpop.f32.mrf.mxu0
        %v7681 = vadd.f32 %v7592, %v7680
        %7682 = vmatmul.bf16.gmra.mxu0 %v7483
        %v7683 = vpop.f32.mrf.mxu0
        %v7684 = vadd.f32 %v7595, %v7683
        %v7685 = vpop.f32.mrf.mxu0
        %v7686 = vadd.f32 %v7597, %v7685
        %7687 = vmatmul.bf16.gmra.mxu0 %v7485
        %v7688 = vpop.f32.mrf.mxu0
        %v7689 = vadd.f32 %v7600, %v7688
        %v7690 = vpop.f32.mrf.mxu0
        %v7691 = vadd.f32 %v7602, %v7690
        %7692 = vmatmul.bf16.gmra.mxu0 %v7487
        %v7693 = vpop.f32.mrf.mxu0
        %v7694 = vadd.f32 %v7605, %v7693
        %v7695 = vpop.f32.mrf.mxu0
        %v7696 = vadd.f32 %v7607, %v7695
        %7697 = vdwg.mxu0
        %7698 = vmatpush.bf16.msra.mxu0 %v7101
        %7699 = vmatpush.bf16.msra.mxu0 %v7097
        %7700 = vmatpush.bf16.msra.mxu0 %v7093
        %7701 = vmatpush.bf16.msra.mxu0 %v7089
        %7702 = vmatpush.bf16.msra.mxu0 %v7085
        %7703 = vmatpush.bf16.msra.mxu0 %v7081
        %7704 = vmatpush.bf16.msra.mxu0 %v7077
        %7705 = vmatpush.bf16.msra.mxu0 %v7073
        %7706 = vmatmul.bf16.gmra.mxu0 %v7456
        %v7707 = vpop.f32.mrf.mxu0
        %v7708 = vadd.f32 %v7203, %v7707
        %v7709 = vpop.f32.mrf.mxu0
        %v7710 = vadd.f32 %v7208, %v7709
        %7711 = vmatmul.bf16.gmra.mxu0 %v7458
        %v7712 = vpop.f32.mrf.mxu0
        %v7713 = vadd.f32 %v7213, %v7712
        %v7714 = vpop.f32.mrf.mxu0
        %v7715 = vadd.f32 %v7218, %v7714
        %7716 = vmatmul.bf16.gmra.mxu0 %v7460
        %v7717 = vpop.f32.mrf.mxu0
        %v7718 = vadd.f32 %v7223, %v7717
        %v7719 = vpop.f32.mrf.mxu0
        %v7720 = vadd.f32 %v7228, %v7719
        %7721 = vmatmul.bf16.gmra.mxu0 %v7462
        %v7722 = vpop.f32.mrf.mxu0
        %v7723 = vadd.f32 %v7233, %v7722
        %v7724 = vpop.f32.mrf.mxu0
        %v7725 = vadd.f32 %v7238, %v7724
        %7726 = vmatmul.bf16.gmra.mxu0 %v7464
        %v7727 = vpop.f32.mrf.mxu0
        %v7728 = vadd.f32 %v7243, %v7727
        %v7729 = vpop.f32.mrf.mxu0
        %v7730 = vadd.f32 %v7248, %v7729
        %7731 = vmatmul.bf16.gmra.mxu0 %v7466
        %v7732 = vpop.f32.mrf.mxu0
        %v7733 = vadd.f32 %v7253, %v7732
        %v7734 = vpop.f32.mrf.mxu0
        %v7735 = vadd.f32 %v7258, %v7734
        %7736 = vmatmul.bf16.gmra.mxu0 %v7468
        %v7737 = vpop.f32.mrf.mxu0
        %v7738 = vadd.f32 %v7263, %v7737
        %v7739 = vpop.f32.mrf.mxu0
        %v7740 = vadd.f32 %v7268, %v7739
        %7741 = vmatmul.bf16.gmra.mxu0 %v7470
        %v7742 = vpop.f32.mrf.mxu0
        %v7743 = vadd.f32 %v7273, %v7742
        %v7744 = vpop.f32.mrf.mxu0
        %v7745 = vadd.f32 %v7278, %v7744
        %7746 = vmatmul.bf16.gmra.mxu0 %v7472
        %v7747 = vpop.f32.mrf.mxu0
        %v7748 = vadd.f32 %v7283, %v7747
        %v7749 = vpop.f32.mrf.mxu0
        %v7750 = vadd.f32 %v7288, %v7749
        %7751 = vmatmul.bf16.gmra.mxu0 %v7474
        %v7752 = vpop.f32.mrf.mxu0
        %v7753 = vadd.f32 %v7293, %v7752
        %v7754 = vpop.f32.mrf.mxu0
        %v7755 = vadd.f32 %v7298, %v7754
        %7756 = vmatmul.bf16.gmra.mxu0 %v7476
        %v7757 = vpop.f32.mrf.mxu0
        %v7758 = vadd.f32 %v7303, %v7757
        %v7759 = vpop.f32.mrf.mxu0
        %v7760 = vadd.f32 %v7308, %v7759
        %7761 = vmatmul.bf16.gmra.mxu0 %v7478
        %v7762 = vpop.f32.mrf.mxu0
        %v7763 = vadd.f32 %v7313, %v7762
        %v7764 = vpop.f32.mrf.mxu0
        %v7765 = vadd.f32 %v7318, %v7764
        %7766 = vmatmul.bf16.gmra.mxu0 %v7480
        %v7767 = vpop.f32.mrf.mxu0
        %v7768 = vadd.f32 %v7323, %v7767
        %v7769 = vpop.f32.mrf.mxu0
        %v7770 = vadd.f32 %v7328, %v7769
        %7771 = vmatmul.bf16.gmra.mxu0 %v7482
        %v7772 = vpop.f32.mrf.mxu0
        %v7773 = vadd.f32 %v7333, %v7772
        %v7774 = vpop.f32.mrf.mxu0
        %v7775 = vadd.f32 %v7338, %v7774
        %7776 = vmatmul.bf16.gmra.mxu0 %v7484
        %v7777 = vpop.f32.mrf.mxu0
        %v7778 = vadd.f32 %v7343, %v7777
        %v7779 = vpop.f32.mrf.mxu0
        %v7780 = vadd.f32 %v7348, %v7779
        %7781 = vmatmul.bf16.gmra.mxu0 %v7486
        %v7782 = vpop.f32.mrf.mxu0
        %v7783 = vadd.f32 %v7353, %v7782
        %v7784 = vpop.f32.mrf.mxu0
        %v7785 = vadd.f32 %v7358, %v7784
        %7786 = vdwg.mxu0
        %7787 = vmatpush.bf16.msra.mxu0 %v7133
        %7788 = vmatpush.bf16.msra.mxu0 %v7129
        %7789 = vmatpush.bf16.msra.mxu0 %v7125
        %7790 = vmatpush.bf16.msra.mxu0 %v7121
        %7791 = vmatpush.bf16.msra.mxu0 %v7117
        %7792 = vmatpush.bf16.msra.mxu0 %v7113
        %7793 = vmatpush.bf16.msra.mxu0 %v7109
        %7794 = vmatpush.bf16.msra.mxu0 %v7105
        %7795 = vmatmul.bf16.gmra.mxu0 %v7457
        %v7796 = vpop.f32.mrf.mxu0
        %v7797 = vadd.f32 %v7708, %v7796
        %v7798 = vpop.f32.mrf.mxu0
        %v7799 = vadd.f32 %v7710, %v7798
        %7800 = vmatmul.bf16.gmra.mxu0 %v7459
        %v7801 = vpop.f32.mrf.mxu0
        %v7802 = vadd.f32 %v7713, %v7801
        %v7803 = vpop.f32.mrf.mxu0
        %v7804 = vadd.f32 %v7715, %v7803
        %7805 = vmatmul.bf16.gmra.mxu0 %v7461
        %v7806 = vpop.f32.mrf.mxu0
        %v7807 = vadd.f32 %v7718, %v7806
        %v7808 = vpop.f32.mrf.mxu0
        %v7809 = vadd.f32 %v7720, %v7808
        %7810 = vmatmul.bf16.gmra.mxu0 %v7463
        %v7811 = vpop.f32.mrf.mxu0
        %v7812 = vadd.f32 %v7723, %v7811
        %v7813 = vpop.f32.mrf.mxu0
        %v7814 = vadd.f32 %v7725, %v7813
        %7815 = vmatmul.bf16.gmra.mxu0 %v7465
        %v7816 = vpop.f32.mrf.mxu0
        %v7817 = vadd.f32 %v7728, %v7816
        %v7818 = vpop.f32.mrf.mxu0
        %v7819 = vadd.f32 %v7730, %v7818
        %7820 = vmatmul.bf16.gmra.mxu0 %v7467
        %v7821 = vpop.f32.mrf.mxu0
        %v7822 = vadd.f32 %v7733, %v7821
        %v7823 = vpop.f32.mrf.mxu0
        %v7824 = vadd.f32 %v7735, %v7823
        %7825 = vmatmul.bf16.gmra.mxu0 %v7469
        %v7826 = vpop.f32.mrf.mxu0
        %v7827 = vadd.f32 %v7738, %v7826
        %v7828 = vpop.f32.mrf.mxu0
        %v7829 = vadd.f32 %v7740, %v7828
        %7830 = vmatmul.bf16.gmra.mxu0 %v7471
        %v7831 = vpop.f32.mrf.mxu0
        %v7832 = vadd.f32 %v7743, %v7831
        %v7833 = vpop.f32.mrf.mxu0
        %v7834 = vadd.f32 %v7745, %v7833
        %7835 = vmatmul.bf16.gmra.mxu0 %v7473
        %v7836 = vpop.f32.mrf.mxu0
        %v7837 = vadd.f32 %v7748, %v7836
        %v7838 = vpop.f32.mrf.mxu0
        %v7839 = vadd.f32 %v7750, %v7838
        %7840 = vmatmul.bf16.gmra.mxu0 %v7475
        %v7841 = vpop.f32.mrf.mxu0
        %v7842 = vadd.f32 %v7753, %v7841
        %v7843 = vpop.f32.mrf.mxu0
        %v7844 = vadd.f32 %v7755, %v7843
        %7845 = vmatmul.bf16.gmra.mxu0 %v7477
        %v7846 = vpop.f32.mrf.mxu0
        %v7847 = vadd.f32 %v7758, %v7846
        %v7848 = vpop.f32.mrf.mxu0
        %v7849 = vadd.f32 %v7760, %v7848
        %7850 = vmatmul.bf16.gmra.mxu0 %v7479
        %v7851 = vpop.f32.mrf.mxu0
        %v7852 = vadd.f32 %v7763, %v7851
        %v7853 = vpop.f32.mrf.mxu0
        %v7854 = vadd.f32 %v7765, %v7853
        %7855 = vmatmul.bf16.gmra.mxu0 %v7481
        %v7856 = vpop.f32.mrf.mxu0
        %v7857 = vadd.f32 %v7768, %v7856
        %v7858 = vpop.f32.mrf.mxu0
        %v7859 = vadd.f32 %v7770, %v7858
        %7860 = vmatmul.bf16.gmra.mxu0 %v7483
        %v7861 = vpop.f32.mrf.mxu0
        %v7862 = vadd.f32 %v7773, %v7861
        %v7863 = vpop.f32.mrf.mxu0
        %v7864 = vadd.f32 %v7775, %v7863
        %7865 = vmatmul.bf16.gmra.mxu0 %v7485
        %v7866 = vpop.f32.mrf.mxu0
        %v7867 = vadd.f32 %v7778, %v7866
        %v7868 = vpop.f32.mrf.mxu0
        %v7869 = vadd.f32 %v7780, %v7868
        %7870 = vmatmul.bf16.gmra.mxu0 %v7487
        %v7871 = vpop.f32.mrf.mxu0
        %v7872 = vadd.f32 %v7783, %v7871
        %v7873 = vpop.f32.mrf.mxu0
        %v7874 = vadd.f32 %v7785, %v7873
        %7875 = vdwg.mxu0
        %7876 = vmatpush.bf16.msra.mxu0 %v7102
        %7877 = vmatpush.bf16.msra.mxu0 %v7098
        %7878 = vmatpush.bf16.msra.mxu0 %v7094
        %7879 = vmatpush.bf16.msra.mxu0 %v7090
        %7880 = vmatpush.bf16.msra.mxu0 %v7086
        %7881 = vmatpush.bf16.msra.mxu0 %v7082
        %7882 = vmatpush.bf16.msra.mxu0 %v7078
        %7883 = vmatpush.bf16.msra.mxu0 %v7074
        %7884 = vmatmul.bf16.gmra.mxu0 %v7456
        %v7885 = vpop.f32.mrf.mxu0
        %v7886 = vadd.f32 %v7203, %v7885
        %v7887 = vpop.f32.mrf.mxu0
        %v7888 = vadd.f32 %v7208, %v7887
        %7889 = vmatmul.bf16.gmra.mxu0 %v7458
        %v7890 = vpop.f32.mrf.mxu0
        %v7891 = vadd.f32 %v7213, %v7890
        %v7892 = vpop.f32.mrf.mxu0
        %v7893 = vadd.f32 %v7218, %v7892
        %7894 = vmatmul.bf16.gmra.mxu0 %v7460
        %v7895 = vpop.f32.mrf.mxu0
        %v7896 = vadd.f32 %v7223, %v7895
        %v7897 = vpop.f32.mrf.mxu0
        %v7898 = vadd.f32 %v7228, %v7897
        %7899 = vmatmul.bf16.gmra.mxu0 %v7462
        %v7900 = vpop.f32.mrf.mxu0
        %v7901 = vadd.f32 %v7233, %v7900
        %v7902 = vpop.f32.mrf.mxu0
        %v7903 = vadd.f32 %v7238, %v7902
        %7904 = vmatmul.bf16.gmra.mxu0 %v7464
        %v7905 = vpop.f32.mrf.mxu0
        %v7906 = vadd.f32 %v7243, %v7905
        %v7907 = vpop.f32.mrf.mxu0
        %v7908 = vadd.f32 %v7248, %v7907
        %7909 = vmatmul.bf16.gmra.mxu0 %v7466
        %v7910 = vpop.f32.mrf.mxu0
        %v7911 = vadd.f32 %v7253, %v7910
        %v7912 = vpop.f32.mrf.mxu0
        %v7913 = vadd.f32 %v7258, %v7912
        %7914 = vmatmul.bf16.gmra.mxu0 %v7468
        %v7915 = vpop.f32.mrf.mxu0
        %v7916 = vadd.f32 %v7263, %v7915
        %v7917 = vpop.f32.mrf.mxu0
        %v7918 = vadd.f32 %v7268, %v7917
        %7919 = vmatmul.bf16.gmra.mxu0 %v7470
        %v7920 = vpop.f32.mrf.mxu0
        %v7921 = vadd.f32 %v7273, %v7920
        %v7922 = vpop.f32.mrf.mxu0
        %v7923 = vadd.f32 %v7278, %v7922
        %7924 = vmatmul.bf16.gmra.mxu0 %v7472
        %v7925 = vpop.f32.mrf.mxu0
        %v7926 = vadd.f32 %v7283, %v7925
        %v7927 = vpop.f32.mrf.mxu0
        %v7928 = vadd.f32 %v7288, %v7927
        %7929 = vmatmul.bf16.gmra.mxu0 %v7474
        %v7930 = vpop.f32.mrf.mxu0
        %v7931 = vadd.f32 %v7293, %v7930
        %v7932 = vpop.f32.mrf.mxu0
        %v7933 = vadd.f32 %v7298, %v7932
        %7934 = vmatmul.bf16.gmra.mxu0 %v7476
        %v7935 = vpop.f32.mrf.mxu0
        %v7936 = vadd.f32 %v7303, %v7935
        %v7937 = vpop.f32.mrf.mxu0
        %v7938 = vadd.f32 %v7308, %v7937
        %7939 = vmatmul.bf16.gmra.mxu0 %v7478
        %v7940 = vpop.f32.mrf.mxu0
        %v7941 = vadd.f32 %v7313, %v7940
        %v7942 = vpop.f32.mrf.mxu0
        %v7943 = vadd.f32 %v7318, %v7942
        %7944 = vmatmul.bf16.gmra.mxu0 %v7480
        %v7945 = vpop.f32.mrf.mxu0
        %v7946 = vadd.f32 %v7323, %v7945
        %v7947 = vpop.f32.mrf.mxu0
        %v7948 = vadd.f32 %v7328, %v7947
        %7949 = vmatmul.bf16.gmra.mxu0 %v7482
        %v7950 = vpop.f32.mrf.mxu0
        %v7951 = vadd.f32 %v7333, %v7950
        %v7952 = vpop.f32.mrf.mxu0
        %v7953 = vadd.f32 %v7338, %v7952
        %7954 = vmatmul.bf16.gmra.mxu0 %v7484
        %v7955 = vpop.f32.mrf.mxu0
        %v7956 = vadd.f32 %v7343, %v7955
        %v7957 = vpop.f32.mrf.mxu0
        %v7958 = vadd.f32 %v7348, %v7957
        %7959 = vmatmul.bf16.gmra.mxu0 %v7486
        %v7960 = vpop.f32.mrf.mxu0
        %v7961 = vadd.f32 %v7353, %v7960
        %v7962 = vpop.f32.mrf.mxu0
        %v7963 = vadd.f32 %v7358, %v7962
        %7964 = vdwg.mxu0
        %7965 = vmatpush.bf16.msra.mxu0 %v7134
        %7966 = vmatpush.bf16.msra.mxu0 %v7130
        %7967 = vmatpush.bf16.msra.mxu0 %v7126
        %7968 = vmatpush.bf16.msra.mxu0 %v7122
        %7969 = vmatpush.bf16.msra.mxu0 %v7118
        %7970 = vmatpush.bf16.msra.mxu0 %v7114
        %7971 = vmatpush.bf16.msra.mxu0 %v7110
        %7972 = vmatpush.bf16.msra.mxu0 %v7106
        %7973 = vmatmul.bf16.gmra.mxu0 %v7457
        %v7974 = vpop.f32.mrf.mxu0
        %v7975 = vadd.f32 %v7886, %v7974
        %v7976 = vpop.f32.mrf.mxu0
        %v7977 = vadd.f32 %v7888, %v7976
        %7978 = vmatmul.bf16.gmra.mxu0 %v7459
        %v7979 = vpop.f32.mrf.mxu0
        %v7980 = vadd.f32 %v7891, %v7979
        %v7981 = vpop.f32.mrf.mxu0
        %v7982 = vadd.f32 %v7893, %v7981
        %7983 = vmatmul.bf16.gmra.mxu0 %v7461
        %v7984 = vpop.f32.mrf.mxu0
        %v7985 = vadd.f32 %v7896, %v7984
        %v7986 = vpop.f32.mrf.mxu0
        %v7987 = vadd.f32 %v7898, %v7986
        %7988 = vmatmul.bf16.gmra.mxu0 %v7463
        %v7989 = vpop.f32.mrf.mxu0
        %v7990 = vadd.f32 %v7901, %v7989
        %v7991 = vpop.f32.mrf.mxu0
        %v7992 = vadd.f32 %v7903, %v7991
        %7993 = vmatmul.bf16.gmra.mxu0 %v7465
        %v7994 = vpop.f32.mrf.mxu0
        %v7995 = vadd.f32 %v7906, %v7994
        %v7996 = vpop.f32.mrf.mxu0
        %v7997 = vadd.f32 %v7908, %v7996
        %7998 = vmatmul.bf16.gmra.mxu0 %v7467
        %v7999 = vpop.f32.mrf.mxu0
        %v8000 = vadd.f32 %v7911, %v7999
        %v8001 = vpop.f32.mrf.mxu0
        %v8002 = vadd.f32 %v7913, %v8001
        %8003 = vmatmul.bf16.gmra.mxu0 %v7469
        %v8004 = vpop.f32.mrf.mxu0
        %v8005 = vadd.f32 %v7916, %v8004
        %v8006 = vpop.f32.mrf.mxu0
        %v8007 = vadd.f32 %v7918, %v8006
        %8008 = vmatmul.bf16.gmra.mxu0 %v7471
        %v8009 = vpop.f32.mrf.mxu0
        %v8010 = vadd.f32 %v7921, %v8009
        %v8011 = vpop.f32.mrf.mxu0
        %v8012 = vadd.f32 %v7923, %v8011
        %8013 = vmatmul.bf16.gmra.mxu0 %v7473
        %v8014 = vpop.f32.mrf.mxu0
        %v8015 = vadd.f32 %v7926, %v8014
        %v8016 = vpop.f32.mrf.mxu0
        %v8017 = vadd.f32 %v7928, %v8016
        %8018 = vmatmul.bf16.gmra.mxu0 %v7475
        %v8019 = vpop.f32.mrf.mxu0
        %v8020 = vadd.f32 %v7931, %v8019
        %v8021 = vpop.f32.mrf.mxu0
        %v8022 = vadd.f32 %v7933, %v8021
        %8023 = vmatmul.bf16.gmra.mxu0 %v7477
        %v8024 = vpop.f32.mrf.mxu0
        %v8025 = vadd.f32 %v7936, %v8024
        %v8026 = vpop.f32.mrf.mxu0
        %v8027 = vadd.f32 %v7938, %v8026
        %8028 = vmatmul.bf16.gmra.mxu0 %v7479
        %v8029 = vpop.f32.mrf.mxu0
        %v8030 = vadd.f32 %v7941, %v8029
        %v8031 = vpop.f32.mrf.mxu0
        %v8032 = vadd.f32 %v7943, %v8031
        %8033 = vmatmul.bf16.gmra.mxu0 %v7481
        %v8034 = vpop.f32.mrf.mxu0
        %v8035 = vadd.f32 %v7946, %v8034
        %v8036 = vpop.f32.mrf.mxu0
        %v8037 = vadd.f32 %v7948, %v8036
        %8038 = vmatmul.bf16.gmra.mxu0 %v7483
        %v8039 = vpop.f32.mrf.mxu0
        %v8040 = vadd.f32 %v7951, %v8039
        %v8041 = vpop.f32.mrf.mxu0
        %v8042 = vadd.f32 %v7953, %v8041
        %8043 = vmatmul.bf16.gmra.mxu0 %v7485
        %v8044 = vpop.f32.mrf.mxu0
        %v8045 = vadd.f32 %v7956, %v8044
        %v8046 = vpop.f32.mrf.mxu0
        %v8047 = vadd.f32 %v7958, %v8046
        %8048 = vmatmul.bf16.gmra.mxu0 %v7487
        %v8049 = vpop.f32.mrf.mxu0
        %v8050 = vadd.f32 %v7961, %v8049
        %v8051 = vpop.f32.mrf.mxu0
        %v8052 = vadd.f32 %v7963, %v8051
        %8053 = vdwg.mxu0
        %8054 = vmatpush.bf16.msra.mxu0 %v7103
        %8055 = vmatpush.bf16.msra.mxu0 %v7099
        %8056 = vmatpush.bf16.msra.mxu0 %v7095
        %8057 = vmatpush.bf16.msra.mxu0 %v7091
        %8058 = vmatpush.bf16.msra.mxu0 %v7087
        %8059 = vmatpush.bf16.msra.mxu0 %v7083
        %8060 = vmatpush.bf16.msra.mxu0 %v7079
        %8061 = vmatpush.bf16.msra.mxu0 %v7075
        %8062 = vmatmul.bf16.gmra.mxu0 %v7456
        %v8063 = vpop.f32.mrf.mxu0
        %v8064 = vadd.f32 %v7203, %v8063
        %v8065 = vpop.f32.mrf.mxu0
        %v8066 = vadd.f32 %v7208, %v8065
        %8067 = vmatmul.bf16.gmra.mxu0 %v7458
        %v8068 = vpop.f32.mrf.mxu0
        %v8069 = vadd.f32 %v7213, %v8068
        %v8070 = vpop.f32.mrf.mxu0
        %v8071 = vadd.f32 %v7218, %v8070
        %8072 = vmatmul.bf16.gmra.mxu0 %v7460
        %v8073 = vpop.f32.mrf.mxu0
        %v8074 = vadd.f32 %v7223, %v8073
        %v8075 = vpop.f32.mrf.mxu0
        %v8076 = vadd.f32 %v7228, %v8075
        %8077 = vmatmul.bf16.gmra.mxu0 %v7462
        %v8078 = vpop.f32.mrf.mxu0
        %v8079 = vadd.f32 %v7233, %v8078
        %v8080 = vpop.f32.mrf.mxu0
        %v8081 = vadd.f32 %v7238, %v8080
        %8082 = vmatmul.bf16.gmra.mxu0 %v7464
        %v8083 = vpop.f32.mrf.mxu0
        %v8084 = vadd.f32 %v7243, %v8083
        %v8085 = vpop.f32.mrf.mxu0
        %v8086 = vadd.f32 %v7248, %v8085
        %8087 = vmatmul.bf16.gmra.mxu0 %v7466
        %v8088 = vpop.f32.mrf.mxu0
        %v8089 = vadd.f32 %v7253, %v8088
        %v8090 = vpop.f32.mrf.mxu0
        %v8091 = vadd.f32 %v7258, %v8090
        %8092 = vmatmul.bf16.gmra.mxu0 %v7468
        %v8093 = vpop.f32.mrf.mxu0
        %v8094 = vadd.f32 %v7263, %v8093
        %v8095 = vpop.f32.mrf.mxu0
        %v8096 = vadd.f32 %v7268, %v8095
        %8097 = vmatmul.bf16.gmra.mxu0 %v7470
        %v8098 = vpop.f32.mrf.mxu0
        %v8099 = vadd.f32 %v7273, %v8098
        %v8100 = vpop.f32.mrf.mxu0
        %v8101 = vadd.f32 %v7278, %v8100
        %8102 = vmatmul.bf16.gmra.mxu0 %v7472
        %v8103 = vpop.f32.mrf.mxu0
        %v8104 = vadd.f32 %v7283, %v8103
        %v8105 = vpop.f32.mrf.mxu0
        %v8106 = vadd.f32 %v7288, %v8105
        %8107 = vmatmul.bf16.gmra.mxu0 %v7474
        %v8108 = vpop.f32.mrf.mxu0
        %v8109 = vadd.f32 %v7293, %v8108
        %v8110 = vpop.f32.mrf.mxu0
        %v8111 = vadd.f32 %v7298, %v8110
        %8112 = vmatmul.bf16.gmra.mxu0 %v7476
        %v8113 = vpop.f32.mrf.mxu0
        %v8114 = vadd.f32 %v7303, %v8113
        %v8115 = vpop.f32.mrf.mxu0
        %v8116 = vadd.f32 %v7308, %v8115
        %8117 = vmatmul.bf16.gmra.mxu0 %v7478
        %v8118 = vpop.f32.mrf.mxu0
        %v8119 = vadd.f32 %v7313, %v8118
        %v8120 = vpop.f32.mrf.mxu0
        %v8121 = vadd.f32 %v7318, %v8120
        %8122 = vmatmul.bf16.gmra.mxu0 %v7480
        %v8123 = vpop.f32.mrf.mxu0
        %v8124 = vadd.f32 %v7323, %v8123
        %v8125 = vpop.f32.mrf.mxu0
        %v8126 = vadd.f32 %v7328, %v8125
        %8127 = vmatmul.bf16.gmra.mxu0 %v7482
        %v8128 = vpop.f32.mrf.mxu0
        %v8129 = vadd.f32 %v7333, %v8128
        %v8130 = vpop.f32.mrf.mxu0
        %v8131 = vadd.f32 %v7338, %v8130
        %8132 = vmatmul.bf16.gmra.mxu0 %v7484
        %v8133 = vpop.f32.mrf.mxu0
        %v8134 = vadd.f32 %v7343, %v8133
        %v8135 = vpop.f32.mrf.mxu0
        %v8136 = vadd.f32 %v7348, %v8135
        %8137 = vmatmul.bf16.gmra.mxu0 %v7486
        %v8138 = vpop.f32.mrf.mxu0
        %v8139 = vadd.f32 %v7353, %v8138
        %v8140 = vpop.f32.mrf.mxu0
        %v8141 = vadd.f32 %v7358, %v8140
        %8142 = vdwg.mxu0
        %8143 = vmatpush.bf16.msra.mxu0 %v7135
        %8144 = vmatpush.bf16.msra.mxu0 %v7131
        %8145 = vmatpush.bf16.msra.mxu0 %v7127
        %8146 = vmatpush.bf16.msra.mxu0 %v7123
        %8147 = vmatpush.bf16.msra.mxu0 %v7119
        %8148 = vmatpush.bf16.msra.mxu0 %v7115
        %8149 = vmatpush.bf16.msra.mxu0 %v7111
        %8150 = vmatpush.bf16.msra.mxu0 %v7107
        %8151 = vmatmul.bf16.gmra.mxu0 %v7457
        %v8152 = vpop.f32.mrf.mxu0
        %v8153 = vadd.f32 %v8064, %v8152
        %v8154 = vpop.f32.mrf.mxu0
        %v8155 = vadd.f32 %v8066, %v8154
        %8156 = vmatmul.bf16.gmra.mxu0 %v7459
        %v8157 = vpop.f32.mrf.mxu0
        %v8158 = vadd.f32 %v8069, %v8157
        %v8159 = vpop.f32.mrf.mxu0
        %v8160 = vadd.f32 %v8071, %v8159
        %8161 = vmatmul.bf16.gmra.mxu0 %v7461
        %v8162 = vpop.f32.mrf.mxu0
        %v8163 = vadd.f32 %v8074, %v8162
        %v8164 = vpop.f32.mrf.mxu0
        %v8165 = vadd.f32 %v8076, %v8164
        %8166 = vmatmul.bf16.gmra.mxu0 %v7463
        %v8167 = vpop.f32.mrf.mxu0
        %v8168 = vadd.f32 %v8079, %v8167
        %v8169 = vpop.f32.mrf.mxu0
        %v8170 = vadd.f32 %v8081, %v8169
        %8171 = vmatmul.bf16.gmra.mxu0 %v7465
        %v8172 = vpop.f32.mrf.mxu0
        %v8173 = vadd.f32 %v8084, %v8172
        %v8174 = vpop.f32.mrf.mxu0
        %v8175 = vadd.f32 %v8086, %v8174
        %8176 = vmatmul.bf16.gmra.mxu0 %v7467
        %v8177 = vpop.f32.mrf.mxu0
        %v8178 = vadd.f32 %v8089, %v8177
        %v8179 = vpop.f32.mrf.mxu0
        %v8180 = vadd.f32 %v8091, %v8179
        %8181 = vmatmul.bf16.gmra.mxu0 %v7469
        %v8182 = vpop.f32.mrf.mxu0
        %v8183 = vadd.f32 %v8094, %v8182
        %v8184 = vpop.f32.mrf.mxu0
        %v8185 = vadd.f32 %v8096, %v8184
        %8186 = vmatmul.bf16.gmra.mxu0 %v7471
        %v8187 = vpop.f32.mrf.mxu0
        %v8188 = vadd.f32 %v8099, %v8187
        %v8189 = vpop.f32.mrf.mxu0
        %v8190 = vadd.f32 %v8101, %v8189
        %8191 = vmatmul.bf16.gmra.mxu0 %v7473
        %v8192 = vpop.f32.mrf.mxu0
        %v8193 = vadd.f32 %v8104, %v8192
        %v8194 = vpop.f32.mrf.mxu0
        %v8195 = vadd.f32 %v8106, %v8194
        %8196 = vmatmul.bf16.gmra.mxu0 %v7475
        %v8197 = vpop.f32.mrf.mxu0
        %v8198 = vadd.f32 %v8109, %v8197
        %v8199 = vpop.f32.mrf.mxu0
        %v8200 = vadd.f32 %v8111, %v8199
        %8201 = vmatmul.bf16.gmra.mxu0 %v7477
        %v8202 = vpop.f32.mrf.mxu0
        %v8203 = vadd.f32 %v8114, %v8202
        %v8204 = vpop.f32.mrf.mxu0
        %v8205 = vadd.f32 %v8116, %v8204
        %8206 = vmatmul.bf16.gmra.mxu0 %v7479
        %v8207 = vpop.f32.mrf.mxu0
        %v8208 = vadd.f32 %v8119, %v8207
        %v8209 = vpop.f32.mrf.mxu0
        %v8210 = vadd.f32 %v8121, %v8209
        %8211 = vmatmul.bf16.gmra.mxu0 %v7481
        %v8212 = vpop.f32.mrf.mxu0
        %v8213 = vadd.f32 %v8124, %v8212
        %v8214 = vpop.f32.mrf.mxu0
        %v8215 = vadd.f32 %v8126, %v8214
        %8216 = vmatmul.bf16.gmra.mxu0 %v7483
        %v8217 = vpop.f32.mrf.mxu0
        %v8218 = vadd.f32 %v8129, %v8217
        %v8219 = vpop.f32.mrf.mxu0
        %v8220 = vadd.f32 %v8131, %v8219
        %8221 = vmatmul.bf16.gmra.mxu0 %v7485
        %v8222 = vpop.f32.mrf.mxu0
        %v8223 = vadd.f32 %v8134, %v8222
        %v8224 = vpop.f32.mrf.mxu0
        %v8225 = vadd.f32 %v8136, %v8224
        %8226 = vmatmul.bf16.gmra.mxu0 %v7487
        %v8227 = vpop.f32.mrf.mxu0
        %v8228 = vadd.f32 %v8139, %v8227
        %v8229 = vpop.f32.mrf.mxu0
        %v8230 = vadd.f32 %v8141, %v8229
        %8231 = vdwg.mxu0
        %v8232 = vmax.f32 %v7619, 0.0
        %v8233 = vmax.f32 %v7797, 0.0
        %v8234 = vmax.f32 %v7975, 0.0
        %v8235 = vmax.f32 %v8153, 0.0
        %v8236 = vmax.f32 %v7621, 0.0
        %v8237 = vmax.f32 %v7799, 0.0
        %v8238 = vmax.f32 %v7977, 0.0
        %v8239 = vmax.f32 %v8155, 0.0
        %v8240 = vmax.f32 %v7624, 0.0
        %v8241 = vmax.f32 %v7802, 0.0
        %v8242 = vmax.f32 %v7980, 0.0
        %v8243 = vmax.f32 %v8158, 0.0
        %v8244 = vmax.f32 %v7626, 0.0
        %v8245 = vmax.f32 %v7804, 0.0
        %v8246 = vmax.f32 %v7982, 0.0
        %v8247 = vmax.f32 %v8160, 0.0
        %v8248 = vmax.f32 %v7629, 0.0
        %v8249 = vmax.f32 %v7807, 0.0
        %v8250 = vmax.f32 %v7985, 0.0
        %v8251 = vmax.f32 %v8163, 0.0
        %v8252 = vmax.f32 %v7631, 0.0
        %v8253 = vmax.f32 %v7809, 0.0
        %v8254 = vmax.f32 %v7987, 0.0
        %v8255 = vmax.f32 %v8165, 0.0
        %v8256 = vmax.f32 %v7634, 0.0
        %v8257 = vmax.f32 %v7812, 0.0
        %v8258 = vmax.f32 %v7990, 0.0
        %v8259 = vmax.f32 %v8168, 0.0
        %v8260 = vmax.f32 %v7636, 0.0
        %v8261 = vmax.f32 %v7814, 0.0
        %v8262 = vmax.f32 %v7992, 0.0
        %v8263 = vmax.f32 %v8170, 0.0
        %v8264 = vmax.f32 %v7639, 0.0
        %v8265 = vmax.f32 %v7817, 0.0
        %v8266 = vmax.f32 %v7995, 0.0
        %v8267 = vmax.f32 %v8173, 0.0
        %v8268 = vmax.f32 %v7641, 0.0
        %v8269 = vmax.f32 %v7819, 0.0
        %v8270 = vmax.f32 %v7997, 0.0
        %v8271 = vmax.f32 %v8175, 0.0
        %v8272 = vmax.f32 %v7644, 0.0
        %v8273 = vmax.f32 %v7822, 0.0
        %v8274 = vmax.f32 %v8000, 0.0
        %v8275 = vmax.f32 %v8178, 0.0
        %v8276 = vmax.f32 %v7646, 0.0
        %v8277 = vmax.f32 %v7824, 0.0
        %v8278 = vmax.f32 %v8002, 0.0
        %v8279 = vmax.f32 %v8180, 0.0
        %v8280 = vmax.f32 %v7649, 0.0
        %v8281 = vmax.f32 %v7827, 0.0
        %v8282 = vmax.f32 %v8005, 0.0
        %v8283 = vmax.f32 %v8183, 0.0
        %v8284 = vmax.f32 %v7651, 0.0
        %v8285 = vmax.f32 %v7829, 0.0
        %v8286 = vmax.f32 %v8007, 0.0
        %v8287 = vmax.f32 %v8185, 0.0
        %v8288 = vmax.f32 %v7654, 0.0
        %v8289 = vmax.f32 %v7832, 0.0
        %v8290 = vmax.f32 %v8010, 0.0
        %v8291 = vmax.f32 %v8188, 0.0
        %v8292 = vmax.f32 %v7656, 0.0
        %v8293 = vmax.f32 %v7834, 0.0
        %v8294 = vmax.f32 %v8012, 0.0
        %v8295 = vmax.f32 %v8190, 0.0
        %v8296 = vmax.f32 %v7659, 0.0
        %v8297 = vmax.f32 %v7837, 0.0
        %v8298 = vmax.f32 %v8015, 0.0
        %v8299 = vmax.f32 %v8193, 0.0
        %v8300 = vmax.f32 %v7661, 0.0
        %v8301 = vmax.f32 %v7839, 0.0
        %v8302 = vmax.f32 %v8017, 0.0
        %v8303 = vmax.f32 %v8195, 0.0
        %v8304 = vmax.f32 %v7664, 0.0
        %v8305 = vmax.f32 %v7842, 0.0
        %v8306 = vmax.f32 %v8020, 0.0
        %v8307 = vmax.f32 %v8198, 0.0
        %v8308 = vmax.f32 %v7666, 0.0
        %v8309 = vmax.f32 %v7844, 0.0
        %v8310 = vmax.f32 %v8022, 0.0
        %v8311 = vmax.f32 %v8200, 0.0
        %v8312 = vmax.f32 %v7669, 0.0
        %v8313 = vmax.f32 %v7847, 0.0
        %v8314 = vmax.f32 %v8025, 0.0
        %v8315 = vmax.f32 %v8203, 0.0
        %v8316 = vmax.f32 %v7671, 0.0
        %v8317 = vmax.f32 %v7849, 0.0
        %v8318 = vmax.f32 %v8027, 0.0
        %v8319 = vmax.f32 %v8205, 0.0
        %v8320 = vmax.f32 %v7674, 0.0
        %v8321 = vmax.f32 %v7852, 0.0
        %v8322 = vmax.f32 %v8030, 0.0
        %v8323 = vmax.f32 %v8208, 0.0
        %v8324 = vmax.f32 %v7676, 0.0
        %v8325 = vmax.f32 %v7854, 0.0
        %v8326 = vmax.f32 %v8032, 0.0
        %v8327 = vmax.f32 %v8210, 0.0
        %v8328 = vmax.f32 %v7679, 0.0
        %v8329 = vmax.f32 %v7857, 0.0
        %v8330 = vmax.f32 %v8035, 0.0
        %v8331 = vmax.f32 %v8213, 0.0
        %v8332 = vmax.f32 %v7681, 0.0
        %v8333 = vmax.f32 %v7859, 0.0
        %v8334 = vmax.f32 %v8037, 0.0
        %v8335 = vmax.f32 %v8215, 0.0
        %v8336 = vmax.f32 %v7684, 0.0
        %v8337 = vmax.f32 %v7862, 0.0
        %v8338 = vmax.f32 %v8040, 0.0
        %v8339 = vmax.f32 %v8218, 0.0
        %v8340 = vmax.f32 %v7686, 0.0
        %v8341 = vmax.f32 %v7864, 0.0
        %v8342 = vmax.f32 %v8042, 0.0
        %v8343 = vmax.f32 %v8220, 0.0
        %v8344 = vmax.f32 %v7689, 0.0
        %v8345 = vmax.f32 %v7867, 0.0
        %v8346 = vmax.f32 %v8045, 0.0
        %v8347 = vmax.f32 %v8223, 0.0
        %v8348 = vmax.f32 %v7691, 0.0
        %v8349 = vmax.f32 %v7869, 0.0
        %v8350 = vmax.f32 %v8047, 0.0
        %v8351 = vmax.f32 %v8225, 0.0
        %v8352 = vmax.f32 %v7694, 0.0
        %v8353 = vmax.f32 %v7872, 0.0
        %v8354 = vmax.f32 %v8050, 0.0
        %v8355 = vmax.f32 %v8228, 0.0
        %v8356 = vmax.f32 %v7696, 0.0
        %v8357 = vmax.f32 %v7874, 0.0
        %v8358 = vmax.f32 %v8052, 0.0
        %v8359 = vmax.f32 %v8230, 0.0
        %v8360 = vpack.c.bf16 %v8236, %v8232
        %v8361 = vpack.c.bf16 %v8237, %v8233
        %v8362 = vpack.c.bf16 %v8238, %v8234
        %v8363 = vpack.c.bf16 %v8239, %v8235
        %v8364 = vpack.c.bf16 %v8244, %v8240
        %v8365 = vpack.c.bf16 %v8245, %v8241
        %v8366 = vpack.c.bf16 %v8246, %v8242
        %v8367 = vpack.c.bf16 %v8247, %v8243
        %v8368 = vpack.c.bf16 %v8252, %v8248
        %v8369 = vpack.c.bf16 %v8253, %v8249
        %v8370 = vpack.c.bf16 %v8254, %v8250
        %v8371 = vpack.c.bf16 %v8255, %v8251
        %v8372 = vpack.c.bf16 %v8260, %v8256
        %v8373 = vpack.c.bf16 %v8261, %v8257
        %v8374 = vpack.c.bf16 %v8262, %v8258
        %v8375 = vpack.c.bf16 %v8263, %v8259
        %v8376 = vpack.c.bf16 %v8268, %v8264
        %v8377 = vpack.c.bf16 %v8269, %v8265
        %v8378 = vpack.c.bf16 %v8270, %v8266
        %v8379 = vpack.c.bf16 %v8271, %v8267
        %v8380 = vpack.c.bf16 %v8276, %v8272
        %v8381 = vpack.c.bf16 %v8277, %v8273
        %v8382 = vpack.c.bf16 %v8278, %v8274
        %v8383 = vpack.c.bf16 %v8279, %v8275
        %v8384 = vpack.c.bf16 %v8284, %v8280
        %v8385 = vpack.c.bf16 %v8285, %v8281
        %v8386 = vpack.c.bf16 %v8286, %v8282
        %v8387 = vpack.c.bf16 %v8287, %v8283
        %v8388 = vpack.c.bf16 %v8292, %v8288
        %v8389 = vpack.c.bf16 %v8293, %v8289
        %v8390 = vpack.c.bf16 %v8294, %v8290
        %v8391 = vpack.c.bf16 %v8295, %v8291
        %v8392 = vpack.c.bf16 %v8300, %v8296
        %v8393 = vpack.c.bf16 %v8301, %v8297
        %v8394 = vpack.c.bf16 %v8302, %v8298
        %v8395 = vpack.c.bf16 %v8303, %v8299
        %v8396 = vpack.c.bf16 %v8308, %v8304
        %v8397 = vpack.c.bf16 %v8309, %v8305
        %v8398 = vpack.c.bf16 %v8310, %v8306
        %v8399 = vpack.c.bf16 %v8311, %v8307
        %v8400 = vpack.c.bf16 %v8316, %v8312
        %v8401 = vpack.c.bf16 %v8317, %v8313
        %v8402 = vpack.c.bf16 %v8318, %v8314
        %v8403 = vpack.c.bf16 %v8319, %v8315
        %v8404 = vpack.c.bf16 %v8324, %v8320
        %v8405 = vpack.c.bf16 %v8325, %v8321
        %v8406 = vpack.c.bf16 %v8326, %v8322
        %v8407 = vpack.c.bf16 %v8327, %v8323
        %v8408 = vpack.c.bf16 %v8332, %v8328
        %v8409 = vpack.c.bf16 %v8333, %v8329
        %v8410 = vpack.c.bf16 %v8334, %v8330
        %v8411 = vpack.c.bf16 %v8335, %v8331
        %v8412 = vpack.c.bf16 %v8340, %v8336
        %v8413 = vpack.c.bf16 %v8341, %v8337
        %v8414 = vpack.c.bf16 %v8342, %v8338
        %v8415 = vpack.c.bf16 %v8343, %v8339
        %v8416 = vpack.c.bf16 %v8348, %v8344
        %v8417 = vpack.c.bf16 %v8349, %v8345
        %v8418 = vpack.c.bf16 %v8350, %v8346
        %v8419 = vpack.c.bf16 %v8351, %v8347
        %v8420 = vpack.c.bf16 %v8356, %v8352
        %v8421 = vpack.c.bf16 %v8357, %v8353
        %v8422 = vpack.c.bf16 %v8358, %v8354
        %v8423 = vpack.c.bf16 %v8359, %v8355
        %v8424 = vld [vmem:[%s9] sm:$0xff]
        %v8425 = vld [vmem:[%s9 + $0x8] sm:$0xff]
        %v8426 = vld [vmem:[%s9 + $0x10] sm:$0xff]
        %v8427 = vld [vmem:[%s9 + $0x18] sm:$0xff]
        %v8428 = vld [vmem:[%s10] sm:$0xff]
        %v8429 = vld [vmem:[%s10 + $0x8] sm:$0xff]
        %v8430 = vld [vmem:[%s10 + $0x10] sm:$0xff]
        %v8431 = vld [vmem:[%s10 + $0x18] sm:$0xff]
        %8433 = vset.pattern.permute.xlu0 0
        %8434 = vperm.xlu0 %8433, %v8428
        %v8435 = vpop.permute.xlu0 %8434
        %8438 = vset.pattern.permute.xlu0 0
        %8439 = vperm.xlu0 %8438, %v8429
        %v8440 = vpop.permute.xlu0 %8439
        %8443 = vset.pattern.permute.xlu0 0
        %8444 = vperm.xlu0 %8443, %v8430
        %v8445 = vpop.permute.xlu0 %8444
        %8448 = vset.pattern.permute.xlu0 0
        %8449 = vperm.xlu0 %8448, %v8431
        %v8450 = vpop.permute.xlu0 %8449
        %v8456 = vunpack.c.l.b16 %v8424
        %v8457 = vunpack.c.h.b16 %v8424
        %v8458 = vunpack.c.l.b16 %v8425
        %v8459 = vunpack.c.h.b16 %v8425
        %v8460 = vunpack.c.l.b16 %v8426
        %v8461 = vunpack.c.h.b16 %v8426
        %v8462 = vunpack.c.l.b16 %v8427
        %v8463 = vunpack.c.h.b16 %v8427
        %v8464 = vpack.c.b16 %v8458, %v8456
        %v8465 = vpack.c.b16 %v8459, %v8457
        %v8466 = vpack.c.b16 %v8462, %v8460
        %v8467 = vpack.c.b16 %v8463, %v8461
        %8472 = vmatpush.bf16.msra.mxu0 %v8388
        %8473 = vmatpush.bf16.msra.mxu0 %v8384
        %8474 = vmatpush.bf16.msra.mxu0 %v8380
        %8475 = vmatpush.bf16.msra.mxu0 %v8376
        %8476 = vmatpush.bf16.msra.mxu0 %v8372
        %8477 = vmatpush.bf16.msra.mxu0 %v8368
        %8478 = vmatpush.bf16.msra.mxu0 %v8364
        %8479 = vmatpush.bf16.msra.mxu0 %v8360
        %8480 = vmatmul.bf16.gmra.mxu0 %v8464
        %v8481 = vpop.f32.mrf.mxu0
        %v8482 = vadd.f32 %v8435, %v8481
        %v8483 = vpop.f32.mrf.mxu0
        %v8484 = vadd.f32 %v8440, %v8483
        %8485 = vmatmul.bf16.gmra.mxu0 %v8466
        %v8486 = vpop.f32.mrf.mxu0
        %v8487 = vadd.f32 %v8445, %v8486
        %v8488 = vpop.f32.mrf.mxu0
        %v8489 = vadd.f32 %v8450, %v8488
        %8490 = vdwg.mxu0
        %8491 = vmatpush.bf16.msra.mxu0 %v8420
        %8492 = vmatpush.bf16.msra.mxu0 %v8416
        %8493 = vmatpush.bf16.msra.mxu0 %v8412
        %8494 = vmatpush.bf16.msra.mxu0 %v8408
        %8495 = vmatpush.bf16.msra.mxu0 %v8404
        %8496 = vmatpush.bf16.msra.mxu0 %v8400
        %8497 = vmatpush.bf16.msra.mxu0 %v8396
        %8498 = vmatpush.bf16.msra.mxu0 %v8392
        %8499 = vmatmul.bf16.gmra.mxu0 %v8465
        %v8500 = vpop.f32.mrf.mxu0
        %v8501 = vadd.f32 %v8482, %v8500
        %v8502 = vpop.f32.mrf.mxu0
        %v8503 = vadd.f32 %v8484, %v8502
        %8504 = vmatmul.bf16.gmra.mxu0 %v8467
        %v8505 = vpop.f32.mrf.mxu0
        %v8506 = vadd.f32 %v8487, %v8505
        %v8507 = vpop.f32.mrf.mxu0
        %v8508 = vadd.f32 %v8489, %v8507
        %8509 = vdwg.mxu0
        %8510 = vmatpush.bf16.msra.mxu0 %v8389
        %8511 = vmatpush.bf16.msra.mxu0 %v8385
        %8512 = vmatpush.bf16.msra.mxu0 %v8381
        %8513 = vmatpush.bf16.msra.mxu0 %v8377
        %8514 = vmatpush.bf16.msra.mxu0 %v8373
        %8515 = vmatpush.bf16.msra.mxu0 %v8369
        %8516 = vmatpush.bf16.msra.mxu0 %v8365
        %8517 = vmatpush.bf16.msra.mxu0 %v8361
        %8518 = vmatmul.bf16.gmra.mxu0 %v8464
        %v8519 = vpop.f32.mrf.mxu0
        %v8520 = vadd.f32 %v8435, %v8519
        %v8521 = vpop.f32.mrf.mxu0
        %v8522 = vadd.f32 %v8440, %v8521
        %8523 = vmatmul.bf16.gmra.mxu0 %v8466
        %v8524 = vpop.f32.mrf.mxu0
        %v8525 = vadd.f32 %v8445, %v8524
        %v8526 = vpop.f32.mrf.mxu0
        %v8527 = vadd.f32 %v8450, %v8526
        %8528 = vdwg.mxu0
        %8529 = vmatpush.bf16.msra.mxu0 %v8421
        %8530 = vmatpush.bf16.msra.mxu0 %v8417
        %8531 = vmatpush.bf16.msra.mxu0 %v8413
        %8532 = vmatpush.bf16.msra.mxu0 %v8409
        %8533 = vmatpush.bf16.msra.mxu0 %v8405
        %8534 = vmatpush.bf16.msra.mxu0 %v8401
        %8535 = vmatpush.bf16.msra.mxu0 %v8397
        %8536 = vmatpush.bf16.msra.mxu0 %v8393
        %8537 = vmatmul.bf16.gmra.mxu0 %v8465
        %v8538 = vpop.f32.mrf.mxu0
        %v8539 = vadd.f32 %v8520, %v8538
        %v8540 = vpop.f32.mrf.mxu0
        %v8541 = vadd.f32 %v8522, %v8540
        %8542 = vmatmul.bf16.gmra.mxu0 %v8467
        %v8543 = vpop.f32.mrf.mxu0
        %v8544 = vadd.f32 %v8525, %v8543
        %v8545 = vpop.f32.mrf.mxu0
        %v8546 = vadd.f32 %v8527, %v8545
        %8547 = vdwg.mxu0
        %8548 = vmatpush.bf16.msra.mxu0 %v8390
        %8549 = vmatpush.bf16.msra.mxu0 %v8386
        %8550 = vmatpush.bf16.msra.mxu0 %v8382
        %8551 = vmatpush.bf16.msra.mxu0 %v8378
        %8552 = vmatpush.bf16.msra.mxu0 %v8374
        %8553 = vmatpush.bf16.msra.mxu0 %v8370
        %8554 = vmatpush.bf16.msra.mxu0 %v8366
        %8555 = vmatpush.bf16.msra.mxu0 %v8362
        %8556 = vmatmul.bf16.gmra.mxu0 %v8464
        %v8557 = vpop.f32.mrf.mxu0
        %v8558 = vadd.f32 %v8435, %v8557
        %v8559 = vpop.f32.mrf.mxu0
        %v8560 = vadd.f32 %v8440, %v8559
        %8561 = vmatmul.bf16.gmra.mxu0 %v8466
        %v8562 = vpop.f32.mrf.mxu0
        %v8563 = vadd.f32 %v8445, %v8562
        %v8564 = vpop.f32.mrf.mxu0
        %v8565 = vadd.f32 %v8450, %v8564
        %8566 = vdwg.mxu0
        %8567 = vmatpush.bf16.msra.mxu0 %v8422
        %8568 = vmatpush.bf16.msra.mxu0 %v8418
        %8569 = vmatpush.bf16.msra.mxu0 %v8414
        %8570 = vmatpush.bf16.msra.mxu0 %v8410
        %8571 = vmatpush.bf16.msra.mxu0 %v8406
        %8572 = vmatpush.bf16.msra.mxu0 %v8402
        %8573 = vmatpush.bf16.msra.mxu0 %v8398
        %8574 = vmatpush.bf16.msra.mxu0 %v8394
        %8575 = vmatmul.bf16.gmra.mxu0 %v8465
        %v8576 = vpop.f32.mrf.mxu0
        %v8577 = vadd.f32 %v8558, %v8576
        %v8578 = vpop.f32.mrf.mxu0
        %v8579 = vadd.f32 %v8560, %v8578
        %8580 = vmatmul.bf16.gmra.mxu0 %v8467
        %v8581 = vpop.f32.mrf.mxu0
        %v8582 = vadd.f32 %v8563, %v8581
        %v8583 = vpop.f32.mrf.mxu0
        %v8584 = vadd.f32 %v8565, %v8583
        %8585 = vdwg.mxu0
        %8586 = vmatpush.bf16.msra.mxu0 %v8391
        %8587 = vmatpush.bf16.msra.mxu0 %v8387
        %8588 = vmatpush.bf16.msra.mxu0 %v8383
        %8589 = vmatpush.bf16.msra.mxu0 %v8379
        %8590 = vmatpush.bf16.msra.mxu0 %v8375
        %8591 = vmatpush.bf16.msra.mxu0 %v8371
        %8592 = vmatpush.bf16.msra.mxu0 %v8367
        %8593 = vmatpush.bf16.msra.mxu0 %v8363
        %8594 = vmatmul.bf16.gmra.mxu0 %v8464
        %v8595 = vpop.f32.mrf.mxu0
        %v8596 = vadd.f32 %v8435, %v8595
        %v8597 = vpop.f32.mrf.mxu0
        %v8598 = vadd.f32 %v8440, %v8597
        %8599 = vmatmul.bf16.gmra.mxu0 %v8466
        %v8600 = vpop.f32.mrf.mxu0
        %v8601 = vadd.f32 %v8445, %v8600
        %v8602 = vpop.f32.mrf.mxu0
        %v8603 = vadd.f32 %v8450, %v8602
        %8604 = vdwg.mxu0
        %8605 = vmatpush.bf16.msra.mxu0 %v8423
        %8606 = vmatpush.bf16.msra.mxu0 %v8419
        %8607 = vmatpush.bf16.msra.mxu0 %v8415
        %8608 = vmatpush.bf16.msra.mxu0 %v8411
        %8609 = vmatpush.bf16.msra.mxu0 %v8407
        %8610 = vmatpush.bf16.msra.mxu0 %v8403
        %8611 = vmatpush.bf16.msra.mxu0 %v8399
        %8612 = vmatpush.bf16.msra.mxu0 %v8395
        %8613 = vmatmul.bf16.gmra.mxu0 %v8465
        %v8614 = vpop.f32.mrf.mxu0
        %v8615 = vadd.f32 %v8596, %v8614
        %v8616 = vpop.f32.mrf.mxu0
        %v8617 = vadd.f32 %v8598, %v8616
        %8618 = vmatmul.bf16.gmra.mxu0 %v8467
        %v8619 = vpop.f32.mrf.mxu0
        %v8620 = vadd.f32 %v8601, %v8619
        %v8621 = vpop.f32.mrf.mxu0
        %v8622 = vadd.f32 %v8603, %v8621
        %8623 = vdwg.mxu0
        %8624 = vst [vmem:[%s404] sm:$0xff] %v8501
        %8625 = vst [vmem:[%s404 + $0x8] sm:$0xff] %v8539
        %8626 = vst [vmem:[%s404 + $0x10] sm:$0xff] %v8577
        %8627 = vst [vmem:[%s404 + $0x18] sm:$0xff] %v8615
        %8628 = vst [vmem:[%s404 + $0x20] sm:$0xff] %v8503
        %8629 = vst [vmem:[%s404 + $0x28] sm:$0xff] %v8541
        %8630 = vst [vmem:[%s404 + $0x30] sm:$0xff] %v8579
        %8631 = vst [vmem:[%s404 + $0x38] sm:$0xff] %v8617
        %8632 = vst [vmem:[%s404 + $0x40] sm:$0xff] %v8506
        %8633 = vst [vmem:[%s404 + $0x48] sm:$0xff] %v8544
        %8634 = vst [vmem:[%s404 + $0x50] sm:$0xff] %v8582
        %8635 = vst [vmem:[%s404 + $0x58] sm:$0xff] %v8620
        %8636 = vst [vmem:[%s404 + $0x60] sm:$0xff] %v8508
        %8637 = vst [vmem:[%s404 + $0x68] sm:$0xff] %v8546
        %8638 = vst [vmem:[%s404 + $0x70] sm:$0xff] %v8584
        %8639 = vst [vmem:[%s404 + $0x78] sm:$0xff] %v8622
        %s8640 = sand.u32 %s285, 1
        %s8641 = scalar_lea.sflag [#allocation3], %s8640
        %s8642 = sand.u32 %s285, 1
        %s8643 = smul.addr %s8642, 128
        %s8644 = scalar_lea.vmem [#allocation2], %s8643
        // Predicated region
        $region65: #{tpu_custom_call.1} parent=63 // pred_check
          %p8645 = pneg %p295
        $region66: #{tpu_custom_call.1} parent=63 // pred_check_branch
          %8647 = sbr.rel (%p8645) target = $region68
        $region67: #{tpu_custom_call.1} parent=63 // pred_region
          %s8648 = smul.u32 4, %s30
          %8650 = vsyncadd %s8641, 0
          %s8651 = smul.addr %s29, 32
          %s8652 = sadd.s32 %s8648, %s8651
          %s8653 = smul.addr %s8652, 8
          %s8654 = scalar_lea.hbm %s11, %s8653
          %s8655 = sshll.u32 %s8644, 4
          %s8656 = int_to_ptr.vmem [resolvable:$true] %s8655
          %s8657 = sshll.u32 %s8654, 4
          %s8658 = int_to_ptr.hbm [resolvable:$true] %s8657
          %8663 = dma.vmem_to_hbm [thread:$0]  %s8656, 2048, %s8658, %s8641, 512, 1024, 32
        $region68: #{tpu_custom_call.1} parent=63 // pred_fallthru
          _
      $region64: #{tpu_custom_call.1} parent=5 // pred_fallthru
        _
      %p8664 = scmp.le.s32.totalorder 2, %s20
      // Predicated region
      $region69: #{tpu_custom_call.1} parent=5 // pred_check
        %p8665 = pneg %p8664
      $region70: #{tpu_custom_call.1} parent=5 // pred_check_branch
        %8667 = sbr.rel (%p8665) target = $region72
      $region71: #{tpu_custom_call.1} parent=5 // pred_region
        %s8668 = ssub.s32 %s20, 2
        // Predicated region
        $region73: #{tpu_custom_call.1} parent=71 // pred_check
          %p8669 = pneg %p301
        $region74: #{tpu_custom_call.1} parent=71 // pred_check_branch
          %8671 = sbr.rel (%p8669) target = $region76
        $region75: #{tpu_custom_call.1} parent=71 // pred_region
          %s8672 = sand.u32 %s286, 1
          %s8673 = scalar_lea.sflag [#allocation3], %s8672
          %s8674 = sand.u32 %s286, 1
          %s8675 = smul.addr %s8674, 128
          %s8676 = scalar_lea.vmem [#allocation2], %s8675
          %8678 = dma.done %s8673, 2048
        $region76: #{tpu_custom_call.1} parent=71 // pred_fallthru
          _
      $region72: #{tpu_custom_call.1} parent=5 // pred_fallthru
        _
    $region6: #{tpu_custom_call.1} parent=1 // loop_footer
      %s24 = sadd.s32 1, %s20
    $region7: #{tpu_custom_call.1} parent=1 // loop_footer_branch
      %19 = sbr.rel target = $region3
    $region8: #{tpu_custom_call.1} parent=1 // loop_exit
      _
    %8679 = vsyncpa [#allocation3], 1
    %s8680 = scalar_lea.sflag [#allocation3], 1
    %8681 = vsyncpa %s8680, 1

</llo_original>
